<compile_context>
chip_gen: v7x
topology: tpu7x:2x2x1
jax: 0.10.0
libtpu: 0.0.40
codegen_flags: <defaults>
</compile_context>

<pallas_src>
import jax
import jax.numpy as jnp
from jax.experimental import pallas as pl
from jax.experimental.pallas import tpu as pltpu


# ----------------------------------------------------------------------------
# Fused kernel
# ----------------------------------------------------------------------------
def make_fused_kernel(num_layers):
    L = num_layers

    def kernel(*refs):
        x_ref = refs[0]                                     # (B, T, F) f32
        wih_refs = refs[1:1 + L]                            # each (I_l, 4H) bf16
        whh_refs = refs[1 + L:1 + 2 * L]                    # each (H, 4H)  bf16
        b_refs = refs[1 + 2 * L:1 + 3 * L]                  # each (1, 4H)  f32 (b_ih+b_hh)
        w1_ref, b1_ref, w2_ref, b2_ref = refs[1 + 3 * L:-1]
        out_ref = refs[-1]                                  # (B, num_classes) f32

        B, T, F = x_ref.shape
        H = whh_refs[0].shape[0]
        G = 4 * H

        # ---- hoist all weight / bias reads out of the unrolled recurrence ----
        wih = [wih_refs[l][...] for l in range(L)]          # bf16
        whh = [whh_refs[l][...] for l in range(L)]          # bf16
        # layer 0 bias is folded into the precomputed projection below
        bias = [None] + [jnp.broadcast_to(b_refs[l][...], (B, G)) for l in range(1, L)]

        # ---- precompute layer-0 input projection for ALL timesteps ----------
        # One (T*B, F) @ (F, 4H) MXU matmul, completely off the recurrent
        # dependency chain.  Reshapes below are layout-preserving (minor dim
        # untouched, B == sublane count).
        x_flat = x_ref[...].reshape(B * T, F).astype(jnp.bfloat16)          # (B*T, F)
        proj0 = (jnp.dot(x_flat, wih[0], preferred_element_type=jnp.float32)
                 + b_refs[0][...]).reshape(B, T, G)                          # (B, T, 4H) f32

        def gate_apply(gates, c):
            # Gate columns pre-permuted host-side (i,f,g,o) -> (i,f,o,g):
            # one contiguous sigmoid slice + one contiguous tanh slice.
            sig = jax.nn.sigmoid(gates[:, : 3 * H])
            i_g = sig[:, 0 * H:1 * H]
            f_g = sig[:, 1 * H:2 * H]
            o_g = sig[:, 2 * H:3 * H]
            g_g = jnp.tanh(gates[:, 3 * H:])
            c_new = f_g * c + i_g * g_g
            h_new = o_g * jnp.tanh(c_new)
            return h_new, c_new

        hs = [jnp.zeros((B, H), jnp.float32) for _ in range(L)]
        cs = [jnp.zeros((B, H), jnp.float32) for _ in range(L)]

        # Fully unrolled recurrence (straight-line code): cells (t,0),(t-1,1),
        # (t-2,2),... are mutually independent -> wavefront ILP for the
        # scheduler; up to L MXU pushes can be in flight.
        for t in range(T):
            # layer 0: input projection already computed; only h @ W_hh on chain
            g0 = proj0[:, t, :] + jnp.dot(hs[0].astype(jnp.bfloat16), whh[0],
                                          preferred_element_type=jnp.float32)
            hs[0], cs[0] = gate_apply(g0, cs[0])
            inp = hs[0]
            for l in range(1, L):
                # two accumulating dots — no lane-axis concat on the critical path
                g = (jnp.dot(inp.astype(jnp.bfloat16), wih[l],
                             preferred_element_type=jnp.float32)
                     + jnp.dot(hs[l].astype(jnp.bfloat16), whh[l],
                               preferred_element_type=jnp.float32)
                     + bias[l])
                hs[l], cs[l] = gate_apply(g, cs[l])
                inp = hs[l]     # inter-layer dropout(0.4) == identity (eval)

        h_last = hs[L - 1]       # == outputs[:, -1, :]

        # Head: dropout(id) -> relu -> fc_1 -> dropout(id) -> relu -> fc_final
        z = jnp.maximum(h_last, 0.0).astype(jnp.bfloat16)
        y1 = jnp.dot(z, w1_ref[...], preferred_element_type=jnp.float32) + b1_ref[...]
        y1 = jnp.maximum(y1, 0.0).astype(jnp.bfloat16)
        out_ref[...] = (jnp.dot(y1, w2_ref[...], preferred_element_type=jnp.float32)
                        + b2_ref[...])

    return kernel


def fused_lstm_forward(x_btf, prep):
    B, T, F = x_btf.shape
    num_layers = len(prep["w_ih"])
    H = prep["w_hh"][0].shape[0]
    num_classes = prep["w2"].shape[1]

    inputs = (x_btf, *prep["w_ih"], *prep["w_hh"], *prep["bias"],
              prep["w1"], prep["b1"], prep["w2"], prep["b2"])

    # Advisory cost estimate (tiny, latency-bound kernel).
    lstm_flops = sum(2 * T * B * (prep["w_ih"][l].shape[0] + H) * 4 * H
                     for l in range(num_layers))
    head_flops = 2 * B * (prep["w1"].shape[0] * prep["w1"].shape[1]
                          + prep["w2"].shape[0] * prep["w2"].shape[1])
    cost = pl.CostEstimate(
        flops=int(lstm_flops + head_flops),
        transcendentals=int(T * num_layers * B * 5 * H),
        bytes_accessed=int(sum(a.size * a.dtype.itemsize for a in inputs)
                           + B * num_classes * 4),
    )

    vmem_spec = pl.BlockSpec(memory_space=pltpu.MemorySpace.VMEM)
    return pl.pallas_call(
        make_fused_kernel(num_layers),
        out_shape=jax.ShapeDtypeStruct((B, num_classes), jnp.float32),
        in_specs=[vmem_spec] * len(inputs),
        out_specs=vmem_spec,
        cost_estimate=cost,
    )(*inputs)


# ----------------------------------------------------------------------------
# One-time parameter preparation (outside the jitted forward)
# ----------------------------------------------------------------------------
def prepare_params(params):
    """Transpose, reorder gates (i,f,g,o)->(i,f,o,g), fuse biases, and cast
    MXU weight operands to bf16.  W_ih / W_hh kept separate (two-dot cell)."""
    def reorder_gates(a, H):
        i = a[..., 0 * H:1 * H]
        f = a[..., 1 * H:2 * H]
        g = a[..., 2 * H:3 * H]
        o = a[..., 3 * H:4 * H]
        return jnp.concatenate([i, f, o, g], axis=-1)

    w_ih_l, w_hh_l, bias_l = [], [], []
    for (w_ih, w_hh, b_ih, b_hh) in params["lstm"]:
        H = w_hh.shape[1]
        w_ih_l.append(reorder_gates(jnp.transpose(w_ih), H).astype(jnp.bfloat16))  # (I_l, 4H)
        w_hh_l.append(reorder_gates(jnp.transpose(w_hh), H).astype(jnp.bfloat16))  # (H, 4H)
        bias_l.append(reorder_gates((b_ih + b_hh)[None, :], H))                    # (1, 4H) f32

    w1, b1 = params["fc1"]
    w2, b2 = params["fc2"]
    return {
        "w_ih": tuple(w_ih_l),
        "w_hh": tuple(w_hh_l),
        "bias": tuple(bias_l),
        "w1": jnp.transpose(w1).astype(jnp.bfloat16),   # (H, 128)
        "b1": b1[None, :],                              # (1, 128) f32
        "w2": jnp.transpose(w2).astype(jnp.bfloat16),   # (128, num_classes)
        "b2": b2[None, :],                              # (1, num_classes) f32
    }


# ----------------------------------------------------------------------------
# Parameter init (deterministic, PyTorch-style uniform bounds, PyTorch layout)
# ----------------------------------------------------------------------------
def init_params(key, num_features, hidden_units, num_layers=5, num_classes=12):
    params = {"lstm": [], "fc1": None, "fc2": None}
    H = hidden_units
    bound_lstm = 1.0 / jnp.sqrt(H)
    for layer in range(num_layers):
        in_size = num_features if layer == 0 else H
        key, k1, k2, k3, k4 = jax.random.split(key, 5)
        w_ih = jax.random.uniform(k1, (4 * H, in_size), jnp.float32,
                                  -bound_lstm, bound_lstm)
        w_hh = jax.random.uniform(k2, (4 * H, H), jnp.float32,
                                  -bound_lstm, bound_lstm)
        b_ih = jax.random.uniform(k3, (4 * H,), jnp.float32,
                                  -bound_lstm, bound_lstm)
        b_hh = jax.random.uniform(k4, (4 * H,), jnp.float32,
                                  -bound_lstm, bound_lstm)
        params["lstm"].append((w_ih, w_hh, b_ih, b_hh))

    key, k1, k2, k3, k4 = jax.random.split(key, 5)
    b1 = 1.0 / jnp.sqrt(H)
    params["fc1"] = (
        jax.random.uniform(k1, (128, H), jnp.float32, -b1, b1),
        jax.random.uniform(k2, (128,), jnp.float32, -b1, b1),
    )
    b2 = 1.0 / jnp.sqrt(128.0)
    params["fc2"] = (
        jax.random.uniform(k3, (num_classes, 128), jnp.float32, -b2, b2),
        jax.random.uniform(k4, (num_classes,), jnp.float32, -b2, b2),
    )
    return params


# ----------------------------------------------------------------------------
# Full forward (matches LSTM.forward semantics, eval-mode dropout)
# ----------------------------------------------------------------------------
@jax.jit
def lstm_model_forward(x, prep):
    # x: (B, T, F) batch_first, exactly like the PyTorch module.
    # No wrapper ops: the single Pallas call IS the whole forward pass.
    return fused_lstm_forward(x, prep)


if __name__ == "__main__":
    num_features = 8
    hidden_units = 32
    seq_length = 8
    batch = 8          # multiple of the sublane count (8) for vreg occupancy

    key = jax.random.PRNGKey(0)
    key, kx, kp = jax.random.split(key, 3)

    x = jax.random.normal(kx, (batch, seq_length, num_features), jnp.float32)
    params = init_params(kp, num_features, hidden_units)
    prep = prepare_params(params)   # one-time host-side prep, outside the jit

    out = lstm_model_forward(x, prep)
    out = jax.block_until_ready(out)
    assert out.shape == (batch, 12), out.shape
    print("KERNEL_OK")
</pallas_src>

<mosaic_0001>
module attributes {stable_mosaic.version = 11 : i64} {
  func.func @kernel(%arg0: memref<8x8x8xf32, #tpu.memory_space<vmem>>, %arg1: memref<8x128xbf16, #tpu.memory_space<vmem>>, %arg2: memref<32x128xbf16, #tpu.memory_space<vmem>>, %arg3: memref<32x128xbf16, #tpu.memory_space<vmem>>, %arg4: memref<32x128xbf16, #tpu.memory_space<vmem>>, %arg5: memref<32x128xbf16, #tpu.memory_space<vmem>>, %arg6: memref<32x128xbf16, #tpu.memory_space<vmem>>, %arg7: memref<32x128xbf16, #tpu.memory_space<vmem>>, %arg8: memref<32x128xbf16, #tpu.memory_space<vmem>>, %arg9: memref<32x128xbf16, #tpu.memory_space<vmem>>, %arg10: memref<32x128xbf16, #tpu.memory_space<vmem>>, %arg11: memref<1x128xf32, #tpu.memory_space<vmem>>, %arg12: memref<1x128xf32, #tpu.memory_space<vmem>>, %arg13: memref<1x128xf32, #tpu.memory_space<vmem>>, %arg14: memref<1x128xf32, #tpu.memory_space<vmem>>, %arg15: memref<1x128xf32, #tpu.memory_space<vmem>>, %arg16: memref<32x128xbf16, #tpu.memory_space<vmem>>, %arg17: memref<1x128xf32, #tpu.memory_space<vmem>>, %arg18: memref<128x12xbf16, #tpu.memory_space<vmem>>, %arg19: memref<1x12xf32, #tpu.memory_space<vmem>>, %arg20: memref<8x12xf32, #tpu.memory_space<vmem>>) attributes {dimension_semantics = [], scalar_prefetch = 0 : i64, scratch_operands = 0 : i64, tpu.core_type = #tpu.core_type<tc>} {
    %c0 = arith.constant 0 : index
    %c0_0 = arith.constant 0 : index
    %0 = vector.load %arg1[%c0, %c0_0] : memref<8x128xbf16, #tpu.memory_space<vmem>>, vector<8x128xbf16>
    %c0_1 = arith.constant 0 : index
    %c0_2 = arith.constant 0 : index
    %1 = vector.load %arg2[%c0_1, %c0_2] : memref<32x128xbf16, #tpu.memory_space<vmem>>, vector<32x128xbf16>
    %c0_3 = arith.constant 0 : index
    %c0_4 = arith.constant 0 : index
    %2 = vector.load %arg3[%c0_3, %c0_4] : memref<32x128xbf16, #tpu.memory_space<vmem>>, vector<32x128xbf16>
    %c0_5 = arith.constant 0 : index
    %c0_6 = arith.constant 0 : index
    %3 = vector.load %arg4[%c0_5, %c0_6] : memref<32x128xbf16, #tpu.memory_space<vmem>>, vector<32x128xbf16>
    %c0_7 = arith.constant 0 : index
    %c0_8 = arith.constant 0 : index
    %4 = vector.load %arg5[%c0_7, %c0_8] : memref<32x128xbf16, #tpu.memory_space<vmem>>, vector<32x128xbf16>
    %c0_9 = arith.constant 0 : index
    %c0_10 = arith.constant 0 : index
    %5 = vector.load %arg6[%c0_9, %c0_10] : memref<32x128xbf16, #tpu.memory_space<vmem>>, vector<32x128xbf16>
    %c0_11 = arith.constant 0 : index
    %c0_12 = arith.constant 0 : index
    %6 = vector.load %arg7[%c0_11, %c0_12] : memref<32x128xbf16, #tpu.memory_space<vmem>>, vector<32x128xbf16>
    %c0_13 = arith.constant 0 : index
    %c0_14 = arith.constant 0 : index
    %7 = vector.load %arg8[%c0_13, %c0_14] : memref<32x128xbf16, #tpu.memory_space<vmem>>, vector<32x128xbf16>
    %c0_15 = arith.constant 0 : index
    %c0_16 = arith.constant 0 : index
    %8 = vector.load %arg9[%c0_15, %c0_16] : memref<32x128xbf16, #tpu.memory_space<vmem>>, vector<32x128xbf16>
    %c0_17 = arith.constant 0 : index
    %c0_18 = arith.constant 0 : index
    %9 = vector.load %arg10[%c0_17, %c0_18] : memref<32x128xbf16, #tpu.memory_space<vmem>>, vector<32x128xbf16>
    %c0_19 = arith.constant 0 : index
    %c0_20 = arith.constant 0 : index
    %10 = vector.load %arg12[%c0_19, %c0_20] : memref<1x128xf32, #tpu.memory_space<vmem>>, vector<1x128xf32>
    %11 = vector.shape_cast %10 : vector<1x128xf32> to vector<1x128xf32>
    %12 = vector.broadcast %11 : vector<1x128xf32> to vector<8x128xf32>
    %c0_21 = arith.constant 0 : index
    %c0_22 = arith.constant 0 : index
    %13 = vector.load %arg13[%c0_21, %c0_22] : memref<1x128xf32, #tpu.memory_space<vmem>>, vector<1x128xf32>
    %14 = vector.shape_cast %13 : vector<1x128xf32> to vector<1x128xf32>
    %15 = vector.broadcast %14 : vector<1x128xf32> to vector<8x128xf32>
    %c0_23 = arith.constant 0 : index
    %c0_24 = arith.constant 0 : index
    %16 = vector.load %arg14[%c0_23, %c0_24] : memref<1x128xf32, #tpu.memory_space<vmem>>, vector<1x128xf32>
    %17 = vector.shape_cast %16 : vector<1x128xf32> to vector<1x128xf32>
    %18 = vector.broadcast %17 : vector<1x128xf32> to vector<8x128xf32>
    %c0_25 = arith.constant 0 : index
    %c0_26 = arith.constant 0 : index
    %19 = vector.load %arg15[%c0_25, %c0_26] : memref<1x128xf32, #tpu.memory_space<vmem>>, vector<1x128xf32>
    %20 = vector.shape_cast %19 : vector<1x128xf32> to vector<1x128xf32>
    %21 = vector.broadcast %20 : vector<1x128xf32> to vector<8x128xf32>
    %c0_27 = arith.constant 0 : index
    %c0_28 = arith.constant 0 : index
    %c0_29 = arith.constant 0 : index
    %22 = vector.load %arg0[%c0_27, %c0_28, %c0_29] : memref<8x8x8xf32, #tpu.memory_space<vmem>>, vector<8x8x8xf32>
    %23 = vector.shape_cast %22 : vector<8x8x8xf32> to vector<64x8xf32>
    %24 = arith.truncf %23 : vector<64x8xf32> to vector<64x8xbf16>
    %cst = arith.constant dense<0.000000e+00> : vector<64x128xf32>
    %25 = tpu.matmul %24, %0, %cst {dimension_numbers = #tpu.dot_dimension_numbers<[1], [0], [0], [1], [0, 0, 1, 1], [], []>} : vector<64x8xbf16>, vector<8x128xbf16>, vector<64x128xf32> -> vector<64x128xf32>
    %c0_30 = arith.constant 0 : index
    %c0_31 = arith.constant 0 : index
    %26 = vector.load %arg11[%c0_30, %c0_31] : memref<1x128xf32, #tpu.memory_space<vmem>>, vector<1x128xf32>
    %27 = vector.broadcast %26 : vector<1x128xf32> to vector<64x128xf32>
    %28 = arith.addf %25, %27 : vector<64x128xf32>
    %29 = vector.shape_cast %28 : vector<64x128xf32> to vector<8x8x128xf32>
    %cst_32 = arith.constant 0.000000e+00 : f32
    %30 = vector.broadcast %cst_32 : f32 to vector<8x32xf32>
    %cst_33 = arith.constant 0.000000e+00 : f32
    %31 = vector.broadcast %cst_33 : f32 to vector<8x32xf32>
    %cst_34 = arith.constant 0.000000e+00 : f32
    %32 = vector.broadcast %cst_34 : f32 to vector<8x32xf32>
    %cst_35 = arith.constant 0.000000e+00 : f32
    %33 = vector.broadcast %cst_35 : f32 to vector<8x32xf32>
    %cst_36 = arith.constant 0.000000e+00 : f32
    %34 = vector.broadcast %cst_36 : f32 to vector<8x32xf32>
    %cst_37 = arith.constant 0.000000e+00 : f32
    %35 = vector.broadcast %cst_37 : f32 to vector<8x32xf32>
    %cst_38 = arith.constant 0.000000e+00 : f32
    %36 = vector.broadcast %cst_38 : f32 to vector<8x32xf32>
    %cst_39 = arith.constant 0.000000e+00 : f32
    %37 = vector.broadcast %cst_39 : f32 to vector<8x32xf32>
    %cst_40 = arith.constant 0.000000e+00 : f32
    %38 = vector.broadcast %cst_40 : f32 to vector<8x32xf32>
    %cst_41 = arith.constant 0.000000e+00 : f32
    %39 = vector.broadcast %cst_41 : f32 to vector<8x32xf32>
    %40 = vector.extract_strided_slice %29 {offsets = [0, 0, 0], sizes = [8, 1, 128], strides = [1, 1, 1]} : vector<8x8x128xf32> to vector<8x1x128xf32>
    %41 = vector.shape_cast %40 : vector<8x1x128xf32> to vector<8x128xf32>
    %42 = arith.truncf %30 : vector<8x32xf32> to vector<8x32xbf16>
    %cst_42 = arith.constant dense<0.000000e+00> : vector<8x128xf32>
    %43 = tpu.matmul %42, %5, %cst_42 {dimension_numbers = #tpu.dot_dimension_numbers<[1], [0], [0], [1], [0, 0, 1, 1], [], []>} : vector<8x32xbf16>, vector<32x128xbf16>, vector<8x128xf32> -> vector<8x128xf32>
    %44 = arith.addf %41, %43 : vector<8x128xf32>
    %45 = vector.extract_strided_slice %44 {offsets = [0, 0], sizes = [8, 96], strides = [1, 1]} : vector<8x128xf32> to vector<8x96xf32>
    %46 = arith.negf %45 : vector<8x96xf32>
    %47 = math.exp %46 : vector<8x96xf32>
    %cst_43 = arith.constant 1.000000e+00 : f32
    %48 = vector.broadcast %cst_43 : f32 to vector<8x96xf32>
    %49 = arith.addf %48, %47 : vector<8x96xf32>
    %50 = arith.divf %48, %49 : vector<8x96xf32>
    %51 = vector.extract_strided_slice %50 {offsets = [0, 0], sizes = [8, 32], strides = [1, 1]} : vector<8x96xf32> to vector<8x32xf32>
    %52 = vector.extract_strided_slice %50 {offsets = [0, 32], sizes = [8, 32], strides = [1, 1]} : vector<8x96xf32> to vector<8x32xf32>
    %53 = vector.extract_strided_slice %50 {offsets = [0, 64], sizes = [8, 32], strides = [1, 1]} : vector<8x96xf32> to vector<8x32xf32>
    %54 = vector.extract_strided_slice %44 {offsets = [0, 96], sizes = [8, 32], strides = [1, 1]} : vector<8x128xf32> to vector<8x32xf32>
    %55 = math.tanh %54 : vector<8x32xf32>
    %56 = arith.mulf %52, %35 : vector<8x32xf32>
    %57 = arith.mulf %51, %55 : vector<8x32xf32>
    %58 = arith.addf %56, %57 : vector<8x32xf32>
    %59 = math.tanh %58 : vector<8x32xf32>
    %60 = arith.mulf %53, %59 : vector<8x32xf32>
    %61 = arith.truncf %60 : vector<8x32xf32> to vector<8x32xbf16>
    %cst_44 = arith.constant dense<0.000000e+00> : vector<8x128xf32>
    %62 = tpu.matmul %61, %1, %cst_44 {dimension_numbers = #tpu.dot_dimension_numbers<[1], [0], [0], [1], [0, 0, 1, 1], [], []>} : vector<8x32xbf16>, vector<32x128xbf16>, vector<8x128xf32> -> vector<8x128xf32>
    %63 = arith.truncf %31 : vector<8x32xf32> to vector<8x32xbf16>
    %cst_45 = arith.constant dense<0.000000e+00> : vector<8x128xf32>
    %64 = tpu.matmul %63, %6, %cst_45 {dimension_numbers = #tpu.dot_dimension_numbers<[1], [0], [0], [1], [0, 0, 1, 1], [], []>} : vector<8x32xbf16>, vector<32x128xbf16>, vector<8x128xf32> -> vector<8x128xf32>
    %65 = arith.addf %62, %64 : vector<8x128xf32>
    %66 = arith.addf %65, %12 : vector<8x128xf32>
    %67 = vector.extract_strided_slice %66 {offsets = [0, 0], sizes = [8, 96], strides = [1, 1]} : vector<8x128xf32> to vector<8x96xf32>
    %68 = arith.negf %67 : vector<8x96xf32>
    %69 = math.exp %68 : vector<8x96xf32>
    %cst_46 = arith.constant 1.000000e+00 : f32
    %70 = vector.broadcast %cst_46 : f32 to vector<8x96xf32>
    %71 = arith.addf %70, %69 : vector<8x96xf32>
    %72 = arith.divf %70, %71 : vector<8x96xf32>
    %73 = vector.extract_strided_slice %72 {offsets = [0, 0], sizes = [8, 32], strides = [1, 1]} : vector<8x96xf32> to vector<8x32xf32>
    %74 = vector.extract_strided_slice %72 {offsets = [0, 32], sizes = [8, 32], strides = [1, 1]} : vector<8x96xf32> to vector<8x32xf32>
    %75 = vector.extract_strided_slice %72 {offsets = [0, 64], sizes = [8, 32], strides = [1, 1]} : vector<8x96xf32> to vector<8x32xf32>
    %76 = vector.extract_strided_slice %66 {offsets = [0, 96], sizes = [8, 32], strides = [1, 1]} : vector<8x128xf32> to vector<8x32xf32>
    %77 = math.tanh %76 : vector<8x32xf32>
    %78 = arith.mulf %74, %36 : vector<8x32xf32>
    %79 = arith.mulf %73, %77 : vector<8x32xf32>
    %80 = arith.addf %78, %79 : vector<8x32xf32>
    %81 = math.tanh %80 : vector<8x32xf32>
    %82 = arith.mulf %75, %81 : vector<8x32xf32>
    %83 = arith.truncf %82 : vector<8x32xf32> to vector<8x32xbf16>
    %cst_47 = arith.constant dense<0.000000e+00> : vector<8x128xf32>
    %84 = tpu.matmul %83, %2, %cst_47 {dimension_numbers = #tpu.dot_dimension_numbers<[1], [0], [0], [1], [0, 0, 1, 1], [], []>} : vector<8x32xbf16>, vector<32x128xbf16>, vector<8x128xf32> -> vector<8x128xf32>
    %85 = arith.truncf %32 : vector<8x32xf32> to vector<8x32xbf16>
    %cst_48 = arith.constant dense<0.000000e+00> : vector<8x128xf32>
    %86 = tpu.matmul %85, %7, %cst_48 {dimension_numbers = #tpu.dot_dimension_numbers<[1], [0], [0], [1], [0, 0, 1, 1], [], []>} : vector<8x32xbf16>, vector<32x128xbf16>, vector<8x128xf32> -> vector<8x128xf32>
    %87 = arith.addf %84, %86 : vector<8x128xf32>
    %88 = arith.addf %87, %15 : vector<8x128xf32>
    %89 = vector.extract_strided_slice %88 {offsets = [0, 0], sizes = [8, 96], strides = [1, 1]} : vector<8x128xf32> to vector<8x96xf32>
    %90 = arith.negf %89 : vector<8x96xf32>
    %91 = math.exp %90 : vector<8x96xf32>
    %cst_49 = arith.constant 1.000000e+00 : f32
    %92 = vector.broadcast %cst_49 : f32 to vector<8x96xf32>
    %93 = arith.addf %92, %91 : vector<8x96xf32>
    %94 = arith.divf %92, %93 : vector<8x96xf32>
    %95 = vector.extract_strided_slice %94 {offsets = [0, 0], sizes = [8, 32], strides = [1, 1]} : vector<8x96xf32> to vector<8x32xf32>
    %96 = vector.extract_strided_slice %94 {offsets = [0, 32], sizes = [8, 32], strides = [1, 1]} : vector<8x96xf32> to vector<8x32xf32>
    %97 = vector.extract_strided_slice %94 {offsets = [0, 64], sizes = [8, 32], strides = [1, 1]} : vector<8x96xf32> to vector<8x32xf32>
    %98 = vector.extract_strided_slice %88 {offsets = [0, 96], sizes = [8, 32], strides = [1, 1]} : vector<8x128xf32> to vector<8x32xf32>
    %99 = math.tanh %98 : vector<8x32xf32>
    %100 = arith.mulf %96, %37 : vector<8x32xf32>
    %101 = arith.mulf %95, %99 : vector<8x32xf32>
    %102 = arith.addf %100, %101 : vector<8x32xf32>
    %103 = math.tanh %102 : vector<8x32xf32>
    %104 = arith.mulf %97, %103 : vector<8x32xf32>
    %105 = arith.truncf %104 : vector<8x32xf32> to vector<8x32xbf16>
    %cst_50 = arith.constant dense<0.000000e+00> : vector<8x128xf32>
    %106 = tpu.matmul %105, %3, %cst_50 {dimension_numbers = #tpu.dot_dimension_numbers<[1], [0], [0], [1], [0, 0, 1, 1], [], []>} : vector<8x32xbf16>, vector<32x128xbf16>, vector<8x128xf32> -> vector<8x128xf32>
    %107 = arith.truncf %33 : vector<8x32xf32> to vector<8x32xbf16>
    %cst_51 = arith.constant dense<0.000000e+00> : vector<8x128xf32>
    %108 = tpu.matmul %107, %8, %cst_51 {dimension_numbers = #tpu.dot_dimension_numbers<[1], [0], [0], [1], [0, 0, 1, 1], [], []>} : vector<8x32xbf16>, vector<32x128xbf16>, vector<8x128xf32> -> vector<8x128xf32>
    %109 = arith.addf %106, %108 : vector<8x128xf32>
    %110 = arith.addf %109, %18 : vector<8x128xf32>
    %111 = vector.extract_strided_slice %110 {offsets = [0, 0], sizes = [8, 96], strides = [1, 1]} : vector<8x128xf32> to vector<8x96xf32>
    %112 = arith.negf %111 : vector<8x96xf32>
    %113 = math.exp %112 : vector<8x96xf32>
    %cst_52 = arith.constant 1.000000e+00 : f32
    %114 = vector.broadcast %cst_52 : f32 to vector<8x96xf32>
    %115 = arith.addf %114, %113 : vector<8x96xf32>
    %116 = arith.divf %114, %115 : vector<8x96xf32>
    %117 = vector.extract_strided_slice %116 {offsets = [0, 0], sizes = [8, 32], strides = [1, 1]} : vector<8x96xf32> to vector<8x32xf32>
    %118 = vector.extract_strided_slice %116 {offsets = [0, 32], sizes = [8, 32], strides = [1, 1]} : vector<8x96xf32> to vector<8x32xf32>
    %119 = vector.extract_strided_slice %116 {offsets = [0, 64], sizes = [8, 32], strides = [1, 1]} : vector<8x96xf32> to vector<8x32xf32>
    %120 = vector.extract_strided_slice %110 {offsets = [0, 96], sizes = [8, 32], strides = [1, 1]} : vector<8x128xf32> to vector<8x32xf32>
    %121 = math.tanh %120 : vector<8x32xf32>
    %122 = arith.mulf %118, %38 : vector<8x32xf32>
    %123 = arith.mulf %117, %121 : vector<8x32xf32>
    %124 = arith.addf %122, %123 : vector<8x32xf32>
    %125 = math.tanh %124 : vector<8x32xf32>
    %126 = arith.mulf %119, %125 : vector<8x32xf32>
    %127 = arith.truncf %126 : vector<8x32xf32> to vector<8x32xbf16>
    %cst_53 = arith.constant dense<0.000000e+00> : vector<8x128xf32>
    %128 = tpu.matmul %127, %4, %cst_53 {dimension_numbers = #tpu.dot_dimension_numbers<[1], [0], [0], [1], [0, 0, 1, 1], [], []>} : vector<8x32xbf16>, vector<32x128xbf16>, vector<8x128xf32> -> vector<8x128xf32>
    %129 = arith.truncf %34 : vector<8x32xf32> to vector<8x32xbf16>
    %cst_54 = arith.constant dense<0.000000e+00> : vector<8x128xf32>
    %130 = tpu.matmul %129, %9, %cst_54 {dimension_numbers = #tpu.dot_dimension_numbers<[1], [0], [0], [1], [0, 0, 1, 1], [], []>} : vector<8x32xbf16>, vector<32x128xbf16>, vector<8x128xf32> -> vector<8x128xf32>
    %131 = arith.addf %128, %130 : vector<8x128xf32>
    %132 = arith.addf %131, %21 : vector<8x128xf32>
    %133 = vector.extract_strided_slice %132 {offsets = [0, 0], sizes = [8, 96], strides = [1, 1]} : vector<8x128xf32> to vector<8x96xf32>
    %134 = arith.negf %133 : vector<8x96xf32>
    %135 = math.exp %134 : vector<8x96xf32>
    %cst_55 = arith.constant 1.000000e+00 : f32
    %136 = vector.broadcast %cst_55 : f32 to vector<8x96xf32>
    %137 = arith.addf %136, %135 : vector<8x96xf32>
    %138 = arith.divf %136, %137 : vector<8x96xf32>
    %139 = vector.extract_strided_slice %138 {offsets = [0, 0], sizes = [8, 32], strides = [1, 1]} : vector<8x96xf32> to vector<8x32xf32>
    %140 = vector.extract_strided_slice %138 {offsets = [0, 32], sizes = [8, 32], strides = [1, 1]} : vector<8x96xf32> to vector<8x32xf32>
    %141 = vector.extract_strided_slice %138 {offsets = [0, 64], sizes = [8, 32], strides = [1, 1]} : vector<8x96xf32> to vector<8x32xf32>
    %142 = vector.extract_strided_slice %132 {offsets = [0, 96], sizes = [8, 32], strides = [1, 1]} : vector<8x128xf32> to vector<8x32xf32>
    %143 = math.tanh %142 : vector<8x32xf32>
    %144 = arith.mulf %140, %39 : vector<8x32xf32>
    %145 = arith.mulf %139, %143 : vector<8x32xf32>
    %146 = arith.addf %144, %145 : vector<8x32xf32>
    %147 = math.tanh %146 : vector<8x32xf32>
    %148 = arith.mulf %141, %147 : vector<8x32xf32>
    %149 = vector.extract_strided_slice %29 {offsets = [0, 1, 0], sizes = [8, 1, 128], strides = [1, 1, 1]} : vector<8x8x128xf32> to vector<8x1x128xf32>
    %150 = vector.shape_cast %149 : vector<8x1x128xf32> to vector<8x128xf32>
    %151 = arith.truncf %60 : vector<8x32xf32> to vector<8x32xbf16>
    %cst_56 = arith.constant dense<0.000000e+00> : vector<8x128xf32>
    %152 = tpu.matmul %151, %5, %cst_56 {dimension_numbers = #tpu.dot_dimension_numbers<[1], [0], [0], [1], [0, 0, 1, 1], [], []>} : vector<8x32xbf16>, vector<32x128xbf16>, vector<8x128xf32> -> vector<8x128xf32>
    %153 = arith.addf %150, %152 : vector<8x128xf32>
    %154 = vector.extract_strided_slice %153 {offsets = [0, 0], sizes = [8, 96], strides = [1, 1]} : vector<8x128xf32> to vector<8x96xf32>
    %155 = arith.negf %154 : vector<8x96xf32>
    %156 = math.exp %155 : vector<8x96xf32>
    %cst_57 = arith.constant 1.000000e+00 : f32
    %157 = vector.broadcast %cst_57 : f32 to vector<8x96xf32>
    %158 = arith.addf %157, %156 : vector<8x96xf32>
    %159 = arith.divf %157, %158 : vector<8x96xf32>
    %160 = vector.extract_strided_slice %159 {offsets = [0, 0], sizes = [8, 32], strides = [1, 1]} : vector<8x96xf32> to vector<8x32xf32>
    %161 = vector.extract_strided_slice %159 {offsets = [0, 32], sizes = [8, 32], strides = [1, 1]} : vector<8x96xf32> to vector<8x32xf32>
    %162 = vector.extract_strided_slice %159 {offsets = [0, 64], sizes = [8, 32], strides = [1, 1]} : vector<8x96xf32> to vector<8x32xf32>
    %163 = vector.extract_strided_slice %153 {offsets = [0, 96], sizes = [8, 32], strides = [1, 1]} : vector<8x128xf32> to vector<8x32xf32>
    %164 = math.tanh %163 : vector<8x32xf32>
    %165 = arith.mulf %161, %58 : vector<8x32xf32>
    %166 = arith.mulf %160, %164 : vector<8x32xf32>
    %167 = arith.addf %165, %166 : vector<8x32xf32>
    %168 = math.tanh %167 : vector<8x32xf32>
    %169 = arith.mulf %162, %168 : vector<8x32xf32>
    %170 = arith.truncf %169 : vector<8x32xf32> to vector<8x32xbf16>
    %cst_58 = arith.constant dense<0.000000e+00> : vector<8x128xf32>
    %171 = tpu.matmul %170, %1, %cst_58 {dimension_numbers = #tpu.dot_dimension_numbers<[1], [0], [0], [1], [0, 0, 1, 1], [], []>} : vector<8x32xbf16>, vector<32x128xbf16>, vector<8x128xf32> -> vector<8x128xf32>
    %172 = arith.truncf %82 : vector<8x32xf32> to vector<8x32xbf16>
    %cst_59 = arith.constant dense<0.000000e+00> : vector<8x128xf32>
    %173 = tpu.matmul %172, %6, %cst_59 {dimension_numbers = #tpu.dot_dimension_numbers<[1], [0], [0], [1], [0, 0, 1, 1], [], []>} : vector<8x32xbf16>, vector<32x128xbf16>, vector<8x128xf32> -> vector<8x128xf32>
    %174 = arith.addf %171, %173 : vector<8x128xf32>
    %175 = arith.addf %174, %12 : vector<8x128xf32>
    %176 = vector.extract_strided_slice %175 {offsets = [0, 0], sizes = [8, 96], strides = [1, 1]} : vector<8x128xf32> to vector<8x96xf32>
    %177 = arith.negf %176 : vector<8x96xf32>
    %178 = math.exp %177 : vector<8x96xf32>
    %cst_60 = arith.constant 1.000000e+00 : f32
    %179 = vector.broadcast %cst_60 : f32 to vector<8x96xf32>
    %180 = arith.addf %179, %178 : vector<8x96xf32>
    %181 = arith.divf %179, %180 : vector<8x96xf32>
    %182 = vector.extract_strided_slice %181 {offsets = [0, 0], sizes = [8, 32], strides = [1, 1]} : vector<8x96xf32> to vector<8x32xf32>
    %183 = vector.extract_strided_slice %181 {offsets = [0, 32], sizes = [8, 32], strides = [1, 1]} : vector<8x96xf32> to vector<8x32xf32>
    %184 = vector.extract_strided_slice %181 {offsets = [0, 64], sizes = [8, 32], strides = [1, 1]} : vector<8x96xf32> to vector<8x32xf32>
    %185 = vector.extract_strided_slice %175 {offsets = [0, 96], sizes = [8, 32], strides = [1, 1]} : vector<8x128xf32> to vector<8x32xf32>
    %186 = math.tanh %185 : vector<8x32xf32>
    %187 = arith.mulf %183, %80 : vector<8x32xf32>
    %188 = arith.mulf %182, %186 : vector<8x32xf32>
    %189 = arith.addf %187, %188 : vector<8x32xf32>
    %190 = math.tanh %189 : vector<8x32xf32>
    %191 = arith.mulf %184, %190 : vector<8x32xf32>
    %192 = arith.truncf %191 : vector<8x32xf32> to vector<8x32xbf16>
    %cst_61 = arith.constant dense<0.000000e+00> : vector<8x128xf32>
    %193 = tpu.matmul %192, %2, %cst_61 {dimension_numbers = #tpu.dot_dimension_numbers<[1], [0], [0], [1], [0, 0, 1, 1], [], []>} : vector<8x32xbf16>, vector<32x128xbf16>, vector<8x128xf32> -> vector<8x128xf32>
    %194 = arith.truncf %104 : vector<8x32xf32> to vector<8x32xbf16>
    %cst_62 = arith.constant dense<0.000000e+00> : vector<8x128xf32>
    %195 = tpu.matmul %194, %7, %cst_62 {dimension_numbers = #tpu.dot_dimension_numbers<[1], [0], [0], [1], [0, 0, 1, 1], [], []>} : vector<8x32xbf16>, vector<32x128xbf16>, vector<8x128xf32> -> vector<8x128xf32>
    %196 = arith.addf %193, %195 : vector<8x128xf32>
    %197 = arith.addf %196, %15 : vector<8x128xf32>
    %198 = vector.extract_strided_slice %197 {offsets = [0, 0], sizes = [8, 96], strides = [1, 1]} : vector<8x128xf32> to vector<8x96xf32>
    %199 = arith.negf %198 : vector<8x96xf32>
    %200 = math.exp %199 : vector<8x96xf32>
    %cst_63 = arith.constant 1.000000e+00 : f32
    %201 = vector.broadcast %cst_63 : f32 to vector<8x96xf32>
    %202 = arith.addf %201, %200 : vector<8x96xf32>
    %203 = arith.divf %201, %202 : vector<8x96xf32>
    %204 = vector.extract_strided_slice %203 {offsets = [0, 0], sizes = [8, 32], strides = [1, 1]} : vector<8x96xf32> to vector<8x32xf32>
    %205 = vector.extract_strided_slice %203 {offsets = [0, 32], sizes = [8, 32], strides = [1, 1]} : vector<8x96xf32> to vector<8x32xf32>
    %206 = vector.extract_strided_slice %203 {offsets = [0, 64], sizes = [8, 32], strides = [1, 1]} : vector<8x96xf32> to vector<8x32xf32>
    %207 = vector.extract_strided_slice %197 {offsets = [0, 96], sizes = [8, 32], strides = [1, 1]} : vector<8x128xf32> to vector<8x32xf32>
    %208 = math.tanh %207 : vector<8x32xf32>
    %209 = arith.mulf %205, %102 : vector<8x32xf32>
    %210 = arith.mulf %204, %208 : vector<8x32xf32>
    %211 = arith.addf %209, %210 : vector<8x32xf32>
    %212 = math.tanh %211 : vector<8x32xf32>
    %213 = arith.mulf %206, %212 : vector<8x32xf32>
    %214 = arith.truncf %213 : vector<8x32xf32> to vector<8x32xbf16>
    %cst_64 = arith.constant dense<0.000000e+00> : vector<8x128xf32>
    %215 = tpu.matmul %214, %3, %cst_64 {dimension_numbers = #tpu.dot_dimension_numbers<[1], [0], [0], [1], [0, 0, 1, 1], [], []>} : vector<8x32xbf16>, vector<32x128xbf16>, vector<8x128xf32> -> vector<8x128xf32>
    %216 = arith.truncf %126 : vector<8x32xf32> to vector<8x32xbf16>
    %cst_65 = arith.constant dense<0.000000e+00> : vector<8x128xf32>
    %217 = tpu.matmul %216, %8, %cst_65 {dimension_numbers = #tpu.dot_dimension_numbers<[1], [0], [0], [1], [0, 0, 1, 1], [], []>} : vector<8x32xbf16>, vector<32x128xbf16>, vector<8x128xf32> -> vector<8x128xf32>
    %218 = arith.addf %215, %217 : vector<8x128xf32>
    %219 = arith.addf %218, %18 : vector<8x128xf32>
    %220 = vector.extract_strided_slice %219 {offsets = [0, 0], sizes = [8, 96], strides = [1, 1]} : vector<8x128xf32> to vector<8x96xf32>
    %221 = arith.negf %220 : vector<8x96xf32>
    %222 = math.exp %221 : vector<8x96xf32>
    %cst_66 = arith.constant 1.000000e+00 : f32
    %223 = vector.broadcast %cst_66 : f32 to vector<8x96xf32>
    %224 = arith.addf %223, %222 : vector<8x96xf32>
    %225 = arith.divf %223, %224 : vector<8x96xf32>
    %226 = vector.extract_strided_slice %225 {offsets = [0, 0], sizes = [8, 32], strides = [1, 1]} : vector<8x96xf32> to vector<8x32xf32>
    %227 = vector.extract_strided_slice %225 {offsets = [0, 32], sizes = [8, 32], strides = [1, 1]} : vector<8x96xf32> to vector<8x32xf32>
    %228 = vector.extract_strided_slice %225 {offsets = [0, 64], sizes = [8, 32], strides = [1, 1]} : vector<8x96xf32> to vector<8x32xf32>
    %229 = vector.extract_strided_slice %219 {offsets = [0, 96], sizes = [8, 32], strides = [1, 1]} : vector<8x128xf32> to vector<8x32xf32>
    %230 = math.tanh %229 : vector<8x32xf32>
    %231 = arith.mulf %227, %124 : vector<8x32xf32>
    %232 = arith.mulf %226, %230 : vector<8x32xf32>
    %233 = arith.addf %231, %232 : vector<8x32xf32>
    %234 = math.tanh %233 : vector<8x32xf32>
    %235 = arith.mulf %228, %234 : vector<8x32xf32>
    %236 = arith.truncf %235 : vector<8x32xf32> to vector<8x32xbf16>
    %cst_67 = arith.constant dense<0.000000e+00> : vector<8x128xf32>
    %237 = tpu.matmul %236, %4, %cst_67 {dimension_numbers = #tpu.dot_dimension_numbers<[1], [0], [0], [1], [0, 0, 1, 1], [], []>} : vector<8x32xbf16>, vector<32x128xbf16>, vector<8x128xf32> -> vector<8x128xf32>
    %238 = arith.truncf %148 : vector<8x32xf32> to vector<8x32xbf16>
    %cst_68 = arith.constant dense<0.000000e+00> : vector<8x128xf32>
    %239 = tpu.matmul %238, %9, %cst_68 {dimension_numbers = #tpu.dot_dimension_numbers<[1], [0], [0], [1], [0, 0, 1, 1], [], []>} : vector<8x32xbf16>, vector<32x128xbf16>, vector<8x128xf32> -> vector<8x128xf32>
    %240 = arith.addf %237, %239 : vector<8x128xf32>
    %241 = arith.addf %240, %21 : vector<8x128xf32>
    %242 = vector.extract_strided_slice %241 {offsets = [0, 0], sizes = [8, 96], strides = [1, 1]} : vector<8x128xf32> to vector<8x96xf32>
    %243 = arith.negf %242 : vector<8x96xf32>
    %244 = math.exp %243 : vector<8x96xf32>
    %cst_69 = arith.constant 1.000000e+00 : f32
    %245 = vector.broadcast %cst_69 : f32 to vector<8x96xf32>
    %246 = arith.addf %245, %244 : vector<8x96xf32>
    %247 = arith.divf %245, %246 : vector<8x96xf32>
    %248 = vector.extract_strided_slice %247 {offsets = [0, 0], sizes = [8, 32], strides = [1, 1]} : vector<8x96xf32> to vector<8x32xf32>
    %249 = vector.extract_strided_slice %247 {offsets = [0, 32], sizes = [8, 32], strides = [1, 1]} : vector<8x96xf32> to vector<8x32xf32>
    %250 = vector.extract_strided_slice %247 {offsets = [0, 64], sizes = [8, 32], strides = [1, 1]} : vector<8x96xf32> to vector<8x32xf32>
    %251 = vector.extract_strided_slice %241 {offsets = [0, 96], sizes = [8, 32], strides = [1, 1]} : vector<8x128xf32> to vector<8x32xf32>
    %252 = math.tanh %251 : vector<8x32xf32>
    %253 = arith.mulf %249, %146 : vector<8x32xf32>
    %254 = arith.mulf %248, %252 : vector<8x32xf32>
    %255 = arith.addf %253, %254 : vector<8x32xf32>
    %256 = math.tanh %255 : vector<8x32xf32>
    %257 = arith.mulf %250, %256 : vector<8x32xf32>
    %258 = vector.extract_strided_slice %29 {offsets = [0, 2, 0], sizes = [8, 1, 128], strides = [1, 1, 1]} : vector<8x8x128xf32> to vector<8x1x128xf32>
    %259 = vector.shape_cast %258 : vector<8x1x128xf32> to vector<8x128xf32>
    %260 = arith.truncf %169 : vector<8x32xf32> to vector<8x32xbf16>
    %cst_70 = arith.constant dense<0.000000e+00> : vector<8x128xf32>
    %261 = tpu.matmul %260, %5, %cst_70 {dimension_numbers = #tpu.dot_dimension_numbers<[1], [0], [0], [1], [0, 0, 1, 1], [], []>} : vector<8x32xbf16>, vector<32x128xbf16>, vector<8x128xf32> -> vector<8x128xf32>
    %262 = arith.addf %259, %261 : vector<8x128xf32>
    %263 = vector.extract_strided_slice %262 {offsets = [0, 0], sizes = [8, 96], strides = [1, 1]} : vector<8x128xf32> to vector<8x96xf32>
    %264 = arith.negf %263 : vector<8x96xf32>
    %265 = math.exp %264 : vector<8x96xf32>
    %cst_71 = arith.constant 1.000000e+00 : f32
    %266 = vector.broadcast %cst_71 : f32 to vector<8x96xf32>
    %267 = arith.addf %266, %265 : vector<8x96xf32>
    %268 = arith.divf %266, %267 : vector<8x96xf32>
    %269 = vector.extract_strided_slice %268 {offsets = [0, 0], sizes = [8, 32], strides = [1, 1]} : vector<8x96xf32> to vector<8x32xf32>
    %270 = vector.extract_strided_slice %268 {offsets = [0, 32], sizes = [8, 32], strides = [1, 1]} : vector<8x96xf32> to vector<8x32xf32>
    %271 = vector.extract_strided_slice %268 {offsets = [0, 64], sizes = [8, 32], strides = [1, 1]} : vector<8x96xf32> to vector<8x32xf32>
    %272 = vector.extract_strided_slice %262 {offsets = [0, 96], sizes = [8, 32], strides = [1, 1]} : vector<8x128xf32> to vector<8x32xf32>
    %273 = math.tanh %272 : vector<8x32xf32>
    %274 = arith.mulf %270, %167 : vector<8x32xf32>
    %275 = arith.mulf %269, %273 : vector<8x32xf32>
    %276 = arith.addf %274, %275 : vector<8x32xf32>
    %277 = math.tanh %276 : vector<8x32xf32>
    %278 = arith.mulf %271, %277 : vector<8x32xf32>
    %279 = arith.truncf %278 : vector<8x32xf32> to vector<8x32xbf16>
    %cst_72 = arith.constant dense<0.000000e+00> : vector<8x128xf32>
    %280 = tpu.matmul %279, %1, %cst_72 {dimension_numbers = #tpu.dot_dimension_numbers<[1], [0], [0], [1], [0, 0, 1, 1], [], []>} : vector<8x32xbf16>, vector<32x128xbf16>, vector<8x128xf32> -> vector<8x128xf32>
    %281 = arith.truncf %191 : vector<8x32xf32> to vector<8x32xbf16>
    %cst_73 = arith.constant dense<0.000000e+00> : vector<8x128xf32>
    %282 = tpu.matmul %281, %6, %cst_73 {dimension_numbers = #tpu.dot_dimension_numbers<[1], [0], [0], [1], [0, 0, 1, 1], [], []>} : vector<8x32xbf16>, vector<32x128xbf16>, vector<8x128xf32> -> vector<8x128xf32>
    %283 = arith.addf %280, %282 : vector<8x128xf32>
    %284 = arith.addf %283, %12 : vector<8x128xf32>
    %285 = vector.extract_strided_slice %284 {offsets = [0, 0], sizes = [8, 96], strides = [1, 1]} : vector<8x128xf32> to vector<8x96xf32>
    %286 = arith.negf %285 : vector<8x96xf32>
    %287 = math.exp %286 : vector<8x96xf32>
    %cst_74 = arith.constant 1.000000e+00 : f32
    %288 = vector.broadcast %cst_74 : f32 to vector<8x96xf32>
    %289 = arith.addf %288, %287 : vector<8x96xf32>
    %290 = arith.divf %288, %289 : vector<8x96xf32>
    %291 = vector.extract_strided_slice %290 {offsets = [0, 0], sizes = [8, 32], strides = [1, 1]} : vector<8x96xf32> to vector<8x32xf32>
    %292 = vector.extract_strided_slice %290 {offsets = [0, 32], sizes = [8, 32], strides = [1, 1]} : vector<8x96xf32> to vector<8x32xf32>
    %293 = vector.extract_strided_slice %290 {offsets = [0, 64], sizes = [8, 32], strides = [1, 1]} : vector<8x96xf32> to vector<8x32xf32>
    %294 = vector.extract_strided_slice %284 {offsets = [0, 96], sizes = [8, 32], strides = [1, 1]} : vector<8x128xf32> to vector<8x32xf32>
    %295 = math.tanh %294 : vector<8x32xf32>
    %296 = arith.mulf %292, %189 : vector<8x32xf32>
    %297 = arith.mulf %291, %295 : vector<8x32xf32>
    %298 = arith.addf %296, %297 : vector<8x32xf32>
    %299 = math.tanh %298 : vector<8x32xf32>
    %300 = arith.mulf %293, %299 : vector<8x32xf32>
    %301 = arith.truncf %300 : vector<8x32xf32> to vector<8x32xbf16>
    %cst_75 = arith.constant dense<0.000000e+00> : vector<8x128xf32>
    %302 = tpu.matmul %301, %2, %cst_75 {dimension_numbers = #tpu.dot_dimension_numbers<[1], [0], [0], [1], [0, 0, 1, 1], [], []>} : vector<8x32xbf16>, vector<32x128xbf16>, vector<8x128xf32> -> vector<8x128xf32>
    %303 = arith.truncf %213 : vector<8x32xf32> to vector<8x32xbf16>
    %cst_76 = arith.constant dense<0.000000e+00> : vector<8x128xf32>
    %304 = tpu.matmul %303, %7, %cst_76 {dimension_numbers = #tpu.dot_dimension_numbers<[1], [0], [0], [1], [0, 0, 1, 1], [], []>} : vector<8x32xbf16>, vector<32x128xbf16>, vector<8x128xf32> -> vector<8x128xf32>
    %305 = arith.addf %302, %304 : vector<8x128xf32>
    %306 = arith.addf %305, %15 : vector<8x128xf32>
    %307 = vector.extract_strided_slice %306 {offsets = [0, 0], sizes = [8, 96], strides = [1, 1]} : vector<8x128xf32> to vector<8x96xf32>
    %308 = arith.negf %307 : vector<8x96xf32>
    %309 = math.exp %308 : vector<8x96xf32>
    %cst_77 = arith.constant 1.000000e+00 : f32
    %310 = vector.broadcast %cst_77 : f32 to vector<8x96xf32>
    %311 = arith.addf %310, %309 : vector<8x96xf32>
    %312 = arith.divf %310, %311 : vector<8x96xf32>
    %313 = vector.extract_strided_slice %312 {offsets = [0, 0], sizes = [8, 32], strides = [1, 1]} : vector<8x96xf32> to vector<8x32xf32>
    %314 = vector.extract_strided_slice %312 {offsets = [0, 32], sizes = [8, 32], strides = [1, 1]} : vector<8x96xf32> to vector<8x32xf32>
    %315 = vector.extract_strided_slice %312 {offsets = [0, 64], sizes = [8, 32], strides = [1, 1]} : vector<8x96xf32> to vector<8x32xf32>
    %316 = vector.extract_strided_slice %306 {offsets = [0, 96], sizes = [8, 32], strides = [1, 1]} : vector<8x128xf32> to vector<8x32xf32>
    %317 = math.tanh %316 : vector<8x32xf32>
    %318 = arith.mulf %314, %211 : vector<8x32xf32>
    %319 = arith.mulf %313, %317 : vector<8x32xf32>
    %320 = arith.addf %318, %319 : vector<8x32xf32>
    %321 = math.tanh %320 : vector<8x32xf32>
    %322 = arith.mulf %315, %321 : vector<8x32xf32>
    %323 = arith.truncf %322 : vector<8x32xf32> to vector<8x32xbf16>
    %cst_78 = arith.constant dense<0.000000e+00> : vector<8x128xf32>
    %324 = tpu.matmul %323, %3, %cst_78 {dimension_numbers = #tpu.dot_dimension_numbers<[1], [0], [0], [1], [0, 0, 1, 1], [], []>} : vector<8x32xbf16>, vector<32x128xbf16>, vector<8x128xf32> -> vector<8x128xf32>
    %325 = arith.truncf %235 : vector<8x32xf32> to vector<8x32xbf16>
    %cst_79 = arith.constant dense<0.000000e+00> : vector<8x128xf32>
    %326 = tpu.matmul %325, %8, %cst_79 {dimension_numbers = #tpu.dot_dimension_numbers<[1], [0], [0], [1], [0, 0, 1, 1], [], []>} : vector<8x32xbf16>, vector<32x128xbf16>, vector<8x128xf32> -> vector<8x128xf32>
    %327 = arith.addf %324, %326 : vector<8x128xf32>
    %328 = arith.addf %327, %18 : vector<8x128xf32>
    %329 = vector.extract_strided_slice %328 {offsets = [0, 0], sizes = [8, 96], strides = [1, 1]} : vector<8x128xf32> to vector<8x96xf32>
    %330 = arith.negf %329 : vector<8x96xf32>
    %331 = math.exp %330 : vector<8x96xf32>
    %cst_80 = arith.constant 1.000000e+00 : f32
    %332 = vector.broadcast %cst_80 : f32 to vector<8x96xf32>
    %333 = arith.addf %332, %331 : vector<8x96xf32>
    %334 = arith.divf %332, %333 : vector<8x96xf32>
    %335 = vector.extract_strided_slice %334 {offsets = [0, 0], sizes = [8, 32], strides = [1, 1]} : vector<8x96xf32> to vector<8x32xf32>
    %336 = vector.extract_strided_slice %334 {offsets = [0, 32], sizes = [8, 32], strides = [1, 1]} : vector<8x96xf32> to vector<8x32xf32>
    %337 = vector.extract_strided_slice %334 {offsets = [0, 64], sizes = [8, 32], strides = [1, 1]} : vector<8x96xf32> to vector<8x32xf32>
    %338 = vector.extract_strided_slice %328 {offsets = [0, 96], sizes = [8, 32], strides = [1, 1]} : vector<8x128xf32> to vector<8x32xf32>
    %339 = math.tanh %338 : vector<8x32xf32>
    %340 = arith.mulf %336, %233 : vector<8x32xf32>
    %341 = arith.mulf %335, %339 : vector<8x32xf32>
    %342 = arith.addf %340, %341 : vector<8x32xf32>
    %343 = math.tanh %342 : vector<8x32xf32>
    %344 = arith.mulf %337, %343 : vector<8x32xf32>
    %345 = arith.truncf %344 : vector<8x32xf32> to vector<8x32xbf16>
    %cst_81 = arith.constant dense<0.000000e+00> : vector<8x128xf32>
    %346 = tpu.matmul %345, %4, %cst_81 {dimension_numbers = #tpu.dot_dimension_numbers<[1], [0], [0], [1], [0, 0, 1, 1], [], []>} : vector<8x32xbf16>, vector<32x128xbf16>, vector<8x128xf32> -> vector<8x128xf32>
    %347 = arith.truncf %257 : vector<8x32xf32> to vector<8x32xbf16>
    %cst_82 = arith.constant dense<0.000000e+00> : vector<8x128xf32>
    %348 = tpu.matmul %347, %9, %cst_82 {dimension_numbers = #tpu.dot_dimension_numbers<[1], [0], [0], [1], [0, 0, 1, 1], [], []>} : vector<8x32xbf16>, vector<32x128xbf16>, vector<8x128xf32> -> vector<8x128xf32>
    %349 = arith.addf %346, %348 : vector<8x128xf32>
    %350 = arith.addf %349, %21 : vector<8x128xf32>
    %351 = vector.extract_strided_slice %350 {offsets = [0, 0], sizes = [8, 96], strides = [1, 1]} : vector<8x128xf32> to vector<8x96xf32>
    %352 = arith.negf %351 : vector<8x96xf32>
    %353 = math.exp %352 : vector<8x96xf32>
    %cst_83 = arith.constant 1.000000e+00 : f32
    %354 = vector.broadcast %cst_83 : f32 to vector<8x96xf32>
    %355 = arith.addf %354, %353 : vector<8x96xf32>
    %356 = arith.divf %354, %355 : vector<8x96xf32>
    %357 = vector.extract_strided_slice %356 {offsets = [0, 0], sizes = [8, 32], strides = [1, 1]} : vector<8x96xf32> to vector<8x32xf32>
    %358 = vector.extract_strided_slice %356 {offsets = [0, 32], sizes = [8, 32], strides = [1, 1]} : vector<8x96xf32> to vector<8x32xf32>
    %359 = vector.extract_strided_slice %356 {offsets = [0, 64], sizes = [8, 32], strides = [1, 1]} : vector<8x96xf32> to vector<8x32xf32>
    %360 = vector.extract_strided_slice %350 {offsets = [0, 96], sizes = [8, 32], strides = [1, 1]} : vector<8x128xf32> to vector<8x32xf32>
    %361 = math.tanh %360 : vector<8x32xf32>
    %362 = arith.mulf %358, %255 : vector<8x32xf32>
    %363 = arith.mulf %357, %361 : vector<8x32xf32>
    %364 = arith.addf %362, %363 : vector<8x32xf32>
    %365 = math.tanh %364 : vector<8x32xf32>
    %366 = arith.mulf %359, %365 : vector<8x32xf32>
    %367 = vector.extract_strided_slice %29 {offsets = [0, 3, 0], sizes = [8, 1, 128], strides = [1, 1, 1]} : vector<8x8x128xf32> to vector<8x1x128xf32>
    %368 = vector.shape_cast %367 : vector<8x1x128xf32> to vector<8x128xf32>
    %369 = arith.truncf %278 : vector<8x32xf32> to vector<8x32xbf16>
    %cst_84 = arith.constant dense<0.000000e+00> : vector<8x128xf32>
    %370 = tpu.matmul %369, %5, %cst_84 {dimension_numbers = #tpu.dot_dimension_numbers<[1], [0], [0], [1], [0, 0, 1, 1], [], []>} : vector<8x32xbf16>, vector<32x128xbf16>, vector<8x128xf32> -> vector<8x128xf32>
    %371 = arith.addf %368, %370 : vector<8x128xf32>
    %372 = vector.extract_strided_slice %371 {offsets = [0, 0], sizes = [8, 96], strides = [1, 1]} : vector<8x128xf32> to vector<8x96xf32>
    %373 = arith.negf %372 : vector<8x96xf32>
    %374 = math.exp %373 : vector<8x96xf32>
    %cst_85 = arith.constant 1.000000e+00 : f32
    %375 = vector.broadcast %cst_85 : f32 to vector<8x96xf32>
    %376 = arith.addf %375, %374 : vector<8x96xf32>
    %377 = arith.divf %375, %376 : vector<8x96xf32>
    %378 = vector.extract_strided_slice %377 {offsets = [0, 0], sizes = [8, 32], strides = [1, 1]} : vector<8x96xf32> to vector<8x32xf32>
    %379 = vector.extract_strided_slice %377 {offsets = [0, 32], sizes = [8, 32], strides = [1, 1]} : vector<8x96xf32> to vector<8x32xf32>
    %380 = vector.extract_strided_slice %377 {offsets = [0, 64], sizes = [8, 32], strides = [1, 1]} : vector<8x96xf32> to vector<8x32xf32>
    %381 = vector.extract_strided_slice %371 {offsets = [0, 96], sizes = [8, 32], strides = [1, 1]} : vector<8x128xf32> to vector<8x32xf32>
    %382 = math.tanh %381 : vector<8x32xf32>
    %383 = arith.mulf %379, %276 : vector<8x32xf32>
    %384 = arith.mulf %378, %382 : vector<8x32xf32>
    %385 = arith.addf %383, %384 : vector<8x32xf32>
    %386 = math.tanh %385 : vector<8x32xf32>
    %387 = arith.mulf %380, %386 : vector<8x32xf32>
    %388 = arith.truncf %387 : vector<8x32xf32> to vector<8x32xbf16>
    %cst_86 = arith.constant dense<0.000000e+00> : vector<8x128xf32>
    %389 = tpu.matmul %388, %1, %cst_86 {dimension_numbers = #tpu.dot_dimension_numbers<[1], [0], [0], [1], [0, 0, 1, 1], [], []>} : vector<8x32xbf16>, vector<32x128xbf16>, vector<8x128xf32> -> vector<8x128xf32>
    %390 = arith.truncf %300 : vector<8x32xf32> to vector<8x32xbf16>
    %cst_87 = arith.constant dense<0.000000e+00> : vector<8x128xf32>
    %391 = tpu.matmul %390, %6, %cst_87 {dimension_numbers = #tpu.dot_dimension_numbers<[1], [0], [0], [1], [0, 0, 1, 1], [], []>} : vector<8x32xbf16>, vector<32x128xbf16>, vector<8x128xf32> -> vector<8x128xf32>
    %392 = arith.addf %389, %391 : vector<8x128xf32>
    %393 = arith.addf %392, %12 : vector<8x128xf32>
    %394 = vector.extract_strided_slice %393 {offsets = [0, 0], sizes = [8, 96], strides = [1, 1]} : vector<8x128xf32> to vector<8x96xf32>
    %395 = arith.negf %394 : vector<8x96xf32>
    %396 = math.exp %395 : vector<8x96xf32>
    %cst_88 = arith.constant 1.000000e+00 : f32
    %397 = vector.broadcast %cst_88 : f32 to vector<8x96xf32>
    %398 = arith.addf %397, %396 : vector<8x96xf32>
    %399 = arith.divf %397, %398 : vector<8x96xf32>
    %400 = vector.extract_strided_slice %399 {offsets = [0, 0], sizes = [8, 32], strides = [1, 1]} : vector<8x96xf32> to vector<8x32xf32>
    %401 = vector.extract_strided_slice %399 {offsets = [0, 32], sizes = [8, 32], strides = [1, 1]} : vector<8x96xf32> to vector<8x32xf32>
    %402 = vector.extract_strided_slice %399 {offsets = [0, 64], sizes = [8, 32], strides = [1, 1]} : vector<8x96xf32> to vector<8x32xf32>
    %403 = vector.extract_strided_slice %393 {offsets = [0, 96], sizes = [8, 32], strides = [1, 1]} : vector<8x128xf32> to vector<8x32xf32>
    %404 = math.tanh %403 : vector<8x32xf32>
    %405 = arith.mulf %401, %298 : vector<8x32xf32>
    %406 = arith.mulf %400, %404 : vector<8x32xf32>
    %407 = arith.addf %405, %406 : vector<8x32xf32>
    %408 = math.tanh %407 : vector<8x32xf32>
    %409 = arith.mulf %402, %408 : vector<8x32xf32>
    %410 = arith.truncf %409 : vector<8x32xf32> to vector<8x32xbf16>
    %cst_89 = arith.constant dense<0.000000e+00> : vector<8x128xf32>
    %411 = tpu.matmul %410, %2, %cst_89 {dimension_numbers = #tpu.dot_dimension_numbers<[1], [0], [0], [1], [0, 0, 1, 1], [], []>} : vector<8x32xbf16>, vector<32x128xbf16>, vector<8x128xf32> -> vector<8x128xf32>
    %412 = arith.truncf %322 : vector<8x32xf32> to vector<8x32xbf16>
    %cst_90 = arith.constant dense<0.000000e+00> : vector<8x128xf32>
    %413 = tpu.matmul %412, %7, %cst_90 {dimension_numbers = #tpu.dot_dimension_numbers<[1], [0], [0], [1], [0, 0, 1, 1], [], []>} : vector<8x32xbf16>, vector<32x128xbf16>, vector<8x128xf32> -> vector<8x128xf32>
    %414 = arith.addf %411, %413 : vector<8x128xf32>
    %415 = arith.addf %414, %15 : vector<8x128xf32>
    %416 = vector.extract_strided_slice %415 {offsets = [0, 0], sizes = [8, 96], strides = [1, 1]} : vector<8x128xf32> to vector<8x96xf32>
    %417 = arith.negf %416 : vector<8x96xf32>
    %418 = math.exp %417 : vector<8x96xf32>
    %cst_91 = arith.constant 1.000000e+00 : f32
    %419 = vector.broadcast %cst_91 : f32 to vector<8x96xf32>
    %420 = arith.addf %419, %418 : vector<8x96xf32>
    %421 = arith.divf %419, %420 : vector<8x96xf32>
    %422 = vector.extract_strided_slice %421 {offsets = [0, 0], sizes = [8, 32], strides = [1, 1]} : vector<8x96xf32> to vector<8x32xf32>
    %423 = vector.extract_strided_slice %421 {offsets = [0, 32], sizes = [8, 32], strides = [1, 1]} : vector<8x96xf32> to vector<8x32xf32>
    %424 = vector.extract_strided_slice %421 {offsets = [0, 64], sizes = [8, 32], strides = [1, 1]} : vector<8x96xf32> to vector<8x32xf32>
    %425 = vector.extract_strided_slice %415 {offsets = [0, 96], sizes = [8, 32], strides = [1, 1]} : vector<8x128xf32> to vector<8x32xf32>
    %426 = math.tanh %425 : vector<8x32xf32>
    %427 = arith.mulf %423, %320 : vector<8x32xf32>
    %428 = arith.mulf %422, %426 : vector<8x32xf32>
    %429 = arith.addf %427, %428 : vector<8x32xf32>
    %430 = math.tanh %429 : vector<8x32xf32>
    %431 = arith.mulf %424, %430 : vector<8x32xf32>
    %432 = arith.truncf %431 : vector<8x32xf32> to vector<8x32xbf16>
    %cst_92 = arith.constant dense<0.000000e+00> : vector<8x128xf32>
    %433 = tpu.matmul %432, %3, %cst_92 {dimension_numbers = #tpu.dot_dimension_numbers<[1], [0], [0], [1], [0, 0, 1, 1], [], []>} : vector<8x32xbf16>, vector<32x128xbf16>, vector<8x128xf32> -> vector<8x128xf32>
    %434 = arith.truncf %344 : vector<8x32xf32> to vector<8x32xbf16>
    %cst_93 = arith.constant dense<0.000000e+00> : vector<8x128xf32>
    %435 = tpu.matmul %434, %8, %cst_93 {dimension_numbers = #tpu.dot_dimension_numbers<[1], [0], [0], [1], [0, 0, 1, 1], [], []>} : vector<8x32xbf16>, vector<32x128xbf16>, vector<8x128xf32> -> vector<8x128xf32>
    %436 = arith.addf %433, %435 : vector<8x128xf32>
    %437 = arith.addf %436, %18 : vector<8x128xf32>
    %438 = vector.extract_strided_slice %437 {offsets = [0, 0], sizes = [8, 96], strides = [1, 1]} : vector<8x128xf32> to vector<8x96xf32>
    %439 = arith.negf %438 : vector<8x96xf32>
    %440 = math.exp %439 : vector<8x96xf32>
    %cst_94 = arith.constant 1.000000e+00 : f32
    %441 = vector.broadcast %cst_94 : f32 to vector<8x96xf32>
    %442 = arith.addf %441, %440 : vector<8x96xf32>
    %443 = arith.divf %441, %442 : vector<8x96xf32>
    %444 = vector.extract_strided_slice %443 {offsets = [0, 0], sizes = [8, 32], strides = [1, 1]} : vector<8x96xf32> to vector<8x32xf32>
    %445 = vector.extract_strided_slice %443 {offsets = [0, 32], sizes = [8, 32], strides = [1, 1]} : vector<8x96xf32> to vector<8x32xf32>
    %446 = vector.extract_strided_slice %443 {offsets = [0, 64], sizes = [8, 32], strides = [1, 1]} : vector<8x96xf32> to vector<8x32xf32>
    %447 = vector.extract_strided_slice %437 {offsets = [0, 96], sizes = [8, 32], strides = [1, 1]} : vector<8x128xf32> to vector<8x32xf32>
    %448 = math.tanh %447 : vector<8x32xf32>
    %449 = arith.mulf %445, %342 : vector<8x32xf32>
    %450 = arith.mulf %444, %448 : vector<8x32xf32>
    %451 = arith.addf %449, %450 : vector<8x32xf32>
    %452 = math.tanh %451 : vector<8x32xf32>
    %453 = arith.mulf %446, %452 : vector<8x32xf32>
    %454 = arith.truncf %453 : vector<8x32xf32> to vector<8x32xbf16>
    %cst_95 = arith.constant dense<0.000000e+00> : vector<8x128xf32>
    %455 = tpu.matmul %454, %4, %cst_95 {dimension_numbers = #tpu.dot_dimension_numbers<[1], [0], [0], [1], [0, 0, 1, 1], [], []>} : vector<8x32xbf16>, vector<32x128xbf16>, vector<8x128xf32> -> vector<8x128xf32>
    %456 = arith.truncf %366 : vector<8x32xf32> to vector<8x32xbf16>
    %cst_96 = arith.constant dense<0.000000e+00> : vector<8x128xf32>
    %457 = tpu.matmul %456, %9, %cst_96 {dimension_numbers = #tpu.dot_dimension_numbers<[1], [0], [0], [1], [0, 0, 1, 1], [], []>} : vector<8x32xbf16>, vector<32x128xbf16>, vector<8x128xf32> -> vector<8x128xf32>
    %458 = arith.addf %455, %457 : vector<8x128xf32>
    %459 = arith.addf %458, %21 : vector<8x128xf32>
    %460 = vector.extract_strided_slice %459 {offsets = [0, 0], sizes = [8, 96], strides = [1, 1]} : vector<8x128xf32> to vector<8x96xf32>
    %461 = arith.negf %460 : vector<8x96xf32>
    %462 = math.exp %461 : vector<8x96xf32>
    %cst_97 = arith.constant 1.000000e+00 : f32
    %463 = vector.broadcast %cst_97 : f32 to vector<8x96xf32>
    %464 = arith.addf %463, %462 : vector<8x96xf32>
    %465 = arith.divf %463, %464 : vector<8x96xf32>
    %466 = vector.extract_strided_slice %465 {offsets = [0, 0], sizes = [8, 32], strides = [1, 1]} : vector<8x96xf32> to vector<8x32xf32>
    %467 = vector.extract_strided_slice %465 {offsets = [0, 32], sizes = [8, 32], strides = [1, 1]} : vector<8x96xf32> to vector<8x32xf32>
    %468 = vector.extract_strided_slice %465 {offsets = [0, 64], sizes = [8, 32], strides = [1, 1]} : vector<8x96xf32> to vector<8x32xf32>
    %469 = vector.extract_strided_slice %459 {offsets = [0, 96], sizes = [8, 32], strides = [1, 1]} : vector<8x128xf32> to vector<8x32xf32>
    %470 = math.tanh %469 : vector<8x32xf32>
    %471 = arith.mulf %467, %364 : vector<8x32xf32>
    %472 = arith.mulf %466, %470 : vector<8x32xf32>
    %473 = arith.addf %471, %472 : vector<8x32xf32>
    %474 = math.tanh %473 : vector<8x32xf32>
    %475 = arith.mulf %468, %474 : vector<8x32xf32>
    %476 = vector.extract_strided_slice %29 {offsets = [0, 4, 0], sizes = [8, 1, 128], strides = [1, 1, 1]} : vector<8x8x128xf32> to vector<8x1x128xf32>
    %477 = vector.shape_cast %476 : vector<8x1x128xf32> to vector<8x128xf32>
    %478 = arith.truncf %387 : vector<8x32xf32> to vector<8x32xbf16>
    %cst_98 = arith.constant dense<0.000000e+00> : vector<8x128xf32>
    %479 = tpu.matmul %478, %5, %cst_98 {dimension_numbers = #tpu.dot_dimension_numbers<[1], [0], [0], [1], [0, 0, 1, 1], [], []>} : vector<8x32xbf16>, vector<32x128xbf16>, vector<8x128xf32> -> vector<8x128xf32>
    %480 = arith.addf %477, %479 : vector<8x128xf32>
    %481 = vector.extract_strided_slice %480 {offsets = [0, 0], sizes = [8, 96], strides = [1, 1]} : vector<8x128xf32> to vector<8x96xf32>
    %482 = arith.negf %481 : vector<8x96xf32>
    %483 = math.exp %482 : vector<8x96xf32>
    %cst_99 = arith.constant 1.000000e+00 : f32
    %484 = vector.broadcast %cst_99 : f32 to vector<8x96xf32>
    %485 = arith.addf %484, %483 : vector<8x96xf32>
    %486 = arith.divf %484, %485 : vector<8x96xf32>
    %487 = vector.extract_strided_slice %486 {offsets = [0, 0], sizes = [8, 32], strides = [1, 1]} : vector<8x96xf32> to vector<8x32xf32>
    %488 = vector.extract_strided_slice %486 {offsets = [0, 32], sizes = [8, 32], strides = [1, 1]} : vector<8x96xf32> to vector<8x32xf32>
    %489 = vector.extract_strided_slice %486 {offsets = [0, 64], sizes = [8, 32], strides = [1, 1]} : vector<8x96xf32> to vector<8x32xf32>
    %490 = vector.extract_strided_slice %480 {offsets = [0, 96], sizes = [8, 32], strides = [1, 1]} : vector<8x128xf32> to vector<8x32xf32>
    %491 = math.tanh %490 : vector<8x32xf32>
    %492 = arith.mulf %488, %385 : vector<8x32xf32>
    %493 = arith.mulf %487, %491 : vector<8x32xf32>
    %494 = arith.addf %492, %493 : vector<8x32xf32>
    %495 = math.tanh %494 : vector<8x32xf32>
    %496 = arith.mulf %489, %495 : vector<8x32xf32>
    %497 = arith.truncf %496 : vector<8x32xf32> to vector<8x32xbf16>
    %cst_100 = arith.constant dense<0.000000e+00> : vector<8x128xf32>
    %498 = tpu.matmul %497, %1, %cst_100 {dimension_numbers = #tpu.dot_dimension_numbers<[1], [0], [0], [1], [0, 0, 1, 1], [], []>} : vector<8x32xbf16>, vector<32x128xbf16>, vector<8x128xf32> -> vector<8x128xf32>
    %499 = arith.truncf %409 : vector<8x32xf32> to vector<8x32xbf16>
    %cst_101 = arith.constant dense<0.000000e+00> : vector<8x128xf32>
    %500 = tpu.matmul %499, %6, %cst_101 {dimension_numbers = #tpu.dot_dimension_numbers<[1], [0], [0], [1], [0, 0, 1, 1], [], []>} : vector<8x32xbf16>, vector<32x128xbf16>, vector<8x128xf32> -> vector<8x128xf32>
    %501 = arith.addf %498, %500 : vector<8x128xf32>
    %502 = arith.addf %501, %12 : vector<8x128xf32>
    %503 = vector.extract_strided_slice %502 {offsets = [0, 0], sizes = [8, 96], strides = [1, 1]} : vector<8x128xf32> to vector<8x96xf32>
    %504 = arith.negf %503 : vector<8x96xf32>
    %505 = math.exp %504 : vector<8x96xf32>
    %cst_102 = arith.constant 1.000000e+00 : f32
    %506 = vector.broadcast %cst_102 : f32 to vector<8x96xf32>
    %507 = arith.addf %506, %505 : vector<8x96xf32>
    %508 = arith.divf %506, %507 : vector<8x96xf32>
    %509 = vector.extract_strided_slice %508 {offsets = [0, 0], sizes = [8, 32], strides = [1, 1]} : vector<8x96xf32> to vector<8x32xf32>
    %510 = vector.extract_strided_slice %508 {offsets = [0, 32], sizes = [8, 32], strides = [1, 1]} : vector<8x96xf32> to vector<8x32xf32>
    %511 = vector.extract_strided_slice %508 {offsets = [0, 64], sizes = [8, 32], strides = [1, 1]} : vector<8x96xf32> to vector<8x32xf32>
    %512 = vector.extract_strided_slice %502 {offsets = [0, 96], sizes = [8, 32], strides = [1, 1]} : vector<8x128xf32> to vector<8x32xf32>
    %513 = math.tanh %512 : vector<8x32xf32>
    %514 = arith.mulf %510, %407 : vector<8x32xf32>
    %515 = arith.mulf %509, %513 : vector<8x32xf32>
    %516 = arith.addf %514, %515 : vector<8x32xf32>
    %517 = math.tanh %516 : vector<8x32xf32>
    %518 = arith.mulf %511, %517 : vector<8x32xf32>
    %519 = arith.truncf %518 : vector<8x32xf32> to vector<8x32xbf16>
    %cst_103 = arith.constant dense<0.000000e+00> : vector<8x128xf32>
    %520 = tpu.matmul %519, %2, %cst_103 {dimension_numbers = #tpu.dot_dimension_numbers<[1], [0], [0], [1], [0, 0, 1, 1], [], []>} : vector<8x32xbf16>, vector<32x128xbf16>, vector<8x128xf32> -> vector<8x128xf32>
    %521 = arith.truncf %431 : vector<8x32xf32> to vector<8x32xbf16>
    %cst_104 = arith.constant dense<0.000000e+00> : vector<8x128xf32>
    %522 = tpu.matmul %521, %7, %cst_104 {dimension_numbers = #tpu.dot_dimension_numbers<[1], [0], [0], [1], [0, 0, 1, 1], [], []>} : vector<8x32xbf16>, vector<32x128xbf16>, vector<8x128xf32> -> vector<8x128xf32>
    %523 = arith.addf %520, %522 : vector<8x128xf32>
    %524 = arith.addf %523, %15 : vector<8x128xf32>
    %525 = vector.extract_strided_slice %524 {offsets = [0, 0], sizes = [8, 96], strides = [1, 1]} : vector<8x128xf32> to vector<8x96xf32>
    %526 = arith.negf %525 : vector<8x96xf32>
    %527 = math.exp %526 : vector<8x96xf32>
    %cst_105 = arith.constant 1.000000e+00 : f32
    %528 = vector.broadcast %cst_105 : f32 to vector<8x96xf32>
    %529 = arith.addf %528, %527 : vector<8x96xf32>
    %530 = arith.divf %528, %529 : vector<8x96xf32>
    %531 = vector.extract_strided_slice %530 {offsets = [0, 0], sizes = [8, 32], strides = [1, 1]} : vector<8x96xf32> to vector<8x32xf32>
    %532 = vector.extract_strided_slice %530 {offsets = [0, 32], sizes = [8, 32], strides = [1, 1]} : vector<8x96xf32> to vector<8x32xf32>
    %533 = vector.extract_strided_slice %530 {offsets = [0, 64], sizes = [8, 32], strides = [1, 1]} : vector<8x96xf32> to vector<8x32xf32>
    %534 = vector.extract_strided_slice %524 {offsets = [0, 96], sizes = [8, 32], strides = [1, 1]} : vector<8x128xf32> to vector<8x32xf32>
    %535 = math.tanh %534 : vector<8x32xf32>
    %536 = arith.mulf %532, %429 : vector<8x32xf32>
    %537 = arith.mulf %531, %535 : vector<8x32xf32>
    %538 = arith.addf %536, %537 : vector<8x32xf32>
    %539 = math.tanh %538 : vector<8x32xf32>
    %540 = arith.mulf %533, %539 : vector<8x32xf32>
    %541 = arith.truncf %540 : vector<8x32xf32> to vector<8x32xbf16>
    %cst_106 = arith.constant dense<0.000000e+00> : vector<8x128xf32>
    %542 = tpu.matmul %541, %3, %cst_106 {dimension_numbers = #tpu.dot_dimension_numbers<[1], [0], [0], [1], [0, 0, 1, 1], [], []>} : vector<8x32xbf16>, vector<32x128xbf16>, vector<8x128xf32> -> vector<8x128xf32>
    %543 = arith.truncf %453 : vector<8x32xf32> to vector<8x32xbf16>
    %cst_107 = arith.constant dense<0.000000e+00> : vector<8x128xf32>
    %544 = tpu.matmul %543, %8, %cst_107 {dimension_numbers = #tpu.dot_dimension_numbers<[1], [0], [0], [1], [0, 0, 1, 1], [], []>} : vector<8x32xbf16>, vector<32x128xbf16>, vector<8x128xf32> -> vector<8x128xf32>
    %545 = arith.addf %542, %544 : vector<8x128xf32>
    %546 = arith.addf %545, %18 : vector<8x128xf32>
    %547 = vector.extract_strided_slice %546 {offsets = [0, 0], sizes = [8, 96], strides = [1, 1]} : vector<8x128xf32> to vector<8x96xf32>
    %548 = arith.negf %547 : vector<8x96xf32>
    %549 = math.exp %548 : vector<8x96xf32>
    %cst_108 = arith.constant 1.000000e+00 : f32
    %550 = vector.broadcast %cst_108 : f32 to vector<8x96xf32>
    %551 = arith.addf %550, %549 : vector<8x96xf32>
    %552 = arith.divf %550, %551 : vector<8x96xf32>
    %553 = vector.extract_strided_slice %552 {offsets = [0, 0], sizes = [8, 32], strides = [1, 1]} : vector<8x96xf32> to vector<8x32xf32>
    %554 = vector.extract_strided_slice %552 {offsets = [0, 32], sizes = [8, 32], strides = [1, 1]} : vector<8x96xf32> to vector<8x32xf32>
    %555 = vector.extract_strided_slice %552 {offsets = [0, 64], sizes = [8, 32], strides = [1, 1]} : vector<8x96xf32> to vector<8x32xf32>
    %556 = vector.extract_strided_slice %546 {offsets = [0, 96], sizes = [8, 32], strides = [1, 1]} : vector<8x128xf32> to vector<8x32xf32>
    %557 = math.tanh %556 : vector<8x32xf32>
    %558 = arith.mulf %554, %451 : vector<8x32xf32>
    %559 = arith.mulf %553, %557 : vector<8x32xf32>
    %560 = arith.addf %558, %559 : vector<8x32xf32>
    %561 = math.tanh %560 : vector<8x32xf32>
    %562 = arith.mulf %555, %561 : vector<8x32xf32>
    %563 = arith.truncf %562 : vector<8x32xf32> to vector<8x32xbf16>
    %cst_109 = arith.constant dense<0.000000e+00> : vector<8x128xf32>
    %564 = tpu.matmul %563, %4, %cst_109 {dimension_numbers = #tpu.dot_dimension_numbers<[1], [0], [0], [1], [0, 0, 1, 1], [], []>} : vector<8x32xbf16>, vector<32x128xbf16>, vector<8x128xf32> -> vector<8x128xf32>
    %565 = arith.truncf %475 : vector<8x32xf32> to vector<8x32xbf16>
    %cst_110 = arith.constant dense<0.000000e+00> : vector<8x128xf32>
    %566 = tpu.matmul %565, %9, %cst_110 {dimension_numbers = #tpu.dot_dimension_numbers<[1], [0], [0], [1], [0, 0, 1, 1], [], []>} : vector<8x32xbf16>, vector<32x128xbf16>, vector<8x128xf32> -> vector<8x128xf32>
    %567 = arith.addf %564, %566 : vector<8x128xf32>
    %568 = arith.addf %567, %21 : vector<8x128xf32>
    %569 = vector.extract_strided_slice %568 {offsets = [0, 0], sizes = [8, 96], strides = [1, 1]} : vector<8x128xf32> to vector<8x96xf32>
    %570 = arith.negf %569 : vector<8x96xf32>
    %571 = math.exp %570 : vector<8x96xf32>
    %cst_111 = arith.constant 1.000000e+00 : f32
    %572 = vector.broadcast %cst_111 : f32 to vector<8x96xf32>
    %573 = arith.addf %572, %571 : vector<8x96xf32>
    %574 = arith.divf %572, %573 : vector<8x96xf32>
    %575 = vector.extract_strided_slice %574 {offsets = [0, 0], sizes = [8, 32], strides = [1, 1]} : vector<8x96xf32> to vector<8x32xf32>
    %576 = vector.extract_strided_slice %574 {offsets = [0, 32], sizes = [8, 32], strides = [1, 1]} : vector<8x96xf32> to vector<8x32xf32>
    %577 = vector.extract_strided_slice %574 {offsets = [0, 64], sizes = [8, 32], strides = [1, 1]} : vector<8x96xf32> to vector<8x32xf32>
    %578 = vector.extract_strided_slice %568 {offsets = [0, 96], sizes = [8, 32], strides = [1, 1]} : vector<8x128xf32> to vector<8x32xf32>
    %579 = math.tanh %578 : vector<8x32xf32>
    %580 = arith.mulf %576, %473 : vector<8x32xf32>
    %581 = arith.mulf %575, %579 : vector<8x32xf32>
    %582 = arith.addf %580, %581 : vector<8x32xf32>
    %583 = math.tanh %582 : vector<8x32xf32>
    %584 = arith.mulf %577, %583 : vector<8x32xf32>
    %585 = vector.extract_strided_slice %29 {offsets = [0, 5, 0], sizes = [8, 1, 128], strides = [1, 1, 1]} : vector<8x8x128xf32> to vector<8x1x128xf32>
    %586 = vector.shape_cast %585 : vector<8x1x128xf32> to vector<8x128xf32>
    %587 = arith.truncf %496 : vector<8x32xf32> to vector<8x32xbf16>
    %cst_112 = arith.constant dense<0.000000e+00> : vector<8x128xf32>
    %588 = tpu.matmul %587, %5, %cst_112 {dimension_numbers = #tpu.dot_dimension_numbers<[1], [0], [0], [1], [0, 0, 1, 1], [], []>} : vector<8x32xbf16>, vector<32x128xbf16>, vector<8x128xf32> -> vector<8x128xf32>
    %589 = arith.addf %586, %588 : vector<8x128xf32>
    %590 = vector.extract_strided_slice %589 {offsets = [0, 0], sizes = [8, 96], strides = [1, 1]} : vector<8x128xf32> to vector<8x96xf32>
    %591 = arith.negf %590 : vector<8x96xf32>
    %592 = math.exp %591 : vector<8x96xf32>
    %cst_113 = arith.constant 1.000000e+00 : f32
    %593 = vector.broadcast %cst_113 : f32 to vector<8x96xf32>
    %594 = arith.addf %593, %592 : vector<8x96xf32>
    %595 = arith.divf %593, %594 : vector<8x96xf32>
    %596 = vector.extract_strided_slice %595 {offsets = [0, 0], sizes = [8, 32], strides = [1, 1]} : vector<8x96xf32> to vector<8x32xf32>
    %597 = vector.extract_strided_slice %595 {offsets = [0, 32], sizes = [8, 32], strides = [1, 1]} : vector<8x96xf32> to vector<8x32xf32>
    %598 = vector.extract_strided_slice %595 {offsets = [0, 64], sizes = [8, 32], strides = [1, 1]} : vector<8x96xf32> to vector<8x32xf32>
    %599 = vector.extract_strided_slice %589 {offsets = [0, 96], sizes = [8, 32], strides = [1, 1]} : vector<8x128xf32> to vector<8x32xf32>
    %600 = math.tanh %599 : vector<8x32xf32>
    %601 = arith.mulf %597, %494 : vector<8x32xf32>
    %602 = arith.mulf %596, %600 : vector<8x32xf32>
    %603 = arith.addf %601, %602 : vector<8x32xf32>
    %604 = math.tanh %603 : vector<8x32xf32>
    %605 = arith.mulf %598, %604 : vector<8x32xf32>
    %606 = arith.truncf %605 : vector<8x32xf32> to vector<8x32xbf16>
    %cst_114 = arith.constant dense<0.000000e+00> : vector<8x128xf32>
    %607 = tpu.matmul %606, %1, %cst_114 {dimension_numbers = #tpu.dot_dimension_numbers<[1], [0], [0], [1], [0, 0, 1, 1], [], []>} : vector<8x32xbf16>, vector<32x128xbf16>, vector<8x128xf32> -> vector<8x128xf32>
    %608 = arith.truncf %518 : vector<8x32xf32> to vector<8x32xbf16>
    %cst_115 = arith.constant dense<0.000000e+00> : vector<8x128xf32>
    %609 = tpu.matmul %608, %6, %cst_115 {dimension_numbers = #tpu.dot_dimension_numbers<[1], [0], [0], [1], [0, 0, 1, 1], [], []>} : vector<8x32xbf16>, vector<32x128xbf16>, vector<8x128xf32> -> vector<8x128xf32>
    %610 = arith.addf %607, %609 : vector<8x128xf32>
    %611 = arith.addf %610, %12 : vector<8x128xf32>
    %612 = vector.extract_strided_slice %611 {offsets = [0, 0], sizes = [8, 96], strides = [1, 1]} : vector<8x128xf32> to vector<8x96xf32>
    %613 = arith.negf %612 : vector<8x96xf32>
    %614 = math.exp %613 : vector<8x96xf32>
    %cst_116 = arith.constant 1.000000e+00 : f32
    %615 = vector.broadcast %cst_116 : f32 to vector<8x96xf32>
    %616 = arith.addf %615, %614 : vector<8x96xf32>
    %617 = arith.divf %615, %616 : vector<8x96xf32>
    %618 = vector.extract_strided_slice %617 {offsets = [0, 0], sizes = [8, 32], strides = [1, 1]} : vector<8x96xf32> to vector<8x32xf32>
    %619 = vector.extract_strided_slice %617 {offsets = [0, 32], sizes = [8, 32], strides = [1, 1]} : vector<8x96xf32> to vector<8x32xf32>
    %620 = vector.extract_strided_slice %617 {offsets = [0, 64], sizes = [8, 32], strides = [1, 1]} : vector<8x96xf32> to vector<8x32xf32>
    %621 = vector.extract_strided_slice %611 {offsets = [0, 96], sizes = [8, 32], strides = [1, 1]} : vector<8x128xf32> to vector<8x32xf32>
    %622 = math.tanh %621 : vector<8x32xf32>
    %623 = arith.mulf %619, %516 : vector<8x32xf32>
    %624 = arith.mulf %618, %622 : vector<8x32xf32>
    %625 = arith.addf %623, %624 : vector<8x32xf32>
    %626 = math.tanh %625 : vector<8x32xf32>
    %627 = arith.mulf %620, %626 : vector<8x32xf32>
    %628 = arith.truncf %627 : vector<8x32xf32> to vector<8x32xbf16>
    %cst_117 = arith.constant dense<0.000000e+00> : vector<8x128xf32>
    %629 = tpu.matmul %628, %2, %cst_117 {dimension_numbers = #tpu.dot_dimension_numbers<[1], [0], [0], [1], [0, 0, 1, 1], [], []>} : vector<8x32xbf16>, vector<32x128xbf16>, vector<8x128xf32> -> vector<8x128xf32>
    %630 = arith.truncf %540 : vector<8x32xf32> to vector<8x32xbf16>
    %cst_118 = arith.constant dense<0.000000e+00> : vector<8x128xf32>
    %631 = tpu.matmul %630, %7, %cst_118 {dimension_numbers = #tpu.dot_dimension_numbers<[1], [0], [0], [1], [0, 0, 1, 1], [], []>} : vector<8x32xbf16>, vector<32x128xbf16>, vector<8x128xf32> -> vector<8x128xf32>
    %632 = arith.addf %629, %631 : vector<8x128xf32>
    %633 = arith.addf %632, %15 : vector<8x128xf32>
    %634 = vector.extract_strided_slice %633 {offsets = [0, 0], sizes = [8, 96], strides = [1, 1]} : vector<8x128xf32> to vector<8x96xf32>
    %635 = arith.negf %634 : vector<8x96xf32>
    %636 = math.exp %635 : vector<8x96xf32>
    %cst_119 = arith.constant 1.000000e+00 : f32
    %637 = vector.broadcast %cst_119 : f32 to vector<8x96xf32>
    %638 = arith.addf %637, %636 : vector<8x96xf32>
    %639 = arith.divf %637, %638 : vector<8x96xf32>
    %640 = vector.extract_strided_slice %639 {offsets = [0, 0], sizes = [8, 32], strides = [1, 1]} : vector<8x96xf32> to vector<8x32xf32>
    %641 = vector.extract_strided_slice %639 {offsets = [0, 32], sizes = [8, 32], strides = [1, 1]} : vector<8x96xf32> to vector<8x32xf32>
    %642 = vector.extract_strided_slice %639 {offsets = [0, 64], sizes = [8, 32], strides = [1, 1]} : vector<8x96xf32> to vector<8x32xf32>
    %643 = vector.extract_strided_slice %633 {offsets = [0, 96], sizes = [8, 32], strides = [1, 1]} : vector<8x128xf32> to vector<8x32xf32>
    %644 = math.tanh %643 : vector<8x32xf32>
    %645 = arith.mulf %641, %538 : vector<8x32xf32>
    %646 = arith.mulf %640, %644 : vector<8x32xf32>
    %647 = arith.addf %645, %646 : vector<8x32xf32>
    %648 = math.tanh %647 : vector<8x32xf32>
    %649 = arith.mulf %642, %648 : vector<8x32xf32>
    %650 = arith.truncf %649 : vector<8x32xf32> to vector<8x32xbf16>
    %cst_120 = arith.constant dense<0.000000e+00> : vector<8x128xf32>
    %651 = tpu.matmul %650, %3, %cst_120 {dimension_numbers = #tpu.dot_dimension_numbers<[1], [0], [0], [1], [0, 0, 1, 1], [], []>} : vector<8x32xbf16>, vector<32x128xbf16>, vector<8x128xf32> -> vector<8x128xf32>
    %652 = arith.truncf %562 : vector<8x32xf32> to vector<8x32xbf16>
    %cst_121 = arith.constant dense<0.000000e+00> : vector<8x128xf32>
    %653 = tpu.matmul %652, %8, %cst_121 {dimension_numbers = #tpu.dot_dimension_numbers<[1], [0], [0], [1], [0, 0, 1, 1], [], []>} : vector<8x32xbf16>, vector<32x128xbf16>, vector<8x128xf32> -> vector<8x128xf32>
    %654 = arith.addf %651, %653 : vector<8x128xf32>
    %655 = arith.addf %654, %18 : vector<8x128xf32>
    %656 = vector.extract_strided_slice %655 {offsets = [0, 0], sizes = [8, 96], strides = [1, 1]} : vector<8x128xf32> to vector<8x96xf32>
    %657 = arith.negf %656 : vector<8x96xf32>
    %658 = math.exp %657 : vector<8x96xf32>
    %cst_122 = arith.constant 1.000000e+00 : f32
    %659 = vector.broadcast %cst_122 : f32 to vector<8x96xf32>
    %660 = arith.addf %659, %658 : vector<8x96xf32>
    %661 = arith.divf %659, %660 : vector<8x96xf32>
    %662 = vector.extract_strided_slice %661 {offsets = [0, 0], sizes = [8, 32], strides = [1, 1]} : vector<8x96xf32> to vector<8x32xf32>
    %663 = vector.extract_strided_slice %661 {offsets = [0, 32], sizes = [8, 32], strides = [1, 1]} : vector<8x96xf32> to vector<8x32xf32>
    %664 = vector.extract_strided_slice %661 {offsets = [0, 64], sizes = [8, 32], strides = [1, 1]} : vector<8x96xf32> to vector<8x32xf32>
    %665 = vector.extract_strided_slice %655 {offsets = [0, 96], sizes = [8, 32], strides = [1, 1]} : vector<8x128xf32> to vector<8x32xf32>
    %666 = math.tanh %665 : vector<8x32xf32>
    %667 = arith.mulf %663, %560 : vector<8x32xf32>
    %668 = arith.mulf %662, %666 : vector<8x32xf32>
    %669 = arith.addf %667, %668 : vector<8x32xf32>
    %670 = math.tanh %669 : vector<8x32xf32>
    %671 = arith.mulf %664, %670 : vector<8x32xf32>
    %672 = arith.truncf %671 : vector<8x32xf32> to vector<8x32xbf16>
    %cst_123 = arith.constant dense<0.000000e+00> : vector<8x128xf32>
    %673 = tpu.matmul %672, %4, %cst_123 {dimension_numbers = #tpu.dot_dimension_numbers<[1], [0], [0], [1], [0, 0, 1, 1], [], []>} : vector<8x32xbf16>, vector<32x128xbf16>, vector<8x128xf32> -> vector<8x128xf32>
    %674 = arith.truncf %584 : vector<8x32xf32> to vector<8x32xbf16>
    %cst_124 = arith.constant dense<0.000000e+00> : vector<8x128xf32>
    %675 = tpu.matmul %674, %9, %cst_124 {dimension_numbers = #tpu.dot_dimension_numbers<[1], [0], [0], [1], [0, 0, 1, 1], [], []>} : vector<8x32xbf16>, vector<32x128xbf16>, vector<8x128xf32> -> vector<8x128xf32>
    %676 = arith.addf %673, %675 : vector<8x128xf32>
    %677 = arith.addf %676, %21 : vector<8x128xf32>
    %678 = vector.extract_strided_slice %677 {offsets = [0, 0], sizes = [8, 96], strides = [1, 1]} : vector<8x128xf32> to vector<8x96xf32>
    %679 = arith.negf %678 : vector<8x96xf32>
    %680 = math.exp %679 : vector<8x96xf32>
    %cst_125 = arith.constant 1.000000e+00 : f32
    %681 = vector.broadcast %cst_125 : f32 to vector<8x96xf32>
    %682 = arith.addf %681, %680 : vector<8x96xf32>
    %683 = arith.divf %681, %682 : vector<8x96xf32>
    %684 = vector.extract_strided_slice %683 {offsets = [0, 0], sizes = [8, 32], strides = [1, 1]} : vector<8x96xf32> to vector<8x32xf32>
    %685 = vector.extract_strided_slice %683 {offsets = [0, 32], sizes = [8, 32], strides = [1, 1]} : vector<8x96xf32> to vector<8x32xf32>
    %686 = vector.extract_strided_slice %683 {offsets = [0, 64], sizes = [8, 32], strides = [1, 1]} : vector<8x96xf32> to vector<8x32xf32>
    %687 = vector.extract_strided_slice %677 {offsets = [0, 96], sizes = [8, 32], strides = [1, 1]} : vector<8x128xf32> to vector<8x32xf32>
    %688 = math.tanh %687 : vector<8x32xf32>
    %689 = arith.mulf %685, %582 : vector<8x32xf32>
    %690 = arith.mulf %684, %688 : vector<8x32xf32>
    %691 = arith.addf %689, %690 : vector<8x32xf32>
    %692 = math.tanh %691 : vector<8x32xf32>
    %693 = arith.mulf %686, %692 : vector<8x32xf32>
    %694 = vector.extract_strided_slice %29 {offsets = [0, 6, 0], sizes = [8, 1, 128], strides = [1, 1, 1]} : vector<8x8x128xf32> to vector<8x1x128xf32>
    %695 = vector.shape_cast %694 : vector<8x1x128xf32> to vector<8x128xf32>
    %696 = arith.truncf %605 : vector<8x32xf32> to vector<8x32xbf16>
    %cst_126 = arith.constant dense<0.000000e+00> : vector<8x128xf32>
    %697 = tpu.matmul %696, %5, %cst_126 {dimension_numbers = #tpu.dot_dimension_numbers<[1], [0], [0], [1], [0, 0, 1, 1], [], []>} : vector<8x32xbf16>, vector<32x128xbf16>, vector<8x128xf32> -> vector<8x128xf32>
    %698 = arith.addf %695, %697 : vector<8x128xf32>
    %699 = vector.extract_strided_slice %698 {offsets = [0, 0], sizes = [8, 96], strides = [1, 1]} : vector<8x128xf32> to vector<8x96xf32>
    %700 = arith.negf %699 : vector<8x96xf32>
    %701 = math.exp %700 : vector<8x96xf32>
    %cst_127 = arith.constant 1.000000e+00 : f32
    %702 = vector.broadcast %cst_127 : f32 to vector<8x96xf32>
    %703 = arith.addf %702, %701 : vector<8x96xf32>
    %704 = arith.divf %702, %703 : vector<8x96xf32>
    %705 = vector.extract_strided_slice %704 {offsets = [0, 0], sizes = [8, 32], strides = [1, 1]} : vector<8x96xf32> to vector<8x32xf32>
    %706 = vector.extract_strided_slice %704 {offsets = [0, 32], sizes = [8, 32], strides = [1, 1]} : vector<8x96xf32> to vector<8x32xf32>
    %707 = vector.extract_strided_slice %704 {offsets = [0, 64], sizes = [8, 32], strides = [1, 1]} : vector<8x96xf32> to vector<8x32xf32>
    %708 = vector.extract_strided_slice %698 {offsets = [0, 96], sizes = [8, 32], strides = [1, 1]} : vector<8x128xf32> to vector<8x32xf32>
    %709 = math.tanh %708 : vector<8x32xf32>
    %710 = arith.mulf %706, %603 : vector<8x32xf32>
    %711 = arith.mulf %705, %709 : vector<8x32xf32>
    %712 = arith.addf %710, %711 : vector<8x32xf32>
    %713 = math.tanh %712 : vector<8x32xf32>
    %714 = arith.mulf %707, %713 : vector<8x32xf32>
    %715 = arith.truncf %714 : vector<8x32xf32> to vector<8x32xbf16>
    %cst_128 = arith.constant dense<0.000000e+00> : vector<8x128xf32>
    %716 = tpu.matmul %715, %1, %cst_128 {dimension_numbers = #tpu.dot_dimension_numbers<[1], [0], [0], [1], [0, 0, 1, 1], [], []>} : vector<8x32xbf16>, vector<32x128xbf16>, vector<8x128xf32> -> vector<8x128xf32>
    %717 = arith.truncf %627 : vector<8x32xf32> to vector<8x32xbf16>
    %cst_129 = arith.constant dense<0.000000e+00> : vector<8x128xf32>
    %718 = tpu.matmul %717, %6, %cst_129 {dimension_numbers = #tpu.dot_dimension_numbers<[1], [0], [0], [1], [0, 0, 1, 1], [], []>} : vector<8x32xbf16>, vector<32x128xbf16>, vector<8x128xf32> -> vector<8x128xf32>
    %719 = arith.addf %716, %718 : vector<8x128xf32>
    %720 = arith.addf %719, %12 : vector<8x128xf32>
    %721 = vector.extract_strided_slice %720 {offsets = [0, 0], sizes = [8, 96], strides = [1, 1]} : vector<8x128xf32> to vector<8x96xf32>
    %722 = arith.negf %721 : vector<8x96xf32>
    %723 = math.exp %722 : vector<8x96xf32>
    %cst_130 = arith.constant 1.000000e+00 : f32
    %724 = vector.broadcast %cst_130 : f32 to vector<8x96xf32>
    %725 = arith.addf %724, %723 : vector<8x96xf32>
    %726 = arith.divf %724, %725 : vector<8x96xf32>
    %727 = vector.extract_strided_slice %726 {offsets = [0, 0], sizes = [8, 32], strides = [1, 1]} : vector<8x96xf32> to vector<8x32xf32>
    %728 = vector.extract_strided_slice %726 {offsets = [0, 32], sizes = [8, 32], strides = [1, 1]} : vector<8x96xf32> to vector<8x32xf32>
    %729 = vector.extract_strided_slice %726 {offsets = [0, 64], sizes = [8, 32], strides = [1, 1]} : vector<8x96xf32> to vector<8x32xf32>
    %730 = vector.extract_strided_slice %720 {offsets = [0, 96], sizes = [8, 32], strides = [1, 1]} : vector<8x128xf32> to vector<8x32xf32>
    %731 = math.tanh %730 : vector<8x32xf32>
    %732 = arith.mulf %728, %625 : vector<8x32xf32>
    %733 = arith.mulf %727, %731 : vector<8x32xf32>
    %734 = arith.addf %732, %733 : vector<8x32xf32>
    %735 = math.tanh %734 : vector<8x32xf32>
    %736 = arith.mulf %729, %735 : vector<8x32xf32>
    %737 = arith.truncf %736 : vector<8x32xf32> to vector<8x32xbf16>
    %cst_131 = arith.constant dense<0.000000e+00> : vector<8x128xf32>
    %738 = tpu.matmul %737, %2, %cst_131 {dimension_numbers = #tpu.dot_dimension_numbers<[1], [0], [0], [1], [0, 0, 1, 1], [], []>} : vector<8x32xbf16>, vector<32x128xbf16>, vector<8x128xf32> -> vector<8x128xf32>
    %739 = arith.truncf %649 : vector<8x32xf32> to vector<8x32xbf16>
    %cst_132 = arith.constant dense<0.000000e+00> : vector<8x128xf32>
    %740 = tpu.matmul %739, %7, %cst_132 {dimension_numbers = #tpu.dot_dimension_numbers<[1], [0], [0], [1], [0, 0, 1, 1], [], []>} : vector<8x32xbf16>, vector<32x128xbf16>, vector<8x128xf32> -> vector<8x128xf32>
    %741 = arith.addf %738, %740 : vector<8x128xf32>
    %742 = arith.addf %741, %15 : vector<8x128xf32>
    %743 = vector.extract_strided_slice %742 {offsets = [0, 0], sizes = [8, 96], strides = [1, 1]} : vector<8x128xf32> to vector<8x96xf32>
    %744 = arith.negf %743 : vector<8x96xf32>
    %745 = math.exp %744 : vector<8x96xf32>
    %cst_133 = arith.constant 1.000000e+00 : f32
    %746 = vector.broadcast %cst_133 : f32 to vector<8x96xf32>
    %747 = arith.addf %746, %745 : vector<8x96xf32>
    %748 = arith.divf %746, %747 : vector<8x96xf32>
    %749 = vector.extract_strided_slice %748 {offsets = [0, 0], sizes = [8, 32], strides = [1, 1]} : vector<8x96xf32> to vector<8x32xf32>
    %750 = vector.extract_strided_slice %748 {offsets = [0, 32], sizes = [8, 32], strides = [1, 1]} : vector<8x96xf32> to vector<8x32xf32>
    %751 = vector.extract_strided_slice %748 {offsets = [0, 64], sizes = [8, 32], strides = [1, 1]} : vector<8x96xf32> to vector<8x32xf32>
    %752 = vector.extract_strided_slice %742 {offsets = [0, 96], sizes = [8, 32], strides = [1, 1]} : vector<8x128xf32> to vector<8x32xf32>
    %753 = math.tanh %752 : vector<8x32xf32>
    %754 = arith.mulf %750, %647 : vector<8x32xf32>
    %755 = arith.mulf %749, %753 : vector<8x32xf32>
    %756 = arith.addf %754, %755 : vector<8x32xf32>
    %757 = math.tanh %756 : vector<8x32xf32>
    %758 = arith.mulf %751, %757 : vector<8x32xf32>
    %759 = arith.truncf %758 : vector<8x32xf32> to vector<8x32xbf16>
    %cst_134 = arith.constant dense<0.000000e+00> : vector<8x128xf32>
    %760 = tpu.matmul %759, %3, %cst_134 {dimension_numbers = #tpu.dot_dimension_numbers<[1], [0], [0], [1], [0, 0, 1, 1], [], []>} : vector<8x32xbf16>, vector<32x128xbf16>, vector<8x128xf32> -> vector<8x128xf32>
    %761 = arith.truncf %671 : vector<8x32xf32> to vector<8x32xbf16>
    %cst_135 = arith.constant dense<0.000000e+00> : vector<8x128xf32>
    %762 = tpu.matmul %761, %8, %cst_135 {dimension_numbers = #tpu.dot_dimension_numbers<[1], [0], [0], [1], [0, 0, 1, 1], [], []>} : vector<8x32xbf16>, vector<32x128xbf16>, vector<8x128xf32> -> vector<8x128xf32>
    %763 = arith.addf %760, %762 : vector<8x128xf32>
    %764 = arith.addf %763, %18 : vector<8x128xf32>
    %765 = vector.extract_strided_slice %764 {offsets = [0, 0], sizes = [8, 96], strides = [1, 1]} : vector<8x128xf32> to vector<8x96xf32>
    %766 = arith.negf %765 : vector<8x96xf32>
    %767 = math.exp %766 : vector<8x96xf32>
    %cst_136 = arith.constant 1.000000e+00 : f32
    %768 = vector.broadcast %cst_136 : f32 to vector<8x96xf32>
    %769 = arith.addf %768, %767 : vector<8x96xf32>
    %770 = arith.divf %768, %769 : vector<8x96xf32>
    %771 = vector.extract_strided_slice %770 {offsets = [0, 0], sizes = [8, 32], strides = [1, 1]} : vector<8x96xf32> to vector<8x32xf32>
    %772 = vector.extract_strided_slice %770 {offsets = [0, 32], sizes = [8, 32], strides = [1, 1]} : vector<8x96xf32> to vector<8x32xf32>
    %773 = vector.extract_strided_slice %770 {offsets = [0, 64], sizes = [8, 32], strides = [1, 1]} : vector<8x96xf32> to vector<8x32xf32>
    %774 = vector.extract_strided_slice %764 {offsets = [0, 96], sizes = [8, 32], strides = [1, 1]} : vector<8x128xf32> to vector<8x32xf32>
    %775 = math.tanh %774 : vector<8x32xf32>
    %776 = arith.mulf %772, %669 : vector<8x32xf32>
    %777 = arith.mulf %771, %775 : vector<8x32xf32>
    %778 = arith.addf %776, %777 : vector<8x32xf32>
    %779 = math.tanh %778 : vector<8x32xf32>
    %780 = arith.mulf %773, %779 : vector<8x32xf32>
    %781 = arith.truncf %780 : vector<8x32xf32> to vector<8x32xbf16>
    %cst_137 = arith.constant dense<0.000000e+00> : vector<8x128xf32>
    %782 = tpu.matmul %781, %4, %cst_137 {dimension_numbers = #tpu.dot_dimension_numbers<[1], [0], [0], [1], [0, 0, 1, 1], [], []>} : vector<8x32xbf16>, vector<32x128xbf16>, vector<8x128xf32> -> vector<8x128xf32>
    %783 = arith.truncf %693 : vector<8x32xf32> to vector<8x32xbf16>
    %cst_138 = arith.constant dense<0.000000e+00> : vector<8x128xf32>
    %784 = tpu.matmul %783, %9, %cst_138 {dimension_numbers = #tpu.dot_dimension_numbers<[1], [0], [0], [1], [0, 0, 1, 1], [], []>} : vector<8x32xbf16>, vector<32x128xbf16>, vector<8x128xf32> -> vector<8x128xf32>
    %785 = arith.addf %782, %784 : vector<8x128xf32>
    %786 = arith.addf %785, %21 : vector<8x128xf32>
    %787 = vector.extract_strided_slice %786 {offsets = [0, 0], sizes = [8, 96], strides = [1, 1]} : vector<8x128xf32> to vector<8x96xf32>
    %788 = arith.negf %787 : vector<8x96xf32>
    %789 = math.exp %788 : vector<8x96xf32>
    %cst_139 = arith.constant 1.000000e+00 : f32
    %790 = vector.broadcast %cst_139 : f32 to vector<8x96xf32>
    %791 = arith.addf %790, %789 : vector<8x96xf32>
    %792 = arith.divf %790, %791 : vector<8x96xf32>
    %793 = vector.extract_strided_slice %792 {offsets = [0, 0], sizes = [8, 32], strides = [1, 1]} : vector<8x96xf32> to vector<8x32xf32>
    %794 = vector.extract_strided_slice %792 {offsets = [0, 32], sizes = [8, 32], strides = [1, 1]} : vector<8x96xf32> to vector<8x32xf32>
    %795 = vector.extract_strided_slice %792 {offsets = [0, 64], sizes = [8, 32], strides = [1, 1]} : vector<8x96xf32> to vector<8x32xf32>
    %796 = vector.extract_strided_slice %786 {offsets = [0, 96], sizes = [8, 32], strides = [1, 1]} : vector<8x128xf32> to vector<8x32xf32>
    %797 = math.tanh %796 : vector<8x32xf32>
    %798 = arith.mulf %794, %691 : vector<8x32xf32>
    %799 = arith.mulf %793, %797 : vector<8x32xf32>
    %800 = arith.addf %798, %799 : vector<8x32xf32>
    %801 = math.tanh %800 : vector<8x32xf32>
    %802 = arith.mulf %795, %801 : vector<8x32xf32>
    %803 = vector.extract_strided_slice %29 {offsets = [0, 7, 0], sizes = [8, 1, 128], strides = [1, 1, 1]} : vector<8x8x128xf32> to vector<8x1x128xf32>
    %804 = vector.shape_cast %803 : vector<8x1x128xf32> to vector<8x128xf32>
    %805 = arith.truncf %714 : vector<8x32xf32> to vector<8x32xbf16>
    %cst_140 = arith.constant dense<0.000000e+00> : vector<8x128xf32>
    %806 = tpu.matmul %805, %5, %cst_140 {dimension_numbers = #tpu.dot_dimension_numbers<[1], [0], [0], [1], [0, 0, 1, 1], [], []>} : vector<8x32xbf16>, vector<32x128xbf16>, vector<8x128xf32> -> vector<8x128xf32>
    %807 = arith.addf %804, %806 : vector<8x128xf32>
    %808 = vector.extract_strided_slice %807 {offsets = [0, 0], sizes = [8, 96], strides = [1, 1]} : vector<8x128xf32> to vector<8x96xf32>
    %809 = arith.negf %808 : vector<8x96xf32>
    %810 = math.exp %809 : vector<8x96xf32>
    %cst_141 = arith.constant 1.000000e+00 : f32
    %811 = vector.broadcast %cst_141 : f32 to vector<8x96xf32>
    %812 = arith.addf %811, %810 : vector<8x96xf32>
    %813 = arith.divf %811, %812 : vector<8x96xf32>
    %814 = vector.extract_strided_slice %813 {offsets = [0, 0], sizes = [8, 32], strides = [1, 1]} : vector<8x96xf32> to vector<8x32xf32>
    %815 = vector.extract_strided_slice %813 {offsets = [0, 32], sizes = [8, 32], strides = [1, 1]} : vector<8x96xf32> to vector<8x32xf32>
    %816 = vector.extract_strided_slice %813 {offsets = [0, 64], sizes = [8, 32], strides = [1, 1]} : vector<8x96xf32> to vector<8x32xf32>
    %817 = vector.extract_strided_slice %807 {offsets = [0, 96], sizes = [8, 32], strides = [1, 1]} : vector<8x128xf32> to vector<8x32xf32>
    %818 = math.tanh %817 : vector<8x32xf32>
    %819 = arith.mulf %815, %712 : vector<8x32xf32>
    %820 = arith.mulf %814, %818 : vector<8x32xf32>
    %821 = arith.addf %819, %820 : vector<8x32xf32>
    %822 = math.tanh %821 : vector<8x32xf32>
    %823 = arith.mulf %816, %822 : vector<8x32xf32>
    %824 = arith.truncf %823 : vector<8x32xf32> to vector<8x32xbf16>
    %cst_142 = arith.constant dense<0.000000e+00> : vector<8x128xf32>
    %825 = tpu.matmul %824, %1, %cst_142 {dimension_numbers = #tpu.dot_dimension_numbers<[1], [0], [0], [1], [0, 0, 1, 1], [], []>} : vector<8x32xbf16>, vector<32x128xbf16>, vector<8x128xf32> -> vector<8x128xf32>
    %826 = arith.truncf %736 : vector<8x32xf32> to vector<8x32xbf16>
    %cst_143 = arith.constant dense<0.000000e+00> : vector<8x128xf32>
    %827 = tpu.matmul %826, %6, %cst_143 {dimension_numbers = #tpu.dot_dimension_numbers<[1], [0], [0], [1], [0, 0, 1, 1], [], []>} : vector<8x32xbf16>, vector<32x128xbf16>, vector<8x128xf32> -> vector<8x128xf32>
    %828 = arith.addf %825, %827 : vector<8x128xf32>
    %829 = arith.addf %828, %12 : vector<8x128xf32>
    %830 = vector.extract_strided_slice %829 {offsets = [0, 0], sizes = [8, 96], strides = [1, 1]} : vector<8x128xf32> to vector<8x96xf32>
    %831 = arith.negf %830 : vector<8x96xf32>
    %832 = math.exp %831 : vector<8x96xf32>
    %cst_144 = arith.constant 1.000000e+00 : f32
    %833 = vector.broadcast %cst_144 : f32 to vector<8x96xf32>
    %834 = arith.addf %833, %832 : vector<8x96xf32>
    %835 = arith.divf %833, %834 : vector<8x96xf32>
    %836 = vector.extract_strided_slice %835 {offsets = [0, 0], sizes = [8, 32], strides = [1, 1]} : vector<8x96xf32> to vector<8x32xf32>
    %837 = vector.extract_strided_slice %835 {offsets = [0, 32], sizes = [8, 32], strides = [1, 1]} : vector<8x96xf32> to vector<8x32xf32>
    %838 = vector.extract_strided_slice %835 {offsets = [0, 64], sizes = [8, 32], strides = [1, 1]} : vector<8x96xf32> to vector<8x32xf32>
    %839 = vector.extract_strided_slice %829 {offsets = [0, 96], sizes = [8, 32], strides = [1, 1]} : vector<8x128xf32> to vector<8x32xf32>
    %840 = math.tanh %839 : vector<8x32xf32>
    %841 = arith.mulf %837, %734 : vector<8x32xf32>
    %842 = arith.mulf %836, %840 : vector<8x32xf32>
    %843 = arith.addf %841, %842 : vector<8x32xf32>
    %844 = math.tanh %843 : vector<8x32xf32>
    %845 = arith.mulf %838, %844 : vector<8x32xf32>
    %846 = arith.truncf %845 : vector<8x32xf32> to vector<8x32xbf16>
    %cst_145 = arith.constant dense<0.000000e+00> : vector<8x128xf32>
    %847 = tpu.matmul %846, %2, %cst_145 {dimension_numbers = #tpu.dot_dimension_numbers<[1], [0], [0], [1], [0, 0, 1, 1], [], []>} : vector<8x32xbf16>, vector<32x128xbf16>, vector<8x128xf32> -> vector<8x128xf32>
    %848 = arith.truncf %758 : vector<8x32xf32> to vector<8x32xbf16>
    %cst_146 = arith.constant dense<0.000000e+00> : vector<8x128xf32>
    %849 = tpu.matmul %848, %7, %cst_146 {dimension_numbers = #tpu.dot_dimension_numbers<[1], [0], [0], [1], [0, 0, 1, 1], [], []>} : vector<8x32xbf16>, vector<32x128xbf16>, vector<8x128xf32> -> vector<8x128xf32>
    %850 = arith.addf %847, %849 : vector<8x128xf32>
    %851 = arith.addf %850, %15 : vector<8x128xf32>
    %852 = vector.extract_strided_slice %851 {offsets = [0, 0], sizes = [8, 96], strides = [1, 1]} : vector<8x128xf32> to vector<8x96xf32>
    %853 = arith.negf %852 : vector<8x96xf32>
    %854 = math.exp %853 : vector<8x96xf32>
    %cst_147 = arith.constant 1.000000e+00 : f32
    %855 = vector.broadcast %cst_147 : f32 to vector<8x96xf32>
    %856 = arith.addf %855, %854 : vector<8x96xf32>
    %857 = arith.divf %855, %856 : vector<8x96xf32>
    %858 = vector.extract_strided_slice %857 {offsets = [0, 0], sizes = [8, 32], strides = [1, 1]} : vector<8x96xf32> to vector<8x32xf32>
    %859 = vector.extract_strided_slice %857 {offsets = [0, 32], sizes = [8, 32], strides = [1, 1]} : vector<8x96xf32> to vector<8x32xf32>
    %860 = vector.extract_strided_slice %857 {offsets = [0, 64], sizes = [8, 32], strides = [1, 1]} : vector<8x96xf32> to vector<8x32xf32>
    %861 = vector.extract_strided_slice %851 {offsets = [0, 96], sizes = [8, 32], strides = [1, 1]} : vector<8x128xf32> to vector<8x32xf32>
    %862 = math.tanh %861 : vector<8x32xf32>
    %863 = arith.mulf %859, %756 : vector<8x32xf32>
    %864 = arith.mulf %858, %862 : vector<8x32xf32>
    %865 = arith.addf %863, %864 : vector<8x32xf32>
    %866 = math.tanh %865 : vector<8x32xf32>
    %867 = arith.mulf %860, %866 : vector<8x32xf32>
    %868 = arith.truncf %867 : vector<8x32xf32> to vector<8x32xbf16>
    %cst_148 = arith.constant dense<0.000000e+00> : vector<8x128xf32>
    %869 = tpu.matmul %868, %3, %cst_148 {dimension_numbers = #tpu.dot_dimension_numbers<[1], [0], [0], [1], [0, 0, 1, 1], [], []>} : vector<8x32xbf16>, vector<32x128xbf16>, vector<8x128xf32> -> vector<8x128xf32>
    %870 = arith.truncf %780 : vector<8x32xf32> to vector<8x32xbf16>
    %cst_149 = arith.constant dense<0.000000e+00> : vector<8x128xf32>
    %871 = tpu.matmul %870, %8, %cst_149 {dimension_numbers = #tpu.dot_dimension_numbers<[1], [0], [0], [1], [0, 0, 1, 1], [], []>} : vector<8x32xbf16>, vector<32x128xbf16>, vector<8x128xf32> -> vector<8x128xf32>
    %872 = arith.addf %869, %871 : vector<8x128xf32>
    %873 = arith.addf %872, %18 : vector<8x128xf32>
    %874 = vector.extract_strided_slice %873 {offsets = [0, 0], sizes = [8, 96], strides = [1, 1]} : vector<8x128xf32> to vector<8x96xf32>
    %875 = arith.negf %874 : vector<8x96xf32>
    %876 = math.exp %875 : vector<8x96xf32>
    %cst_150 = arith.constant 1.000000e+00 : f32
    %877 = vector.broadcast %cst_150 : f32 to vector<8x96xf32>
    %878 = arith.addf %877, %876 : vector<8x96xf32>
    %879 = arith.divf %877, %878 : vector<8x96xf32>
    %880 = vector.extract_strided_slice %879 {offsets = [0, 0], sizes = [8, 32], strides = [1, 1]} : vector<8x96xf32> to vector<8x32xf32>
    %881 = vector.extract_strided_slice %879 {offsets = [0, 32], sizes = [8, 32], strides = [1, 1]} : vector<8x96xf32> to vector<8x32xf32>
    %882 = vector.extract_strided_slice %879 {offsets = [0, 64], sizes = [8, 32], strides = [1, 1]} : vector<8x96xf32> to vector<8x32xf32>
    %883 = vector.extract_strided_slice %873 {offsets = [0, 96], sizes = [8, 32], strides = [1, 1]} : vector<8x128xf32> to vector<8x32xf32>
    %884 = math.tanh %883 : vector<8x32xf32>
    %885 = arith.mulf %881, %778 : vector<8x32xf32>
    %886 = arith.mulf %880, %884 : vector<8x32xf32>
    %887 = arith.addf %885, %886 : vector<8x32xf32>
    %888 = math.tanh %887 : vector<8x32xf32>
    %889 = arith.mulf %882, %888 : vector<8x32xf32>
    %890 = arith.truncf %889 : vector<8x32xf32> to vector<8x32xbf16>
    %cst_151 = arith.constant dense<0.000000e+00> : vector<8x128xf32>
    %891 = tpu.matmul %890, %4, %cst_151 {dimension_numbers = #tpu.dot_dimension_numbers<[1], [0], [0], [1], [0, 0, 1, 1], [], []>} : vector<8x32xbf16>, vector<32x128xbf16>, vector<8x128xf32> -> vector<8x128xf32>
    %892 = arith.truncf %802 : vector<8x32xf32> to vector<8x32xbf16>
    %cst_152 = arith.constant dense<0.000000e+00> : vector<8x128xf32>
    %893 = tpu.matmul %892, %9, %cst_152 {dimension_numbers = #tpu.dot_dimension_numbers<[1], [0], [0], [1], [0, 0, 1, 1], [], []>} : vector<8x32xbf16>, vector<32x128xbf16>, vector<8x128xf32> -> vector<8x128xf32>
    %894 = arith.addf %891, %893 : vector<8x128xf32>
    %895 = arith.addf %894, %21 : vector<8x128xf32>
    %896 = vector.extract_strided_slice %895 {offsets = [0, 0], sizes = [8, 96], strides = [1, 1]} : vector<8x128xf32> to vector<8x96xf32>
    %897 = arith.negf %896 : vector<8x96xf32>
    %898 = math.exp %897 : vector<8x96xf32>
    %cst_153 = arith.constant 1.000000e+00 : f32
    %899 = vector.broadcast %cst_153 : f32 to vector<8x96xf32>
    %900 = arith.addf %899, %898 : vector<8x96xf32>
    %901 = arith.divf %899, %900 : vector<8x96xf32>
    %902 = vector.extract_strided_slice %901 {offsets = [0, 0], sizes = [8, 32], strides = [1, 1]} : vector<8x96xf32> to vector<8x32xf32>
    %903 = vector.extract_strided_slice %901 {offsets = [0, 32], sizes = [8, 32], strides = [1, 1]} : vector<8x96xf32> to vector<8x32xf32>
    %904 = vector.extract_strided_slice %901 {offsets = [0, 64], sizes = [8, 32], strides = [1, 1]} : vector<8x96xf32> to vector<8x32xf32>
    %905 = vector.extract_strided_slice %895 {offsets = [0, 96], sizes = [8, 32], strides = [1, 1]} : vector<8x128xf32> to vector<8x32xf32>
    %906 = math.tanh %905 : vector<8x32xf32>
    %907 = arith.mulf %903, %800 : vector<8x32xf32>
    %908 = arith.mulf %902, %906 : vector<8x32xf32>
    %909 = arith.addf %907, %908 : vector<8x32xf32>
    %910 = math.tanh %909 : vector<8x32xf32>
    %911 = arith.mulf %904, %910 : vector<8x32xf32>
    %cst_154 = arith.constant 0.000000e+00 : f32
    %912 = vector.broadcast %cst_154 : f32 to vector<8x32xf32>
    %913 = arith.maximumf %911, %912 : vector<8x32xf32>
    %914 = arith.truncf %913 : vector<8x32xf32> to vector<8x32xbf16>
    %c0_155 = arith.constant 0 : index
    %c0_156 = arith.constant 0 : index
    %915 = vector.load %arg16[%c0_155, %c0_156] : memref<32x128xbf16, #tpu.memory_space<vmem>>, vector<32x128xbf16>
    %cst_157 = arith.constant dense<0.000000e+00> : vector<8x128xf32>
    %916 = tpu.matmul %914, %915, %cst_157 {dimension_numbers = #tpu.dot_dimension_numbers<[1], [0], [0], [1], [0, 0, 1, 1], [], []>} : vector<8x32xbf16>, vector<32x128xbf16>, vector<8x128xf32> -> vector<8x128xf32>
    %c0_158 = arith.constant 0 : index
    %c0_159 = arith.constant 0 : index
    %917 = vector.load %arg17[%c0_158, %c0_159] : memref<1x128xf32, #tpu.memory_space<vmem>>, vector<1x128xf32>
    %918 = vector.broadcast %917 : vector<1x128xf32> to vector<8x128xf32>
    %919 = arith.addf %916, %918 : vector<8x128xf32>
    %cst_160 = arith.constant 0.000000e+00 : f32
    %920 = vector.broadcast %cst_160 : f32 to vector<8x128xf32>
    %921 = arith.maximumf %919, %920 : vector<8x128xf32>
    %922 = arith.truncf %921 : vector<8x128xf32> to vector<8x128xbf16>
    %c0_161 = arith.constant 0 : index
    %c0_162 = arith.constant 0 : index
    %923 = vector.load %arg18[%c0_161, %c0_162] : memref<128x12xbf16, #tpu.memory_space<vmem>>, vector<128x12xbf16>
    %cst_163 = arith.constant dense<0.000000e+00> : vector<8x12xf32>
    %924 = tpu.matmul %922, %923, %cst_163 {dimension_numbers = #tpu.dot_dimension_numbers<[1], [0], [0], [1], [0, 0, 1, 1], [], []>} : vector<8x128xbf16>, vector<128x12xbf16>, vector<8x12xf32> -> vector<8x12xf32>
    %c0_164 = arith.constant 0 : index
    %c0_165 = arith.constant 0 : index
    %925 = vector.load %arg19[%c0_164, %c0_165] : memref<1x12xf32, #tpu.memory_space<vmem>>, vector<1x12xf32>
    %926 = vector.broadcast %925 : vector<1x12xf32> to vector<8x12xf32>
    %927 = arith.addf %924, %926 : vector<8x12xf32>
    %c0_166 = arith.constant 0 : index
    %c0_167 = arith.constant 0 : index
    %928 = vector.load %arg20[%c0_166, %c0_167] : memref<8x12xf32, #tpu.memory_space<vmem>>, vector<8x12xf32>
    tpu.vector_store %arg20[%c0_166, %c0_167], %927 {strides = array<i32>} : memref<8x12xf32, #tpu.memory_space<vmem>>, vector<8x12xf32>,
    return
  }
}

</mosaic_0001>

<llo_original>
// kernel: lstm_model_forward.1
$region0: #{lstm_model_forward.1}
  #allocation0 [shape = 'u32[]', space=smem, size = 0x4, offset = 0x4, fixed_abs, tag = 'smem constant byte address 0x4 - core index']
  #allocation1 [shape = 'u32[144,128]{1,0:T(1,128)}', space=vmem, size = 0x12000, scoped, tag = 'internal scratch']
  %s0 = inlined_call_operand.vmem [shape: f32[8,8,8], index: 0, kind: input, shape index: {}]
  %s1 = inlined_call_operand.hbm [shape: bf16[8,128], index: 1, kind: input, shape index: {}]
  %s2 = inlined_call_operand.vmem [shape: bf16[32,128], index: 2, kind: input, shape index: {}]
  %s3 = inlined_call_operand.vmem [shape: bf16[32,128], index: 3, kind: input, shape index: {}]
  %s4 = inlined_call_operand.vmem [shape: bf16[32,128], index: 4, kind: input, shape index: {}]
  %s5 = inlined_call_operand.vmem [shape: bf16[32,128], index: 5, kind: input, shape index: {}]
  %s6 = inlined_call_operand.hbm [shape: bf16[32,128], index: 6, kind: input, shape index: {}]
  %s7 = inlined_call_operand.hbm [shape: bf16[32,128], index: 7, kind: input, shape index: {}]
  %s8 = inlined_call_operand.hbm [shape: bf16[32,128], index: 8, kind: input, shape index: {}]
  %s9 = inlined_call_operand.hbm [shape: bf16[32,128], index: 9, kind: input, shape index: {}]
  %s10 = inlined_call_operand.hbm [shape: bf16[32,128], index: 10, kind: input, shape index: {}]
  %s11 = inlined_call_operand.hbm [shape: f32[1,128], index: 11, kind: input, shape index: {}]
  %s12 = inlined_call_operand.hbm [shape: f32[1,128], index: 12, kind: input, shape index: {}]
  %s13 = inlined_call_operand.hbm [shape: f32[1,128], index: 13, kind: input, shape index: {}]
  %s14 = inlined_call_operand.hbm [shape: f32[1,128], index: 14, kind: input, shape index: {}]
  %s15 = inlined_call_operand.hbm [shape: f32[1,128], index: 15, kind: input, shape index: {}]
  %s16 = inlined_call_operand.hbm [shape: bf16[32,128], index: 16, kind: input, shape index: {}]
  %s17 = inlined_call_operand.hbm [shape: f32[1,128], index: 17, kind: input, shape index: {}]
  %s18 = inlined_call_operand.vmem [shape: bf16[128,12], index: 18, kind: input, shape index: {}]
  %s19 = inlined_call_operand.hbm [shape: f32[1,12], index: 19, kind: input, shape index: {}]
  %s20 = inlined_call_operand.hbm [shape: f32[8,12], index: 20, kind: output, shape index: {}]
  %s21 = sld [smem:[#allocation0]]
  $region146: #{lstm_model_forward.1} parent=0
    _
  %s23 = ssub.s32 1, %s21
  %s24 = scalar_select 0, %s23, %s21
  $region1: #{lstm_model_forward.1} parent=0
    #allocation2 [shape = 'u8[2048]{0}', space=vmem, size = 0x800, scoped, tag = 'input window, operand 1, single buffered']
    #allocation3 [shape = 's32[1]{0}', space=sflag, size = 0x4, scoped, tag = 'scoped memory for lstm_model_forward.1']
    #allocation4 [shape = 's32[1]{0}', space=sflag, size = 0x4, scoped, tag = 'scoped memory for lstm_model_forward.1']
    #allocation5 [shape = 'u8[8192]{0}', space=vmem, size = 0x2000, scoped, tag = 'input window, operand 6, single buffered']
    #allocation6 [shape = 's32[1]{0}', space=sflag, size = 0x4, scoped, tag = 'scoped memory for lstm_model_forward.1']
    #allocation7 [shape = 'u8[8192]{0}', space=vmem, size = 0x2000, scoped, tag = 'input window, operand 7, single buffered']
    #allocation8 [shape = 'u8[8192]{0}', space=vmem, size = 0x2000, scoped, tag = 'input window, operand 8, single buffered']
    #allocation9 [shape = 's32[1]{0}', space=sflag, size = 0x4, scoped, tag = 'scoped memory for lstm_model_forward.1']
    #allocation10 [shape = 'u8[8192]{0}', space=vmem, size = 0x2000, scoped, tag = 'input window, operand 9, single buffered']
    #allocation11 [shape = 'u8[8192]{0}', space=vmem, size = 0x2000, scoped, tag = 'input window, operand 10, single buffered']
    #allocation12 [shape = 's32[1]{0}', space=sflag, size = 0x4, scoped, tag = 'scoped memory for lstm_model_forward.1']
    #allocation13 [shape = 'u8[512]{0}', space=vmem, size = 0x400, scoped, tag = 'input window, operand 11, single buffered']
    #allocation14 [shape = 'u8[512]{0}', space=vmem, size = 0x400, scoped, tag = 'input window, operand 12, single buffered']
    #allocation15 [shape = 's32[1]{0}', space=sflag, size = 0x4, scoped, tag = 'scoped memory for lstm_model_forward.1']
    #allocation16 [shape = 'u8[512]{0}', space=vmem, size = 0x400, scoped, tag = 'input window, operand 13, single buffered']
    #allocation17 [shape = 'u8[512]{0}', space=vmem, size = 0x400, scoped, tag = 'input window, operand 14, single buffered']
    #allocation18 [shape = 's32[1]{0}', space=sflag, size = 0x4, scoped, tag = 'scoped memory for lstm_model_forward.1']
    #allocation19 [shape = 'u8[512]{0}', space=vmem, size = 0x400, scoped, tag = 'input window, operand 15, single buffered']
    #allocation20 [shape = 'u8[8192]{0}', space=vmem, size = 0x2000, scoped, tag = 'input window, operand 16, single buffered']
    #allocation21 [shape = 's32[1]{0}', space=sflag, size = 0x4, scoped, tag = 'scoped memory for lstm_model_forward.1']
    #allocation22 [shape = 'u8[512]{0}', space=vmem, size = 0x400, scoped, tag = 'input window, operand 17, single buffered']
    #allocation23 [shape = 'u8[512]{0}', space=vmem, size = 0x400, scoped, tag = 'input window, operand 19, single buffered']
    #allocation24 [shape = 's32[1]{0}', space=sflag, size = 0x4, scoped, tag = 'scoped memory for lstm_model_forward.1']
    #allocation25 [shape = 'u8[4096]{0}', space=vmem, size = 0x1000, scoped, tag = 'output window, operand 0, single buffered']
    %25 = vsyncpa [#allocation3], 0
    %26 = vsyncpa [#allocation6], 0
    %27 = vsyncpa [#allocation9], 0
    %28 = vsyncpa [#allocation12], 0
    %29 = vsyncpa [#allocation15], 0
    %30 = vsyncpa [#allocation18], 0
    %31 = vsyncpa [#allocation21], 0
    %32 = vsyncpa [#allocation24], 0
    %33 = vsyncpa [#allocation4], 0
    // Predicated region
    $region2: #{lstm_model_forward.1} parent=1 // pred_check
      _
    $region3: #{lstm_model_forward.1} parent=1 // pred_check_branch
      %35 = sbr.rel (0) target = $region5
    $region4: #{lstm_model_forward.1} parent=1 // pred_region
      _
    $region5: #{lstm_model_forward.1} parent=1 // pred_fallthru
      _
    // Predicated region
    $region6: #{lstm_model_forward.1} parent=1 // pred_check
      _
    $region7: #{lstm_model_forward.1} parent=1 // pred_check_branch
      %37 = sbr.rel (0) target = $region9
    $region8: #{lstm_model_forward.1} parent=1 // pred_region
      %s39 = ssub.s32 64, 64
      %40 = vsyncadd [#allocation3], %s39
      %s42 = sshll.u32 [#allocation2], 4
      %s43 = int_to_ptr.vmem [resolvable:$true] %s42
      %45 = dma.hbm_to_vmem [thread:$0]  %s1, 64, %s43, [#allocation3]
    $region9: #{lstm_model_forward.1} parent=1 // pred_fallthru
      _
    // Predicated region
    $region10: #{lstm_model_forward.1} parent=1 // pred_check
      _
    $region11: #{lstm_model_forward.1} parent=1 // pred_check_branch
      %47 = sbr.rel (0) target = $region13
    $region12: #{lstm_model_forward.1} parent=1 // pred_region
      _
    $region13: #{lstm_model_forward.1} parent=1 // pred_fallthru
      _
    // Predicated region
    $region14: #{lstm_model_forward.1} parent=1 // pred_check
      _
    $region15: #{lstm_model_forward.1} parent=1 // pred_check_branch
      %49 = sbr.rel (0) target = $region17
    $region16: #{lstm_model_forward.1} parent=1 // pred_region
      _
    $region17: #{lstm_model_forward.1} parent=1 // pred_fallthru
      _
    // Predicated region
    $region18: #{lstm_model_forward.1} parent=1 // pred_check
      _
    $region19: #{lstm_model_forward.1} parent=1 // pred_check_branch
      %51 = sbr.rel (0) target = $region21
    $region20: #{lstm_model_forward.1} parent=1 // pred_region
      _
    $region21: #{lstm_model_forward.1} parent=1 // pred_fallthru
      _
    // Predicated region
    $region22: #{lstm_model_forward.1} parent=1 // pred_check
      _
    $region23: #{lstm_model_forward.1} parent=1 // pred_check_branch
      %53 = sbr.rel (0) target = $region25
    $region24: #{lstm_model_forward.1} parent=1 // pred_region
      _
    $region25: #{lstm_model_forward.1} parent=1 // pred_fallthru
      _
    // Predicated region
    $region26: #{lstm_model_forward.1} parent=1 // pred_check
      _
    $region27: #{lstm_model_forward.1} parent=1 // pred_check_branch
      %55 = sbr.rel (0) target = $region29
    $region28: #{lstm_model_forward.1} parent=1 // pred_region
      %s57 = ssub.s32 256, 256
      %58 = vsyncadd [#allocation6], %s57
      %s59 = sshll.u32 [#allocation5], 4
      %s60 = int_to_ptr.vmem [resolvable:$true] %s59
      %65 = dma.hbm_to_vmem [thread:$0]  %s6, 256, %s60, [#allocation6], 64, 64, 4
    $region29: #{lstm_model_forward.1} parent=1 // pred_fallthru
      _
    // Predicated region
    $region30: #{lstm_model_forward.1} parent=1 // pred_check
      _
    $region31: #{lstm_model_forward.1} parent=1 // pred_check_branch
      %67 = sbr.rel (0) target = $region33
    $region32: #{lstm_model_forward.1} parent=1 // pred_region
      %s69 = ssub.s32 256, 256
      %70 = vsyncadd [#allocation6], %s69
      %s71 = sshll.u32 [#allocation7], 4
      %s72 = int_to_ptr.vmem [resolvable:$true] %s71
      %77 = dma.hbm_to_vmem [thread:$0]  %s7, 256, %s72, [#allocation6], 64, 64, 4
    $region33: #{lstm_model_forward.1} parent=1 // pred_fallthru
      _
    // Predicated region
    $region34: #{lstm_model_forward.1} parent=1 // pred_check
      _
    $region35: #{lstm_model_forward.1} parent=1 // pred_check_branch
      %79 = sbr.rel (0) target = $region37
    $region36: #{lstm_model_forward.1} parent=1 // pred_region
      %s81 = ssub.s32 256, 256
      %82 = vsyncadd [#allocation9], %s81
      %s83 = sshll.u32 [#allocation8], 4
      %s84 = int_to_ptr.vmem [resolvable:$true] %s83
      %89 = dma.hbm_to_vmem [thread:$0]  %s8, 256, %s84, [#allocation9], 64, 64, 4
    $region37: #{lstm_model_forward.1} parent=1 // pred_fallthru
      _
    // Predicated region
    $region38: #{lstm_model_forward.1} parent=1 // pred_check
      _
    $region39: #{lstm_model_forward.1} parent=1 // pred_check_branch
      %91 = sbr.rel (0) target = $region41
    $region40: #{lstm_model_forward.1} parent=1 // pred_region
      %s93 = ssub.s32 256, 256
      %94 = vsyncadd [#allocation9], %s93
      %s95 = sshll.u32 [#allocation10], 4
      %s96 = int_to_ptr.vmem [resolvable:$true] %s95
      %101 = dma.hbm_to_vmem [thread:$0]  %s9, 256, %s96, [#allocation9], 64, 64, 4
    $region41: #{lstm_model_forward.1} parent=1 // pred_fallthru
      _
    // Predicated region
    $region42: #{lstm_model_forward.1} parent=1 // pred_check
      _
    $region43: #{lstm_model_forward.1} parent=1 // pred_check_branch
      %103 = sbr.rel (0) target = $region45
    $region44: #{lstm_model_forward.1} parent=1 // pred_region
      %s105 = ssub.s32 256, 256
      %106 = vsyncadd [#allocation12], %s105
      %s107 = sshll.u32 [#allocation11], 4
      %s108 = int_to_ptr.vmem [resolvable:$true] %s107
      %113 = dma.hbm_to_vmem [thread:$0]  %s10, 256, %s108, [#allocation12], 64, 64, 4
    $region45: #{lstm_model_forward.1} parent=1 // pred_fallthru
      _
    // Predicated region
    $region46: #{lstm_model_forward.1} parent=1 // pred_check
      _
    $region47: #{lstm_model_forward.1} parent=1 // pred_check_branch
      %115 = sbr.rel (0) target = $region49
    $region48: #{lstm_model_forward.1} parent=1 // pred_region
      %s117 = ssub.s32 16, 16
      %118 = vsyncadd [#allocation12], %s117
      %s120 = sshll.u32 [#allocation13], 4
      %s121 = int_to_ptr.vmem [resolvable:$true] %s120
      %123 = dma.hbm_to_vmem [thread:$0]  %s11, 16, %s121, [#allocation12]
    $region49: #{lstm_model_forward.1} parent=1 // pred_fallthru
      _
    // Predicated region
    $region50: #{lstm_model_forward.1} parent=1 // pred_check
      _
    $region51: #{lstm_model_forward.1} parent=1 // pred_check_branch
      %125 = sbr.rel (0) target = $region53
    $region52: #{lstm_model_forward.1} parent=1 // pred_region
      %s127 = ssub.s32 16, 16
      %128 = vsyncadd [#allocation15], %s127
      %s130 = sshll.u32 [#allocation14], 4
      %s131 = int_to_ptr.vmem [resolvable:$true] %s130
      %133 = dma.hbm_to_vmem [thread:$0]  %s12, 16, %s131, [#allocation15]
    $region53: #{lstm_model_forward.1} parent=1 // pred_fallthru
      _
    // Predicated region
    $region54: #{lstm_model_forward.1} parent=1 // pred_check
      _
    $region55: #{lstm_model_forward.1} parent=1 // pred_check_branch
      %135 = sbr.rel (0) target = $region57
    $region56: #{lstm_model_forward.1} parent=1 // pred_region
      %s137 = ssub.s32 16, 16
      %138 = vsyncadd [#allocation15], %s137
      %s140 = sshll.u32 [#allocation16], 4
      %s141 = int_to_ptr.vmem [resolvable:$true] %s140
      %143 = dma.hbm_to_vmem [thread:$0]  %s13, 16, %s141, [#allocation15]
    $region57: #{lstm_model_forward.1} parent=1 // pred_fallthru
      _
    // Predicated region
    $region58: #{lstm_model_forward.1} parent=1 // pred_check
      _
    $region59: #{lstm_model_forward.1} parent=1 // pred_check_branch
      %145 = sbr.rel (0) target = $region61
    $region60: #{lstm_model_forward.1} parent=1 // pred_region
      %s147 = ssub.s32 16, 16
      %148 = vsyncadd [#allocation18], %s147
      %s150 = sshll.u32 [#allocation17], 4
      %s151 = int_to_ptr.vmem [resolvable:$true] %s150
      %153 = dma.hbm_to_vmem [thread:$0]  %s14, 16, %s151, [#allocation18]
    $region61: #{lstm_model_forward.1} parent=1 // pred_fallthru
      _
    // Predicated region
    $region62: #{lstm_model_forward.1} parent=1 // pred_check
      _
    $region63: #{lstm_model_forward.1} parent=1 // pred_check_branch
      %155 = sbr.rel (0) target = $region65
    $region64: #{lstm_model_forward.1} parent=1 // pred_region
      %s157 = ssub.s32 16, 16
      %158 = vsyncadd [#allocation18], %s157
      %s160 = sshll.u32 [#allocation19], 4
      %s161 = int_to_ptr.vmem [resolvable:$true] %s160
      %163 = dma.hbm_to_vmem [thread:$0]  %s15, 16, %s161, [#allocation18]
    $region65: #{lstm_model_forward.1} parent=1 // pred_fallthru
      _
    // Predicated region
    $region66: #{lstm_model_forward.1} parent=1 // pred_check
      _
    $region67: #{lstm_model_forward.1} parent=1 // pred_check_branch
      %165 = sbr.rel (0) target = $region69
    $region68: #{lstm_model_forward.1} parent=1 // pred_region
      %s167 = ssub.s32 256, 256
      %168 = vsyncadd [#allocation21], %s167
      %s169 = sshll.u32 [#allocation20], 4
      %s170 = int_to_ptr.vmem [resolvable:$true] %s169
      %175 = dma.hbm_to_vmem [thread:$0]  %s16, 256, %s170, [#allocation21], 64, 64, 4
    $region69: #{lstm_model_forward.1} parent=1 // pred_fallthru
      _
    // Predicated region
    $region70: #{lstm_model_forward.1} parent=1 // pred_check
      _
    $region71: #{lstm_model_forward.1} parent=1 // pred_check_branch
      %177 = sbr.rel (0) target = $region73
    $region72: #{lstm_model_forward.1} parent=1 // pred_region
      %s179 = ssub.s32 16, 16
      %180 = vsyncadd [#allocation21], %s179
      %s182 = sshll.u32 [#allocation22], 4
      %s183 = int_to_ptr.vmem [resolvable:$true] %s182
      %185 = dma.hbm_to_vmem [thread:$0]  %s17, 16, %s183, [#allocation21]
    $region73: #{lstm_model_forward.1} parent=1 // pred_fallthru
      _
    // Predicated region
    $region74: #{lstm_model_forward.1} parent=1 // pred_check
      _
    $region75: #{lstm_model_forward.1} parent=1 // pred_check_branch
      %187 = sbr.rel (0) target = $region77
    $region76: #{lstm_model_forward.1} parent=1 // pred_region
      _
    $region77: #{lstm_model_forward.1} parent=1 // pred_fallthru
      _
    // Predicated region
    $region78: #{lstm_model_forward.1} parent=1 // pred_check
      _
    $region79: #{lstm_model_forward.1} parent=1 // pred_check_branch
      %189 = sbr.rel (0) target = $region81
    $region80: #{lstm_model_forward.1} parent=1 // pred_region
      %s191 = ssub.s32 16, 16
      %192 = vsyncadd [#allocation24], %s191
      %s194 = sshll.u32 [#allocation23], 4
      %s195 = int_to_ptr.vmem [resolvable:$true] %s194
      %197 = dma.hbm_to_vmem [thread:$0]  %s19, 16, %s195, [#allocation24]
    $region81: #{lstm_model_forward.1} parent=1 // pred_fallthru
      _
    // Predicated region
    $region82: #{lstm_model_forward.1} parent=1 // pred_check
      _
    $region83: #{lstm_model_forward.1} parent=1 // pred_check_branch
      %199 = sbr.rel (0) target = $region85
    $region84: #{lstm_model_forward.1} parent=1 // pred_region
      %200 = dma.done [#allocation3], 64
    $region85: #{lstm_model_forward.1} parent=1 // pred_fallthru
      _
    // Predicated region
    $region86: #{lstm_model_forward.1} parent=1 // pred_check
      _
    $region87: #{lstm_model_forward.1} parent=1 // pred_check_branch
      %202 = sbr.rel (0) target = $region89
    $region88: #{lstm_model_forward.1} parent=1 // pred_region
      %203 = dma.done [#allocation6], 256
    $region89: #{lstm_model_forward.1} parent=1 // pred_fallthru
      _
    // Predicated region
    $region90: #{lstm_model_forward.1} parent=1 // pred_check
      _
    $region91: #{lstm_model_forward.1} parent=1 // pred_check_branch
      %205 = sbr.rel (0) target = $region93
    $region92: #{lstm_model_forward.1} parent=1 // pred_region
      %206 = dma.done [#allocation6], 256
    $region93: #{lstm_model_forward.1} parent=1 // pred_fallthru
      _
    // Predicated region
    $region94: #{lstm_model_forward.1} parent=1 // pred_check
      _
    $region95: #{lstm_model_forward.1} parent=1 // pred_check_branch
      %208 = sbr.rel (0) target = $region97
    $region96: #{lstm_model_forward.1} parent=1 // pred_region
      %209 = dma.done [#allocation9], 256
    $region97: #{lstm_model_forward.1} parent=1 // pred_fallthru
      _
    // Predicated region
    $region98: #{lstm_model_forward.1} parent=1 // pred_check
      _
    $region99: #{lstm_model_forward.1} parent=1 // pred_check_branch
      %211 = sbr.rel (0) target = $region101
    $region100: #{lstm_model_forward.1} parent=1 // pred_region
      %212 = dma.done [#allocation9], 256
    $region101: #{lstm_model_forward.1} parent=1 // pred_fallthru
      _
    // Predicated region
    $region102: #{lstm_model_forward.1} parent=1 // pred_check
      _
    $region103: #{lstm_model_forward.1} parent=1 // pred_check_branch
      %214 = sbr.rel (0) target = $region105
    $region104: #{lstm_model_forward.1} parent=1 // pred_region
      %215 = dma.done [#allocation12], 256
    $region105: #{lstm_model_forward.1} parent=1 // pred_fallthru
      _
    // Predicated region
    $region106: #{lstm_model_forward.1} parent=1 // pred_check
      _
    $region107: #{lstm_model_forward.1} parent=1 // pred_check_branch
      %217 = sbr.rel (0) target = $region109
    $region108: #{lstm_model_forward.1} parent=1 // pred_region
      %218 = dma.done [#allocation12], 16
    $region109: #{lstm_model_forward.1} parent=1 // pred_fallthru
      _
    // Predicated region
    $region110: #{lstm_model_forward.1} parent=1 // pred_check
      _
    $region111: #{lstm_model_forward.1} parent=1 // pred_check_branch
      %220 = sbr.rel (0) target = $region113
    $region112: #{lstm_model_forward.1} parent=1 // pred_region
      %221 = dma.done [#allocation15], 16
    $region113: #{lstm_model_forward.1} parent=1 // pred_fallthru
      _
    // Predicated region
    $region114: #{lstm_model_forward.1} parent=1 // pred_check
      _
    $region115: #{lstm_model_forward.1} parent=1 // pred_check_branch
      %223 = sbr.rel (0) target = $region117
    $region116: #{lstm_model_forward.1} parent=1 // pred_region
      %224 = dma.done [#allocation15], 16
    $region117: #{lstm_model_forward.1} parent=1 // pred_fallthru
      _
    // Predicated region
    $region118: #{lstm_model_forward.1} parent=1 // pred_check
      _
    $region119: #{lstm_model_forward.1} parent=1 // pred_check_branch
      %226 = sbr.rel (0) target = $region121
    $region120: #{lstm_model_forward.1} parent=1 // pred_region
      %227 = dma.done [#allocation18], 16
    $region121: #{lstm_model_forward.1} parent=1 // pred_fallthru
      _
    // Predicated region
    $region122: #{lstm_model_forward.1} parent=1 // pred_check
      _
    $region123: #{lstm_model_forward.1} parent=1 // pred_check_branch
      %229 = sbr.rel (0) target = $region125
    $region124: #{lstm_model_forward.1} parent=1 // pred_region
      %230 = dma.done [#allocation18], 16
    $region125: #{lstm_model_forward.1} parent=1 // pred_fallthru
      _
    // Predicated region
    $region126: #{lstm_model_forward.1} parent=1 // pred_check
      _
    $region127: #{lstm_model_forward.1} parent=1 // pred_check_branch
      %232 = sbr.rel (0) target = $region129
    $region128: #{lstm_model_forward.1} parent=1 // pred_region
      %233 = dma.done [#allocation21], 256
    $region129: #{lstm_model_forward.1} parent=1 // pred_fallthru
      _
    // Predicated region
    $region130: #{lstm_model_forward.1} parent=1 // pred_check
      _
    $region131: #{lstm_model_forward.1} parent=1 // pred_check_branch
      %235 = sbr.rel (0) target = $region133
    $region132: #{lstm_model_forward.1} parent=1 // pred_region
      %236 = dma.done [#allocation21], 16
    $region133: #{lstm_model_forward.1} parent=1 // pred_fallthru
      _
    // Predicated region
    $region134: #{lstm_model_forward.1} parent=1 // pred_check
      _
    $region135: #{lstm_model_forward.1} parent=1 // pred_check_branch
      %238 = sbr.rel (0) target = $region137
    $region136: #{lstm_model_forward.1} parent=1 // pred_region
      %239 = dma.done [#allocation24], 16
    $region137: #{lstm_model_forward.1} parent=1 // pred_fallthru
      _
    %v241 = vld [vmem:[#allocation2] sm:$0xf]
    %v242 = vld [vmem:[%s2] sm:$0xf]
    %v243 = vld [vmem:[%s2 + $0x4] sm:$0xf]
    %v244 = vld [vmem:[%s2 + $0x8] sm:$0xf]
    %v245 = vld [vmem:[%s2 + $0xc] sm:$0xf]
    %v246 = vld [vmem:[%s3] sm:$0xf]
    %v247 = vld [vmem:[%s3 + $0x4] sm:$0xf]
    %v248 = vld [vmem:[%s3 + $0x8] sm:$0xf]
    %v249 = vld [vmem:[%s3 + $0xc] sm:$0xf]
    %v250 = vld [vmem:[%s4] sm:$0xf]
    %v251 = vld [vmem:[%s4 + $0x4] sm:$0xf]
    %v252 = vld [vmem:[%s4 + $0x8] sm:$0xf]
    %v253 = vld [vmem:[%s4 + $0xc] sm:$0xf]
    %v254 = vld [vmem:[%s5] sm:$0xf]
    %v255 = vld [vmem:[%s5 + $0x4] sm:$0xf]
    %v256 = vld [vmem:[%s5 + $0x8] sm:$0xf]
    %v257 = vld [vmem:[%s5 + $0xc] sm:$0xf]
    %v258 = vld [vmem:[#allocation5] sm:$0xf]
    %v259 = vld [vmem:[#allocation5 + $0x4] sm:$0xf]
    %v260 = vld [vmem:[#allocation5 + $0x8] sm:$0xf]
    %v261 = vld [vmem:[#allocation5 + $0xc] sm:$0xf]
    %v262 = vld [vmem:[#allocation7] sm:$0xf]
    %v263 = vld [vmem:[#allocation7 + $0x4] sm:$0xf]
    %v264 = vld [vmem:[#allocation7 + $0x8] sm:$0xf]
    %v265 = vld [vmem:[#allocation7 + $0xc] sm:$0xf]
    %v266 = vld [vmem:[#allocation8] sm:$0xf]
    %v267 = vld [vmem:[#allocation8 + $0x4] sm:$0xf]
    %v268 = vld [vmem:[#allocation8 + $0x8] sm:$0xf]
    %v269 = vld [vmem:[#allocation8 + $0xc] sm:$0xf]
    %v270 = vld [vmem:[#allocation10] sm:$0xf]
    %v271 = vld [vmem:[#allocation10 + $0x4] sm:$0xf]
    %v272 = vld [vmem:[#allocation10 + $0x8] sm:$0xf]
    %v273 = vld [vmem:[#allocation10 + $0xc] sm:$0xf]
    %v274 = vld [vmem:[#allocation11] sm:$0xf]
    %v275 = vld [vmem:[#allocation11 + $0x4] sm:$0xf]
    %v276 = vld [vmem:[#allocation11 + $0x8] sm:$0xf]
    %v277 = vld [vmem:[#allocation11 + $0xc] sm:$0xf]
    %v278 = vld [vmem:[#allocation14] sm:$0x1]
    %v280 = vlaneseq
    %v281 = vshrl.u32 %v280, 7
    %v282 = vsub.s32 0, %v281
    %v283 = vrot.slane %v278, %v282
    %v285 = vld [vmem:[#allocation16] sm:$0x1]
    %v287 = vlaneseq
    %v288 = vshrl.u32 %v287, 7
    %v289 = vsub.s32 0, %v288
    %v290 = vrot.slane %v285, %v289
    %v292 = vld [vmem:[#allocation17] sm:$0x1]
    %v294 = vlaneseq
    %v295 = vshrl.u32 %v294, 7
    %v296 = vsub.s32 0, %v295
    %v297 = vrot.slane %v292, %v296
    %v299 = vld [vmem:[#allocation19] sm:$0x1]
    %v301 = vlaneseq
    %v302 = vshrl.u32 %v301, 7
    %v303 = vsub.s32 0, %v302
    %v304 = vrot.slane %v299, %v303
    %v306 = vld [vmem:[%s0] sm:$0xff]
    %v307 = vld [vmem:[%s0 + $0x8] sm:$0xff]
    %v308 = vld [vmem:[%s0 + $0x10] sm:$0xff]
    %v309 = vld [vmem:[%s0 + $0x18] sm:$0xff]
    %v310 = vld [vmem:[%s0 + $0x20] sm:$0xff]
    %v311 = vld [vmem:[%s0 + $0x28] sm:$0xff]
    %v312 = vld [vmem:[%s0 + $0x30] sm:$0xff]
    %v313 = vld [vmem:[%s0 + $0x38] sm:$0xff]
    %v314 = vpack.c.bf16 %v307, %v306
    %v315 = vpack.c.bf16 %v309, %v308
    %v316 = vpack.c.bf16 %v311, %v310
    %v317 = vpack.c.bf16 %v313, %v312
    %v318 = vld [vmem:[#allocation13] sm:$0x1]
    %v320 = vlaneseq
    %v321 = vshrl.u32 %v320, 7
    %v322 = vsub.s32 0, %v321
    %v323 = vrot.slane %v318, %v322
    %vm325 = vcmask 64512
    %v327 = vsel %vm325, %v314, 0
    %v330 = vsel %vm325, %v315, 0
    %v333 = vsel %vm325, %v316, 0
    %v336 = vsel %vm325, %v317, 0
    %vm338 = vcmask 1043456
    %v340 = vsel %vm338, %v241, 0
    %342 = vmatprep.subr.bf16.mxu0 0
    %343 = vmatpush1.bf16.msra.mxu0 %v340
    %344 = vmatprep.subr.bf16.mxu0 0
    %345 = vmatpush1.bf16.msra.mxu0 0
    %346 = vmatprep.subr.bf16.mxu0 0
    %347 = vmatpush1.bf16.msra.mxu0 0
    %348 = vmatprep.subr.bf16.mxu0 0
    %349 = vmatpush1.bf16.msra.mxu0 0
    %350 = vmatprep.subr.bf16.mxu0 0
    %351 = vmatpush1.bf16.msra.mxu0 0
    %352 = vmatprep.subr.bf16.mxu0 0
    %353 = vmatpush1.bf16.msra.mxu0 0
    %354 = vmatprep.subr.bf16.mxu0 0
    %355 = vmatpush1.bf16.msra.mxu0 0
    %356 = vmatprep.subr.bf16.mxu0 0
    %357 = vmatpush1.bf16.msra.mxu0 0
    %358 = vmatprep.subr.bf16.mxu0 0
    %359 = vmatpush1.bf16.msra.mxu0 0
    %360 = vmatprep.subr.bf16.mxu0 0
    %361 = vmatpush1.bf16.msra.mxu0 0
    %362 = vmatprep.subr.bf16.mxu0 0
    %363 = vmatpush1.bf16.msra.mxu0 0
    %364 = vmatprep.subr.bf16.mxu0 0
    %365 = vmatpush1.bf16.msra.mxu0 0
    %366 = vmatprep.subr.bf16.mxu0 0
    %367 = vmatpush1.bf16.msra.mxu0 0
    %368 = vmatprep.subr.bf16.mxu0 0
    %369 = vmatpush1.bf16.msra.mxu0 0
    %370 = vmatprep.subr.bf16.mxu0 0
    %371 = vmatpush1.bf16.msra.mxu0 0
    %372 = vmatprep.subr.bf16.mxu0 0
    %373 = vmatpush1.bf16.msra.mxu0 0
    %374 = vmatprep.mubr.bf16.mxu0 0
    %375 = vmatmul.mubr.bf16.gmra.mrb[0].mxu0 %v327
    %v376 = vpop.f32.mrb[0].mxu0
    %v377 = vadd.f32 %v323, %v376
    %v378 = vpop.f32.mrb[0].mxu0
    %v379 = vpop.f32.mrb[0].mxu0
    %v380 = vadd.f32 %v323, %v379
    %v381 = vpop.f32.mrb[0].mxu0
    %382 = vmatprep.mubr.bf16.mxu0 0
    %383 = vmatmul.mubr.bf16.gmra.mrb[0].mxu0 %v330
    %v384 = vpop.f32.mrb[0].mxu0
    %v385 = vadd.f32 %v323, %v384
    %v386 = vpop.f32.mrb[0].mxu0
    %v387 = vpop.f32.mrb[0].mxu0
    %v388 = vadd.f32 %v323, %v387
    %v389 = vpop.f32.mrb[0].mxu0
    %390 = vmatprep.mubr.bf16.mxu0 0
    %391 = vmatmul.mubr.bf16.gmra.mrb[0].mxu0 %v333
    %v392 = vpop.f32.mrb[0].mxu0
    %v393 = vadd.f32 %v323, %v392
    %v394 = vpop.f32.mrb[0].mxu0
    %v395 = vpop.f32.mrb[0].mxu0
    %v396 = vadd.f32 %v323, %v395
    %v397 = vpop.f32.mrb[0].mxu0
    %398 = vmatprep.mubr.bf16.mxu0 0
    %399 = vmatmul.mubr.bf16.gmra.mrb[0].mxu0 %v336
    %v400 = vpop.f32.mrb[0].mxu0
    %v401 = vadd.f32 %v323, %v400
    %v402 = vpop.f32.mrb[0].mxu0
    %v403 = vpop.f32.mrb[0].mxu0
    %v404 = vadd.f32 %v323, %v403
    %v405 = vpop.f32.mrb[0].mxu0
    %406 = vdwg.mxu0
    %v411 = vunpack.c.l.b16 %v258
    %v412 = vunpack.c.l.b16 %v259
    %v413 = vunpack.c.l.b16 %v260
    %v414 = vunpack.c.l.b16 %v261
    %v415 = vpack.c.b16 %v412, %v411
    %v416 = vpack.c.b16 %v414, %v413
    %vm419 = vcmask 261120
    %v421 = vsel %vm419, 0, 0
    %423 = vmatprep.subr.bf16.mxu0 0
    %424 = vmatpush1.bf16.msra.mxu0 %v415
    %425 = vmatprep.subr.bf16.mxu0 0
    %426 = vmatpush1.bf16.msra.mxu0 %v416
    %427 = vmatprep.subr.bf16.mxu0 0
    %428 = vmatpush1.bf16.msra.mxu0 0
    %429 = vmatprep.subr.bf16.mxu0 0
    %430 = vmatpush1.bf16.msra.mxu0 0
    %431 = vmatprep.subr.bf16.mxu0 0
    %432 = vmatpush1.bf16.msra.mxu0 0
    %433 = vmatprep.subr.bf16.mxu0 0
    %434 = vmatpush1.bf16.msra.mxu0 0
    %435 = vmatprep.subr.bf16.mxu0 0
    %436 = vmatpush1.bf16.msra.mxu0 0
    %437 = vmatprep.subr.bf16.mxu0 0
    %438 = vmatpush1.bf16.msra.mxu0 0
    %439 = vmatprep.subr.bf16.mxu0 0
    %440 = vmatpush1.bf16.msra.mxu0 0
    %441 = vmatprep.subr.bf16.mxu0 0
    %442 = vmatpush1.bf16.msra.mxu0 0
    %443 = vmatprep.subr.bf16.mxu0 0
    %444 = vmatpush1.bf16.msra.mxu0 0
    %445 = vmatprep.subr.bf16.mxu0 0
    %446 = vmatpush1.bf16.msra.mxu0 0
    %447 = vmatprep.subr.bf16.mxu0 0
    %448 = vmatpush1.bf16.msra.mxu0 0
    %449 = vmatprep.subr.bf16.mxu0 0
    %450 = vmatpush1.bf16.msra.mxu0 0
    %451 = vmatprep.subr.bf16.mxu0 0
    %452 = vmatpush1.bf16.msra.mxu0 0
    %453 = vmatprep.subr.bf16.mxu0 0
    %454 = vmatpush1.bf16.msra.mxu0 0
    %455 = vmatprep.mubr.bf16.mxu0 0
    %456 = vmatmul.mubr.bf16.gmra.mrb[0].mxu0 %v421
    %v457 = vpop.f32.mrb[0].mxu0
    %v458 = vadd.f32 0.0, %v457
    %v459 = vpop.f32.mrb[0].mxu0
    %v460 = vpop.f32.mrb[0].mxu0
    %v461 = vpop.f32.mrb[0].mxu0
    %462 = vdwg.mxu0
    %v464 = vrot.slane %v458, 1
    %v465 = vrot.slane %v458, 2
    %v466 = vrot.slane %v458, 3
    %v467 = vrot.slane %v458, 4
    %v468 = vrot.slane %v458, 5
    %v469 = vrot.slane %v458, 6
    %v470 = vrot.slane %v458, 7
    %v479 = vadd.f32 %v377, %v458
    %v480 = vadd.f32 %v380, %v464
    %v481 = vadd.f32 %v385, %v465
    %v482 = vadd.f32 %v388, %v466
    %v483 = vadd.f32 %v393, %v467
    %v484 = vadd.f32 %v396, %v468
    %v485 = vadd.f32 %v401, %v469
    %v486 = vadd.f32 %v404, %v470
    %v487 = vxor.u32 %v479, 2147483648
    %v488 = vxor.u32 %v480, 2147483648
    %v489 = vxor.u32 %v481, 2147483648
    %v490 = vxor.u32 %v482, 2147483648
    %v491 = vxor.u32 %v483, 2147483648
    %v492 = vxor.u32 %v484, 2147483648
    %v493 = vxor.u32 %v485, 2147483648
    %v494 = vxor.u32 %v486, 2147483648
    %v495 = vmul.f32 %v487, 1.442695
    %v496 = vpow.pop %v495
    %v497 = vmul.f32 %v488, 1.442695
    %v498 = vpow.pop %v497
    %v499 = vmul.f32 %v489, 1.442695
    %v500 = vpow.pop %v499
    %v501 = vmul.f32 %v490, 1.442695
    %v502 = vpow.pop %v501
    %v503 = vmul.f32 %v491, 1.442695
    %v504 = vpow.pop %v503
    %v505 = vmul.f32 %v492, 1.442695
    %v506 = vpow.pop %v505
    %v507 = vmul.f32 %v493, 1.442695
    %v508 = vpow.pop %v507
    %v509 = vmul.f32 %v494, 1.442695
    %v510 = vpow.pop %v509
    %v511 = vadd.f32 %v496, 1.0
    %v512 = vadd.f32 %v498, 1.0
    %v513 = vadd.f32 %v500, 1.0
    %v514 = vadd.f32 %v502, 1.0
    %v515 = vadd.f32 %v504, 1.0
    %v516 = vadd.f32 %v506, 1.0
    %v517 = vadd.f32 %v508, 1.0
    %v518 = vadd.f32 %v510, 1.0
    %v519 = vrcp.pop %v511
    %v520 = vmul.f32 1.0, %v519
    %v521 = vrcp.pop %v512
    %v522 = vmul.f32 1.0, %v521
    %v523 = vrcp.pop %v513
    %v524 = vmul.f32 1.0, %v523
    %v525 = vrcp.pop %v514
    %v526 = vmul.f32 1.0, %v525
    %v527 = vrcp.pop %v515
    %v528 = vmul.f32 1.0, %v527
    %v529 = vrcp.pop %v516
    %v530 = vmul.f32 1.0, %v529
    %v531 = vrcp.pop %v517
    %v532 = vmul.f32 1.0, %v531
    %v533 = vrcp.pop %v518
    %v534 = vmul.f32 1.0, %v533
    %v535 = vtanh.pop %v479
    %v536 = vtanh.pop %v480
    %v537 = vtanh.pop %v481
    %v538 = vtanh.pop %v482
    %v539 = vtanh.pop %v483
    %v540 = vtanh.pop %v484
    %v541 = vtanh.pop %v485
    %v542 = vtanh.pop %v486
    %v543 = vmul.f32 %v520, 0.0
    %v544 = vmul.f32 %v522, 0.0
    %v545 = vmul.f32 %v524, 0.0
    %v546 = vmul.f32 %v526, 0.0
    %v547 = vmul.f32 %v528, 0.0
    %v548 = vmul.f32 %v530, 0.0
    %v549 = vmul.f32 %v532, 0.0
    %v550 = vmul.f32 %v534, 0.0
    %559 = vrot.lane.b32.xlu0 %v535, 32
    %v560 = vpop.permute.xlu0 %559
    %561 = vrot.lane.b32.xlu0 %v536, 32
    %v562 = vpop.permute.xlu0 %561
    %563 = vrot.lane.b32.xlu0 %v537, 32
    %v564 = vpop.permute.xlu0 %563
    %565 = vrot.lane.b32.xlu0 %v538, 32
    %v566 = vpop.permute.xlu0 %565
    %567 = vrot.lane.b32.xlu0 %v539, 32
    %v568 = vpop.permute.xlu0 %567
    %569 = vrot.lane.b32.xlu0 %v540, 32
    %v570 = vpop.permute.xlu0 %569
    %571 = vrot.lane.b32.xlu0 %v541, 32
    %v572 = vpop.permute.xlu0 %571
    %573 = vrot.lane.b32.xlu0 %v542, 32
    %v574 = vpop.permute.xlu0 %573
    %v583 = vmul.f32 %v520, %v560
    %v584 = vmul.f32 %v522, %v562
    %v585 = vmul.f32 %v524, %v564
    %v586 = vmul.f32 %v526, %v566
    %v587 = vmul.f32 %v528, %v568
    %v588 = vmul.f32 %v530, %v570
    %v589 = vmul.f32 %v532, %v572
    %v590 = vmul.f32 %v534, %v574
    %599 = vrot.lane.b32.xlu0 %v583, 32
    %v600 = vpop.permute.xlu0 %599
    %601 = vrot.lane.b32.xlu0 %v584, 32
    %v602 = vpop.permute.xlu0 %601
    %603 = vrot.lane.b32.xlu0 %v585, 32
    %v604 = vpop.permute.xlu0 %603
    %605 = vrot.lane.b32.xlu0 %v586, 32
    %v606 = vpop.permute.xlu0 %605
    %607 = vrot.lane.b32.xlu0 %v587, 32
    %v608 = vpop.permute.xlu0 %607
    %609 = vrot.lane.b32.xlu0 %v588, 32
    %v610 = vpop.permute.xlu0 %609
    %611 = vrot.lane.b32.xlu0 %v589, 32
    %v612 = vpop.permute.xlu0 %611
    %613 = vrot.lane.b32.xlu0 %v590, 32
    %v614 = vpop.permute.xlu0 %613
    %v623 = vadd.f32 %v543, %v600
    %v624 = vadd.f32 %v544, %v602
    %v625 = vadd.f32 %v545, %v604
    %v626 = vadd.f32 %v546, %v606
    %v627 = vadd.f32 %v547, %v608
    %v628 = vadd.f32 %v548, %v610
    %v629 = vadd.f32 %v549, %v612
    %v630 = vadd.f32 %v550, %v614
    %v631 = vtanh.pop %v623
    %v632 = vtanh.pop %v624
    %v633 = vtanh.pop %v625
    %v634 = vtanh.pop %v626
    %v635 = vtanh.pop %v627
    %v636 = vtanh.pop %v628
    %v637 = vtanh.pop %v629
    %v638 = vtanh.pop %v630
    %647 = vrot.lane.b32.xlu0 %v631, 32
    %v648 = vpop.permute.xlu0 %647
    %649 = vrot.lane.b32.xlu0 %v632, 32
    %v650 = vpop.permute.xlu0 %649
    %651 = vrot.lane.b32.xlu0 %v633, 32
    %v652 = vpop.permute.xlu0 %651
    %653 = vrot.lane.b32.xlu0 %v634, 32
    %v654 = vpop.permute.xlu0 %653
    %655 = vrot.lane.b32.xlu0 %v635, 32
    %v656 = vpop.permute.xlu0 %655
    %657 = vrot.lane.b32.xlu0 %v636, 32
    %v658 = vpop.permute.xlu0 %657
    %659 = vrot.lane.b32.xlu0 %v637, 32
    %v660 = vpop.permute.xlu0 %659
    %661 = vrot.lane.b32.xlu0 %v638, 32
    %v662 = vpop.permute.xlu0 %661
    %v671 = vmul.f32 %v520, %v648
    %v672 = vmul.f32 %v522, %v650
    %v673 = vmul.f32 %v524, %v652
    %v674 = vmul.f32 %v526, %v654
    %v675 = vmul.f32 %v528, %v656
    %v676 = vmul.f32 %v530, %v658
    %v677 = vmul.f32 %v532, %v660
    %v678 = vmul.f32 %v534, %v662
    %v679 = vpack.c.bf16 %v671, %v671
    %v680 = vpack.c.bf16 %v672, %v672
    %v681 = vpack.c.bf16 %v673, %v673
    %v682 = vpack.c.bf16 %v674, %v674
    %v683 = vpack.c.bf16 %v675, %v675
    %v684 = vpack.c.bf16 %v676, %v676
    %v685 = vpack.c.bf16 %v677, %v677
    %v686 = vpack.c.bf16 %v678, %v678
    %v691 = vunpack.c.l.b16 %v262
    %v692 = vunpack.c.l.b16 %v263
    %v693 = vunpack.c.l.b16 %v264
    %v694 = vunpack.c.l.b16 %v265
    %v695 = vpack.c.b16 %v692, %v691
    %v696 = vpack.c.b16 %v694, %v693
    %699 = vmatprep.subr.bf16.mxu0 0
    %700 = vmatpush1.bf16.msra.mxu0 %v695
    %701 = vmatprep.subr.bf16.mxu0 0
    %702 = vmatpush1.bf16.msra.mxu0 %v696
    %703 = vmatprep.subr.bf16.mxu0 0
    %704 = vmatpush1.bf16.msra.mxu0 0
    %705 = vmatprep.subr.bf16.mxu0 0
    %706 = vmatpush1.bf16.msra.mxu0 0
    %707 = vmatprep.subr.bf16.mxu0 0
    %708 = vmatpush1.bf16.msra.mxu0 0
    %709 = vmatprep.subr.bf16.mxu0 0
    %710 = vmatpush1.bf16.msra.mxu0 0
    %711 = vmatprep.subr.bf16.mxu0 0
    %712 = vmatpush1.bf16.msra.mxu0 0
    %713 = vmatprep.subr.bf16.mxu0 0
    %714 = vmatpush1.bf16.msra.mxu0 0
    %715 = vmatprep.subr.bf16.mxu0 0
    %716 = vmatpush1.bf16.msra.mxu0 0
    %717 = vmatprep.subr.bf16.mxu0 0
    %718 = vmatpush1.bf16.msra.mxu0 0
    %719 = vmatprep.subr.bf16.mxu0 0
    %720 = vmatpush1.bf16.msra.mxu0 0
    %721 = vmatprep.subr.bf16.mxu0 0
    %722 = vmatpush1.bf16.msra.mxu0 0
    %723 = vmatprep.subr.bf16.mxu0 0
    %724 = vmatpush1.bf16.msra.mxu0 0
    %725 = vmatprep.subr.bf16.mxu0 0
    %726 = vmatpush1.bf16.msra.mxu0 0
    %727 = vmatprep.subr.bf16.mxu0 0
    %728 = vmatpush1.bf16.msra.mxu0 0
    %729 = vmatprep.subr.bf16.mxu0 0
    %730 = vmatpush1.bf16.msra.mxu0 0
    %731 = vmatprep.mubr.bf16.mxu0 0
    %732 = vmatmul.mubr.bf16.gmra.mrb[0].mxu0 %v421
    %v733 = vpop.f32.mrb[0].mxu0
    %v734 = vadd.f32 0.0, %v733
    %v735 = vpop.f32.mrb[0].mxu0
    %v736 = vpop.f32.mrb[0].mxu0
    %v737 = vpop.f32.mrb[0].mxu0
    %738 = vdwg.mxu0
    %v747 = vunpack.c.l.b16 %v679
    %v748 = vunpack.c.l.b16 %v680
    %v749 = vunpack.c.l.b16 %v681
    %v750 = vunpack.c.l.b16 %v682
    %v751 = vunpack.c.l.b16 %v683
    %v752 = vunpack.c.l.b16 %v684
    %v753 = vunpack.c.l.b16 %v685
    %v754 = vunpack.c.l.b16 %v686
    %v755 = vrot.slane %v748, 7
    %vm756 = vcmask 1041409
    %v757 = vsel %vm756, %v755, %v747
    %v758 = vrot.slane %v749, 6
    %vm759 = vcmask 1042434
    %v760 = vsel %vm759, %v758, %v757
    %v761 = vrot.slane %v750, 5
    %vm762 = vcmask 1043459
    %v763 = vsel %vm762, %v761, %v760
    %v764 = vrot.slane %v751, 4
    %vm765 = vcmask 1044484
    %v766 = vsel %vm765, %v764, %v763
    %v767 = vrot.slane %v752, 3
    %vm768 = vcmask 1045509
    %v769 = vsel %vm768, %v767, %v766
    %v770 = vrot.slane %v753, 2
    %vm771 = vcmask 1046534
    %v772 = vsel %vm771, %v770, %v769
    %v773 = vrot.slane %v754, 1
    %vm774 = vcmask 1047559
    %v775 = vsel %vm774, %v773, %v772
    %v776 = vpack.c.b16 %v775, %v775
    %777 = vrot.lane.b32.xlu0 %v776, 64
    %v778 = vpop.permute.xlu0 %777
    %v783 = vunpack.c.l.b16 %v242
    %v784 = vunpack.c.l.b16 %v243
    %v785 = vunpack.c.l.b16 %v244
    %v786 = vunpack.c.l.b16 %v245
    %v787 = vpack.c.b16 %v784, %v783
    %v788 = vpack.c.b16 %v786, %v785
    %v792 = vsel %vm419, %v778, 0
    %794 = vmatprep.subr.bf16.mxu0 0
    %795 = vmatpush1.bf16.msra.mxu0 %v787
    %796 = vmatprep.subr.bf16.mxu0 0
    %797 = vmatpush1.bf16.msra.mxu0 %v788
    %798 = vmatprep.subr.bf16.mxu0 0
    %799 = vmatpush1.bf16.msra.mxu0 0
    %800 = vmatprep.subr.bf16.mxu0 0
    %801 = vmatpush1.bf16.msra.mxu0 0
    %802 = vmatprep.subr.bf16.mxu0 0
    %803 = vmatpush1.bf16.msra.mxu0 0
    %804 = vmatprep.subr.bf16.mxu0 0
    %805 = vmatpush1.bf16.msra.mxu0 0
    %806 = vmatprep.subr.bf16.mxu0 0
    %807 = vmatpush1.bf16.msra.mxu0 0
    %808 = vmatprep.subr.bf16.mxu0 0
    %809 = vmatpush1.bf16.msra.mxu0 0
    %810 = vmatprep.subr.bf16.mxu0 0
    %811 = vmatpush1.bf16.msra.mxu0 0
    %812 = vmatprep.subr.bf16.mxu0 0
    %813 = vmatpush1.bf16.msra.mxu0 0
    %814 = vmatprep.subr.bf16.mxu0 0
    %815 = vmatpush1.bf16.msra.mxu0 0
    %816 = vmatprep.subr.bf16.mxu0 0
    %817 = vmatpush1.bf16.msra.mxu0 0
    %818 = vmatprep.subr.bf16.mxu0 0
    %819 = vmatpush1.bf16.msra.mxu0 0
    %820 = vmatprep.subr.bf16.mxu0 0
    %821 = vmatpush1.bf16.msra.mxu0 0
    %822 = vmatprep.subr.bf16.mxu0 0
    %823 = vmatpush1.bf16.msra.mxu0 0
    %824 = vmatprep.subr.bf16.mxu0 0
    %825 = vmatpush1.bf16.msra.mxu0 0
    %826 = vmatprep.mubr.bf16.mxu0 0
    %827 = vmatmul.mubr.bf16.gmra.mrb[0].mxu0 %v792
    %v828 = vpop.f32.mrb[0].mxu0
    %v829 = vadd.f32 %v734, %v828
    %v830 = vpop.f32.mrb[0].mxu0
    %v831 = vpop.f32.mrb[0].mxu0
    %v832 = vpop.f32.mrb[0].mxu0
    %833 = vdwg.mxu0
    %v834 = vadd.f32 %v829, %v283
    %v835 = vxor.u32 %v834, 2147483648
    %v836 = vmul.f32 %v835, 1.442695
    %v837 = vpow.pop %v836
    %v838 = vadd.f32 %v837, 1.0
    %v839 = vrcp.pop %v838
    %v840 = vmul.f32 1.0, %v839
    %v841 = vtanh.pop %v834
    %v842 = vmul.f32 %v840, 0.0
    %844 = vrot.lane.b32.xlu0 %v841, 32
    %v845 = vpop.permute.xlu0 %844
    %v847 = vmul.f32 %v840, %v845
    %849 = vrot.lane.b32.xlu0 %v847, 32
    %v850 = vpop.permute.xlu0 %849
    %v852 = vadd.f32 %v842, %v850
    %v853 = vtanh.pop %v852
    %855 = vrot.lane.b32.xlu0 %v853, 32
    %v856 = vpop.permute.xlu0 %855
    %v858 = vmul.f32 %v840, %v856
    %v859 = vpack.c.bf16 %v858, %v858
    %v864 = vunpack.c.l.b16 %v266
    %v865 = vunpack.c.l.b16 %v267
    %v866 = vunpack.c.l.b16 %v268
    %v867 = vunpack.c.l.b16 %v269
    %v868 = vpack.c.b16 %v865, %v864
    %v869 = vpack.c.b16 %v867, %v866
    %872 = vmatprep.subr.bf16.mxu0 0
    %873 = vmatpush1.bf16.msra.mxu0 %v868
    %874 = vmatprep.subr.bf16.mxu0 0
    %875 = vmatpush1.bf16.msra.mxu0 %v869
    %876 = vmatprep.subr.bf16.mxu0 0
    %877 = vmatpush1.bf16.msra.mxu0 0
    %878 = vmatprep.subr.bf16.mxu0 0
    %879 = vmatpush1.bf16.msra.mxu0 0
    %880 = vmatprep.subr.bf16.mxu0 0
    %881 = vmatpush1.bf16.msra.mxu0 0
    %882 = vmatprep.subr.bf16.mxu0 0
    %883 = vmatpush1.bf16.msra.mxu0 0
    %884 = vmatprep.subr.bf16.mxu0 0
    %885 = vmatpush1.bf16.msra.mxu0 0
    %886 = vmatprep.subr.bf16.mxu0 0
    %887 = vmatpush1.bf16.msra.mxu0 0
    %888 = vmatprep.subr.bf16.mxu0 0
    %889 = vmatpush1.bf16.msra.mxu0 0
    %890 = vmatprep.subr.bf16.mxu0 0
    %891 = vmatpush1.bf16.msra.mxu0 0
    %892 = vmatprep.subr.bf16.mxu0 0
    %893 = vmatpush1.bf16.msra.mxu0 0
    %894 = vmatprep.subr.bf16.mxu0 0
    %895 = vmatpush1.bf16.msra.mxu0 0
    %896 = vmatprep.subr.bf16.mxu0 0
    %897 = vmatpush1.bf16.msra.mxu0 0
    %898 = vmatprep.subr.bf16.mxu0 0
    %899 = vmatpush1.bf16.msra.mxu0 0
    %900 = vmatprep.subr.bf16.mxu0 0
    %901 = vmatpush1.bf16.msra.mxu0 0
    %902 = vmatprep.subr.bf16.mxu0 0
    %903 = vmatpush1.bf16.msra.mxu0 0
    %904 = vmatprep.mubr.bf16.mxu0 0
    %905 = vmatmul.mubr.bf16.gmra.mrb[0].mxu0 %v421
    %v906 = vpop.f32.mrb[0].mxu0
    %v907 = vadd.f32 0.0, %v906
    %v908 = vpop.f32.mrb[0].mxu0
    %v909 = vpop.f32.mrb[0].mxu0
    %v910 = vpop.f32.mrb[0].mxu0
    %911 = vdwg.mxu0
    %913 = vrot.lane.b32.xlu0 %v859, 64
    %v914 = vpop.permute.xlu0 %913
    %v919 = vunpack.c.l.b16 %v246
    %v920 = vunpack.c.l.b16 %v247
    %v921 = vunpack.c.l.b16 %v248
    %v922 = vunpack.c.l.b16 %v249
    %v923 = vpack.c.b16 %v920, %v919
    %v924 = vpack.c.b16 %v922, %v921
    %v928 = vsel %vm419, %v914, 0
    %930 = vmatprep.subr.bf16.mxu0 0
    %931 = vmatpush1.bf16.msra.mxu0 %v923
    %932 = vmatprep.subr.bf16.mxu0 0
    %933 = vmatpush1.bf16.msra.mxu0 %v924
    %934 = vmatprep.subr.bf16.mxu0 0
    %935 = vmatpush1.bf16.msra.mxu0 0
    %936 = vmatprep.subr.bf16.mxu0 0
    %937 = vmatpush1.bf16.msra.mxu0 0
    %938 = vmatprep.subr.bf16.mxu0 0
    %939 = vmatpush1.bf16.msra.mxu0 0
    %940 = vmatprep.subr.bf16.mxu0 0
    %941 = vmatpush1.bf16.msra.mxu0 0
    %942 = vmatprep.subr.bf16.mxu0 0
    %943 = vmatpush1.bf16.msra.mxu0 0
    %944 = vmatprep.subr.bf16.mxu0 0
    %945 = vmatpush1.bf16.msra.mxu0 0
    %946 = vmatprep.subr.bf16.mxu0 0
    %947 = vmatpush1.bf16.msra.mxu0 0
    %948 = vmatprep.subr.bf16.mxu0 0
    %949 = vmatpush1.bf16.msra.mxu0 0
    %950 = vmatprep.subr.bf16.mxu0 0
    %951 = vmatpush1.bf16.msra.mxu0 0
    %952 = vmatprep.subr.bf16.mxu0 0
    %953 = vmatpush1.bf16.msra.mxu0 0
    %954 = vmatprep.subr.bf16.mxu0 0
    %955 = vmatpush1.bf16.msra.mxu0 0
    %956 = vmatprep.subr.bf16.mxu0 0
    %957 = vmatpush1.bf16.msra.mxu0 0
    %958 = vmatprep.subr.bf16.mxu0 0
    %959 = vmatpush1.bf16.msra.mxu0 0
    %960 = vmatprep.subr.bf16.mxu0 0
    %961 = vmatpush1.bf16.msra.mxu0 0
    %962 = vmatprep.mubr.bf16.mxu0 0
    %963 = vmatmul.mubr.bf16.gmra.mrb[0].mxu0 %v928
    %v964 = vpop.f32.mrb[0].mxu0
    %v965 = vadd.f32 %v907, %v964
    %v966 = vpop.f32.mrb[0].mxu0
    %v967 = vpop.f32.mrb[0].mxu0
    %v968 = vpop.f32.mrb[0].mxu0
    %969 = vdwg.mxu0
    %v970 = vadd.f32 %v965, %v290
    %v971 = vxor.u32 %v970, 2147483648
    %v972 = vmul.f32 %v971, 1.442695
    %v973 = vpow.pop %v972
    %v974 = vadd.f32 %v973, 1.0
    %v975 = vrcp.pop %v974
    %v976 = vmul.f32 1.0, %v975
    %v977 = vtanh.pop %v970
    %v978 = vmul.f32 %v976, 0.0
    %980 = vrot.lane.b32.xlu0 %v977, 32
    %v981 = vpop.permute.xlu0 %980
    %v983 = vmul.f32 %v976, %v981
    %985 = vrot.lane.b32.xlu0 %v983, 32
    %v986 = vpop.permute.xlu0 %985
    %v988 = vadd.f32 %v978, %v986
    %v989 = vtanh.pop %v988
    %991 = vrot.lane.b32.xlu0 %v989, 32
    %v992 = vpop.permute.xlu0 %991
    %v994 = vmul.f32 %v976, %v992
    %v995 = vpack.c.bf16 %v994, %v994
    %v1000 = vunpack.c.l.b16 %v270
    %v1001 = vunpack.c.l.b16 %v271
    %v1002 = vunpack.c.l.b16 %v272
    %v1003 = vunpack.c.l.b16 %v273
    %v1004 = vpack.c.b16 %v1001, %v1000
    %v1005 = vpack.c.b16 %v1003, %v1002
    %1008 = vmatprep.subr.bf16.mxu0 0
    %1009 = vmatpush1.bf16.msra.mxu0 %v1004
    %1010 = vmatprep.subr.bf16.mxu0 0
    %1011 = vmatpush1.bf16.msra.mxu0 %v1005
    %1012 = vmatprep.subr.bf16.mxu0 0
    %1013 = vmatpush1.bf16.msra.mxu0 0
    %1014 = vmatprep.subr.bf16.mxu0 0
    %1015 = vmatpush1.bf16.msra.mxu0 0
    %1016 = vmatprep.subr.bf16.mxu0 0
    %1017 = vmatpush1.bf16.msra.mxu0 0
    %1018 = vmatprep.subr.bf16.mxu0 0
    %1019 = vmatpush1.bf16.msra.mxu0 0
    %1020 = vmatprep.subr.bf16.mxu0 0
    %1021 = vmatpush1.bf16.msra.mxu0 0
    %1022 = vmatprep.subr.bf16.mxu0 0
    %1023 = vmatpush1.bf16.msra.mxu0 0
    %1024 = vmatprep.subr.bf16.mxu0 0
    %1025 = vmatpush1.bf16.msra.mxu0 0
    %1026 = vmatprep.subr.bf16.mxu0 0
    %1027 = vmatpush1.bf16.msra.mxu0 0
    %1028 = vmatprep.subr.bf16.mxu0 0
    %1029 = vmatpush1.bf16.msra.mxu0 0
    %1030 = vmatprep.subr.bf16.mxu0 0
    %1031 = vmatpush1.bf16.msra.mxu0 0
    %1032 = vmatprep.subr.bf16.mxu0 0
    %1033 = vmatpush1.bf16.msra.mxu0 0
    %1034 = vmatprep.subr.bf16.mxu0 0
    %1035 = vmatpush1.bf16.msra.mxu0 0
    %1036 = vmatprep.subr.bf16.mxu0 0
    %1037 = vmatpush1.bf16.msra.mxu0 0
    %1038 = vmatprep.subr.bf16.mxu0 0
    %1039 = vmatpush1.bf16.msra.mxu0 0
    %1040 = vmatprep.mubr.bf16.mxu0 0
    %1041 = vmatmul.mubr.bf16.gmra.mrb[0].mxu0 %v421
    %v1042 = vpop.f32.mrb[0].mxu0
    %v1043 = vadd.f32 0.0, %v1042
    %v1044 = vpop.f32.mrb[0].mxu0
    %v1045 = vpop.f32.mrb[0].mxu0
    %v1046 = vpop.f32.mrb[0].mxu0
    %1047 = vdwg.mxu0
    %1049 = vrot.lane.b32.xlu0 %v995, 64
    %v1050 = vpop.permute.xlu0 %1049
    %v1055 = vunpack.c.l.b16 %v250
    %v1056 = vunpack.c.l.b16 %v251
    %v1057 = vunpack.c.l.b16 %v252
    %v1058 = vunpack.c.l.b16 %v253
    %v1059 = vpack.c.b16 %v1056, %v1055
    %v1060 = vpack.c.b16 %v1058, %v1057
    %v1064 = vsel %vm419, %v1050, 0
    %1066 = vmatprep.subr.bf16.mxu0 0
    %1067 = vmatpush1.bf16.msra.mxu0 %v1059
    %1068 = vmatprep.subr.bf16.mxu0 0
    %1069 = vmatpush1.bf16.msra.mxu0 %v1060
    %1070 = vmatprep.subr.bf16.mxu0 0
    %1071 = vmatpush1.bf16.msra.mxu0 0
    %1072 = vmatprep.subr.bf16.mxu0 0
    %1073 = vmatpush1.bf16.msra.mxu0 0
    %1074 = vmatprep.subr.bf16.mxu0 0
    %1075 = vmatpush1.bf16.msra.mxu0 0
    %1076 = vmatprep.subr.bf16.mxu0 0
    %1077 = vmatpush1.bf16.msra.mxu0 0
    %1078 = vmatprep.subr.bf16.mxu0 0
    %1079 = vmatpush1.bf16.msra.mxu0 0
    %1080 = vmatprep.subr.bf16.mxu0 0
    %1081 = vmatpush1.bf16.msra.mxu0 0
    %1082 = vmatprep.subr.bf16.mxu0 0
    %1083 = vmatpush1.bf16.msra.mxu0 0
    %1084 = vmatprep.subr.bf16.mxu0 0
    %1085 = vmatpush1.bf16.msra.mxu0 0
    %1086 = vmatprep.subr.bf16.mxu0 0
    %1087 = vmatpush1.bf16.msra.mxu0 0
    %1088 = vmatprep.subr.bf16.mxu0 0
    %1089 = vmatpush1.bf16.msra.mxu0 0
    %1090 = vmatprep.subr.bf16.mxu0 0
    %1091 = vmatpush1.bf16.msra.mxu0 0
    %1092 = vmatprep.subr.bf16.mxu0 0
    %1093 = vmatpush1.bf16.msra.mxu0 0
    %1094 = vmatprep.subr.bf16.mxu0 0
    %1095 = vmatpush1.bf16.msra.mxu0 0
    %1096 = vmatprep.subr.bf16.mxu0 0
    %1097 = vmatpush1.bf16.msra.mxu0 0
    %1098 = vmatprep.mubr.bf16.mxu0 0
    %1099 = vmatmul.mubr.bf16.gmra.mrb[0].mxu0 %v1064
    %v1100 = vpop.f32.mrb[0].mxu0
    %v1101 = vadd.f32 %v1043, %v1100
    %v1102 = vpop.f32.mrb[0].mxu0
    %v1103 = vpop.f32.mrb[0].mxu0
    %v1104 = vpop.f32.mrb[0].mxu0
    %1105 = vdwg.mxu0
    %v1106 = vadd.f32 %v1101, %v297
    %v1107 = vxor.u32 %v1106, 2147483648
    %v1108 = vmul.f32 %v1107, 1.442695
    %v1109 = vpow.pop %v1108
    %v1110 = vadd.f32 %v1109, 1.0
    %v1111 = vrcp.pop %v1110
    %v1112 = vmul.f32 1.0, %v1111
    %v1113 = vtanh.pop %v1106
    %v1114 = vmul.f32 %v1112, 0.0
    %1116 = vrot.lane.b32.xlu0 %v1113, 32
    %v1117 = vpop.permute.xlu0 %1116
    %v1119 = vmul.f32 %v1112, %v1117
    %1121 = vrot.lane.b32.xlu0 %v1119, 32
    %v1122 = vpop.permute.xlu0 %1121
    %v1124 = vadd.f32 %v1114, %v1122
    %v1125 = vtanh.pop %v1124
    %1127 = vrot.lane.b32.xlu0 %v1125, 32
    %v1128 = vpop.permute.xlu0 %1127
    %v1130 = vmul.f32 %v1112, %v1128
    %v1131 = vpack.c.bf16 %v1130, %v1130
    %v1136 = vunpack.c.l.b16 %v274
    %v1137 = vunpack.c.l.b16 %v275
    %v1138 = vunpack.c.l.b16 %v276
    %v1139 = vunpack.c.l.b16 %v277
    %v1140 = vpack.c.b16 %v1137, %v1136
    %v1141 = vpack.c.b16 %v1139, %v1138
    %1144 = vmatprep.subr.bf16.mxu0 0
    %1145 = vmatpush1.bf16.msra.mxu0 %v1140
    %1146 = vmatprep.subr.bf16.mxu0 0
    %1147 = vmatpush1.bf16.msra.mxu0 %v1141
    %1148 = vmatprep.subr.bf16.mxu0 0
    %1149 = vmatpush1.bf16.msra.mxu0 0
    %1150 = vmatprep.subr.bf16.mxu0 0
    %1151 = vmatpush1.bf16.msra.mxu0 0
    %1152 = vmatprep.subr.bf16.mxu0 0
    %1153 = vmatpush1.bf16.msra.mxu0 0
    %1154 = vmatprep.subr.bf16.mxu0 0
    %1155 = vmatpush1.bf16.msra.mxu0 0
    %1156 = vmatprep.subr.bf16.mxu0 0
    %1157 = vmatpush1.bf16.msra.mxu0 0
    %1158 = vmatprep.subr.bf16.mxu0 0
    %1159 = vmatpush1.bf16.msra.mxu0 0
    %1160 = vmatprep.subr.bf16.mxu0 0
    %1161 = vmatpush1.bf16.msra.mxu0 0
    %1162 = vmatprep.subr.bf16.mxu0 0
    %1163 = vmatpush1.bf16.msra.mxu0 0
    %1164 = vmatprep.subr.bf16.mxu0 0
    %1165 = vmatpush1.bf16.msra.mxu0 0
    %1166 = vmatprep.subr.bf16.mxu0 0
    %1167 = vmatpush1.bf16.msra.mxu0 0
    %1168 = vmatprep.subr.bf16.mxu0 0
    %1169 = vmatpush1.bf16.msra.mxu0 0
    %1170 = vmatprep.subr.bf16.mxu0 0
    %1171 = vmatpush1.bf16.msra.mxu0 0
    %1172 = vmatprep.subr.bf16.mxu0 0
    %1173 = vmatpush1.bf16.msra.mxu0 0
    %1174 = vmatprep.subr.bf16.mxu0 0
    %1175 = vmatpush1.bf16.msra.mxu0 0
    %1176 = vmatprep.mubr.bf16.mxu0 0
    %1177 = vmatmul.mubr.bf16.gmra.mrb[0].mxu0 %v421
    %v1178 = vpop.f32.mrb[0].mxu0
    %v1179 = vadd.f32 0.0, %v1178
    %v1180 = vpop.f32.mrb[0].mxu0
    %v1181 = vpop.f32.mrb[0].mxu0
    %v1182 = vpop.f32.mrb[0].mxu0
    %1183 = vdwg.mxu0
    %1185 = vrot.lane.b32.xlu0 %v1131, 64
    %v1186 = vpop.permute.xlu0 %1185
    %v1191 = vunpack.c.l.b16 %v254
    %v1192 = vunpack.c.l.b16 %v255
    %v1193 = vunpack.c.l.b16 %v256
    %v1194 = vunpack.c.l.b16 %v257
    %v1195 = vpack.c.b16 %v1192, %v1191
    %v1196 = vpack.c.b16 %v1194, %v1193
    %v1200 = vsel %vm419, %v1186, 0
    %1202 = vmatprep.subr.bf16.mxu0 0
    %1203 = vmatpush1.bf16.msra.mxu0 %v1195
    %1204 = vmatprep.subr.bf16.mxu0 0
    %1205 = vmatpush1.bf16.msra.mxu0 %v1196
    %1206 = vmatprep.subr.bf16.mxu0 0
    %1207 = vmatpush1.bf16.msra.mxu0 0
    %1208 = vmatprep.subr.bf16.mxu0 0
    %1209 = vmatpush1.bf16.msra.mxu0 0
    %1210 = vmatprep.subr.bf16.mxu0 0
    %1211 = vmatpush1.bf16.msra.mxu0 0
    %1212 = vmatprep.subr.bf16.mxu0 0
    %1213 = vmatpush1.bf16.msra.mxu0 0
    %1214 = vmatprep.subr.bf16.mxu0 0
    %1215 = vmatpush1.bf16.msra.mxu0 0
    %1216 = vmatprep.subr.bf16.mxu0 0
    %1217 = vmatpush1.bf16.msra.mxu0 0
    %1218 = vmatprep.subr.bf16.mxu0 0
    %1219 = vmatpush1.bf16.msra.mxu0 0
    %1220 = vmatprep.subr.bf16.mxu0 0
    %1221 = vmatpush1.bf16.msra.mxu0 0
    %1222 = vmatprep.subr.bf16.mxu0 0
    %1223 = vmatpush1.bf16.msra.mxu0 0
    %1224 = vmatprep.subr.bf16.mxu0 0
    %1225 = vmatpush1.bf16.msra.mxu0 0
    %1226 = vmatprep.subr.bf16.mxu0 0
    %1227 = vmatpush1.bf16.msra.mxu0 0
    %1228 = vmatprep.subr.bf16.mxu0 0
    %1229 = vmatpush1.bf16.msra.mxu0 0
    %1230 = vmatprep.subr.bf16.mxu0 0
    %1231 = vmatpush1.bf16.msra.mxu0 0
    %1232 = vmatprep.subr.bf16.mxu0 0
    %1233 = vmatpush1.bf16.msra.mxu0 0
    %1234 = vmatprep.mubr.bf16.mxu0 0
    %1235 = vmatmul.mubr.bf16.gmra.mrb[0].mxu0 %v1200
    %v1236 = vpop.f32.mrb[0].mxu0
    %v1237 = vadd.f32 %v1179, %v1236
    %v1238 = vpop.f32.mrb[0].mxu0
    %v1239 = vpop.f32.mrb[0].mxu0
    %v1240 = vpop.f32.mrb[0].mxu0
    %1241 = vdwg.mxu0
    %v1242 = vadd.f32 %v1237, %v304
    %v1243 = vxor.u32 %v1242, 2147483648
    %v1244 = vmul.f32 %v1243, 1.442695
    %v1245 = vpow.pop %v1244
    %v1246 = vadd.f32 %v1245, 1.0
    %v1247 = vrcp.pop %v1246
    %v1248 = vmul.f32 1.0, %v1247
    %v1249 = vtanh.pop %v1242
    %v1250 = vmul.f32 %v1248, 0.0
    %1252 = vrot.lane.b32.xlu0 %v1249, 32
    %v1253 = vpop.permute.xlu0 %1252
    %v1255 = vmul.f32 %v1248, %v1253
    %1257 = vrot.lane.b32.xlu0 %v1255, 32
    %v1258 = vpop.permute.xlu0 %1257
    %v1260 = vadd.f32 %v1250, %v1258
    %v1261 = vtanh.pop %v1260
    %1263 = vrot.lane.b32.xlu0 %v1261, 32
    %v1264 = vpop.permute.xlu0 %1263
    %v1266 = vmul.f32 %v1248, %v1264
    %1267 = vmatprep.subr.bf16.mxu0 0
    %1268 = vmatpush1.bf16.msra.mxu0 %v415
    %1269 = vmatprep.subr.bf16.mxu0 0
    %1270 = vmatpush1.bf16.msra.mxu0 %v416
    %1271 = vmatprep.subr.bf16.mxu0 0
    %1272 = vmatpush1.bf16.msra.mxu0 0
    %1273 = vmatprep.subr.bf16.mxu0 0
    %1274 = vmatpush1.bf16.msra.mxu0 0
    %1275 = vmatprep.subr.bf16.mxu0 0
    %1276 = vmatpush1.bf16.msra.mxu0 0
    %1277 = vmatprep.subr.bf16.mxu0 0
    %1278 = vmatpush1.bf16.msra.mxu0 0
    %1279 = vmatprep.subr.bf16.mxu0 0
    %1280 = vmatpush1.bf16.msra.mxu0 0
    %1281 = vmatprep.subr.bf16.mxu0 0
    %1282 = vmatpush1.bf16.msra.mxu0 0
    %1283 = vmatprep.subr.bf16.mxu0 0
    %1284 = vmatpush1.bf16.msra.mxu0 0
    %1285 = vmatprep.subr.bf16.mxu0 0
    %1286 = vmatpush1.bf16.msra.mxu0 0
    %1287 = vmatprep.subr.bf16.mxu0 0
    %1288 = vmatpush1.bf16.msra.mxu0 0
    %1289 = vmatprep.subr.bf16.mxu0 0
    %1290 = vmatpush1.bf16.msra.mxu0 0
    %1291 = vmatprep.subr.bf16.mxu0 0
    %1292 = vmatpush1.bf16.msra.mxu0 0
    %1293 = vmatprep.subr.bf16.mxu0 0
    %1294 = vmatpush1.bf16.msra.mxu0 0
    %1295 = vmatprep.subr.bf16.mxu0 0
    %1296 = vmatpush1.bf16.msra.mxu0 0
    %1297 = vmatprep.subr.bf16.mxu0 0
    %1298 = vmatpush1.bf16.msra.mxu0 0
    %1299 = vmatprep.mubr.bf16.mxu0 0
    %1300 = vmatmul.mubr.bf16.gmra.mrb[0].mxu0 %v792
    %v1301 = vpop.f32.mrb[0].mxu0
    %v1302 = vadd.f32 0.0, %v1301
    %v1303 = vpop.f32.mrb[0].mxu0
    %v1304 = vpop.f32.mrb[0].mxu0
    %v1305 = vpop.f32.mrb[0].mxu0
    %1306 = vdwg.mxu0
    %v1308 = vrot.slane %v1302, 7
    %v1309 = vrot.slane %v1302, 1
    %v1310 = vrot.slane %v1302, 2
    %v1311 = vrot.slane %v1302, 3
    %v1312 = vrot.slane %v1302, 4
    %v1313 = vrot.slane %v1302, 5
    %v1314 = vrot.slane %v1302, 6
    %v1323 = vadd.f32 %v377, %v1308
    %v1324 = vadd.f32 %v380, %v1302
    %v1325 = vadd.f32 %v385, %v1309
    %v1326 = vadd.f32 %v388, %v1310
    %v1327 = vadd.f32 %v393, %v1311
    %v1328 = vadd.f32 %v396, %v1312
    %v1329 = vadd.f32 %v401, %v1313
    %v1330 = vadd.f32 %v404, %v1314
    %v1331 = vxor.u32 %v1323, 2147483648
    %v1332 = vxor.u32 %v1324, 2147483648
    %v1333 = vxor.u32 %v1325, 2147483648
    %v1334 = vxor.u32 %v1326, 2147483648
    %v1335 = vxor.u32 %v1327, 2147483648
    %v1336 = vxor.u32 %v1328, 2147483648
    %v1337 = vxor.u32 %v1329, 2147483648
    %v1338 = vxor.u32 %v1330, 2147483648
    %v1339 = vmul.f32 %v1331, 1.442695
    %v1340 = vpow.pop %v1339
    %v1341 = vmul.f32 %v1332, 1.442695
    %v1342 = vpow.pop %v1341
    %v1343 = vmul.f32 %v1333, 1.442695
    %v1344 = vpow.pop %v1343
    %v1345 = vmul.f32 %v1334, 1.442695
    %v1346 = vpow.pop %v1345
    %v1347 = vmul.f32 %v1335, 1.442695
    %v1348 = vpow.pop %v1347
    %v1349 = vmul.f32 %v1336, 1.442695
    %v1350 = vpow.pop %v1349
    %v1351 = vmul.f32 %v1337, 1.442695
    %v1352 = vpow.pop %v1351
    %v1353 = vmul.f32 %v1338, 1.442695
    %v1354 = vpow.pop %v1353
    %v1355 = vadd.f32 %v1340, 1.0
    %v1356 = vadd.f32 %v1342, 1.0
    %v1357 = vadd.f32 %v1344, 1.0
    %v1358 = vadd.f32 %v1346, 1.0
    %v1359 = vadd.f32 %v1348, 1.0
    %v1360 = vadd.f32 %v1350, 1.0
    %v1361 = vadd.f32 %v1352, 1.0
    %v1362 = vadd.f32 %v1354, 1.0
    %v1363 = vrcp.pop %v1355
    %v1364 = vmul.f32 1.0, %v1363
    %v1365 = vrcp.pop %v1356
    %v1366 = vmul.f32 1.0, %v1365
    %v1367 = vrcp.pop %v1357
    %v1368 = vmul.f32 1.0, %v1367
    %v1369 = vrcp.pop %v1358
    %v1370 = vmul.f32 1.0, %v1369
    %v1371 = vrcp.pop %v1359
    %v1372 = vmul.f32 1.0, %v1371
    %v1373 = vrcp.pop %v1360
    %v1374 = vmul.f32 1.0, %v1373
    %v1375 = vrcp.pop %v1361
    %v1376 = vmul.f32 1.0, %v1375
    %v1377 = vrcp.pop %v1362
    %v1378 = vmul.f32 1.0, %v1377
    %v1379 = vtanh.pop %v1323
    %v1380 = vtanh.pop %v1324
    %v1381 = vtanh.pop %v1325
    %v1382 = vtanh.pop %v1326
    %v1383 = vtanh.pop %v1327
    %v1384 = vtanh.pop %v1328
    %v1385 = vtanh.pop %v1329
    %v1386 = vtanh.pop %v1330
    %v1395 = vrot.slane %v623, 7
    %v1396 = vrot.slane %v624, 7
    %v1397 = vrot.slane %v625, 7
    %v1398 = vrot.slane %v626, 7
    %v1399 = vrot.slane %v627, 7
    %v1400 = vrot.slane %v628, 7
    %v1401 = vrot.slane %v629, 7
    %v1402 = vrot.slane %v630, 7
    %v1411 = vmul.f32 %v1364, %v1395
    %v1412 = vmul.f32 %v1366, %v1396
    %v1413 = vmul.f32 %v1368, %v1397
    %v1414 = vmul.f32 %v1370, %v1398
    %v1415 = vmul.f32 %v1372, %v1399
    %v1416 = vmul.f32 %v1374, %v1400
    %v1417 = vmul.f32 %v1376, %v1401
    %v1418 = vmul.f32 %v1378, %v1402
    %1427 = vrot.lane.b32.xlu0 %v1379, 32
    %v1428 = vpop.permute.xlu0 %1427
    %1429 = vrot.lane.b32.xlu0 %v1380, 32
    %v1430 = vpop.permute.xlu0 %1429
    %1431 = vrot.lane.b32.xlu0 %v1381, 32
    %v1432 = vpop.permute.xlu0 %1431
    %1433 = vrot.lane.b32.xlu0 %v1382, 32
    %v1434 = vpop.permute.xlu0 %1433
    %1435 = vrot.lane.b32.xlu0 %v1383, 32
    %v1436 = vpop.permute.xlu0 %1435
    %1437 = vrot.lane.b32.xlu0 %v1384, 32
    %v1438 = vpop.permute.xlu0 %1437
    %1439 = vrot.lane.b32.xlu0 %v1385, 32
    %v1440 = vpop.permute.xlu0 %1439
    %1441 = vrot.lane.b32.xlu0 %v1386, 32
    %v1442 = vpop.permute.xlu0 %1441
    %v1451 = vmul.f32 %v1364, %v1428
    %v1452 = vmul.f32 %v1366, %v1430
    %v1453 = vmul.f32 %v1368, %v1432
    %v1454 = vmul.f32 %v1370, %v1434
    %v1455 = vmul.f32 %v1372, %v1436
    %v1456 = vmul.f32 %v1374, %v1438
    %v1457 = vmul.f32 %v1376, %v1440
    %v1458 = vmul.f32 %v1378, %v1442
    %1467 = vrot.lane.b32.xlu0 %v1451, 32
    %v1468 = vpop.permute.xlu0 %1467
    %1469 = vrot.lane.b32.xlu0 %v1452, 32
    %v1470 = vpop.permute.xlu0 %1469
    %1471 = vrot.lane.b32.xlu0 %v1453, 32
    %v1472 = vpop.permute.xlu0 %1471
    %1473 = vrot.lane.b32.xlu0 %v1454, 32
    %v1474 = vpop.permute.xlu0 %1473
    %1475 = vrot.lane.b32.xlu0 %v1455, 32
    %v1476 = vpop.permute.xlu0 %1475
    %1477 = vrot.lane.b32.xlu0 %v1456, 32
    %v1478 = vpop.permute.xlu0 %1477
    %1479 = vrot.lane.b32.xlu0 %v1457, 32
    %v1480 = vpop.permute.xlu0 %1479
    %1481 = vrot.lane.b32.xlu0 %v1458, 32
    %v1482 = vpop.permute.xlu0 %1481
    %v1491 = vadd.f32 %v1411, %v1468
    %v1492 = vadd.f32 %v1412, %v1470
    %v1493 = vadd.f32 %v1413, %v1472
    %v1494 = vadd.f32 %v1414, %v1474
    %v1495 = vadd.f32 %v1415, %v1476
    %v1496 = vadd.f32 %v1416, %v1478
    %v1497 = vadd.f32 %v1417, %v1480
    %v1498 = vadd.f32 %v1418, %v1482
    %v1499 = vtanh.pop %v1491
    %v1500 = vtanh.pop %v1492
    %v1501 = vtanh.pop %v1493
    %v1502 = vtanh.pop %v1494
    %v1503 = vtanh.pop %v1495
    %v1504 = vtanh.pop %v1496
    %v1505 = vtanh.pop %v1497
    %v1506 = vtanh.pop %v1498
    %1515 = vrot.lane.b32.xlu0 %v1499, 32
    %v1516 = vpop.permute.xlu0 %1515
    %1517 = vrot.lane.b32.xlu0 %v1500, 32
    %v1518 = vpop.permute.xlu0 %1517
    %1519 = vrot.lane.b32.xlu0 %v1501, 32
    %v1520 = vpop.permute.xlu0 %1519
    %1521 = vrot.lane.b32.xlu0 %v1502, 32
    %v1522 = vpop.permute.xlu0 %1521
    %1523 = vrot.lane.b32.xlu0 %v1503, 32
    %v1524 = vpop.permute.xlu0 %1523
    %1525 = vrot.lane.b32.xlu0 %v1504, 32
    %v1526 = vpop.permute.xlu0 %1525
    %1527 = vrot.lane.b32.xlu0 %v1505, 32
    %v1528 = vpop.permute.xlu0 %1527
    %1529 = vrot.lane.b32.xlu0 %v1506, 32
    %v1530 = vpop.permute.xlu0 %1529
    %v1539 = vmul.f32 %v1364, %v1516
    %v1540 = vmul.f32 %v1366, %v1518
    %v1541 = vmul.f32 %v1368, %v1520
    %v1542 = vmul.f32 %v1370, %v1522
    %v1543 = vmul.f32 %v1372, %v1524
    %v1544 = vmul.f32 %v1374, %v1526
    %v1545 = vmul.f32 %v1376, %v1528
    %v1546 = vmul.f32 %v1378, %v1530
    %v1547 = vpack.c.bf16 %v1539, %v1539
    %v1548 = vpack.c.bf16 %v1540, %v1540
    %v1549 = vpack.c.bf16 %v1541, %v1541
    %v1550 = vpack.c.bf16 %v1542, %v1542
    %v1551 = vpack.c.bf16 %v1543, %v1543
    %v1552 = vpack.c.bf16 %v1544, %v1544
    %v1553 = vpack.c.bf16 %v1545, %v1545
    %v1554 = vpack.c.bf16 %v1546, %v1546
    %1555 = vmatprep.subr.bf16.mxu0 0
    %1556 = vmatpush1.bf16.msra.mxu0 %v695
    %1557 = vmatprep.subr.bf16.mxu0 0
    %1558 = vmatpush1.bf16.msra.mxu0 %v696
    %1559 = vmatprep.subr.bf16.mxu0 0
    %1560 = vmatpush1.bf16.msra.mxu0 0
    %1561 = vmatprep.subr.bf16.mxu0 0
    %1562 = vmatpush1.bf16.msra.mxu0 0
    %1563 = vmatprep.subr.bf16.mxu0 0
    %1564 = vmatpush1.bf16.msra.mxu0 0
    %1565 = vmatprep.subr.bf16.mxu0 0
    %1566 = vmatpush1.bf16.msra.mxu0 0
    %1567 = vmatprep.subr.bf16.mxu0 0
    %1568 = vmatpush1.bf16.msra.mxu0 0
    %1569 = vmatprep.subr.bf16.mxu0 0
    %1570 = vmatpush1.bf16.msra.mxu0 0
    %1571 = vmatprep.subr.bf16.mxu0 0
    %1572 = vmatpush1.bf16.msra.mxu0 0
    %1573 = vmatprep.subr.bf16.mxu0 0
    %1574 = vmatpush1.bf16.msra.mxu0 0
    %1575 = vmatprep.subr.bf16.mxu0 0
    %1576 = vmatpush1.bf16.msra.mxu0 0
    %1577 = vmatprep.subr.bf16.mxu0 0
    %1578 = vmatpush1.bf16.msra.mxu0 0
    %1579 = vmatprep.subr.bf16.mxu0 0
    %1580 = vmatpush1.bf16.msra.mxu0 0
    %1581 = vmatprep.subr.bf16.mxu0 0
    %1582 = vmatpush1.bf16.msra.mxu0 0
    %1583 = vmatprep.subr.bf16.mxu0 0
    %1584 = vmatpush1.bf16.msra.mxu0 0
    %1585 = vmatprep.subr.bf16.mxu0 0
    %1586 = vmatpush1.bf16.msra.mxu0 0
    %1587 = vmatprep.mubr.bf16.mxu0 0
    %1588 = vmatmul.mubr.bf16.gmra.mrb[0].mxu0 %v928
    %v1589 = vpop.f32.mrb[0].mxu0
    %v1590 = vadd.f32 0.0, %v1589
    %v1591 = vpop.f32.mrb[0].mxu0
    %v1592 = vpop.f32.mrb[0].mxu0
    %v1593 = vpop.f32.mrb[0].mxu0
    %1594 = vdwg.mxu0
    %v1603 = vunpack.c.l.b16 %v1547
    %v1604 = vunpack.c.l.b16 %v1548
    %v1605 = vunpack.c.l.b16 %v1549
    %v1606 = vunpack.c.l.b16 %v1550
    %v1607 = vunpack.c.l.b16 %v1551
    %v1608 = vunpack.c.l.b16 %v1552
    %v1609 = vunpack.c.l.b16 %v1553
    %v1610 = vunpack.c.l.b16 %v1554
    %v1611 = vrot.slane %v1603, 1
    %v1612 = vsel %vm756, %v1604, %v1611
    %v1613 = vrot.slane %v1605, 7
    %v1614 = vsel %vm759, %v1613, %v1612
    %v1615 = vrot.slane %v1606, 6
    %v1616 = vsel %vm762, %v1615, %v1614
    %v1617 = vrot.slane %v1607, 5
    %v1618 = vsel %vm765, %v1617, %v1616
    %v1619 = vrot.slane %v1608, 4
    %v1620 = vsel %vm768, %v1619, %v1618
    %v1621 = vrot.slane %v1609, 3
    %v1622 = vsel %vm771, %v1621, %v1620
    %v1623 = vrot.slane %v1610, 2
    %v1624 = vsel %vm774, %v1623, %v1622
    %v1625 = vpack.c.b16 %v1624, %v1624
    %1626 = vrot.lane.b32.xlu0 %v1625, 64
    %v1627 = vpop.permute.xlu0 %1626
    %v1629 = vsel %vm419, %v1627, 0
    %1631 = vmatprep.subr.bf16.mxu0 0
    %1632 = vmatpush1.bf16.msra.mxu0 %v787
    %1633 = vmatprep.subr.bf16.mxu0 0
    %1634 = vmatpush1.bf16.msra.mxu0 %v788
    %1635 = vmatprep.subr.bf16.mxu0 0
    %1636 = vmatpush1.bf16.msra.mxu0 0
    %1637 = vmatprep.subr.bf16.mxu0 0
    %1638 = vmatpush1.bf16.msra.mxu0 0
    %1639 = vmatprep.subr.bf16.mxu0 0
    %1640 = vmatpush1.bf16.msra.mxu0 0
    %1641 = vmatprep.subr.bf16.mxu0 0
    %1642 = vmatpush1.bf16.msra.mxu0 0
    %1643 = vmatprep.subr.bf16.mxu0 0
    %1644 = vmatpush1.bf16.msra.mxu0 0
    %1645 = vmatprep.subr.bf16.mxu0 0
    %1646 = vmatpush1.bf16.msra.mxu0 0
    %1647 = vmatprep.subr.bf16.mxu0 0
    %1648 = vmatpush1.bf16.msra.mxu0 0
    %1649 = vmatprep.subr.bf16.mxu0 0
    %1650 = vmatpush1.bf16.msra.mxu0 0
    %1651 = vmatprep.subr.bf16.mxu0 0
    %1652 = vmatpush1.bf16.msra.mxu0 0
    %1653 = vmatprep.subr.bf16.mxu0 0
    %1654 = vmatpush1.bf16.msra.mxu0 0
    %1655 = vmatprep.subr.bf16.mxu0 0
    %1656 = vmatpush1.bf16.msra.mxu0 0
    %1657 = vmatprep.subr.bf16.mxu0 0
    %1658 = vmatpush1.bf16.msra.mxu0 0
    %1659 = vmatprep.subr.bf16.mxu0 0
    %1660 = vmatpush1.bf16.msra.mxu0 0
    %1661 = vmatprep.subr.bf16.mxu0 0
    %1662 = vmatpush1.bf16.msra.mxu0 0
    %1663 = vmatprep.mubr.bf16.mxu0 0
    %1664 = vmatmul.mubr.bf16.gmra.mrb[0].mxu0 %v1629
    %v1665 = vpop.f32.mrb[0].mxu0
    %v1666 = vadd.f32 %v1590, %v1665
    %v1667 = vpop.f32.mrb[0].mxu0
    %v1668 = vpop.f32.mrb[0].mxu0
    %v1669 = vpop.f32.mrb[0].mxu0
    %1670 = vdwg.mxu0
    %v1671 = vadd.f32 %v1666, %v283
    %v1672 = vxor.u32 %v1671, 2147483648
    %v1673 = vmul.f32 %v1672, 1.442695
    %v1674 = vpow.pop %v1673
    %v1675 = vadd.f32 %v1674, 1.0
    %v1676 = vrcp.pop %v1675
    %v1677 = vmul.f32 1.0, %v1676
    %v1678 = vtanh.pop %v1671
    %v1679 = vmul.f32 %v1677, %v852
    %1681 = vrot.lane.b32.xlu0 %v1678, 32
    %v1682 = vpop.permute.xlu0 %1681
    %v1684 = vmul.f32 %v1677, %v1682
    %1686 = vrot.lane.b32.xlu0 %v1684, 32
    %v1687 = vpop.permute.xlu0 %1686
    %v1689 = vadd.f32 %v1679, %v1687
    %v1690 = vtanh.pop %v1689
    %1692 = vrot.lane.b32.xlu0 %v1690, 32
    %v1693 = vpop.permute.xlu0 %1692
    %v1695 = vmul.f32 %v1677, %v1693
    %v1696 = vpack.c.bf16 %v1695, %v1695
    %1697 = vmatprep.subr.bf16.mxu0 0
    %1698 = vmatpush1.bf16.msra.mxu0 %v868
    %1699 = vmatprep.subr.bf16.mxu0 0
    %1700 = vmatpush1.bf16.msra.mxu0 %v869
    %1701 = vmatprep.subr.bf16.mxu0 0
    %1702 = vmatpush1.bf16.msra.mxu0 0
    %1703 = vmatprep.subr.bf16.mxu0 0
    %1704 = vmatpush1.bf16.msra.mxu0 0
    %1705 = vmatprep.subr.bf16.mxu0 0
    %1706 = vmatpush1.bf16.msra.mxu0 0
    %1707 = vmatprep.subr.bf16.mxu0 0
    %1708 = vmatpush1.bf16.msra.mxu0 0
    %1709 = vmatprep.subr.bf16.mxu0 0
    %1710 = vmatpush1.bf16.msra.mxu0 0
    %1711 = vmatprep.subr.bf16.mxu0 0
    %1712 = vmatpush1.bf16.msra.mxu0 0
    %1713 = vmatprep.subr.bf16.mxu0 0
    %1714 = vmatpush1.bf16.msra.mxu0 0
    %1715 = vmatprep.subr.bf16.mxu0 0
    %1716 = vmatpush1.bf16.msra.mxu0 0
    %1717 = vmatprep.subr.bf16.mxu0 0
    %1718 = vmatpush1.bf16.msra.mxu0 0
    %1719 = vmatprep.subr.bf16.mxu0 0
    %1720 = vmatpush1.bf16.msra.mxu0 0
    %1721 = vmatprep.subr.bf16.mxu0 0
    %1722 = vmatpush1.bf16.msra.mxu0 0
    %1723 = vmatprep.subr.bf16.mxu0 0
    %1724 = vmatpush1.bf16.msra.mxu0 0
    %1725 = vmatprep.subr.bf16.mxu0 0
    %1726 = vmatpush1.bf16.msra.mxu0 0
    %1727 = vmatprep.subr.bf16.mxu0 0
    %1728 = vmatpush1.bf16.msra.mxu0 0
    %1729 = vmatprep.mubr.bf16.mxu0 0
    %1730 = vmatmul.mubr.bf16.gmra.mrb[0].mxu0 %v1064
    %v1731 = vpop.f32.mrb[0].mxu0
    %v1732 = vadd.f32 0.0, %v1731
    %v1733 = vpop.f32.mrb[0].mxu0
    %v1734 = vpop.f32.mrb[0].mxu0
    %v1735 = vpop.f32.mrb[0].mxu0
    %1736 = vdwg.mxu0
    %1738 = vrot.lane.b32.xlu0 %v1696, 64
    %v1739 = vpop.permute.xlu0 %1738
    %v1741 = vsel %vm419, %v1739, 0
    %1743 = vmatprep.subr.bf16.mxu0 0
    %1744 = vmatpush1.bf16.msra.mxu0 %v923
    %1745 = vmatprep.subr.bf16.mxu0 0
    %1746 = vmatpush1.bf16.msra.mxu0 %v924
    %1747 = vmatprep.subr.bf16.mxu0 0
    %1748 = vmatpush1.bf16.msra.mxu0 0
    %1749 = vmatprep.subr.bf16.mxu0 0
    %1750 = vmatpush1.bf16.msra.mxu0 0
    %1751 = vmatprep.subr.bf16.mxu0 0
    %1752 = vmatpush1.bf16.msra.mxu0 0
    %1753 = vmatprep.subr.bf16.mxu0 0
    %1754 = vmatpush1.bf16.msra.mxu0 0
    %1755 = vmatprep.subr.bf16.mxu0 0
    %1756 = vmatpush1.bf16.msra.mxu0 0
    %1757 = vmatprep.subr.bf16.mxu0 0
    %1758 = vmatpush1.bf16.msra.mxu0 0
    %1759 = vmatprep.subr.bf16.mxu0 0
    %1760 = vmatpush1.bf16.msra.mxu0 0
    %1761 = vmatprep.subr.bf16.mxu0 0
    %1762 = vmatpush1.bf16.msra.mxu0 0
    %1763 = vmatprep.subr.bf16.mxu0 0
    %1764 = vmatpush1.bf16.msra.mxu0 0
    %1765 = vmatprep.subr.bf16.mxu0 0
    %1766 = vmatpush1.bf16.msra.mxu0 0
    %1767 = vmatprep.subr.bf16.mxu0 0
    %1768 = vmatpush1.bf16.msra.mxu0 0
    %1769 = vmatprep.subr.bf16.mxu0 0
    %1770 = vmatpush1.bf16.msra.mxu0 0
    %1771 = vmatprep.subr.bf16.mxu0 0
    %1772 = vmatpush1.bf16.msra.mxu0 0
    %1773 = vmatprep.subr.bf16.mxu0 0
    %1774 = vmatpush1.bf16.msra.mxu0 0
    %1775 = vmatprep.mubr.bf16.mxu0 0
    %1776 = vmatmul.mubr.bf16.gmra.mrb[0].mxu0 %v1741
    %v1777 = vpop.f32.mrb[0].mxu0
    %v1778 = vadd.f32 %v1732, %v1777
    %v1779 = vpop.f32.mrb[0].mxu0
    %v1780 = vpop.f32.mrb[0].mxu0
    %v1781 = vpop.f32.mrb[0].mxu0
    %1782 = vdwg.mxu0
    %v1783 = vadd.f32 %v1778, %v290
    %v1784 = vxor.u32 %v1783, 2147483648
    %v1785 = vmul.f32 %v1784, 1.442695
    %v1786 = vpow.pop %v1785
    %v1787 = vadd.f32 %v1786, 1.0
    %v1788 = vrcp.pop %v1787
    %v1789 = vmul.f32 1.0, %v1788
    %v1790 = vtanh.pop %v1783
    %v1791 = vmul.f32 %v1789, %v988
    %1793 = vrot.lane.b32.xlu0 %v1790, 32
    %v1794 = vpop.permute.xlu0 %1793
    %v1796 = vmul.f32 %v1789, %v1794
    %1798 = vrot.lane.b32.xlu0 %v1796, 32
    %v1799 = vpop.permute.xlu0 %1798
    %v1801 = vadd.f32 %v1791, %v1799
    %v1802 = vtanh.pop %v1801
    %1804 = vrot.lane.b32.xlu0 %v1802, 32
    %v1805 = vpop.permute.xlu0 %1804
    %v1807 = vmul.f32 %v1789, %v1805
    %v1808 = vpack.c.bf16 %v1807, %v1807
    %1809 = vmatprep.subr.bf16.mxu0 0
    %1810 = vmatpush1.bf16.msra.mxu0 %v1004
    %1811 = vmatprep.subr.bf16.mxu0 0
    %1812 = vmatpush1.bf16.msra.mxu0 %v1005
    %1813 = vmatprep.subr.bf16.mxu0 0
    %1814 = vmatpush1.bf16.msra.mxu0 0
    %1815 = vmatprep.subr.bf16.mxu0 0
    %1816 = vmatpush1.bf16.msra.mxu0 0
    %1817 = vmatprep.subr.bf16.mxu0 0
    %1818 = vmatpush1.bf16.msra.mxu0 0
    %1819 = vmatprep.subr.bf16.mxu0 0
    %1820 = vmatpush1.bf16.msra.mxu0 0
    %1821 = vmatprep.subr.bf16.mxu0 0
    %1822 = vmatpush1.bf16.msra.mxu0 0
    %1823 = vmatprep.subr.bf16.mxu0 0
    %1824 = vmatpush1.bf16.msra.mxu0 0
    %1825 = vmatprep.subr.bf16.mxu0 0
    %1826 = vmatpush1.bf16.msra.mxu0 0
    %1827 = vmatprep.subr.bf16.mxu0 0
    %1828 = vmatpush1.bf16.msra.mxu0 0
    %1829 = vmatprep.subr.bf16.mxu0 0
    %1830 = vmatpush1.bf16.msra.mxu0 0
    %1831 = vmatprep.subr.bf16.mxu0 0
    %1832 = vmatpush1.bf16.msra.mxu0 0
    %1833 = vmatprep.subr.bf16.mxu0 0
    %1834 = vmatpush1.bf16.msra.mxu0 0
    %1835 = vmatprep.subr.bf16.mxu0 0
    %1836 = vmatpush1.bf16.msra.mxu0 0
    %1837 = vmatprep.subr.bf16.mxu0 0
    %1838 = vmatpush1.bf16.msra.mxu0 0
    %1839 = vmatprep.subr.bf16.mxu0 0
    %1840 = vmatpush1.bf16.msra.mxu0 0
    %1841 = vmatprep.mubr.bf16.mxu0 0
    %1842 = vmatmul.mubr.bf16.gmra.mrb[0].mxu0 %v1200
    %v1843 = vpop.f32.mrb[0].mxu0
    %v1844 = vadd.f32 0.0, %v1843
    %v1845 = vpop.f32.mrb[0].mxu0
    %v1846 = vpop.f32.mrb[0].mxu0
    %v1847 = vpop.f32.mrb[0].mxu0
    %1848 = vdwg.mxu0
    %1850 = vrot.lane.b32.xlu0 %v1808, 64
    %v1851 = vpop.permute.xlu0 %1850
    %v1853 = vsel %vm419, %v1851, 0
    %1855 = vmatprep.subr.bf16.mxu0 0
    %1856 = vmatpush1.bf16.msra.mxu0 %v1059
    %1857 = vmatprep.subr.bf16.mxu0 0
    %1858 = vmatpush1.bf16.msra.mxu0 %v1060
    %1859 = vmatprep.subr.bf16.mxu0 0
    %1860 = vmatpush1.bf16.msra.mxu0 0
    %1861 = vmatprep.subr.bf16.mxu0 0
    %1862 = vmatpush1.bf16.msra.mxu0 0
    %1863 = vmatprep.subr.bf16.mxu0 0
    %1864 = vmatpush1.bf16.msra.mxu0 0
    %1865 = vmatprep.subr.bf16.mxu0 0
    %1866 = vmatpush1.bf16.msra.mxu0 0
    %1867 = vmatprep.subr.bf16.mxu0 0
    %1868 = vmatpush1.bf16.msra.mxu0 0
    %1869 = vmatprep.subr.bf16.mxu0 0
    %1870 = vmatpush1.bf16.msra.mxu0 0
    %1871 = vmatprep.subr.bf16.mxu0 0
    %1872 = vmatpush1.bf16.msra.mxu0 0
    %1873 = vmatprep.subr.bf16.mxu0 0
    %1874 = vmatpush1.bf16.msra.mxu0 0
    %1875 = vmatprep.subr.bf16.mxu0 0
    %1876 = vmatpush1.bf16.msra.mxu0 0
    %1877 = vmatprep.subr.bf16.mxu0 0
    %1878 = vmatpush1.bf16.msra.mxu0 0
    %1879 = vmatprep.subr.bf16.mxu0 0
    %1880 = vmatpush1.bf16.msra.mxu0 0
    %1881 = vmatprep.subr.bf16.mxu0 0
    %1882 = vmatpush1.bf16.msra.mxu0 0
    %1883 = vmatprep.subr.bf16.mxu0 0
    %1884 = vmatpush1.bf16.msra.mxu0 0
    %1885 = vmatprep.subr.bf16.mxu0 0
    %1886 = vmatpush1.bf16.msra.mxu0 0
    %1887 = vmatprep.mubr.bf16.mxu0 0
    %1888 = vmatmul.mubr.bf16.gmra.mrb[0].mxu0 %v1853
    %v1889 = vpop.f32.mrb[0].mxu0
    %v1890 = vadd.f32 %v1844, %v1889
    %v1891 = vpop.f32.mrb[0].mxu0
    %v1892 = vpop.f32.mrb[0].mxu0
    %v1893 = vpop.f32.mrb[0].mxu0
    %1894 = vdwg.mxu0
    %v1895 = vadd.f32 %v1890, %v297
    %v1896 = vxor.u32 %v1895, 2147483648
    %v1897 = vmul.f32 %v1896, 1.442695
    %v1898 = vpow.pop %v1897
    %v1899 = vadd.f32 %v1898, 1.0
    %v1900 = vrcp.pop %v1899
    %v1901 = vmul.f32 1.0, %v1900
    %v1902 = vtanh.pop %v1895
    %v1903 = vmul.f32 %v1901, %v1124
    %1905 = vrot.lane.b32.xlu0 %v1902, 32
    %v1906 = vpop.permute.xlu0 %1905
    %v1908 = vmul.f32 %v1901, %v1906
    %1910 = vrot.lane.b32.xlu0 %v1908, 32
    %v1911 = vpop.permute.xlu0 %1910
    %v1913 = vadd.f32 %v1903, %v1911
    %v1914 = vtanh.pop %v1913
    %1916 = vrot.lane.b32.xlu0 %v1914, 32
    %v1917 = vpop.permute.xlu0 %1916
    %v1919 = vmul.f32 %v1901, %v1917
    %v1920 = vpack.c.bf16 %v1919, %v1919
    %v1921 = vpack.c.bf16 %v1266, %v1266
    %1923 = vrot.lane.b32.xlu0 %v1921, 64
    %v1924 = vpop.permute.xlu0 %1923
    %v1926 = vsel %vm419, %v1924, 0
    %1928 = vmatprep.subr.bf16.mxu0 0
    %1929 = vmatpush1.bf16.msra.mxu0 %v1140
    %1930 = vmatprep.subr.bf16.mxu0 0
    %1931 = vmatpush1.bf16.msra.mxu0 %v1141
    %1932 = vmatprep.subr.bf16.mxu0 0
    %1933 = vmatpush1.bf16.msra.mxu0 0
    %1934 = vmatprep.subr.bf16.mxu0 0
    %1935 = vmatpush1.bf16.msra.mxu0 0
    %1936 = vmatprep.subr.bf16.mxu0 0
    %1937 = vmatpush1.bf16.msra.mxu0 0
    %1938 = vmatprep.subr.bf16.mxu0 0
    %1939 = vmatpush1.bf16.msra.mxu0 0
    %1940 = vmatprep.subr.bf16.mxu0 0
    %1941 = vmatpush1.bf16.msra.mxu0 0
    %1942 = vmatprep.subr.bf16.mxu0 0
    %1943 = vmatpush1.bf16.msra.mxu0 0
    %1944 = vmatprep.subr.bf16.mxu0 0
    %1945 = vmatpush1.bf16.msra.mxu0 0
    %1946 = vmatprep.subr.bf16.mxu0 0
    %1947 = vmatpush1.bf16.msra.mxu0 0
    %1948 = vmatprep.subr.bf16.mxu0 0
    %1949 = vmatpush1.bf16.msra.mxu0 0
    %1950 = vmatprep.subr.bf16.mxu0 0
    %1951 = vmatpush1.bf16.msra.mxu0 0
    %1952 = vmatprep.subr.bf16.mxu0 0
    %1953 = vmatpush1.bf16.msra.mxu0 0
    %1954 = vmatprep.subr.bf16.mxu0 0
    %1955 = vmatpush1.bf16.msra.mxu0 0
    %1956 = vmatprep.subr.bf16.mxu0 0
    %1957 = vmatpush1.bf16.msra.mxu0 0
    %1958 = vmatprep.subr.bf16.mxu0 0
    %1959 = vmatpush1.bf16.msra.mxu0 0
    %1960 = vmatprep.mubr.bf16.mxu0 0
    %1961 = vmatmul.mubr.bf16.gmra.mrb[0].mxu0 %v1926
    %v1962 = vpop.f32.mrb[0].mxu0
    %v1963 = vadd.f32 0.0, %v1962
    %v1964 = vpop.f32.mrb[0].mxu0
    %v1965 = vpop.f32.mrb[0].mxu0
    %v1966 = vpop.f32.mrb[0].mxu0
    %1967 = vdwg.mxu0
    %1969 = vrot.lane.b32.xlu0 %v1920, 64
    %v1970 = vpop.permute.xlu0 %1969
    %v1972 = vsel %vm419, %v1970, 0
    %1974 = vmatprep.subr.bf16.mxu0 0
    %1975 = vmatpush1.bf16.msra.mxu0 %v1195
    %1976 = vmatprep.subr.bf16.mxu0 0
    %1977 = vmatpush1.bf16.msra.mxu0 %v1196
    %1978 = vmatprep.subr.bf16.mxu0 0
    %1979 = vmatpush1.bf16.msra.mxu0 0
    %1980 = vmatprep.subr.bf16.mxu0 0
    %1981 = vmatpush1.bf16.msra.mxu0 0
    %1982 = vmatprep.subr.bf16.mxu0 0
    %1983 = vmatpush1.bf16.msra.mxu0 0
    %1984 = vmatprep.subr.bf16.mxu0 0
    %1985 = vmatpush1.bf16.msra.mxu0 0
    %1986 = vmatprep.subr.bf16.mxu0 0
    %1987 = vmatpush1.bf16.msra.mxu0 0
    %1988 = vmatprep.subr.bf16.mxu0 0
    %1989 = vmatpush1.bf16.msra.mxu0 0
    %1990 = vmatprep.subr.bf16.mxu0 0
    %1991 = vmatpush1.bf16.msra.mxu0 0
    %1992 = vmatprep.subr.bf16.mxu0 0
    %1993 = vmatpush1.bf16.msra.mxu0 0
    %1994 = vmatprep.subr.bf16.mxu0 0
    %1995 = vmatpush1.bf16.msra.mxu0 0
    %1996 = vmatprep.subr.bf16.mxu0 0
    %1997 = vmatpush1.bf16.msra.mxu0 0
    %1998 = vmatprep.subr.bf16.mxu0 0
    %1999 = vmatpush1.bf16.msra.mxu0 0
    %2000 = vmatprep.subr.bf16.mxu0 0
    %2001 = vmatpush1.bf16.msra.mxu0 0
    %2002 = vmatprep.subr.bf16.mxu0 0
    %2003 = vmatpush1.bf16.msra.mxu0 0
    %2004 = vmatprep.subr.bf16.mxu0 0
    %2005 = vmatpush1.bf16.msra.mxu0 0
    %2006 = vmatprep.mubr.bf16.mxu0 0
    %2007 = vmatmul.mubr.bf16.gmra.mrb[0].mxu0 %v1972
    %v2008 = vpop.f32.mrb[0].mxu0
    %v2009 = vadd.f32 %v1963, %v2008
    %v2010 = vpop.f32.mrb[0].mxu0
    %v2011 = vpop.f32.mrb[0].mxu0
    %v2012 = vpop.f32.mrb[0].mxu0
    %2013 = vdwg.mxu0
    %v2014 = vadd.f32 %v2009, %v304
    %v2015 = vxor.u32 %v2014, 2147483648
    %v2016 = vmul.f32 %v2015, 1.442695
    %v2017 = vpow.pop %v2016
    %v2018 = vadd.f32 %v2017, 1.0
    %v2019 = vrcp.pop %v2018
    %v2020 = vmul.f32 1.0, %v2019
    %v2021 = vtanh.pop %v2014
    %v2022 = vmul.f32 %v2020, %v1260
    %2024 = vrot.lane.b32.xlu0 %v2021, 32
    %v2025 = vpop.permute.xlu0 %2024
    %v2027 = vmul.f32 %v2020, %v2025
    %2029 = vrot.lane.b32.xlu0 %v2027, 32
    %v2030 = vpop.permute.xlu0 %2029
    %v2032 = vadd.f32 %v2022, %v2030
    %v2033 = vtanh.pop %v2032
    %2035 = vrot.lane.b32.xlu0 %v2033, 32
    %v2036 = vpop.permute.xlu0 %2035
    %v2038 = vmul.f32 %v2020, %v2036
    %2039 = vmatprep.subr.bf16.mxu0 0
    %2040 = vmatpush1.bf16.msra.mxu0 %v415
    %2041 = vmatprep.subr.bf16.mxu0 0
    %2042 = vmatpush1.bf16.msra.mxu0 %v416
    %2043 = vmatprep.subr.bf16.mxu0 0
    %2044 = vmatpush1.bf16.msra.mxu0 0
    %2045 = vmatprep.subr.bf16.mxu0 0
    %2046 = vmatpush1.bf16.msra.mxu0 0
    %2047 = vmatprep.subr.bf16.mxu0 0
    %2048 = vmatpush1.bf16.msra.mxu0 0
    %2049 = vmatprep.subr.bf16.mxu0 0
    %2050 = vmatpush1.bf16.msra.mxu0 0
    %2051 = vmatprep.subr.bf16.mxu0 0
    %2052 = vmatpush1.bf16.msra.mxu0 0
    %2053 = vmatprep.subr.bf16.mxu0 0
    %2054 = vmatpush1.bf16.msra.mxu0 0
    %2055 = vmatprep.subr.bf16.mxu0 0
    %2056 = vmatpush1.bf16.msra.mxu0 0
    %2057 = vmatprep.subr.bf16.mxu0 0
    %2058 = vmatpush1.bf16.msra.mxu0 0
    %2059 = vmatprep.subr.bf16.mxu0 0
    %2060 = vmatpush1.bf16.msra.mxu0 0
    %2061 = vmatprep.subr.bf16.mxu0 0
    %2062 = vmatpush1.bf16.msra.mxu0 0
    %2063 = vmatprep.subr.bf16.mxu0 0
    %2064 = vmatpush1.bf16.msra.mxu0 0
    %2065 = vmatprep.subr.bf16.mxu0 0
    %2066 = vmatpush1.bf16.msra.mxu0 0
    %2067 = vmatprep.subr.bf16.mxu0 0
    %2068 = vmatpush1.bf16.msra.mxu0 0
    %2069 = vmatprep.subr.bf16.mxu0 0
    %2070 = vmatpush1.bf16.msra.mxu0 0
    %2071 = vmatprep.mubr.bf16.mxu0 0
    %2072 = vmatmul.mubr.bf16.gmra.mrb[0].mxu0 %v1629
    %v2073 = vpop.f32.mrb[0].mxu0
    %v2074 = vadd.f32 0.0, %v2073
    %v2075 = vpop.f32.mrb[0].mxu0
    %v2076 = vpop.f32.mrb[0].mxu0
    %v2077 = vpop.f32.mrb[0].mxu0
    %2078 = vdwg.mxu0
    %v2080 = vrot.slane %v2074, 6
    %v2081 = vrot.slane %v2074, 7
    %v2082 = vrot.slane %v2074, 1
    %v2083 = vrot.slane %v2074, 2
    %v2084 = vrot.slane %v2074, 3
    %v2085 = vrot.slane %v2074, 4
    %v2086 = vrot.slane %v2074, 5
    %v2095 = vadd.f32 %v377, %v2080
    %v2096 = vadd.f32 %v380, %v2081
    %v2097 = vadd.f32 %v385, %v2074
    %v2098 = vadd.f32 %v388, %v2082
    %v2099 = vadd.f32 %v393, %v2083
    %v2100 = vadd.f32 %v396, %v2084
    %v2101 = vadd.f32 %v401, %v2085
    %v2102 = vadd.f32 %v404, %v2086
    %v2103 = vxor.u32 %v2095, 2147483648
    %v2104 = vxor.u32 %v2096, 2147483648
    %v2105 = vxor.u32 %v2097, 2147483648
    %v2106 = vxor.u32 %v2098, 2147483648
    %v2107 = vxor.u32 %v2099, 2147483648
    %v2108 = vxor.u32 %v2100, 2147483648
    %v2109 = vxor.u32 %v2101, 2147483648
    %v2110 = vxor.u32 %v2102, 2147483648
    %v2111 = vmul.f32 %v2103, 1.442695
    %v2112 = vpow.pop %v2111
    %v2113 = vmul.f32 %v2104, 1.442695
    %v2114 = vpow.pop %v2113
    %v2115 = vmul.f32 %v2105, 1.442695
    %v2116 = vpow.pop %v2115
    %v2117 = vmul.f32 %v2106, 1.442695
    %v2118 = vpow.pop %v2117
    %v2119 = vmul.f32 %v2107, 1.442695
    %v2120 = vpow.pop %v2119
    %v2121 = vmul.f32 %v2108, 1.442695
    %v2122 = vpow.pop %v2121
    %v2123 = vmul.f32 %v2109, 1.442695
    %v2124 = vpow.pop %v2123
    %v2125 = vmul.f32 %v2110, 1.442695
    %v2126 = vpow.pop %v2125
    %v2127 = vadd.f32 %v2112, 1.0
    %v2128 = vadd.f32 %v2114, 1.0
    %v2129 = vadd.f32 %v2116, 1.0
    %v2130 = vadd.f32 %v2118, 1.0
    %v2131 = vadd.f32 %v2120, 1.0
    %v2132 = vadd.f32 %v2122, 1.0
    %v2133 = vadd.f32 %v2124, 1.0
    %v2134 = vadd.f32 %v2126, 1.0
    %v2135 = vrcp.pop %v2127
    %v2136 = vmul.f32 1.0, %v2135
    %v2137 = vrcp.pop %v2128
    %v2138 = vmul.f32 1.0, %v2137
    %v2139 = vrcp.pop %v2129
    %v2140 = vmul.f32 1.0, %v2139
    %v2141 = vrcp.pop %v2130
    %v2142 = vmul.f32 1.0, %v2141
    %v2143 = vrcp.pop %v2131
    %v2144 = vmul.f32 1.0, %v2143
    %v2145 = vrcp.pop %v2132
    %v2146 = vmul.f32 1.0, %v2145
    %v2147 = vrcp.pop %v2133
    %v2148 = vmul.f32 1.0, %v2147
    %v2149 = vrcp.pop %v2134
    %v2150 = vmul.f32 1.0, %v2149
    %v2151 = vtanh.pop %v2095
    %v2152 = vtanh.pop %v2096
    %v2153 = vtanh.pop %v2097
    %v2154 = vtanh.pop %v2098
    %v2155 = vtanh.pop %v2099
    %v2156 = vtanh.pop %v2100
    %v2157 = vtanh.pop %v2101
    %v2158 = vtanh.pop %v2102
    %v2167 = vrot.slane %v1491, 7
    %v2168 = vrot.slane %v1492, 7
    %v2169 = vrot.slane %v1493, 7
    %v2170 = vrot.slane %v1494, 7
    %v2171 = vrot.slane %v1495, 7
    %v2172 = vrot.slane %v1496, 7
    %v2173 = vrot.slane %v1497, 7
    %v2174 = vrot.slane %v1498, 7
    %v2183 = vmul.f32 %v2136, %v2167
    %v2184 = vmul.f32 %v2138, %v2168
    %v2185 = vmul.f32 %v2140, %v2169
    %v2186 = vmul.f32 %v2142, %v2170
    %v2187 = vmul.f32 %v2144, %v2171
    %v2188 = vmul.f32 %v2146, %v2172
    %v2189 = vmul.f32 %v2148, %v2173
    %v2190 = vmul.f32 %v2150, %v2174
    %2199 = vrot.lane.b32.xlu0 %v2151, 32
    %v2200 = vpop.permute.xlu0 %2199
    %2201 = vrot.lane.b32.xlu0 %v2152, 32
    %v2202 = vpop.permute.xlu0 %2201
    %2203 = vrot.lane.b32.xlu0 %v2153, 32
    %v2204 = vpop.permute.xlu0 %2203
    %2205 = vrot.lane.b32.xlu0 %v2154, 32
    %v2206 = vpop.permute.xlu0 %2205
    %2207 = vrot.lane.b32.xlu0 %v2155, 32
    %v2208 = vpop.permute.xlu0 %2207
    %2209 = vrot.lane.b32.xlu0 %v2156, 32
    %v2210 = vpop.permute.xlu0 %2209
    %2211 = vrot.lane.b32.xlu0 %v2157, 32
    %v2212 = vpop.permute.xlu0 %2211
    %2213 = vrot.lane.b32.xlu0 %v2158, 32
    %v2214 = vpop.permute.xlu0 %2213
    %v2223 = vmul.f32 %v2136, %v2200
    %v2224 = vmul.f32 %v2138, %v2202
    %v2225 = vmul.f32 %v2140, %v2204
    %v2226 = vmul.f32 %v2142, %v2206
    %v2227 = vmul.f32 %v2144, %v2208
    %v2228 = vmul.f32 %v2146, %v2210
    %v2229 = vmul.f32 %v2148, %v2212
    %v2230 = vmul.f32 %v2150, %v2214
    %2239 = vrot.lane.b32.xlu0 %v2223, 32
    %v2240 = vpop.permute.xlu0 %2239
    %2241 = vrot.lane.b32.xlu0 %v2224, 32
    %v2242 = vpop.permute.xlu0 %2241
    %2243 = vrot.lane.b32.xlu0 %v2225, 32
    %v2244 = vpop.permute.xlu0 %2243
    %2245 = vrot.lane.b32.xlu0 %v2226, 32
    %v2246 = vpop.permute.xlu0 %2245
    %2247 = vrot.lane.b32.xlu0 %v2227, 32
    %v2248 = vpop.permute.xlu0 %2247
    %2249 = vrot.lane.b32.xlu0 %v2228, 32
    %v2250 = vpop.permute.xlu0 %2249
    %2251 = vrot.lane.b32.xlu0 %v2229, 32
    %v2252 = vpop.permute.xlu0 %2251
    %2253 = vrot.lane.b32.xlu0 %v2230, 32
    %v2254 = vpop.permute.xlu0 %2253
    %v2263 = vadd.f32 %v2183, %v2240
    %v2264 = vadd.f32 %v2184, %v2242
    %v2265 = vadd.f32 %v2185, %v2244
    %v2266 = vadd.f32 %v2186, %v2246
    %v2267 = vadd.f32 %v2187, %v2248
    %v2268 = vadd.f32 %v2188, %v2250
    %v2269 = vadd.f32 %v2189, %v2252
    %v2270 = vadd.f32 %v2190, %v2254
    %v2271 = vtanh.pop %v2263
    %v2272 = vtanh.pop %v2264
    %v2273 = vtanh.pop %v2265
    %v2274 = vtanh.pop %v2266
    %v2275 = vtanh.pop %v2267
    %v2276 = vtanh.pop %v2268
    %v2277 = vtanh.pop %v2269
    %v2278 = vtanh.pop %v2270
    %2287 = vrot.lane.b32.xlu0 %v2271, 32
    %v2288 = vpop.permute.xlu0 %2287
    %2289 = vrot.lane.b32.xlu0 %v2272, 32
    %v2290 = vpop.permute.xlu0 %2289
    %2291 = vrot.lane.b32.xlu0 %v2273, 32
    %v2292 = vpop.permute.xlu0 %2291
    %2293 = vrot.lane.b32.xlu0 %v2274, 32
    %v2294 = vpop.permute.xlu0 %2293
    %2295 = vrot.lane.b32.xlu0 %v2275, 32
    %v2296 = vpop.permute.xlu0 %2295
    %2297 = vrot.lane.b32.xlu0 %v2276, 32
    %v2298 = vpop.permute.xlu0 %2297
    %2299 = vrot.lane.b32.xlu0 %v2277, 32
    %v2300 = vpop.permute.xlu0 %2299
    %2301 = vrot.lane.b32.xlu0 %v2278, 32
    %v2302 = vpop.permute.xlu0 %2301
    %v2311 = vmul.f32 %v2136, %v2288
    %v2312 = vmul.f32 %v2138, %v2290
    %v2313 = vmul.f32 %v2140, %v2292
    %v2314 = vmul.f32 %v2142, %v2294
    %v2315 = vmul.f32 %v2144, %v2296
    %v2316 = vmul.f32 %v2146, %v2298
    %v2317 = vmul.f32 %v2148, %v2300
    %v2318 = vmul.f32 %v2150, %v2302
    %v2319 = vpack.c.bf16 %v2311, %v2311
    %v2320 = vpack.c.bf16 %v2312, %v2312
    %v2321 = vpack.c.bf16 %v2313, %v2313
    %v2322 = vpack.c.bf16 %v2314, %v2314
    %v2323 = vpack.c.bf16 %v2315, %v2315
    %v2324 = vpack.c.bf16 %v2316, %v2316
    %v2325 = vpack.c.bf16 %v2317, %v2317
    %v2326 = vpack.c.bf16 %v2318, %v2318
    %2327 = vmatprep.subr.bf16.mxu0 0
    %2328 = vmatpush1.bf16.msra.mxu0 %v695
    %2329 = vmatprep.subr.bf16.mxu0 0
    %2330 = vmatpush1.bf16.msra.mxu0 %v696
    %2331 = vmatprep.subr.bf16.mxu0 0
    %2332 = vmatpush1.bf16.msra.mxu0 0
    %2333 = vmatprep.subr.bf16.mxu0 0
    %2334 = vmatpush1.bf16.msra.mxu0 0
    %2335 = vmatprep.subr.bf16.mxu0 0
    %2336 = vmatpush1.bf16.msra.mxu0 0
    %2337 = vmatprep.subr.bf16.mxu0 0
    %2338 = vmatpush1.bf16.msra.mxu0 0
    %2339 = vmatprep.subr.bf16.mxu0 0
    %2340 = vmatpush1.bf16.msra.mxu0 0
    %2341 = vmatprep.subr.bf16.mxu0 0
    %2342 = vmatpush1.bf16.msra.mxu0 0
    %2343 = vmatprep.subr.bf16.mxu0 0
    %2344 = vmatpush1.bf16.msra.mxu0 0
    %2345 = vmatprep.subr.bf16.mxu0 0
    %2346 = vmatpush1.bf16.msra.mxu0 0
    %2347 = vmatprep.subr.bf16.mxu0 0
    %2348 = vmatpush1.bf16.msra.mxu0 0
    %2349 = vmatprep.subr.bf16.mxu0 0
    %2350 = vmatpush1.bf16.msra.mxu0 0
    %2351 = vmatprep.subr.bf16.mxu0 0
    %2352 = vmatpush1.bf16.msra.mxu0 0
    %2353 = vmatprep.subr.bf16.mxu0 0
    %2354 = vmatpush1.bf16.msra.mxu0 0
    %2355 = vmatprep.subr.bf16.mxu0 0
    %2356 = vmatpush1.bf16.msra.mxu0 0
    %2357 = vmatprep.subr.bf16.mxu0 0
    %2358 = vmatpush1.bf16.msra.mxu0 0
    %2359 = vmatprep.mubr.bf16.mxu0 0
    %2360 = vmatmul.mubr.bf16.gmra.mrb[0].mxu0 %v1741
    %v2361 = vpop.f32.mrb[0].mxu0
    %v2362 = vadd.f32 0.0, %v2361
    %v2363 = vpop.f32.mrb[0].mxu0
    %v2364 = vpop.f32.mrb[0].mxu0
    %v2365 = vpop.f32.mrb[0].mxu0
    %2366 = vdwg.mxu0
    %v2375 = vunpack.c.l.b16 %v2319
    %v2376 = vunpack.c.l.b16 %v2320
    %v2377 = vunpack.c.l.b16 %v2321
    %v2378 = vunpack.c.l.b16 %v2322
    %v2379 = vunpack.c.l.b16 %v2323
    %v2380 = vunpack.c.l.b16 %v2324
    %v2381 = vunpack.c.l.b16 %v2325
    %v2382 = vunpack.c.l.b16 %v2326
    %v2383 = vrot.slane %v2375, 2
    %v2384 = vrot.slane %v2376, 1
    %v2385 = vsel %vm756, %v2384, %v2383
    %v2386 = vsel %vm759, %v2377, %v2385
    %v2387 = vrot.slane %v2378, 7
    %v2388 = vsel %vm762, %v2387, %v2386
    %v2389 = vrot.slane %v2379, 6
    %v2390 = vsel %vm765, %v2389, %v2388
    %v2391 = vrot.slane %v2380, 5
    %v2392 = vsel %vm768, %v2391, %v2390
    %v2393 = vrot.slane %v2381, 4
    %v2394 = vsel %vm771, %v2393, %v2392
    %v2395 = vrot.slane %v2382, 3
    %v2396 = vsel %vm774, %v2395, %v2394
    %v2397 = vpack.c.b16 %v2396, %v2396
    %2398 = vrot.lane.b32.xlu0 %v2397, 64
    %v2399 = vpop.permute.xlu0 %2398
    %v2401 = vsel %vm419, %v2399, 0
    %2403 = vmatprep.subr.bf16.mxu0 0
    %2404 = vmatpush1.bf16.msra.mxu0 %v787
    %2405 = vmatprep.subr.bf16.mxu0 0
    %2406 = vmatpush1.bf16.msra.mxu0 %v788
    %2407 = vmatprep.subr.bf16.mxu0 0
    %2408 = vmatpush1.bf16.msra.mxu0 0
    %2409 = vmatprep.subr.bf16.mxu0 0
    %2410 = vmatpush1.bf16.msra.mxu0 0
    %2411 = vmatprep.subr.bf16.mxu0 0
    %2412 = vmatpush1.bf16.msra.mxu0 0
    %2413 = vmatprep.subr.bf16.mxu0 0
    %2414 = vmatpush1.bf16.msra.mxu0 0
    %2415 = vmatprep.subr.bf16.mxu0 0
    %2416 = vmatpush1.bf16.msra.mxu0 0
    %2417 = vmatprep.subr.bf16.mxu0 0
    %2418 = vmatpush1.bf16.msra.mxu0 0
    %2419 = vmatprep.subr.bf16.mxu0 0
    %2420 = vmatpush1.bf16.msra.mxu0 0
    %2421 = vmatprep.subr.bf16.mxu0 0
    %2422 = vmatpush1.bf16.msra.mxu0 0
    %2423 = vmatprep.subr.bf16.mxu0 0
    %2424 = vmatpush1.bf16.msra.mxu0 0
    %2425 = vmatprep.subr.bf16.mxu0 0
    %2426 = vmatpush1.bf16.msra.mxu0 0
    %2427 = vmatprep.subr.bf16.mxu0 0
    %2428 = vmatpush1.bf16.msra.mxu0 0
    %2429 = vmatprep.subr.bf16.mxu0 0
    %2430 = vmatpush1.bf16.msra.mxu0 0
    %2431 = vmatprep.subr.bf16.mxu0 0
    %2432 = vmatpush1.bf16.msra.mxu0 0
    %2433 = vmatprep.subr.bf16.mxu0 0
    %2434 = vmatpush1.bf16.msra.mxu0 0
    %2435 = vmatprep.mubr.bf16.mxu0 0
    %2436 = vmatmul.mubr.bf16.gmra.mrb[0].mxu0 %v2401
    %v2437 = vpop.f32.mrb[0].mxu0
    %v2438 = vadd.f32 %v2362, %v2437
    %v2439 = vpop.f32.mrb[0].mxu0
    %v2440 = vpop.f32.mrb[0].mxu0
    %v2441 = vpop.f32.mrb[0].mxu0
    %2442 = vdwg.mxu0
    %v2443 = vadd.f32 %v2438, %v283
    %v2444 = vxor.u32 %v2443, 2147483648
    %v2445 = vmul.f32 %v2444, 1.442695
    %v2446 = vpow.pop %v2445
    %v2447 = vadd.f32 %v2446, 1.0
    %v2448 = vrcp.pop %v2447
    %v2449 = vmul.f32 1.0, %v2448
    %v2450 = vtanh.pop %v2443
    %v2451 = vmul.f32 %v2449, %v1689
    %2453 = vrot.lane.b32.xlu0 %v2450, 32
    %v2454 = vpop.permute.xlu0 %2453
    %v2456 = vmul.f32 %v2449, %v2454
    %2458 = vrot.lane.b32.xlu0 %v2456, 32
    %v2459 = vpop.permute.xlu0 %2458
    %v2461 = vadd.f32 %v2451, %v2459
    %v2462 = vtanh.pop %v2461
    %2464 = vrot.lane.b32.xlu0 %v2462, 32
    %v2465 = vpop.permute.xlu0 %2464
    %v2467 = vmul.f32 %v2449, %v2465
    %v2468 = vpack.c.bf16 %v2467, %v2467
    %2469 = vmatprep.subr.bf16.mxu0 0
    %2470 = vmatpush1.bf16.msra.mxu0 %v868
    %2471 = vmatprep.subr.bf16.mxu0 0
    %2472 = vmatpush1.bf16.msra.mxu0 %v869
    %2473 = vmatprep.subr.bf16.mxu0 0
    %2474 = vmatpush1.bf16.msra.mxu0 0
    %2475 = vmatprep.subr.bf16.mxu0 0
    %2476 = vmatpush1.bf16.msra.mxu0 0
    %2477 = vmatprep.subr.bf16.mxu0 0
    %2478 = vmatpush1.bf16.msra.mxu0 0
    %2479 = vmatprep.subr.bf16.mxu0 0
    %2480 = vmatpush1.bf16.msra.mxu0 0
    %2481 = vmatprep.subr.bf16.mxu0 0
    %2482 = vmatpush1.bf16.msra.mxu0 0
    %2483 = vmatprep.subr.bf16.mxu0 0
    %2484 = vmatpush1.bf16.msra.mxu0 0
    %2485 = vmatprep.subr.bf16.mxu0 0
    %2486 = vmatpush1.bf16.msra.mxu0 0
    %2487 = vmatprep.subr.bf16.mxu0 0
    %2488 = vmatpush1.bf16.msra.mxu0 0
    %2489 = vmatprep.subr.bf16.mxu0 0
    %2490 = vmatpush1.bf16.msra.mxu0 0
    %2491 = vmatprep.subr.bf16.mxu0 0
    %2492 = vmatpush1.bf16.msra.mxu0 0
    %2493 = vmatprep.subr.bf16.mxu0 0
    %2494 = vmatpush1.bf16.msra.mxu0 0
    %2495 = vmatprep.subr.bf16.mxu0 0
    %2496 = vmatpush1.bf16.msra.mxu0 0
    %2497 = vmatprep.subr.bf16.mxu0 0
    %2498 = vmatpush1.bf16.msra.mxu0 0
    %2499 = vmatprep.subr.bf16.mxu0 0
    %2500 = vmatpush1.bf16.msra.mxu0 0
    %2501 = vmatprep.mubr.bf16.mxu0 0
    %2502 = vmatmul.mubr.bf16.gmra.mrb[0].mxu0 %v1853
    %v2503 = vpop.f32.mrb[0].mxu0
    %v2504 = vadd.f32 0.0, %v2503
    %v2505 = vpop.f32.mrb[0].mxu0
    %v2506 = vpop.f32.mrb[0].mxu0
    %v2507 = vpop.f32.mrb[0].mxu0
    %2508 = vdwg.mxu0
    %2510 = vrot.lane.b32.xlu0 %v2468, 64
    %v2511 = vpop.permute.xlu0 %2510
    %v2513 = vsel %vm419, %v2511, 0
    %2515 = vmatprep.subr.bf16.mxu0 0
    %2516 = vmatpush1.bf16.msra.mxu0 %v923
    %2517 = vmatprep.subr.bf16.mxu0 0
    %2518 = vmatpush1.bf16.msra.mxu0 %v924
    %2519 = vmatprep.subr.bf16.mxu0 0
    %2520 = vmatpush1.bf16.msra.mxu0 0
    %2521 = vmatprep.subr.bf16.mxu0 0
    %2522 = vmatpush1.bf16.msra.mxu0 0
    %2523 = vmatprep.subr.bf16.mxu0 0
    %2524 = vmatpush1.bf16.msra.mxu0 0
    %2525 = vmatprep.subr.bf16.mxu0 0
    %2526 = vmatpush1.bf16.msra.mxu0 0
    %2527 = vmatprep.subr.bf16.mxu0 0
    %2528 = vmatpush1.bf16.msra.mxu0 0
    %2529 = vmatprep.subr.bf16.mxu0 0
    %2530 = vmatpush1.bf16.msra.mxu0 0
    %2531 = vmatprep.subr.bf16.mxu0 0
    %2532 = vmatpush1.bf16.msra.mxu0 0
    %2533 = vmatprep.subr.bf16.mxu0 0
    %2534 = vmatpush1.bf16.msra.mxu0 0
    %2535 = vmatprep.subr.bf16.mxu0 0
    %2536 = vmatpush1.bf16.msra.mxu0 0
    %2537 = vmatprep.subr.bf16.mxu0 0
    %2538 = vmatpush1.bf16.msra.mxu0 0
    %2539 = vmatprep.subr.bf16.mxu0 0
    %2540 = vmatpush1.bf16.msra.mxu0 0
    %2541 = vmatprep.subr.bf16.mxu0 0
    %2542 = vmatpush1.bf16.msra.mxu0 0
    %2543 = vmatprep.subr.bf16.mxu0 0
    %2544 = vmatpush1.bf16.msra.mxu0 0
    %2545 = vmatprep.subr.bf16.mxu0 0
    %2546 = vmatpush1.bf16.msra.mxu0 0
    %2547 = vmatprep.mubr.bf16.mxu0 0
    %2548 = vmatmul.mubr.bf16.gmra.mrb[0].mxu0 %v2513
    %v2549 = vpop.f32.mrb[0].mxu0
    %v2550 = vadd.f32 %v2504, %v2549
    %v2551 = vpop.f32.mrb[0].mxu0
    %v2552 = vpop.f32.mrb[0].mxu0
    %v2553 = vpop.f32.mrb[0].mxu0
    %2554 = vdwg.mxu0
    %v2555 = vadd.f32 %v2550, %v290
    %v2556 = vxor.u32 %v2555, 2147483648
    %v2557 = vmul.f32 %v2556, 1.442695
    %v2558 = vpow.pop %v2557
    %v2559 = vadd.f32 %v2558, 1.0
    %v2560 = vrcp.pop %v2559
    %v2561 = vmul.f32 1.0, %v2560
    %v2562 = vtanh.pop %v2555
    %v2563 = vmul.f32 %v2561, %v1801
    %2565 = vrot.lane.b32.xlu0 %v2562, 32
    %v2566 = vpop.permute.xlu0 %2565
    %v2568 = vmul.f32 %v2561, %v2566
    %2570 = vrot.lane.b32.xlu0 %v2568, 32
    %v2571 = vpop.permute.xlu0 %2570
    %v2573 = vadd.f32 %v2563, %v2571
    %v2574 = vtanh.pop %v2573
    %2576 = vrot.lane.b32.xlu0 %v2574, 32
    %v2577 = vpop.permute.xlu0 %2576
    %v2579 = vmul.f32 %v2561, %v2577
    %v2580 = vpack.c.bf16 %v2579, %v2579
    %2581 = vmatprep.subr.bf16.mxu0 0
    %2582 = vmatpush1.bf16.msra.mxu0 %v1004
    %2583 = vmatprep.subr.bf16.mxu0 0
    %2584 = vmatpush1.bf16.msra.mxu0 %v1005
    %2585 = vmatprep.subr.bf16.mxu0 0
    %2586 = vmatpush1.bf16.msra.mxu0 0
    %2587 = vmatprep.subr.bf16.mxu0 0
    %2588 = vmatpush1.bf16.msra.mxu0 0
    %2589 = vmatprep.subr.bf16.mxu0 0
    %2590 = vmatpush1.bf16.msra.mxu0 0
    %2591 = vmatprep.subr.bf16.mxu0 0
    %2592 = vmatpush1.bf16.msra.mxu0 0
    %2593 = vmatprep.subr.bf16.mxu0 0
    %2594 = vmatpush1.bf16.msra.mxu0 0
    %2595 = vmatprep.subr.bf16.mxu0 0
    %2596 = vmatpush1.bf16.msra.mxu0 0
    %2597 = vmatprep.subr.bf16.mxu0 0
    %2598 = vmatpush1.bf16.msra.mxu0 0
    %2599 = vmatprep.subr.bf16.mxu0 0
    %2600 = vmatpush1.bf16.msra.mxu0 0
    %2601 = vmatprep.subr.bf16.mxu0 0
    %2602 = vmatpush1.bf16.msra.mxu0 0
    %2603 = vmatprep.subr.bf16.mxu0 0
    %2604 = vmatpush1.bf16.msra.mxu0 0
    %2605 = vmatprep.subr.bf16.mxu0 0
    %2606 = vmatpush1.bf16.msra.mxu0 0
    %2607 = vmatprep.subr.bf16.mxu0 0
    %2608 = vmatpush1.bf16.msra.mxu0 0
    %2609 = vmatprep.subr.bf16.mxu0 0
    %2610 = vmatpush1.bf16.msra.mxu0 0
    %2611 = vmatprep.subr.bf16.mxu0 0
    %2612 = vmatpush1.bf16.msra.mxu0 0
    %2613 = vmatprep.mubr.bf16.mxu0 0
    %2614 = vmatmul.mubr.bf16.gmra.mrb[0].mxu0 %v1972
    %v2615 = vpop.f32.mrb[0].mxu0
    %v2616 = vadd.f32 0.0, %v2615
    %v2617 = vpop.f32.mrb[0].mxu0
    %v2618 = vpop.f32.mrb[0].mxu0
    %v2619 = vpop.f32.mrb[0].mxu0
    %2620 = vdwg.mxu0
    %2622 = vrot.lane.b32.xlu0 %v2580, 64
    %v2623 = vpop.permute.xlu0 %2622
    %v2625 = vsel %vm419, %v2623, 0
    %2627 = vmatprep.subr.bf16.mxu0 0
    %2628 = vmatpush1.bf16.msra.mxu0 %v1059
    %2629 = vmatprep.subr.bf16.mxu0 0
    %2630 = vmatpush1.bf16.msra.mxu0 %v1060
    %2631 = vmatprep.subr.bf16.mxu0 0
    %2632 = vmatpush1.bf16.msra.mxu0 0
    %2633 = vmatprep.subr.bf16.mxu0 0
    %2634 = vmatpush1.bf16.msra.mxu0 0
    %2635 = vmatprep.subr.bf16.mxu0 0
    %2636 = vmatpush1.bf16.msra.mxu0 0
    %2637 = vmatprep.subr.bf16.mxu0 0
    %2638 = vmatpush1.bf16.msra.mxu0 0
    %2639 = vmatprep.subr.bf16.mxu0 0
    %2640 = vmatpush1.bf16.msra.mxu0 0
    %2641 = vmatprep.subr.bf16.mxu0 0
    %2642 = vmatpush1.bf16.msra.mxu0 0
    %2643 = vmatprep.subr.bf16.mxu0 0
    %2644 = vmatpush1.bf16.msra.mxu0 0
    %2645 = vmatprep.subr.bf16.mxu0 0
    %2646 = vmatpush1.bf16.msra.mxu0 0
    %2647 = vmatprep.subr.bf16.mxu0 0
    %2648 = vmatpush1.bf16.msra.mxu0 0
    %2649 = vmatprep.subr.bf16.mxu0 0
    %2650 = vmatpush1.bf16.msra.mxu0 0
    %2651 = vmatprep.subr.bf16.mxu0 0
    %2652 = vmatpush1.bf16.msra.mxu0 0
    %2653 = vmatprep.subr.bf16.mxu0 0
    %2654 = vmatpush1.bf16.msra.mxu0 0
    %2655 = vmatprep.subr.bf16.mxu0 0
    %2656 = vmatpush1.bf16.msra.mxu0 0
    %2657 = vmatprep.subr.bf16.mxu0 0
    %2658 = vmatpush1.bf16.msra.mxu0 0
    %2659 = vmatprep.mubr.bf16.mxu0 0
    %2660 = vmatmul.mubr.bf16.gmra.mrb[0].mxu0 %v2625
    %v2661 = vpop.f32.mrb[0].mxu0
    %v2662 = vadd.f32 %v2616, %v2661
    %v2663 = vpop.f32.mrb[0].mxu0
    %v2664 = vpop.f32.mrb[0].mxu0
    %v2665 = vpop.f32.mrb[0].mxu0
    %2666 = vdwg.mxu0
    %v2667 = vadd.f32 %v2662, %v297
    %v2668 = vxor.u32 %v2667, 2147483648
    %v2669 = vmul.f32 %v2668, 1.442695
    %v2670 = vpow.pop %v2669
    %v2671 = vadd.f32 %v2670, 1.0
    %v2672 = vrcp.pop %v2671
    %v2673 = vmul.f32 1.0, %v2672
    %v2674 = vtanh.pop %v2667
    %v2675 = vmul.f32 %v2673, %v1913
    %2677 = vrot.lane.b32.xlu0 %v2674, 32
    %v2678 = vpop.permute.xlu0 %2677
    %v2680 = vmul.f32 %v2673, %v2678
    %2682 = vrot.lane.b32.xlu0 %v2680, 32
    %v2683 = vpop.permute.xlu0 %2682
    %v2685 = vadd.f32 %v2675, %v2683
    %v2686 = vtanh.pop %v2685
    %2688 = vrot.lane.b32.xlu0 %v2686, 32
    %v2689 = vpop.permute.xlu0 %2688
    %v2691 = vmul.f32 %v2673, %v2689
    %v2692 = vpack.c.bf16 %v2691, %v2691
    %v2693 = vpack.c.bf16 %v2038, %v2038
    %2695 = vrot.lane.b32.xlu0 %v2693, 64
    %v2696 = vpop.permute.xlu0 %2695
    %v2698 = vsel %vm419, %v2696, 0
    %2700 = vmatprep.subr.bf16.mxu0 0
    %2701 = vmatpush1.bf16.msra.mxu0 %v1140
    %2702 = vmatprep.subr.bf16.mxu0 0
    %2703 = vmatpush1.bf16.msra.mxu0 %v1141
    %2704 = vmatprep.subr.bf16.mxu0 0
    %2705 = vmatpush1.bf16.msra.mxu0 0
    %2706 = vmatprep.subr.bf16.mxu0 0
    %2707 = vmatpush1.bf16.msra.mxu0 0
    %2708 = vmatprep.subr.bf16.mxu0 0
    %2709 = vmatpush1.bf16.msra.mxu0 0
    %2710 = vmatprep.subr.bf16.mxu0 0
    %2711 = vmatpush1.bf16.msra.mxu0 0
    %2712 = vmatprep.subr.bf16.mxu0 0
    %2713 = vmatpush1.bf16.msra.mxu0 0
    %2714 = vmatprep.subr.bf16.mxu0 0
    %2715 = vmatpush1.bf16.msra.mxu0 0
    %2716 = vmatprep.subr.bf16.mxu0 0
    %2717 = vmatpush1.bf16.msra.mxu0 0
    %2718 = vmatprep.subr.bf16.mxu0 0
    %2719 = vmatpush1.bf16.msra.mxu0 0
    %2720 = vmatprep.subr.bf16.mxu0 0
    %2721 = vmatpush1.bf16.msra.mxu0 0
    %2722 = vmatprep.subr.bf16.mxu0 0
    %2723 = vmatpush1.bf16.msra.mxu0 0
    %2724 = vmatprep.subr.bf16.mxu0 0
    %2725 = vmatpush1.bf16.msra.mxu0 0
    %2726 = vmatprep.subr.bf16.mxu0 0
    %2727 = vmatpush1.bf16.msra.mxu0 0
    %2728 = vmatprep.subr.bf16.mxu0 0
    %2729 = vmatpush1.bf16.msra.mxu0 0
    %2730 = vmatprep.subr.bf16.mxu0 0
    %2731 = vmatpush1.bf16.msra.mxu0 0
    %2732 = vmatprep.mubr.bf16.mxu0 0
    %2733 = vmatmul.mubr.bf16.gmra.mrb[0].mxu0 %v2698
    %v2734 = vpop.f32.mrb[0].mxu0
    %v2735 = vadd.f32 0.0, %v2734
    %v2736 = vpop.f32.mrb[0].mxu0
    %v2737 = vpop.f32.mrb[0].mxu0
    %v2738 = vpop.f32.mrb[0].mxu0
    %2739 = vdwg.mxu0
    %2741 = vrot.lane.b32.xlu0 %v2692, 64
    %v2742 = vpop.permute.xlu0 %2741
    %v2744 = vsel %vm419, %v2742, 0
    %2746 = vmatprep.subr.bf16.mxu0 0
    %2747 = vmatpush1.bf16.msra.mxu0 %v1195
    %2748 = vmatprep.subr.bf16.mxu0 0
    %2749 = vmatpush1.bf16.msra.mxu0 %v1196
    %2750 = vmatprep.subr.bf16.mxu0 0
    %2751 = vmatpush1.bf16.msra.mxu0 0
    %2752 = vmatprep.subr.bf16.mxu0 0
    %2753 = vmatpush1.bf16.msra.mxu0 0
    %2754 = vmatprep.subr.bf16.mxu0 0
    %2755 = vmatpush1.bf16.msra.mxu0 0
    %2756 = vmatprep.subr.bf16.mxu0 0
    %2757 = vmatpush1.bf16.msra.mxu0 0
    %2758 = vmatprep.subr.bf16.mxu0 0
    %2759 = vmatpush1.bf16.msra.mxu0 0
    %2760 = vmatprep.subr.bf16.mxu0 0
    %2761 = vmatpush1.bf16.msra.mxu0 0
    %2762 = vmatprep.subr.bf16.mxu0 0
    %2763 = vmatpush1.bf16.msra.mxu0 0
    %2764 = vmatprep.subr.bf16.mxu0 0
    %2765 = vmatpush1.bf16.msra.mxu0 0
    %2766 = vmatprep.subr.bf16.mxu0 0
    %2767 = vmatpush1.bf16.msra.mxu0 0
    %2768 = vmatprep.subr.bf16.mxu0 0
    %2769 = vmatpush1.bf16.msra.mxu0 0
    %2770 = vmatprep.subr.bf16.mxu0 0
    %2771 = vmatpush1.bf16.msra.mxu0 0
    %2772 = vmatprep.subr.bf16.mxu0 0
    %2773 = vmatpush1.bf16.msra.mxu0 0
    %2774 = vmatprep.subr.bf16.mxu0 0
    %2775 = vmatpush1.bf16.msra.mxu0 0
    %2776 = vmatprep.subr.bf16.mxu0 0
    %2777 = vmatpush1.bf16.msra.mxu0 0
    %2778 = vmatprep.mubr.bf16.mxu0 0
    %2779 = vmatmul.mubr.bf16.gmra.mrb[0].mxu0 %v2744
    %v2780 = vpop.f32.mrb[0].mxu0
    %v2781 = vadd.f32 %v2735, %v2780
    %v2782 = vpop.f32.mrb[0].mxu0
    %v2783 = vpop.f32.mrb[0].mxu0
    %v2784 = vpop.f32.mrb[0].mxu0
    %2785 = vdwg.mxu0
    %v2786 = vadd.f32 %v2781, %v304
    %v2787 = vxor.u32 %v2786, 2147483648
    %v2788 = vmul.f32 %v2787, 1.442695
    %v2789 = vpow.pop %v2788
    %v2790 = vadd.f32 %v2789, 1.0
    %v2791 = vrcp.pop %v2790
    %v2792 = vmul.f32 1.0, %v2791
    %v2793 = vtanh.pop %v2786
    %v2794 = vmul.f32 %v2792, %v2032
    %2796 = vrot.lane.b32.xlu0 %v2793, 32
    %v2797 = vpop.permute.xlu0 %2796
    %v2799 = vmul.f32 %v2792, %v2797
    %2801 = vrot.lane.b32.xlu0 %v2799, 32
    %v2802 = vpop.permute.xlu0 %2801
    %v2804 = vadd.f32 %v2794, %v2802
    %v2805 = vtanh.pop %v2804
    %2807 = vrot.lane.b32.xlu0 %v2805, 32
    %v2808 = vpop.permute.xlu0 %2807
    %v2810 = vmul.f32 %v2792, %v2808
    %2811 = vmatprep.subr.bf16.mxu0 0
    %2812 = vmatpush1.bf16.msra.mxu0 %v415
    %2813 = vmatprep.subr.bf16.mxu0 0
    %2814 = vmatpush1.bf16.msra.mxu0 %v416
    %2815 = vmatprep.subr.bf16.mxu0 0
    %2816 = vmatpush1.bf16.msra.mxu0 0
    %2817 = vmatprep.subr.bf16.mxu0 0
    %2818 = vmatpush1.bf16.msra.mxu0 0
    %2819 = vmatprep.subr.bf16.mxu0 0
    %2820 = vmatpush1.bf16.msra.mxu0 0
    %2821 = vmatprep.subr.bf16.mxu0 0
    %2822 = vmatpush1.bf16.msra.mxu0 0
    %2823 = vmatprep.subr.bf16.mxu0 0
    %2824 = vmatpush1.bf16.msra.mxu0 0
    %2825 = vmatprep.subr.bf16.mxu0 0
    %2826 = vmatpush1.bf16.msra.mxu0 0
    %2827 = vmatprep.subr.bf16.mxu0 0
    %2828 = vmatpush1.bf16.msra.mxu0 0
    %2829 = vmatprep.subr.bf16.mxu0 0
    %2830 = vmatpush1.bf16.msra.mxu0 0
    %2831 = vmatprep.subr.bf16.mxu0 0
    %2832 = vmatpush1.bf16.msra.mxu0 0
    %2833 = vmatprep.subr.bf16.mxu0 0
    %2834 = vmatpush1.bf16.msra.mxu0 0
    %2835 = vmatprep.subr.bf16.mxu0 0
    %2836 = vmatpush1.bf16.msra.mxu0 0
    %2837 = vmatprep.subr.bf16.mxu0 0
    %2838 = vmatpush1.bf16.msra.mxu0 0
    %2839 = vmatprep.subr.bf16.mxu0 0
    %2840 = vmatpush1.bf16.msra.mxu0 0
    %2841 = vmatprep.subr.bf16.mxu0 0
    %2842 = vmatpush1.bf16.msra.mxu0 0
    %2843 = vmatprep.mubr.bf16.mxu0 0
    %2844 = vmatmul.mubr.bf16.gmra.mrb[0].mxu0 %v2401
    %v2845 = vpop.f32.mrb[0].mxu0
    %v2846 = vadd.f32 0.0, %v2845
    %v2847 = vpop.f32.mrb[0].mxu0
    %v2848 = vpop.f32.mrb[0].mxu0
    %v2849 = vpop.f32.mrb[0].mxu0
    %2850 = vdwg.mxu0
    %v2852 = vrot.slane %v2846, 5
    %v2853 = vrot.slane %v2846, 6
    %v2854 = vrot.slane %v2846, 7
    %v2855 = vrot.slane %v2846, 1
    %v2856 = vrot.slane %v2846, 2
    %v2857 = vrot.slane %v2846, 3
    %v2858 = vrot.slane %v2846, 4
    %v2867 = vadd.f32 %v377, %v2852
    %v2868 = vadd.f32 %v380, %v2853
    %v2869 = vadd.f32 %v385, %v2854
    %v2870 = vadd.f32 %v388, %v2846
    %v2871 = vadd.f32 %v393, %v2855
    %v2872 = vadd.f32 %v396, %v2856
    %v2873 = vadd.f32 %v401, %v2857
    %v2874 = vadd.f32 %v404, %v2858
    %v2875 = vxor.u32 %v2867, 2147483648
    %v2876 = vxor.u32 %v2868, 2147483648
    %v2877 = vxor.u32 %v2869, 2147483648
    %v2878 = vxor.u32 %v2870, 2147483648
    %v2879 = vxor.u32 %v2871, 2147483648
    %v2880 = vxor.u32 %v2872, 2147483648
    %v2881 = vxor.u32 %v2873, 2147483648
    %v2882 = vxor.u32 %v2874, 2147483648
    %v2883 = vmul.f32 %v2875, 1.442695
    %v2884 = vpow.pop %v2883
    %v2885 = vmul.f32 %v2876, 1.442695
    %v2886 = vpow.pop %v2885
    %v2887 = vmul.f32 %v2877, 1.442695
    %v2888 = vpow.pop %v2887
    %v2889 = vmul.f32 %v2878, 1.442695
    %v2890 = vpow.pop %v2889
    %v2891 = vmul.f32 %v2879, 1.442695
    %v2892 = vpow.pop %v2891
    %v2893 = vmul.f32 %v2880, 1.442695
    %v2894 = vpow.pop %v2893
    %v2895 = vmul.f32 %v2881, 1.442695
    %v2896 = vpow.pop %v2895
    %v2897 = vmul.f32 %v2882, 1.442695
    %v2898 = vpow.pop %v2897
    %v2899 = vadd.f32 %v2884, 1.0
    %v2900 = vadd.f32 %v2886, 1.0
    %v2901 = vadd.f32 %v2888, 1.0
    %v2902 = vadd.f32 %v2890, 1.0
    %v2903 = vadd.f32 %v2892, 1.0
    %v2904 = vadd.f32 %v2894, 1.0
    %v2905 = vadd.f32 %v2896, 1.0
    %v2906 = vadd.f32 %v2898, 1.0
    %v2907 = vrcp.pop %v2899
    %v2908 = vmul.f32 1.0, %v2907
    %v2909 = vrcp.pop %v2900
    %v2910 = vmul.f32 1.0, %v2909
    %v2911 = vrcp.pop %v2901
    %v2912 = vmul.f32 1.0, %v2911
    %v2913 = vrcp.pop %v2902
    %v2914 = vmul.f32 1.0, %v2913
    %v2915 = vrcp.pop %v2903
    %v2916 = vmul.f32 1.0, %v2915
    %v2917 = vrcp.pop %v2904
    %v2918 = vmul.f32 1.0, %v2917
    %v2919 = vrcp.pop %v2905
    %v2920 = vmul.f32 1.0, %v2919
    %v2921 = vrcp.pop %v2906
    %v2922 = vmul.f32 1.0, %v2921
    %v2923 = vtanh.pop %v2867
    %v2924 = vtanh.pop %v2868
    %v2925 = vtanh.pop %v2869
    %v2926 = vtanh.pop %v2870
    %v2927 = vtanh.pop %v2871
    %v2928 = vtanh.pop %v2872
    %v2929 = vtanh.pop %v2873
    %v2930 = vtanh.pop %v2874
    %v2939 = vrot.slane %v2263, 7
    %v2940 = vrot.slane %v2264, 7
    %v2941 = vrot.slane %v2265, 7
    %v2942 = vrot.slane %v2266, 7
    %v2943 = vrot.slane %v2267, 7
    %v2944 = vrot.slane %v2268, 7
    %v2945 = vrot.slane %v2269, 7
    %v2946 = vrot.slane %v2270, 7
    %v2955 = vmul.f32 %v2908, %v2939
    %v2956 = vmul.f32 %v2910, %v2940
    %v2957 = vmul.f32 %v2912, %v2941
    %v2958 = vmul.f32 %v2914, %v2942
    %v2959 = vmul.f32 %v2916, %v2943
    %v2960 = vmul.f32 %v2918, %v2944
    %v2961 = vmul.f32 %v2920, %v2945
    %v2962 = vmul.f32 %v2922, %v2946
    %2971 = vrot.lane.b32.xlu0 %v2923, 32
    %v2972 = vpop.permute.xlu0 %2971
    %2973 = vrot.lane.b32.xlu0 %v2924, 32
    %v2974 = vpop.permute.xlu0 %2973
    %2975 = vrot.lane.b32.xlu0 %v2925, 32
    %v2976 = vpop.permute.xlu0 %2975
    %2977 = vrot.lane.b32.xlu0 %v2926, 32
    %v2978 = vpop.permute.xlu0 %2977
    %2979 = vrot.lane.b32.xlu0 %v2927, 32
    %v2980 = vpop.permute.xlu0 %2979
    %2981 = vrot.lane.b32.xlu0 %v2928, 32
    %v2982 = vpop.permute.xlu0 %2981
    %2983 = vrot.lane.b32.xlu0 %v2929, 32
    %v2984 = vpop.permute.xlu0 %2983
    %2985 = vrot.lane.b32.xlu0 %v2930, 32
    %v2986 = vpop.permute.xlu0 %2985
    %v2995 = vmul.f32 %v2908, %v2972
    %v2996 = vmul.f32 %v2910, %v2974
    %v2997 = vmul.f32 %v2912, %v2976
    %v2998 = vmul.f32 %v2914, %v2978
    %v2999 = vmul.f32 %v2916, %v2980
    %v3000 = vmul.f32 %v2918, %v2982
    %v3001 = vmul.f32 %v2920, %v2984
    %v3002 = vmul.f32 %v2922, %v2986
    %3011 = vrot.lane.b32.xlu0 %v2995, 32
    %v3012 = vpop.permute.xlu0 %3011
    %3013 = vrot.lane.b32.xlu0 %v2996, 32
    %v3014 = vpop.permute.xlu0 %3013
    %3015 = vrot.lane.b32.xlu0 %v2997, 32
    %v3016 = vpop.permute.xlu0 %3015
    %3017 = vrot.lane.b32.xlu0 %v2998, 32
    %v3018 = vpop.permute.xlu0 %3017
    %3019 = vrot.lane.b32.xlu0 %v2999, 32
    %v3020 = vpop.permute.xlu0 %3019
    %3021 = vrot.lane.b32.xlu0 %v3000, 32
    %v3022 = vpop.permute.xlu0 %3021
    %3023 = vrot.lane.b32.xlu0 %v3001, 32
    %v3024 = vpop.permute.xlu0 %3023
    %3025 = vrot.lane.b32.xlu0 %v3002, 32
    %v3026 = vpop.permute.xlu0 %3025
    %v3035 = vadd.f32 %v2955, %v3012
    %v3036 = vadd.f32 %v2956, %v3014
    %v3037 = vadd.f32 %v2957, %v3016
    %v3038 = vadd.f32 %v2958, %v3018
    %v3039 = vadd.f32 %v2959, %v3020
    %v3040 = vadd.f32 %v2960, %v3022
    %v3041 = vadd.f32 %v2961, %v3024
    %v3042 = vadd.f32 %v2962, %v3026
    %v3043 = vtanh.pop %v3035
    %v3044 = vtanh.pop %v3036
    %v3045 = vtanh.pop %v3037
    %v3046 = vtanh.pop %v3038
    %v3047 = vtanh.pop %v3039
    %v3048 = vtanh.pop %v3040
    %v3049 = vtanh.pop %v3041
    %v3050 = vtanh.pop %v3042
    %3059 = vrot.lane.b32.xlu0 %v3043, 32
    %v3060 = vpop.permute.xlu0 %3059
    %3061 = vrot.lane.b32.xlu0 %v3044, 32
    %v3062 = vpop.permute.xlu0 %3061
    %3063 = vrot.lane.b32.xlu0 %v3045, 32
    %v3064 = vpop.permute.xlu0 %3063
    %3065 = vrot.lane.b32.xlu0 %v3046, 32
    %v3066 = vpop.permute.xlu0 %3065
    %3067 = vrot.lane.b32.xlu0 %v3047, 32
    %v3068 = vpop.permute.xlu0 %3067
    %3069 = vrot.lane.b32.xlu0 %v3048, 32
    %v3070 = vpop.permute.xlu0 %3069
    %3071 = vrot.lane.b32.xlu0 %v3049, 32
    %v3072 = vpop.permute.xlu0 %3071
    %3073 = vrot.lane.b32.xlu0 %v3050, 32
    %v3074 = vpop.permute.xlu0 %3073
    %v3083 = vmul.f32 %v2908, %v3060
    %v3084 = vmul.f32 %v2910, %v3062
    %v3085 = vmul.f32 %v2912, %v3064
    %v3086 = vmul.f32 %v2914, %v3066
    %v3087 = vmul.f32 %v2916, %v3068
    %v3088 = vmul.f32 %v2918, %v3070
    %v3089 = vmul.f32 %v2920, %v3072
    %v3090 = vmul.f32 %v2922, %v3074
    %v3091 = vpack.c.bf16 %v3083, %v3083
    %v3092 = vpack.c.bf16 %v3084, %v3084
    %v3093 = vpack.c.bf16 %v3085, %v3085
    %v3094 = vpack.c.bf16 %v3086, %v3086
    %v3095 = vpack.c.bf16 %v3087, %v3087
    %v3096 = vpack.c.bf16 %v3088, %v3088
    %v3097 = vpack.c.bf16 %v3089, %v3089
    %v3098 = vpack.c.bf16 %v3090, %v3090
    %3099 = vmatprep.subr.bf16.mxu0 0
    %3100 = vmatpush1.bf16.msra.mxu0 %v695
    %3101 = vmatprep.subr.bf16.mxu0 0
    %3102 = vmatpush1.bf16.msra.mxu0 %v696
    %3103 = vmatprep.subr.bf16.mxu0 0
    %3104 = vmatpush1.bf16.msra.mxu0 0
    %3105 = vmatprep.subr.bf16.mxu0 0
    %3106 = vmatpush1.bf16.msra.mxu0 0
    %3107 = vmatprep.subr.bf16.mxu0 0
    %3108 = vmatpush1.bf16.msra.mxu0 0
    %3109 = vmatprep.subr.bf16.mxu0 0
    %3110 = vmatpush1.bf16.msra.mxu0 0
    %3111 = vmatprep.subr.bf16.mxu0 0
    %3112 = vmatpush1.bf16.msra.mxu0 0
    %3113 = vmatprep.subr.bf16.mxu0 0
    %3114 = vmatpush1.bf16.msra.mxu0 0
    %3115 = vmatprep.subr.bf16.mxu0 0
    %3116 = vmatpush1.bf16.msra.mxu0 0
    %3117 = vmatprep.subr.bf16.mxu0 0
    %3118 = vmatpush1.bf16.msra.mxu0 0
    %3119 = vmatprep.subr.bf16.mxu0 0
    %3120 = vmatpush1.bf16.msra.mxu0 0
    %3121 = vmatprep.subr.bf16.mxu0 0
    %3122 = vmatpush1.bf16.msra.mxu0 0
    %3123 = vmatprep.subr.bf16.mxu0 0
    %3124 = vmatpush1.bf16.msra.mxu0 0
    %3125 = vmatprep.subr.bf16.mxu0 0
    %3126 = vmatpush1.bf16.msra.mxu0 0
    %3127 = vmatprep.subr.bf16.mxu0 0
    %3128 = vmatpush1.bf16.msra.mxu0 0
    %3129 = vmatprep.subr.bf16.mxu0 0
    %3130 = vmatpush1.bf16.msra.mxu0 0
    %3131 = vmatprep.mubr.bf16.mxu0 0
    %3132 = vmatmul.mubr.bf16.gmra.mrb[0].mxu0 %v2513
    %v3133 = vpop.f32.mrb[0].mxu0
    %v3134 = vadd.f32 0.0, %v3133
    %v3135 = vpop.f32.mrb[0].mxu0
    %v3136 = vpop.f32.mrb[0].mxu0
    %v3137 = vpop.f32.mrb[0].mxu0
    %3138 = vdwg.mxu0
    %v3147 = vunpack.c.l.b16 %v3091
    %v3148 = vunpack.c.l.b16 %v3092
    %v3149 = vunpack.c.l.b16 %v3093
    %v3150 = vunpack.c.l.b16 %v3094
    %v3151 = vunpack.c.l.b16 %v3095
    %v3152 = vunpack.c.l.b16 %v3096
    %v3153 = vunpack.c.l.b16 %v3097
    %v3154 = vunpack.c.l.b16 %v3098
    %v3155 = vrot.slane %v3147, 3
    %v3156 = vrot.slane %v3148, 2
    %v3157 = vsel %vm756, %v3156, %v3155
    %v3158 = vrot.slane %v3149, 1
    %v3159 = vsel %vm759, %v3158, %v3157
    %v3160 = vsel %vm762, %v3150, %v3159
    %v3161 = vrot.slane %v3151, 7
    %v3162 = vsel %vm765, %v3161, %v3160
    %v3163 = vrot.slane %v3152, 6
    %v3164 = vsel %vm768, %v3163, %v3162
    %v3165 = vrot.slane %v3153, 5
    %v3166 = vsel %vm771, %v3165, %v3164
    %v3167 = vrot.slane %v3154, 4
    %v3168 = vsel %vm774, %v3167, %v3166
    %v3169 = vpack.c.b16 %v3168, %v3168
    %3170 = vrot.lane.b32.xlu0 %v3169, 64
    %v3171 = vpop.permute.xlu0 %3170
    %v3173 = vsel %vm419, %v3171, 0
    %3175 = vmatprep.subr.bf16.mxu0 0
    %3176 = vmatpush1.bf16.msra.mxu0 %v787
    %3177 = vmatprep.subr.bf16.mxu0 0
    %3178 = vmatpush1.bf16.msra.mxu0 %v788
    %3179 = vmatprep.subr.bf16.mxu0 0
    %3180 = vmatpush1.bf16.msra.mxu0 0
    %3181 = vmatprep.subr.bf16.mxu0 0
    %3182 = vmatpush1.bf16.msra.mxu0 0
    %3183 = vmatprep.subr.bf16.mxu0 0
    %3184 = vmatpush1.bf16.msra.mxu0 0
    %3185 = vmatprep.subr.bf16.mxu0 0
    %3186 = vmatpush1.bf16.msra.mxu0 0
    %3187 = vmatprep.subr.bf16.mxu0 0
    %3188 = vmatpush1.bf16.msra.mxu0 0
    %3189 = vmatprep.subr.bf16.mxu0 0
    %3190 = vmatpush1.bf16.msra.mxu0 0
    %3191 = vmatprep.subr.bf16.mxu0 0
    %3192 = vmatpush1.bf16.msra.mxu0 0
    %3193 = vmatprep.subr.bf16.mxu0 0
    %3194 = vmatpush1.bf16.msra.mxu0 0
    %3195 = vmatprep.subr.bf16.mxu0 0
    %3196 = vmatpush1.bf16.msra.mxu0 0
    %3197 = vmatprep.subr.bf16.mxu0 0
    %3198 = vmatpush1.bf16.msra.mxu0 0
    %3199 = vmatprep.subr.bf16.mxu0 0
    %3200 = vmatpush1.bf16.msra.mxu0 0
    %3201 = vmatprep.subr.bf16.mxu0 0
    %3202 = vmatpush1.bf16.msra.mxu0 0
    %3203 = vmatprep.subr.bf16.mxu0 0
    %3204 = vmatpush1.bf16.msra.mxu0 0
    %3205 = vmatprep.subr.bf16.mxu0 0
    %3206 = vmatpush1.bf16.msra.mxu0 0
    %3207 = vmatprep.mubr.bf16.mxu0 0
    %3208 = vmatmul.mubr.bf16.gmra.mrb[0].mxu0 %v3173
    %v3209 = vpop.f32.mrb[0].mxu0
    %v3210 = vadd.f32 %v3134, %v3209
    %v3211 = vpop.f32.mrb[0].mxu0
    %v3212 = vpop.f32.mrb[0].mxu0
    %v3213 = vpop.f32.mrb[0].mxu0
    %3214 = vdwg.mxu0
    %v3215 = vadd.f32 %v3210, %v283
    %v3216 = vxor.u32 %v3215, 2147483648
    %v3217 = vmul.f32 %v3216, 1.442695
    %v3218 = vpow.pop %v3217
    %v3219 = vadd.f32 %v3218, 1.0
    %v3220 = vrcp.pop %v3219
    %v3221 = vmul.f32 1.0, %v3220
    %v3222 = vtanh.pop %v3215
    %v3223 = vmul.f32 %v3221, %v2461
    %3225 = vrot.lane.b32.xlu0 %v3222, 32
    %v3226 = vpop.permute.xlu0 %3225
    %v3228 = vmul.f32 %v3221, %v3226
    %3230 = vrot.lane.b32.xlu0 %v3228, 32
    %v3231 = vpop.permute.xlu0 %3230
    %v3233 = vadd.f32 %v3223, %v3231
    %v3234 = vtanh.pop %v3233
    %3236 = vrot.lane.b32.xlu0 %v3234, 32
    %v3237 = vpop.permute.xlu0 %3236
    %v3239 = vmul.f32 %v3221, %v3237
    %v3240 = vpack.c.bf16 %v3239, %v3239
    %3241 = vmatprep.subr.bf16.mxu0 0
    %3242 = vmatpush1.bf16.msra.mxu0 %v868
    %3243 = vmatprep.subr.bf16.mxu0 0
    %3244 = vmatpush1.bf16.msra.mxu0 %v869
    %3245 = vmatprep.subr.bf16.mxu0 0
    %3246 = vmatpush1.bf16.msra.mxu0 0
    %3247 = vmatprep.subr.bf16.mxu0 0
    %3248 = vmatpush1.bf16.msra.mxu0 0
    %3249 = vmatprep.subr.bf16.mxu0 0
    %3250 = vmatpush1.bf16.msra.mxu0 0
    %3251 = vmatprep.subr.bf16.mxu0 0
    %3252 = vmatpush1.bf16.msra.mxu0 0
    %3253 = vmatprep.subr.bf16.mxu0 0
    %3254 = vmatpush1.bf16.msra.mxu0 0
    %3255 = vmatprep.subr.bf16.mxu0 0
    %3256 = vmatpush1.bf16.msra.mxu0 0
    %3257 = vmatprep.subr.bf16.mxu0 0
    %3258 = vmatpush1.bf16.msra.mxu0 0
    %3259 = vmatprep.subr.bf16.mxu0 0
    %3260 = vmatpush1.bf16.msra.mxu0 0
    %3261 = vmatprep.subr.bf16.mxu0 0
    %3262 = vmatpush1.bf16.msra.mxu0 0
    %3263 = vmatprep.subr.bf16.mxu0 0
    %3264 = vmatpush1.bf16.msra.mxu0 0
    %3265 = vmatprep.subr.bf16.mxu0 0
    %3266 = vmatpush1.bf16.msra.mxu0 0
    %3267 = vmatprep.subr.bf16.mxu0 0
    %3268 = vmatpush1.bf16.msra.mxu0 0
    %3269 = vmatprep.subr.bf16.mxu0 0
    %3270 = vmatpush1.bf16.msra.mxu0 0
    %3271 = vmatprep.subr.bf16.mxu0 0
    %3272 = vmatpush1.bf16.msra.mxu0 0
    %3273 = vmatprep.mubr.bf16.mxu0 0
    %3274 = vmatmul.mubr.bf16.gmra.mrb[0].mxu0 %v2625
    %v3275 = vpop.f32.mrb[0].mxu0
    %v3276 = vadd.f32 0.0, %v3275
    %v3277 = vpop.f32.mrb[0].mxu0
    %v3278 = vpop.f32.mrb[0].mxu0
    %v3279 = vpop.f32.mrb[0].mxu0
    %3280 = vdwg.mxu0
    %3282 = vrot.lane.b32.xlu0 %v3240, 64
    %v3283 = vpop.permute.xlu0 %3282
    %v3285 = vsel %vm419, %v3283, 0
    %3287 = vmatprep.subr.bf16.mxu0 0
    %3288 = vmatpush1.bf16.msra.mxu0 %v923
    %3289 = vmatprep.subr.bf16.mxu0 0
    %3290 = vmatpush1.bf16.msra.mxu0 %v924
    %3291 = vmatprep.subr.bf16.mxu0 0
    %3292 = vmatpush1.bf16.msra.mxu0 0
    %3293 = vmatprep.subr.bf16.mxu0 0
    %3294 = vmatpush1.bf16.msra.mxu0 0
    %3295 = vmatprep.subr.bf16.mxu0 0
    %3296 = vmatpush1.bf16.msra.mxu0 0
    %3297 = vmatprep.subr.bf16.mxu0 0
    %3298 = vmatpush1.bf16.msra.mxu0 0
    %3299 = vmatprep.subr.bf16.mxu0 0
    %3300 = vmatpush1.bf16.msra.mxu0 0
    %3301 = vmatprep.subr.bf16.mxu0 0
    %3302 = vmatpush1.bf16.msra.mxu0 0
    %3303 = vmatprep.subr.bf16.mxu0 0
    %3304 = vmatpush1.bf16.msra.mxu0 0
    %3305 = vmatprep.subr.bf16.mxu0 0
    %3306 = vmatpush1.bf16.msra.mxu0 0
    %3307 = vmatprep.subr.bf16.mxu0 0
    %3308 = vmatpush1.bf16.msra.mxu0 0
    %3309 = vmatprep.subr.bf16.mxu0 0
    %3310 = vmatpush1.bf16.msra.mxu0 0
    %3311 = vmatprep.subr.bf16.mxu0 0
    %3312 = vmatpush1.bf16.msra.mxu0 0
    %3313 = vmatprep.subr.bf16.mxu0 0
    %3314 = vmatpush1.bf16.msra.mxu0 0
    %3315 = vmatprep.subr.bf16.mxu0 0
    %3316 = vmatpush1.bf16.msra.mxu0 0
    %3317 = vmatprep.subr.bf16.mxu0 0
    %3318 = vmatpush1.bf16.msra.mxu0 0
    %3319 = vmatprep.mubr.bf16.mxu0 0
    %3320 = vmatmul.mubr.bf16.gmra.mrb[0].mxu0 %v3285
    %v3321 = vpop.f32.mrb[0].mxu0
    %v3322 = vadd.f32 %v3276, %v3321
    %v3323 = vpop.f32.mrb[0].mxu0
    %v3324 = vpop.f32.mrb[0].mxu0
    %v3325 = vpop.f32.mrb[0].mxu0
    %3326 = vdwg.mxu0
    %v3327 = vadd.f32 %v3322, %v290
    %v3328 = vxor.u32 %v3327, 2147483648
    %v3329 = vmul.f32 %v3328, 1.442695
    %v3330 = vpow.pop %v3329
    %v3331 = vadd.f32 %v3330, 1.0
    %v3332 = vrcp.pop %v3331
    %v3333 = vmul.f32 1.0, %v3332
    %v3334 = vtanh.pop %v3327
    %v3335 = vmul.f32 %v3333, %v2573
    %3337 = vrot.lane.b32.xlu0 %v3334, 32
    %v3338 = vpop.permute.xlu0 %3337
    %v3340 = vmul.f32 %v3333, %v3338
    %3342 = vrot.lane.b32.xlu0 %v3340, 32
    %v3343 = vpop.permute.xlu0 %3342
    %v3345 = vadd.f32 %v3335, %v3343
    %v3346 = vtanh.pop %v3345
    %3348 = vrot.lane.b32.xlu0 %v3346, 32
    %v3349 = vpop.permute.xlu0 %3348
    %v3351 = vmul.f32 %v3333, %v3349
    %v3352 = vpack.c.bf16 %v3351, %v3351
    %3353 = vmatprep.subr.bf16.mxu0 0
    %3354 = vmatpush1.bf16.msra.mxu0 %v1004
    %3355 = vmatprep.subr.bf16.mxu0 0
    %3356 = vmatpush1.bf16.msra.mxu0 %v1005
    %3357 = vmatprep.subr.bf16.mxu0 0
    %3358 = vmatpush1.bf16.msra.mxu0 0
    %3359 = vmatprep.subr.bf16.mxu0 0
    %3360 = vmatpush1.bf16.msra.mxu0 0
    %3361 = vmatprep.subr.bf16.mxu0 0
    %3362 = vmatpush1.bf16.msra.mxu0 0
    %3363 = vmatprep.subr.bf16.mxu0 0
    %3364 = vmatpush1.bf16.msra.mxu0 0
    %3365 = vmatprep.subr.bf16.mxu0 0
    %3366 = vmatpush1.bf16.msra.mxu0 0
    %3367 = vmatprep.subr.bf16.mxu0 0
    %3368 = vmatpush1.bf16.msra.mxu0 0
    %3369 = vmatprep.subr.bf16.mxu0 0
    %3370 = vmatpush1.bf16.msra.mxu0 0
    %3371 = vmatprep.subr.bf16.mxu0 0
    %3372 = vmatpush1.bf16.msra.mxu0 0
    %3373 = vmatprep.subr.bf16.mxu0 0
    %3374 = vmatpush1.bf16.msra.mxu0 0
    %3375 = vmatprep.subr.bf16.mxu0 0
    %3376 = vmatpush1.bf16.msra.mxu0 0
    %3377 = vmatprep.subr.bf16.mxu0 0
    %3378 = vmatpush1.bf16.msra.mxu0 0
    %3379 = vmatprep.subr.bf16.mxu0 0
    %3380 = vmatpush1.bf16.msra.mxu0 0
    %3381 = vmatprep.subr.bf16.mxu0 0
    %3382 = vmatpush1.bf16.msra.mxu0 0
    %3383 = vmatprep.subr.bf16.mxu0 0
    %3384 = vmatpush1.bf16.msra.mxu0 0
    %3385 = vmatprep.mubr.bf16.mxu0 0
    %3386 = vmatmul.mubr.bf16.gmra.mrb[0].mxu0 %v2744
    %v3387 = vpop.f32.mrb[0].mxu0
    %v3388 = vadd.f32 0.0, %v3387
    %v3389 = vpop.f32.mrb[0].mxu0
    %v3390 = vpop.f32.mrb[0].mxu0
    %v3391 = vpop.f32.mrb[0].mxu0
    %3392 = vdwg.mxu0
    %3394 = vrot.lane.b32.xlu0 %v3352, 64
    %v3395 = vpop.permute.xlu0 %3394
    %v3397 = vsel %vm419, %v3395, 0
    %3399 = vmatprep.subr.bf16.mxu0 0
    %3400 = vmatpush1.bf16.msra.mxu0 %v1059
    %3401 = vmatprep.subr.bf16.mxu0 0
    %3402 = vmatpush1.bf16.msra.mxu0 %v1060
    %3403 = vmatprep.subr.bf16.mxu0 0
    %3404 = vmatpush1.bf16.msra.mxu0 0
    %3405 = vmatprep.subr.bf16.mxu0 0
    %3406 = vmatpush1.bf16.msra.mxu0 0
    %3407 = vmatprep.subr.bf16.mxu0 0
    %3408 = vmatpush1.bf16.msra.mxu0 0
    %3409 = vmatprep.subr.bf16.mxu0 0
    %3410 = vmatpush1.bf16.msra.mxu0 0
    %3411 = vmatprep.subr.bf16.mxu0 0
    %3412 = vmatpush1.bf16.msra.mxu0 0
    %3413 = vmatprep.subr.bf16.mxu0 0
    %3414 = vmatpush1.bf16.msra.mxu0 0
    %3415 = vmatprep.subr.bf16.mxu0 0
    %3416 = vmatpush1.bf16.msra.mxu0 0
    %3417 = vmatprep.subr.bf16.mxu0 0
    %3418 = vmatpush1.bf16.msra.mxu0 0
    %3419 = vmatprep.subr.bf16.mxu0 0
    %3420 = vmatpush1.bf16.msra.mxu0 0
    %3421 = vmatprep.subr.bf16.mxu0 0
    %3422 = vmatpush1.bf16.msra.mxu0 0
    %3423 = vmatprep.subr.bf16.mxu0 0
    %3424 = vmatpush1.bf16.msra.mxu0 0
    %3425 = vmatprep.subr.bf16.mxu0 0
    %3426 = vmatpush1.bf16.msra.mxu0 0
    %3427 = vmatprep.subr.bf16.mxu0 0
    %3428 = vmatpush1.bf16.msra.mxu0 0
    %3429 = vmatprep.subr.bf16.mxu0 0
    %3430 = vmatpush1.bf16.msra.mxu0 0
    %3431 = vmatprep.mubr.bf16.mxu0 0
    %3432 = vmatmul.mubr.bf16.gmra.mrb[0].mxu0 %v3397
    %v3433 = vpop.f32.mrb[0].mxu0
    %v3434 = vadd.f32 %v3388, %v3433
    %v3435 = vpop.f32.mrb[0].mxu0
    %v3436 = vpop.f32.mrb[0].mxu0
    %v3437 = vpop.f32.mrb[0].mxu0
    %3438 = vdwg.mxu0
    %v3439 = vadd.f32 %v3434, %v297
    %v3440 = vxor.u32 %v3439, 2147483648
    %v3441 = vmul.f32 %v3440, 1.442695
    %v3442 = vpow.pop %v3441
    %v3443 = vadd.f32 %v3442, 1.0
    %v3444 = vrcp.pop %v3443
    %v3445 = vmul.f32 1.0, %v3444
    %v3446 = vtanh.pop %v3439
    %v3447 = vmul.f32 %v3445, %v2685
    %3449 = vrot.lane.b32.xlu0 %v3446, 32
    %v3450 = vpop.permute.xlu0 %3449
    %v3452 = vmul.f32 %v3445, %v3450
    %3454 = vrot.lane.b32.xlu0 %v3452, 32
    %v3455 = vpop.permute.xlu0 %3454
    %v3457 = vadd.f32 %v3447, %v3455
    %v3458 = vtanh.pop %v3457
    %3460 = vrot.lane.b32.xlu0 %v3458, 32
    %v3461 = vpop.permute.xlu0 %3460
    %v3463 = vmul.f32 %v3445, %v3461
    %v3464 = vpack.c.bf16 %v3463, %v3463
    %v3465 = vpack.c.bf16 %v2810, %v2810
    %3467 = vrot.lane.b32.xlu0 %v3465, 64
    %v3468 = vpop.permute.xlu0 %3467
    %v3470 = vsel %vm419, %v3468, 0
    %3472 = vmatprep.subr.bf16.mxu0 0
    %3473 = vmatpush1.bf16.msra.mxu0 %v1140
    %3474 = vmatprep.subr.bf16.mxu0 0
    %3475 = vmatpush1.bf16.msra.mxu0 %v1141
    %3476 = vmatprep.subr.bf16.mxu0 0
    %3477 = vmatpush1.bf16.msra.mxu0 0
    %3478 = vmatprep.subr.bf16.mxu0 0
    %3479 = vmatpush1.bf16.msra.mxu0 0
    %3480 = vmatprep.subr.bf16.mxu0 0
    %3481 = vmatpush1.bf16.msra.mxu0 0
    %3482 = vmatprep.subr.bf16.mxu0 0
    %3483 = vmatpush1.bf16.msra.mxu0 0
    %3484 = vmatprep.subr.bf16.mxu0 0
    %3485 = vmatpush1.bf16.msra.mxu0 0
    %3486 = vmatprep.subr.bf16.mxu0 0
    %3487 = vmatpush1.bf16.msra.mxu0 0
    %3488 = vmatprep.subr.bf16.mxu0 0
    %3489 = vmatpush1.bf16.msra.mxu0 0
    %3490 = vmatprep.subr.bf16.mxu0 0
    %3491 = vmatpush1.bf16.msra.mxu0 0
    %3492 = vmatprep.subr.bf16.mxu0 0
    %3493 = vmatpush1.bf16.msra.mxu0 0
    %3494 = vmatprep.subr.bf16.mxu0 0
    %3495 = vmatpush1.bf16.msra.mxu0 0
    %3496 = vmatprep.subr.bf16.mxu0 0
    %3497 = vmatpush1.bf16.msra.mxu0 0
    %3498 = vmatprep.subr.bf16.mxu0 0
    %3499 = vmatpush1.bf16.msra.mxu0 0
    %3500 = vmatprep.subr.bf16.mxu0 0
    %3501 = vmatpush1.bf16.msra.mxu0 0
    %3502 = vmatprep.subr.bf16.mxu0 0
    %3503 = vmatpush1.bf16.msra.mxu0 0
    %3504 = vmatprep.mubr.bf16.mxu0 0
    %3505 = vmatmul.mubr.bf16.gmra.mrb[0].mxu0 %v3470
    %v3506 = vpop.f32.mrb[0].mxu0
    %v3507 = vadd.f32 0.0, %v3506
    %v3508 = vpop.f32.mrb[0].mxu0
    %v3509 = vpop.f32.mrb[0].mxu0
    %v3510 = vpop.f32.mrb[0].mxu0
    %3511 = vdwg.mxu0
    %3513 = vrot.lane.b32.xlu0 %v3464, 64
    %v3514 = vpop.permute.xlu0 %3513
    %v3516 = vsel %vm419, %v3514, 0
    %3518 = vmatprep.subr.bf16.mxu0 0
    %3519 = vmatpush1.bf16.msra.mxu0 %v1195
    %3520 = vmatprep.subr.bf16.mxu0 0
    %3521 = vmatpush1.bf16.msra.mxu0 %v1196
    %3522 = vmatprep.subr.bf16.mxu0 0
    %3523 = vmatpush1.bf16.msra.mxu0 0
    %3524 = vmatprep.subr.bf16.mxu0 0
    %3525 = vmatpush1.bf16.msra.mxu0 0
    %3526 = vmatprep.subr.bf16.mxu0 0
    %3527 = vmatpush1.bf16.msra.mxu0 0
    %3528 = vmatprep.subr.bf16.mxu0 0
    %3529 = vmatpush1.bf16.msra.mxu0 0
    %3530 = vmatprep.subr.bf16.mxu0 0
    %3531 = vmatpush1.bf16.msra.mxu0 0
    %3532 = vmatprep.subr.bf16.mxu0 0
    %3533 = vmatpush1.bf16.msra.mxu0 0
    %3534 = vmatprep.subr.bf16.mxu0 0
    %3535 = vmatpush1.bf16.msra.mxu0 0
    %3536 = vmatprep.subr.bf16.mxu0 0
    %3537 = vmatpush1.bf16.msra.mxu0 0
    %3538 = vmatprep.subr.bf16.mxu0 0
    %3539 = vmatpush1.bf16.msra.mxu0 0
    %3540 = vmatprep.subr.bf16.mxu0 0
    %3541 = vmatpush1.bf16.msra.mxu0 0
    %3542 = vmatprep.subr.bf16.mxu0 0
    %3543 = vmatpush1.bf16.msra.mxu0 0
    %3544 = vmatprep.subr.bf16.mxu0 0
    %3545 = vmatpush1.bf16.msra.mxu0 0
    %3546 = vmatprep.subr.bf16.mxu0 0
    %3547 = vmatpush1.bf16.msra.mxu0 0
    %3548 = vmatprep.subr.bf16.mxu0 0
    %3549 = vmatpush1.bf16.msra.mxu0 0
    %3550 = vmatprep.mubr.bf16.mxu0 0
    %3551 = vmatmul.mubr.bf16.gmra.mrb[0].mxu0 %v3516
    %v3552 = vpop.f32.mrb[0].mxu0
    %v3553 = vadd.f32 %v3507, %v3552
    %v3554 = vpop.f32.mrb[0].mxu0
    %v3555 = vpop.f32.mrb[0].mxu0
    %v3556 = vpop.f32.mrb[0].mxu0
    %3557 = vdwg.mxu0
    %v3558 = vadd.f32 %v3553, %v304
    %v3559 = vxor.u32 %v3558, 2147483648
    %v3560 = vmul.f32 %v3559, 1.442695
    %v3561 = vpow.pop %v3560
    %v3562 = vadd.f32 %v3561, 1.0
    %v3563 = vrcp.pop %v3562
    %v3564 = vmul.f32 1.0, %v3563
    %v3565 = vtanh.pop %v3558
    %v3566 = vmul.f32 %v3564, %v2804
    %3568 = vrot.lane.b32.xlu0 %v3565, 32
    %v3569 = vpop.permute.xlu0 %3568
    %v3571 = vmul.f32 %v3564, %v3569
    %3573 = vrot.lane.b32.xlu0 %v3571, 32
    %v3574 = vpop.permute.xlu0 %3573
    %v3576 = vadd.f32 %v3566, %v3574
    %v3577 = vtanh.pop %v3576
    %3579 = vrot.lane.b32.xlu0 %v3577, 32
    %v3580 = vpop.permute.xlu0 %3579
    %v3582 = vmul.f32 %v3564, %v3580
    %3583 = vmatprep.subr.bf16.mxu0 0
    %3584 = vmatpush1.bf16.msra.mxu0 %v415
    %3585 = vmatprep.subr.bf16.mxu0 0
    %3586 = vmatpush1.bf16.msra.mxu0 %v416
    %3587 = vmatprep.subr.bf16.mxu0 0
    %3588 = vmatpush1.bf16.msra.mxu0 0
    %3589 = vmatprep.subr.bf16.mxu0 0
    %3590 = vmatpush1.bf16.msra.mxu0 0
    %3591 = vmatprep.subr.bf16.mxu0 0
    %3592 = vmatpush1.bf16.msra.mxu0 0
    %3593 = vmatprep.subr.bf16.mxu0 0
    %3594 = vmatpush1.bf16.msra.mxu0 0
    %3595 = vmatprep.subr.bf16.mxu0 0
    %3596 = vmatpush1.bf16.msra.mxu0 0
    %3597 = vmatprep.subr.bf16.mxu0 0
    %3598 = vmatpush1.bf16.msra.mxu0 0
    %3599 = vmatprep.subr.bf16.mxu0 0
    %3600 = vmatpush1.bf16.msra.mxu0 0
    %3601 = vmatprep.subr.bf16.mxu0 0
    %3602 = vmatpush1.bf16.msra.mxu0 0
    %3603 = vmatprep.subr.bf16.mxu0 0
    %3604 = vmatpush1.bf16.msra.mxu0 0
    %3605 = vmatprep.subr.bf16.mxu0 0
    %3606 = vmatpush1.bf16.msra.mxu0 0
    %3607 = vmatprep.subr.bf16.mxu0 0
    %3608 = vmatpush1.bf16.msra.mxu0 0
    %3609 = vmatprep.subr.bf16.mxu0 0
    %3610 = vmatpush1.bf16.msra.mxu0 0
    %3611 = vmatprep.subr.bf16.mxu0 0
    %3612 = vmatpush1.bf16.msra.mxu0 0
    %3613 = vmatprep.subr.bf16.mxu0 0
    %3614 = vmatpush1.bf16.msra.mxu0 0
    %3615 = vmatprep.mubr.bf16.mxu0 0
    %3616 = vmatmul.mubr.bf16.gmra.mrb[0].mxu0 %v3173
    %v3617 = vpop.f32.mrb[0].mxu0
    %v3618 = vadd.f32 0.0, %v3617
    %v3619 = vpop.f32.mrb[0].mxu0
    %v3620 = vpop.f32.mrb[0].mxu0
    %v3621 = vpop.f32.mrb[0].mxu0
    %3622 = vdwg.mxu0
    %v3624 = vrot.slane %v3618, 4
    %v3625 = vrot.slane %v3618, 5
    %v3626 = vrot.slane %v3618, 6
    %v3627 = vrot.slane %v3618, 7
    %v3628 = vrot.slane %v3618, 1
    %v3629 = vrot.slane %v3618, 2
    %v3630 = vrot.slane %v3618, 3
    %v3639 = vadd.f32 %v377, %v3624
    %v3640 = vadd.f32 %v380, %v3625
    %v3641 = vadd.f32 %v385, %v3626
    %v3642 = vadd.f32 %v388, %v3627
    %v3643 = vadd.f32 %v393, %v3618
    %v3644 = vadd.f32 %v396, %v3628
    %v3645 = vadd.f32 %v401, %v3629
    %v3646 = vadd.f32 %v404, %v3630
    %v3647 = vxor.u32 %v3639, 2147483648
    %v3648 = vxor.u32 %v3640, 2147483648
    %v3649 = vxor.u32 %v3641, 2147483648
    %v3650 = vxor.u32 %v3642, 2147483648
    %v3651 = vxor.u32 %v3643, 2147483648
    %v3652 = vxor.u32 %v3644, 2147483648
    %v3653 = vxor.u32 %v3645, 2147483648
    %v3654 = vxor.u32 %v3646, 2147483648
    %v3655 = vmul.f32 %v3647, 1.442695
    %v3656 = vpow.pop %v3655
    %v3657 = vmul.f32 %v3648, 1.442695
    %v3658 = vpow.pop %v3657
    %v3659 = vmul.f32 %v3649, 1.442695
    %v3660 = vpow.pop %v3659
    %v3661 = vmul.f32 %v3650, 1.442695
    %v3662 = vpow.pop %v3661
    %v3663 = vmul.f32 %v3651, 1.442695
    %v3664 = vpow.pop %v3663
    %v3665 = vmul.f32 %v3652, 1.442695
    %v3666 = vpow.pop %v3665
    %v3667 = vmul.f32 %v3653, 1.442695
    %v3668 = vpow.pop %v3667
    %v3669 = vmul.f32 %v3654, 1.442695
    %v3670 = vpow.pop %v3669
    %v3671 = vadd.f32 %v3656, 1.0
    %v3672 = vadd.f32 %v3658, 1.0
    %v3673 = vadd.f32 %v3660, 1.0
    %v3674 = vadd.f32 %v3662, 1.0
    %v3675 = vadd.f32 %v3664, 1.0
    %v3676 = vadd.f32 %v3666, 1.0
    %v3677 = vadd.f32 %v3668, 1.0
    %v3678 = vadd.f32 %v3670, 1.0
    %v3679 = vrcp.pop %v3671
    %v3680 = vmul.f32 1.0, %v3679
    %v3681 = vrcp.pop %v3672
    %v3682 = vmul.f32 1.0, %v3681
    %v3683 = vrcp.pop %v3673
    %v3684 = vmul.f32 1.0, %v3683
    %v3685 = vrcp.pop %v3674
    %v3686 = vmul.f32 1.0, %v3685
    %v3687 = vrcp.pop %v3675
    %v3688 = vmul.f32 1.0, %v3687
    %v3689 = vrcp.pop %v3676
    %v3690 = vmul.f32 1.0, %v3689
    %v3691 = vrcp.pop %v3677
    %v3692 = vmul.f32 1.0, %v3691
    %v3693 = vrcp.pop %v3678
    %v3694 = vmul.f32 1.0, %v3693
    %v3695 = vtanh.pop %v3639
    %v3696 = vtanh.pop %v3640
    %v3697 = vtanh.pop %v3641
    %v3698 = vtanh.pop %v3642
    %v3699 = vtanh.pop %v3643
    %v3700 = vtanh.pop %v3644
    %v3701 = vtanh.pop %v3645
    %v3702 = vtanh.pop %v3646
    %v3711 = vrot.slane %v3035, 7
    %v3712 = vrot.slane %v3036, 7
    %v3713 = vrot.slane %v3037, 7
    %v3714 = vrot.slane %v3038, 7
    %v3715 = vrot.slane %v3039, 7
    %v3716 = vrot.slane %v3040, 7
    %v3717 = vrot.slane %v3041, 7
    %v3718 = vrot.slane %v3042, 7
    %v3727 = vmul.f32 %v3680, %v3711
    %v3728 = vmul.f32 %v3682, %v3712
    %v3729 = vmul.f32 %v3684, %v3713
    %v3730 = vmul.f32 %v3686, %v3714
    %v3731 = vmul.f32 %v3688, %v3715
    %v3732 = vmul.f32 %v3690, %v3716
    %v3733 = vmul.f32 %v3692, %v3717
    %v3734 = vmul.f32 %v3694, %v3718
    %3743 = vrot.lane.b32.xlu0 %v3695, 32
    %v3744 = vpop.permute.xlu0 %3743
    %3745 = vrot.lane.b32.xlu0 %v3696, 32
    %v3746 = vpop.permute.xlu0 %3745
    %3747 = vrot.lane.b32.xlu0 %v3697, 32
    %v3748 = vpop.permute.xlu0 %3747
    %3749 = vrot.lane.b32.xlu0 %v3698, 32
    %v3750 = vpop.permute.xlu0 %3749
    %3751 = vrot.lane.b32.xlu0 %v3699, 32
    %v3752 = vpop.permute.xlu0 %3751
    %3753 = vrot.lane.b32.xlu0 %v3700, 32
    %v3754 = vpop.permute.xlu0 %3753
    %3755 = vrot.lane.b32.xlu0 %v3701, 32
    %v3756 = vpop.permute.xlu0 %3755
    %3757 = vrot.lane.b32.xlu0 %v3702, 32
    %v3758 = vpop.permute.xlu0 %3757
    %v3767 = vmul.f32 %v3680, %v3744
    %v3768 = vmul.f32 %v3682, %v3746
    %v3769 = vmul.f32 %v3684, %v3748
    %v3770 = vmul.f32 %v3686, %v3750
    %v3771 = vmul.f32 %v3688, %v3752
    %v3772 = vmul.f32 %v3690, %v3754
    %v3773 = vmul.f32 %v3692, %v3756
    %v3774 = vmul.f32 %v3694, %v3758
    %3783 = vrot.lane.b32.xlu0 %v3767, 32
    %v3784 = vpop.permute.xlu0 %3783
    %3785 = vrot.lane.b32.xlu0 %v3768, 32
    %v3786 = vpop.permute.xlu0 %3785
    %3787 = vrot.lane.b32.xlu0 %v3769, 32
    %v3788 = vpop.permute.xlu0 %3787
    %3789 = vrot.lane.b32.xlu0 %v3770, 32
    %v3790 = vpop.permute.xlu0 %3789
    %3791 = vrot.lane.b32.xlu0 %v3771, 32
    %v3792 = vpop.permute.xlu0 %3791
    %3793 = vrot.lane.b32.xlu0 %v3772, 32
    %v3794 = vpop.permute.xlu0 %3793
    %3795 = vrot.lane.b32.xlu0 %v3773, 32
    %v3796 = vpop.permute.xlu0 %3795
    %3797 = vrot.lane.b32.xlu0 %v3774, 32
    %v3798 = vpop.permute.xlu0 %3797
    %v3807 = vadd.f32 %v3727, %v3784
    %v3808 = vadd.f32 %v3728, %v3786
    %v3809 = vadd.f32 %v3729, %v3788
    %v3810 = vadd.f32 %v3730, %v3790
    %v3811 = vadd.f32 %v3731, %v3792
    %v3812 = vadd.f32 %v3732, %v3794
    %v3813 = vadd.f32 %v3733, %v3796
    %v3814 = vadd.f32 %v3734, %v3798
    %v3815 = vtanh.pop %v3807
    %v3816 = vtanh.pop %v3808
    %v3817 = vtanh.pop %v3809
    %v3818 = vtanh.pop %v3810
    %v3819 = vtanh.pop %v3811
    %v3820 = vtanh.pop %v3812
    %v3821 = vtanh.pop %v3813
    %v3822 = vtanh.pop %v3814
    %3831 = vrot.lane.b32.xlu0 %v3815, 32
    %v3832 = vpop.permute.xlu0 %3831
    %3833 = vrot.lane.b32.xlu0 %v3816, 32
    %v3834 = vpop.permute.xlu0 %3833
    %3835 = vrot.lane.b32.xlu0 %v3817, 32
    %v3836 = vpop.permute.xlu0 %3835
    %3837 = vrot.lane.b32.xlu0 %v3818, 32
    %v3838 = vpop.permute.xlu0 %3837
    %3839 = vrot.lane.b32.xlu0 %v3819, 32
    %v3840 = vpop.permute.xlu0 %3839
    %3841 = vrot.lane.b32.xlu0 %v3820, 32
    %v3842 = vpop.permute.xlu0 %3841
    %3843 = vrot.lane.b32.xlu0 %v3821, 32
    %v3844 = vpop.permute.xlu0 %3843
    %3845 = vrot.lane.b32.xlu0 %v3822, 32
    %v3846 = vpop.permute.xlu0 %3845
    %v3855 = vmul.f32 %v3680, %v3832
    %v3856 = vmul.f32 %v3682, %v3834
    %v3857 = vmul.f32 %v3684, %v3836
    %v3858 = vmul.f32 %v3686, %v3838
    %v3859 = vmul.f32 %v3688, %v3840
    %v3860 = vmul.f32 %v3690, %v3842
    %v3861 = vmul.f32 %v3692, %v3844
    %v3862 = vmul.f32 %v3694, %v3846
    %v3863 = vpack.c.bf16 %v3855, %v3855
    %v3864 = vpack.c.bf16 %v3856, %v3856
    %v3865 = vpack.c.bf16 %v3857, %v3857
    %v3866 = vpack.c.bf16 %v3858, %v3858
    %v3867 = vpack.c.bf16 %v3859, %v3859
    %v3868 = vpack.c.bf16 %v3860, %v3860
    %v3869 = vpack.c.bf16 %v3861, %v3861
    %v3870 = vpack.c.bf16 %v3862, %v3862
    %3871 = vmatprep.subr.bf16.mxu0 0
    %3872 = vmatpush1.bf16.msra.mxu0 %v695
    %3873 = vmatprep.subr.bf16.mxu0 0
    %3874 = vmatpush1.bf16.msra.mxu0 %v696
    %3875 = vmatprep.subr.bf16.mxu0 0
    %3876 = vmatpush1.bf16.msra.mxu0 0
    %3877 = vmatprep.subr.bf16.mxu0 0
    %3878 = vmatpush1.bf16.msra.mxu0 0
    %3879 = vmatprep.subr.bf16.mxu0 0
    %3880 = vmatpush1.bf16.msra.mxu0 0
    %3881 = vmatprep.subr.bf16.mxu0 0
    %3882 = vmatpush1.bf16.msra.mxu0 0
    %3883 = vmatprep.subr.bf16.mxu0 0
    %3884 = vmatpush1.bf16.msra.mxu0 0
    %3885 = vmatprep.subr.bf16.mxu0 0
    %3886 = vmatpush1.bf16.msra.mxu0 0
    %3887 = vmatprep.subr.bf16.mxu0 0
    %3888 = vmatpush1.bf16.msra.mxu0 0
    %3889 = vmatprep.subr.bf16.mxu0 0
    %3890 = vmatpush1.bf16.msra.mxu0 0
    %3891 = vmatprep.subr.bf16.mxu0 0
    %3892 = vmatpush1.bf16.msra.mxu0 0
    %3893 = vmatprep.subr.bf16.mxu0 0
    %3894 = vmatpush1.bf16.msra.mxu0 0
    %3895 = vmatprep.subr.bf16.mxu0 0
    %3896 = vmatpush1.bf16.msra.mxu0 0
    %3897 = vmatprep.subr.bf16.mxu0 0
    %3898 = vmatpush1.bf16.msra.mxu0 0
    %3899 = vmatprep.subr.bf16.mxu0 0
    %3900 = vmatpush1.bf16.msra.mxu0 0
    %3901 = vmatprep.subr.bf16.mxu0 0
    %3902 = vmatpush1.bf16.msra.mxu0 0
    %3903 = vmatprep.mubr.bf16.mxu0 0
    %3904 = vmatmul.mubr.bf16.gmra.mrb[0].mxu0 %v3285
    %v3905 = vpop.f32.mrb[0].mxu0
    %v3906 = vadd.f32 0.0, %v3905
    %v3907 = vpop.f32.mrb[0].mxu0
    %v3908 = vpop.f32.mrb[0].mxu0
    %v3909 = vpop.f32.mrb[0].mxu0
    %3910 = vdwg.mxu0
    %v3919 = vunpack.c.l.b16 %v3863
    %v3920 = vunpack.c.l.b16 %v3864
    %v3921 = vunpack.c.l.b16 %v3865
    %v3922 = vunpack.c.l.b16 %v3866
    %v3923 = vunpack.c.l.b16 %v3867
    %v3924 = vunpack.c.l.b16 %v3868
    %v3925 = vunpack.c.l.b16 %v3869
    %v3926 = vunpack.c.l.b16 %v3870
    %v3927 = vrot.slane %v3919, 4
    %v3928 = vrot.slane %v3920, 3
    %v3929 = vsel %vm756, %v3928, %v3927
    %v3930 = vrot.slane %v3921, 2
    %v3931 = vsel %vm759, %v3930, %v3929
    %v3932 = vrot.slane %v3922, 1
    %v3933 = vsel %vm762, %v3932, %v3931
    %v3934 = vsel %vm765, %v3923, %v3933
    %v3935 = vrot.slane %v3924, 7
    %v3936 = vsel %vm768, %v3935, %v3934
    %v3937 = vrot.slane %v3925, 6
    %v3938 = vsel %vm771, %v3937, %v3936
    %v3939 = vrot.slane %v3926, 5
    %v3940 = vsel %vm774, %v3939, %v3938
    %v3941 = vpack.c.b16 %v3940, %v3940
    %3942 = vrot.lane.b32.xlu0 %v3941, 64
    %v3943 = vpop.permute.xlu0 %3942
    %v3945 = vsel %vm419, %v3943, 0
    %3947 = vmatprep.subr.bf16.mxu0 0
    %3948 = vmatpush1.bf16.msra.mxu0 %v787
    %3949 = vmatprep.subr.bf16.mxu0 0
    %3950 = vmatpush1.bf16.msra.mxu0 %v788
    %3951 = vmatprep.subr.bf16.mxu0 0
    %3952 = vmatpush1.bf16.msra.mxu0 0
    %3953 = vmatprep.subr.bf16.mxu0 0
    %3954 = vmatpush1.bf16.msra.mxu0 0
    %3955 = vmatprep.subr.bf16.mxu0 0
    %3956 = vmatpush1.bf16.msra.mxu0 0
    %3957 = vmatprep.subr.bf16.mxu0 0
    %3958 = vmatpush1.bf16.msra.mxu0 0
    %3959 = vmatprep.subr.bf16.mxu0 0
    %3960 = vmatpush1.bf16.msra.mxu0 0
    %3961 = vmatprep.subr.bf16.mxu0 0
    %3962 = vmatpush1.bf16.msra.mxu0 0
    %3963 = vmatprep.subr.bf16.mxu0 0
    %3964 = vmatpush1.bf16.msra.mxu0 0
    %3965 = vmatprep.subr.bf16.mxu0 0
    %3966 = vmatpush1.bf16.msra.mxu0 0
    %3967 = vmatprep.subr.bf16.mxu0 0
    %3968 = vmatpush1.bf16.msra.mxu0 0
    %3969 = vmatprep.subr.bf16.mxu0 0
    %3970 = vmatpush1.bf16.msra.mxu0 0
    %3971 = vmatprep.subr.bf16.mxu0 0
    %3972 = vmatpush1.bf16.msra.mxu0 0
    %3973 = vmatprep.subr.bf16.mxu0 0
    %3974 = vmatpush1.bf16.msra.mxu0 0
    %3975 = vmatprep.subr.bf16.mxu0 0
    %3976 = vmatpush1.bf16.msra.mxu0 0
    %3977 = vmatprep.subr.bf16.mxu0 0
    %3978 = vmatpush1.bf16.msra.mxu0 0
    %3979 = vmatprep.mubr.bf16.mxu0 0
    %3980 = vmatmul.mubr.bf16.gmra.mrb[0].mxu0 %v3945
    %v3981 = vpop.f32.mrb[0].mxu0
    %v3982 = vadd.f32 %v3906, %v3981
    %v3983 = vpop.f32.mrb[0].mxu0
    %v3984 = vpop.f32.mrb[0].mxu0
    %v3985 = vpop.f32.mrb[0].mxu0
    %3986 = vdwg.mxu0
    %v3987 = vadd.f32 %v3982, %v283
    %v3988 = vxor.u32 %v3987, 2147483648
    %v3989 = vmul.f32 %v3988, 1.442695
    %v3990 = vpow.pop %v3989
    %v3991 = vadd.f32 %v3990, 1.0
    %v3992 = vrcp.pop %v3991
    %v3993 = vmul.f32 1.0, %v3992
    %v3994 = vtanh.pop %v3987
    %v3995 = vmul.f32 %v3993, %v3233
    %3997 = vrot.lane.b32.xlu0 %v3994, 32
    %v3998 = vpop.permute.xlu0 %3997
    %v4000 = vmul.f32 %v3993, %v3998
    %4002 = vrot.lane.b32.xlu0 %v4000, 32
    %v4003 = vpop.permute.xlu0 %4002
    %v4005 = vadd.f32 %v3995, %v4003
    %v4006 = vtanh.pop %v4005
    %4008 = vrot.lane.b32.xlu0 %v4006, 32
    %v4009 = vpop.permute.xlu0 %4008
    %v4011 = vmul.f32 %v3993, %v4009
    %v4012 = vpack.c.bf16 %v4011, %v4011
    %4013 = vmatprep.subr.bf16.mxu0 0
    %4014 = vmatpush1.bf16.msra.mxu0 %v868
    %4015 = vmatprep.subr.bf16.mxu0 0
    %4016 = vmatpush1.bf16.msra.mxu0 %v869
    %4017 = vmatprep.subr.bf16.mxu0 0
    %4018 = vmatpush1.bf16.msra.mxu0 0
    %4019 = vmatprep.subr.bf16.mxu0 0
    %4020 = vmatpush1.bf16.msra.mxu0 0
    %4021 = vmatprep.subr.bf16.mxu0 0
    %4022 = vmatpush1.bf16.msra.mxu0 0
    %4023 = vmatprep.subr.bf16.mxu0 0
    %4024 = vmatpush1.bf16.msra.mxu0 0
    %4025 = vmatprep.subr.bf16.mxu0 0
    %4026 = vmatpush1.bf16.msra.mxu0 0
    %4027 = vmatprep.subr.bf16.mxu0 0
    %4028 = vmatpush1.bf16.msra.mxu0 0
    %4029 = vmatprep.subr.bf16.mxu0 0
    %4030 = vmatpush1.bf16.msra.mxu0 0
    %4031 = vmatprep.subr.bf16.mxu0 0
    %4032 = vmatpush1.bf16.msra.mxu0 0
    %4033 = vmatprep.subr.bf16.mxu0 0
    %4034 = vmatpush1.bf16.msra.mxu0 0
    %4035 = vmatprep.subr.bf16.mxu0 0
    %4036 = vmatpush1.bf16.msra.mxu0 0
    %4037 = vmatprep.subr.bf16.mxu0 0
    %4038 = vmatpush1.bf16.msra.mxu0 0
    %4039 = vmatprep.subr.bf16.mxu0 0
    %4040 = vmatpush1.bf16.msra.mxu0 0
    %4041 = vmatprep.subr.bf16.mxu0 0
    %4042 = vmatpush1.bf16.msra.mxu0 0
    %4043 = vmatprep.subr.bf16.mxu0 0
    %4044 = vmatpush1.bf16.msra.mxu0 0
    %4045 = vmatprep.mubr.bf16.mxu0 0
    %4046 = vmatmul.mubr.bf16.gmra.mrb[0].mxu0 %v3397
    %v4047 = vpop.f32.mrb[0].mxu0
    %v4048 = vadd.f32 0.0, %v4047
    %v4049 = vpop.f32.mrb[0].mxu0
    %v4050 = vpop.f32.mrb[0].mxu0
    %v4051 = vpop.f32.mrb[0].mxu0
    %4052 = vdwg.mxu0
    %4054 = vrot.lane.b32.xlu0 %v4012, 64
    %v4055 = vpop.permute.xlu0 %4054
    %v4057 = vsel %vm419, %v4055, 0
    %4059 = vmatprep.subr.bf16.mxu0 0
    %4060 = vmatpush1.bf16.msra.mxu0 %v923
    %4061 = vmatprep.subr.bf16.mxu0 0
    %4062 = vmatpush1.bf16.msra.mxu0 %v924
    %4063 = vmatprep.subr.bf16.mxu0 0
    %4064 = vmatpush1.bf16.msra.mxu0 0
    %4065 = vmatprep.subr.bf16.mxu0 0
    %4066 = vmatpush1.bf16.msra.mxu0 0
    %4067 = vmatprep.subr.bf16.mxu0 0
    %4068 = vmatpush1.bf16.msra.mxu0 0
    %4069 = vmatprep.subr.bf16.mxu0 0
    %4070 = vmatpush1.bf16.msra.mxu0 0
    %4071 = vmatprep.subr.bf16.mxu0 0
    %4072 = vmatpush1.bf16.msra.mxu0 0
    %4073 = vmatprep.subr.bf16.mxu0 0
    %4074 = vmatpush1.bf16.msra.mxu0 0
    %4075 = vmatprep.subr.bf16.mxu0 0
    %4076 = vmatpush1.bf16.msra.mxu0 0
    %4077 = vmatprep.subr.bf16.mxu0 0
    %4078 = vmatpush1.bf16.msra.mxu0 0
    %4079 = vmatprep.subr.bf16.mxu0 0
    %4080 = vmatpush1.bf16.msra.mxu0 0
    %4081 = vmatprep.subr.bf16.mxu0 0
    %4082 = vmatpush1.bf16.msra.mxu0 0
    %4083 = vmatprep.subr.bf16.mxu0 0
    %4084 = vmatpush1.bf16.msra.mxu0 0
    %4085 = vmatprep.subr.bf16.mxu0 0
    %4086 = vmatpush1.bf16.msra.mxu0 0
    %4087 = vmatprep.subr.bf16.mxu0 0
    %4088 = vmatpush1.bf16.msra.mxu0 0
    %4089 = vmatprep.subr.bf16.mxu0 0
    %4090 = vmatpush1.bf16.msra.mxu0 0
    %4091 = vmatprep.mubr.bf16.mxu0 0
    %4092 = vmatmul.mubr.bf16.gmra.mrb[0].mxu0 %v4057
    %v4093 = vpop.f32.mrb[0].mxu0
    %v4094 = vadd.f32 %v4048, %v4093
    %v4095 = vpop.f32.mrb[0].mxu0
    %v4096 = vpop.f32.mrb[0].mxu0
    %v4097 = vpop.f32.mrb[0].mxu0
    %4098 = vdwg.mxu0
    %v4099 = vadd.f32 %v4094, %v290
    %v4100 = vxor.u32 %v4099, 2147483648
    %v4101 = vmul.f32 %v4100, 1.442695
    %v4102 = vpow.pop %v4101
    %v4103 = vadd.f32 %v4102, 1.0
    %v4104 = vrcp.pop %v4103
    %v4105 = vmul.f32 1.0, %v4104
    %v4106 = vtanh.pop %v4099
    %v4107 = vmul.f32 %v4105, %v3345
    %4109 = vrot.lane.b32.xlu0 %v4106, 32
    %v4110 = vpop.permute.xlu0 %4109
    %v4112 = vmul.f32 %v4105, %v4110
    %4114 = vrot.lane.b32.xlu0 %v4112, 32
    %v4115 = vpop.permute.xlu0 %4114
    %v4117 = vadd.f32 %v4107, %v4115
    %v4118 = vtanh.pop %v4117
    %4120 = vrot.lane.b32.xlu0 %v4118, 32
    %v4121 = vpop.permute.xlu0 %4120
    %v4123 = vmul.f32 %v4105, %v4121
    %v4124 = vpack.c.bf16 %v4123, %v4123
    %4125 = vmatprep.subr.bf16.mxu0 0
    %4126 = vmatpush1.bf16.msra.mxu0 %v1004
    %4127 = vmatprep.subr.bf16.mxu0 0
    %4128 = vmatpush1.bf16.msra.mxu0 %v1005
    %4129 = vmatprep.subr.bf16.mxu0 0
    %4130 = vmatpush1.bf16.msra.mxu0 0
    %4131 = vmatprep.subr.bf16.mxu0 0
    %4132 = vmatpush1.bf16.msra.mxu0 0
    %4133 = vmatprep.subr.bf16.mxu0 0
    %4134 = vmatpush1.bf16.msra.mxu0 0
    %4135 = vmatprep.subr.bf16.mxu0 0
    %4136 = vmatpush1.bf16.msra.mxu0 0
    %4137 = vmatprep.subr.bf16.mxu0 0
    %4138 = vmatpush1.bf16.msra.mxu0 0
    %4139 = vmatprep.subr.bf16.mxu0 0
    %4140 = vmatpush1.bf16.msra.mxu0 0
    %4141 = vmatprep.subr.bf16.mxu0 0
    %4142 = vmatpush1.bf16.msra.mxu0 0
    %4143 = vmatprep.subr.bf16.mxu0 0
    %4144 = vmatpush1.bf16.msra.mxu0 0
    %4145 = vmatprep.subr.bf16.mxu0 0
    %4146 = vmatpush1.bf16.msra.mxu0 0
    %4147 = vmatprep.subr.bf16.mxu0 0
    %4148 = vmatpush1.bf16.msra.mxu0 0
    %4149 = vmatprep.subr.bf16.mxu0 0
    %4150 = vmatpush1.bf16.msra.mxu0 0
    %4151 = vmatprep.subr.bf16.mxu0 0
    %4152 = vmatpush1.bf16.msra.mxu0 0
    %4153 = vmatprep.subr.bf16.mxu0 0
    %4154 = vmatpush1.bf16.msra.mxu0 0
    %4155 = vmatprep.subr.bf16.mxu0 0
    %4156 = vmatpush1.bf16.msra.mxu0 0
    %4157 = vmatprep.mubr.bf16.mxu0 0
    %4158 = vmatmul.mubr.bf16.gmra.mrb[0].mxu0 %v3516
    %v4159 = vpop.f32.mrb[0].mxu0
    %v4160 = vadd.f32 0.0, %v4159
    %v4161 = vpop.f32.mrb[0].mxu0
    %v4162 = vpop.f32.mrb[0].mxu0
    %v4163 = vpop.f32.mrb[0].mxu0
    %4164 = vdwg.mxu0
    %4166 = vrot.lane.b32.xlu0 %v4124, 64
    %v4167 = vpop.permute.xlu0 %4166
    %v4169 = vsel %vm419, %v4167, 0
    %4171 = vmatprep.subr.bf16.mxu0 0
    %4172 = vmatpush1.bf16.msra.mxu0 %v1059
    %4173 = vmatprep.subr.bf16.mxu0 0
    %4174 = vmatpush1.bf16.msra.mxu0 %v1060
    %4175 = vmatprep.subr.bf16.mxu0 0
    %4176 = vmatpush1.bf16.msra.mxu0 0
    %4177 = vmatprep.subr.bf16.mxu0 0
    %4178 = vmatpush1.bf16.msra.mxu0 0
    %4179 = vmatprep.subr.bf16.mxu0 0
    %4180 = vmatpush1.bf16.msra.mxu0 0
    %4181 = vmatprep.subr.bf16.mxu0 0
    %4182 = vmatpush1.bf16.msra.mxu0 0
    %4183 = vmatprep.subr.bf16.mxu0 0
    %4184 = vmatpush1.bf16.msra.mxu0 0
    %4185 = vmatprep.subr.bf16.mxu0 0
    %4186 = vmatpush1.bf16.msra.mxu0 0
    %4187 = vmatprep.subr.bf16.mxu0 0
    %4188 = vmatpush1.bf16.msra.mxu0 0
    %4189 = vmatprep.subr.bf16.mxu0 0
    %4190 = vmatpush1.bf16.msra.mxu0 0
    %4191 = vmatprep.subr.bf16.mxu0 0
    %4192 = vmatpush1.bf16.msra.mxu0 0
    %4193 = vmatprep.subr.bf16.mxu0 0
    %4194 = vmatpush1.bf16.msra.mxu0 0
    %4195 = vmatprep.subr.bf16.mxu0 0
    %4196 = vmatpush1.bf16.msra.mxu0 0
    %4197 = vmatprep.subr.bf16.mxu0 0
    %4198 = vmatpush1.bf16.msra.mxu0 0
    %4199 = vmatprep.subr.bf16.mxu0 0
    %4200 = vmatpush1.bf16.msra.mxu0 0
    %4201 = vmatprep.subr.bf16.mxu0 0
    %4202 = vmatpush1.bf16.msra.mxu0 0
    %4203 = vmatprep.mubr.bf16.mxu0 0
    %4204 = vmatmul.mubr.bf16.gmra.mrb[0].mxu0 %v4169
    %v4205 = vpop.f32.mrb[0].mxu0
    %v4206 = vadd.f32 %v4160, %v4205
    %v4207 = vpop.f32.mrb[0].mxu0
    %v4208 = vpop.f32.mrb[0].mxu0
    %v4209 = vpop.f32.mrb[0].mxu0
    %4210 = vdwg.mxu0
    %v4211 = vadd.f32 %v4206, %v297
    %v4212 = vxor.u32 %v4211, 2147483648
    %v4213 = vmul.f32 %v4212, 1.442695
    %v4214 = vpow.pop %v4213
    %v4215 = vadd.f32 %v4214, 1.0
    %v4216 = vrcp.pop %v4215
    %v4217 = vmul.f32 1.0, %v4216
    %v4218 = vtanh.pop %v4211
    %v4219 = vmul.f32 %v4217, %v3457
    %4221 = vrot.lane.b32.xlu0 %v4218, 32
    %v4222 = vpop.permute.xlu0 %4221
    %v4224 = vmul.f32 %v4217, %v4222
    %4226 = vrot.lane.b32.xlu0 %v4224, 32
    %v4227 = vpop.permute.xlu0 %4226
    %v4229 = vadd.f32 %v4219, %v4227
    %v4230 = vtanh.pop %v4229
    %4232 = vrot.lane.b32.xlu0 %v4230, 32
    %v4233 = vpop.permute.xlu0 %4232
    %v4235 = vmul.f32 %v4217, %v4233
    %v4236 = vpack.c.bf16 %v4235, %v4235
    %v4237 = vpack.c.bf16 %v3582, %v3582
    %4239 = vrot.lane.b32.xlu0 %v4237, 64
    %v4240 = vpop.permute.xlu0 %4239
    %v4242 = vsel %vm419, %v4240, 0
    %4244 = vmatprep.subr.bf16.mxu0 0
    %4245 = vmatpush1.bf16.msra.mxu0 %v1140
    %4246 = vmatprep.subr.bf16.mxu0 0
    %4247 = vmatpush1.bf16.msra.mxu0 %v1141
    %4248 = vmatprep.subr.bf16.mxu0 0
    %4249 = vmatpush1.bf16.msra.mxu0 0
    %4250 = vmatprep.subr.bf16.mxu0 0
    %4251 = vmatpush1.bf16.msra.mxu0 0
    %4252 = vmatprep.subr.bf16.mxu0 0
    %4253 = vmatpush1.bf16.msra.mxu0 0
    %4254 = vmatprep.subr.bf16.mxu0 0
    %4255 = vmatpush1.bf16.msra.mxu0 0
    %4256 = vmatprep.subr.bf16.mxu0 0
    %4257 = vmatpush1.bf16.msra.mxu0 0
    %4258 = vmatprep.subr.bf16.mxu0 0
    %4259 = vmatpush1.bf16.msra.mxu0 0
    %4260 = vmatprep.subr.bf16.mxu0 0
    %4261 = vmatpush1.bf16.msra.mxu0 0
    %4262 = vmatprep.subr.bf16.mxu0 0
    %4263 = vmatpush1.bf16.msra.mxu0 0
    %4264 = vmatprep.subr.bf16.mxu0 0
    %4265 = vmatpush1.bf16.msra.mxu0 0
    %4266 = vmatprep.subr.bf16.mxu0 0
    %4267 = vmatpush1.bf16.msra.mxu0 0
    %4268 = vmatprep.subr.bf16.mxu0 0
    %4269 = vmatpush1.bf16.msra.mxu0 0
    %4270 = vmatprep.subr.bf16.mxu0 0
    %4271 = vmatpush1.bf16.msra.mxu0 0
    %4272 = vmatprep.subr.bf16.mxu0 0
    %4273 = vmatpush1.bf16.msra.mxu0 0
    %4274 = vmatprep.subr.bf16.mxu0 0
    %4275 = vmatpush1.bf16.msra.mxu0 0
    %4276 = vmatprep.mubr.bf16.mxu0 0
    %4277 = vmatmul.mubr.bf16.gmra.mrb[0].mxu0 %v4242
    %v4278 = vpop.f32.mrb[0].mxu0
    %v4279 = vadd.f32 0.0, %v4278
    %v4280 = vpop.f32.mrb[0].mxu0
    %v4281 = vpop.f32.mrb[0].mxu0
    %v4282 = vpop.f32.mrb[0].mxu0
    %4283 = vdwg.mxu0
    %4285 = vrot.lane.b32.xlu0 %v4236, 64
    %v4286 = vpop.permute.xlu0 %4285
    %v4288 = vsel %vm419, %v4286, 0
    %4290 = vmatprep.subr.bf16.mxu0 0
    %4291 = vmatpush1.bf16.msra.mxu0 %v1195
    %4292 = vmatprep.subr.bf16.mxu0 0
    %4293 = vmatpush1.bf16.msra.mxu0 %v1196
    %4294 = vmatprep.subr.bf16.mxu0 0
    %4295 = vmatpush1.bf16.msra.mxu0 0
    %4296 = vmatprep.subr.bf16.mxu0 0
    %4297 = vmatpush1.bf16.msra.mxu0 0
    %4298 = vmatprep.subr.bf16.mxu0 0
    %4299 = vmatpush1.bf16.msra.mxu0 0
    %4300 = vmatprep.subr.bf16.mxu0 0
    %4301 = vmatpush1.bf16.msra.mxu0 0
    %4302 = vmatprep.subr.bf16.mxu0 0
    %4303 = vmatpush1.bf16.msra.mxu0 0
    %4304 = vmatprep.subr.bf16.mxu0 0
    %4305 = vmatpush1.bf16.msra.mxu0 0
    %4306 = vmatprep.subr.bf16.mxu0 0
    %4307 = vmatpush1.bf16.msra.mxu0 0
    %4308 = vmatprep.subr.bf16.mxu0 0
    %4309 = vmatpush1.bf16.msra.mxu0 0
    %4310 = vmatprep.subr.bf16.mxu0 0
    %4311 = vmatpush1.bf16.msra.mxu0 0
    %4312 = vmatprep.subr.bf16.mxu0 0
    %4313 = vmatpush1.bf16.msra.mxu0 0
    %4314 = vmatprep.subr.bf16.mxu0 0
    %4315 = vmatpush1.bf16.msra.mxu0 0
    %4316 = vmatprep.subr.bf16.mxu0 0
    %4317 = vmatpush1.bf16.msra.mxu0 0
    %4318 = vmatprep.subr.bf16.mxu0 0
    %4319 = vmatpush1.bf16.msra.mxu0 0
    %4320 = vmatprep.subr.bf16.mxu0 0
    %4321 = vmatpush1.bf16.msra.mxu0 0
    %4322 = vmatprep.mubr.bf16.mxu0 0
    %4323 = vmatmul.mubr.bf16.gmra.mrb[0].mxu0 %v4288
    %v4324 = vpop.f32.mrb[0].mxu0
    %v4325 = vadd.f32 %v4279, %v4324
    %v4326 = vpop.f32.mrb[0].mxu0
    %v4327 = vpop.f32.mrb[0].mxu0
    %v4328 = vpop.f32.mrb[0].mxu0
    %4329 = vdwg.mxu0
    %v4330 = vadd.f32 %v4325, %v304
    %v4331 = vxor.u32 %v4330, 2147483648
    %v4332 = vmul.f32 %v4331, 1.442695
    %v4333 = vpow.pop %v4332
    %v4334 = vadd.f32 %v4333, 1.0
    %v4335 = vrcp.pop %v4334
    %v4336 = vmul.f32 1.0, %v4335
    %v4337 = vtanh.pop %v4330
    %v4338 = vmul.f32 %v4336, %v3576
    %4340 = vrot.lane.b32.xlu0 %v4337, 32
    %v4341 = vpop.permute.xlu0 %4340
    %v4343 = vmul.f32 %v4336, %v4341
    %4345 = vrot.lane.b32.xlu0 %v4343, 32
    %v4346 = vpop.permute.xlu0 %4345
    %v4348 = vadd.f32 %v4338, %v4346
    %v4349 = vtanh.pop %v4348
    %4351 = vrot.lane.b32.xlu0 %v4349, 32
    %v4352 = vpop.permute.xlu0 %4351
    %v4354 = vmul.f32 %v4336, %v4352
    %4355 = vmatprep.subr.bf16.mxu0 0
    %4356 = vmatpush1.bf16.msra.mxu0 %v415
    %4357 = vmatprep.subr.bf16.mxu0 0
    %4358 = vmatpush1.bf16.msra.mxu0 %v416
    %4359 = vmatprep.subr.bf16.mxu0 0
    %4360 = vmatpush1.bf16.msra.mxu0 0
    %4361 = vmatprep.subr.bf16.mxu0 0
    %4362 = vmatpush1.bf16.msra.mxu0 0
    %4363 = vmatprep.subr.bf16.mxu0 0
    %4364 = vmatpush1.bf16.msra.mxu0 0
    %4365 = vmatprep.subr.bf16.mxu0 0
    %4366 = vmatpush1.bf16.msra.mxu0 0
    %4367 = vmatprep.subr.bf16.mxu0 0
    %4368 = vmatpush1.bf16.msra.mxu0 0
    %4369 = vmatprep.subr.bf16.mxu0 0
    %4370 = vmatpush1.bf16.msra.mxu0 0
    %4371 = vmatprep.subr.bf16.mxu0 0
    %4372 = vmatpush1.bf16.msra.mxu0 0
    %4373 = vmatprep.subr.bf16.mxu0 0
    %4374 = vmatpush1.bf16.msra.mxu0 0
    %4375 = vmatprep.subr.bf16.mxu0 0
    %4376 = vmatpush1.bf16.msra.mxu0 0
    %4377 = vmatprep.subr.bf16.mxu0 0
    %4378 = vmatpush1.bf16.msra.mxu0 0
    %4379 = vmatprep.subr.bf16.mxu0 0
    %4380 = vmatpush1.bf16.msra.mxu0 0
    %4381 = vmatprep.subr.bf16.mxu0 0
    %4382 = vmatpush1.bf16.msra.mxu0 0
    %4383 = vmatprep.subr.bf16.mxu0 0
    %4384 = vmatpush1.bf16.msra.mxu0 0
    %4385 = vmatprep.subr.bf16.mxu0 0
    %4386 = vmatpush1.bf16.msra.mxu0 0
    %4387 = vmatprep.mubr.bf16.mxu0 0
    %4388 = vmatmul.mubr.bf16.gmra.mrb[0].mxu0 %v3945
    %v4389 = vpop.f32.mrb[0].mxu0
    %v4390 = vadd.f32 0.0, %v4389
    %v4391 = vpop.f32.mrb[0].mxu0
    %v4392 = vpop.f32.mrb[0].mxu0
    %v4393 = vpop.f32.mrb[0].mxu0
    %4394 = vdwg.mxu0
    %v4396 = vrot.slane %v4390, 3
    %v4397 = vrot.slane %v4390, 4
    %v4398 = vrot.slane %v4390, 5
    %v4399 = vrot.slane %v4390, 6
    %v4400 = vrot.slane %v4390, 7
    %v4401 = vrot.slane %v4390, 1
    %v4402 = vrot.slane %v4390, 2
    %v4411 = vadd.f32 %v377, %v4396
    %v4412 = vadd.f32 %v380, %v4397
    %v4413 = vadd.f32 %v385, %v4398
    %v4414 = vadd.f32 %v388, %v4399
    %v4415 = vadd.f32 %v393, %v4400
    %v4416 = vadd.f32 %v396, %v4390
    %v4417 = vadd.f32 %v401, %v4401
    %v4418 = vadd.f32 %v404, %v4402
    %v4419 = vxor.u32 %v4411, 2147483648
    %v4420 = vxor.u32 %v4412, 2147483648
    %v4421 = vxor.u32 %v4413, 2147483648
    %v4422 = vxor.u32 %v4414, 2147483648
    %v4423 = vxor.u32 %v4415, 2147483648
    %v4424 = vxor.u32 %v4416, 2147483648
    %v4425 = vxor.u32 %v4417, 2147483648
    %v4426 = vxor.u32 %v4418, 2147483648
    %v4427 = vmul.f32 %v4419, 1.442695
    %v4428 = vpow.pop %v4427
    %v4429 = vmul.f32 %v4420, 1.442695
    %v4430 = vpow.pop %v4429
    %v4431 = vmul.f32 %v4421, 1.442695
    %v4432 = vpow.pop %v4431
    %v4433 = vmul.f32 %v4422, 1.442695
    %v4434 = vpow.pop %v4433
    %v4435 = vmul.f32 %v4423, 1.442695
    %v4436 = vpow.pop %v4435
    %v4437 = vmul.f32 %v4424, 1.442695
    %v4438 = vpow.pop %v4437
    %v4439 = vmul.f32 %v4425, 1.442695
    %v4440 = vpow.pop %v4439
    %v4441 = vmul.f32 %v4426, 1.442695
    %v4442 = vpow.pop %v4441
    %v4443 = vadd.f32 %v4428, 1.0
    %v4444 = vadd.f32 %v4430, 1.0
    %v4445 = vadd.f32 %v4432, 1.0
    %v4446 = vadd.f32 %v4434, 1.0
    %v4447 = vadd.f32 %v4436, 1.0
    %v4448 = vadd.f32 %v4438, 1.0
    %v4449 = vadd.f32 %v4440, 1.0
    %v4450 = vadd.f32 %v4442, 1.0
    %v4451 = vrcp.pop %v4443
    %v4452 = vmul.f32 1.0, %v4451
    %v4453 = vrcp.pop %v4444
    %v4454 = vmul.f32 1.0, %v4453
    %v4455 = vrcp.pop %v4445
    %v4456 = vmul.f32 1.0, %v4455
    %v4457 = vrcp.pop %v4446
    %v4458 = vmul.f32 1.0, %v4457
    %v4459 = vrcp.pop %v4447
    %v4460 = vmul.f32 1.0, %v4459
    %v4461 = vrcp.pop %v4448
    %v4462 = vmul.f32 1.0, %v4461
    %v4463 = vrcp.pop %v4449
    %v4464 = vmul.f32 1.0, %v4463
    %v4465 = vrcp.pop %v4450
    %v4466 = vmul.f32 1.0, %v4465
    %v4467 = vtanh.pop %v4411
    %v4468 = vtanh.pop %v4412
    %v4469 = vtanh.pop %v4413
    %v4470 = vtanh.pop %v4414
    %v4471 = vtanh.pop %v4415
    %v4472 = vtanh.pop %v4416
    %v4473 = vtanh.pop %v4417
    %v4474 = vtanh.pop %v4418
    %v4483 = vrot.slane %v3807, 7
    %v4484 = vrot.slane %v3808, 7
    %v4485 = vrot.slane %v3809, 7
    %v4486 = vrot.slane %v3810, 7
    %v4487 = vrot.slane %v3811, 7
    %v4488 = vrot.slane %v3812, 7
    %v4489 = vrot.slane %v3813, 7
    %v4490 = vrot.slane %v3814, 7
    %v4499 = vmul.f32 %v4452, %v4483
    %v4500 = vmul.f32 %v4454, %v4484
    %v4501 = vmul.f32 %v4456, %v4485
    %v4502 = vmul.f32 %v4458, %v4486
    %v4503 = vmul.f32 %v4460, %v4487
    %v4504 = vmul.f32 %v4462, %v4488
    %v4505 = vmul.f32 %v4464, %v4489
    %v4506 = vmul.f32 %v4466, %v4490
    %4515 = vrot.lane.b32.xlu0 %v4467, 32
    %v4516 = vpop.permute.xlu0 %4515
    %4517 = vrot.lane.b32.xlu0 %v4468, 32
    %v4518 = vpop.permute.xlu0 %4517
    %4519 = vrot.lane.b32.xlu0 %v4469, 32
    %v4520 = vpop.permute.xlu0 %4519
    %4521 = vrot.lane.b32.xlu0 %v4470, 32
    %v4522 = vpop.permute.xlu0 %4521
    %4523 = vrot.lane.b32.xlu0 %v4471, 32
    %v4524 = vpop.permute.xlu0 %4523
    %4525 = vrot.lane.b32.xlu0 %v4472, 32
    %v4526 = vpop.permute.xlu0 %4525
    %4527 = vrot.lane.b32.xlu0 %v4473, 32
    %v4528 = vpop.permute.xlu0 %4527
    %4529 = vrot.lane.b32.xlu0 %v4474, 32
    %v4530 = vpop.permute.xlu0 %4529
    %v4539 = vmul.f32 %v4452, %v4516
    %v4540 = vmul.f32 %v4454, %v4518
    %v4541 = vmul.f32 %v4456, %v4520
    %v4542 = vmul.f32 %v4458, %v4522
    %v4543 = vmul.f32 %v4460, %v4524
    %v4544 = vmul.f32 %v4462, %v4526
    %v4545 = vmul.f32 %v4464, %v4528
    %v4546 = vmul.f32 %v4466, %v4530
    %4555 = vrot.lane.b32.xlu0 %v4539, 32
    %v4556 = vpop.permute.xlu0 %4555
    %4557 = vrot.lane.b32.xlu0 %v4540, 32
    %v4558 = vpop.permute.xlu0 %4557
    %4559 = vrot.lane.b32.xlu0 %v4541, 32
    %v4560 = vpop.permute.xlu0 %4559
    %4561 = vrot.lane.b32.xlu0 %v4542, 32
    %v4562 = vpop.permute.xlu0 %4561
    %4563 = vrot.lane.b32.xlu0 %v4543, 32
    %v4564 = vpop.permute.xlu0 %4563
    %4565 = vrot.lane.b32.xlu0 %v4544, 32
    %v4566 = vpop.permute.xlu0 %4565
    %4567 = vrot.lane.b32.xlu0 %v4545, 32
    %v4568 = vpop.permute.xlu0 %4567
    %4569 = vrot.lane.b32.xlu0 %v4546, 32
    %v4570 = vpop.permute.xlu0 %4569
    %v4579 = vadd.f32 %v4499, %v4556
    %v4580 = vadd.f32 %v4500, %v4558
    %v4581 = vadd.f32 %v4501, %v4560
    %v4582 = vadd.f32 %v4502, %v4562
    %v4583 = vadd.f32 %v4503, %v4564
    %v4584 = vadd.f32 %v4504, %v4566
    %v4585 = vadd.f32 %v4505, %v4568
    %v4586 = vadd.f32 %v4506, %v4570
    %v4587 = vtanh.pop %v4579
    %v4588 = vtanh.pop %v4580
    %v4589 = vtanh.pop %v4581
    %v4590 = vtanh.pop %v4582
    %v4591 = vtanh.pop %v4583
    %v4592 = vtanh.pop %v4584
    %v4593 = vtanh.pop %v4585
    %v4594 = vtanh.pop %v4586
    %4603 = vrot.lane.b32.xlu0 %v4587, 32
    %v4604 = vpop.permute.xlu0 %4603
    %4605 = vrot.lane.b32.xlu0 %v4588, 32
    %v4606 = vpop.permute.xlu0 %4605
    %4607 = vrot.lane.b32.xlu0 %v4589, 32
    %v4608 = vpop.permute.xlu0 %4607
    %4609 = vrot.lane.b32.xlu0 %v4590, 32
    %v4610 = vpop.permute.xlu0 %4609
    %4611 = vrot.lane.b32.xlu0 %v4591, 32
    %v4612 = vpop.permute.xlu0 %4611
    %4613 = vrot.lane.b32.xlu0 %v4592, 32
    %v4614 = vpop.permute.xlu0 %4613
    %4615 = vrot.lane.b32.xlu0 %v4593, 32
    %v4616 = vpop.permute.xlu0 %4615
    %4617 = vrot.lane.b32.xlu0 %v4594, 32
    %v4618 = vpop.permute.xlu0 %4617
    %v4627 = vmul.f32 %v4452, %v4604
    %v4628 = vmul.f32 %v4454, %v4606
    %v4629 = vmul.f32 %v4456, %v4608
    %v4630 = vmul.f32 %v4458, %v4610
    %v4631 = vmul.f32 %v4460, %v4612
    %v4632 = vmul.f32 %v4462, %v4614
    %v4633 = vmul.f32 %v4464, %v4616
    %v4634 = vmul.f32 %v4466, %v4618
    %v4635 = vpack.c.bf16 %v4627, %v4627
    %v4636 = vpack.c.bf16 %v4628, %v4628
    %v4637 = vpack.c.bf16 %v4629, %v4629
    %v4638 = vpack.c.bf16 %v4630, %v4630
    %v4639 = vpack.c.bf16 %v4631, %v4631
    %v4640 = vpack.c.bf16 %v4632, %v4632
    %v4641 = vpack.c.bf16 %v4633, %v4633
    %v4642 = vpack.c.bf16 %v4634, %v4634
    %4643 = vmatprep.subr.bf16.mxu0 0
    %4644 = vmatpush1.bf16.msra.mxu0 %v695
    %4645 = vmatprep.subr.bf16.mxu0 0
    %4646 = vmatpush1.bf16.msra.mxu0 %v696
    %4647 = vmatprep.subr.bf16.mxu0 0
    %4648 = vmatpush1.bf16.msra.mxu0 0
    %4649 = vmatprep.subr.bf16.mxu0 0
    %4650 = vmatpush1.bf16.msra.mxu0 0
    %4651 = vmatprep.subr.bf16.mxu0 0
    %4652 = vmatpush1.bf16.msra.mxu0 0
    %4653 = vmatprep.subr.bf16.mxu0 0
    %4654 = vmatpush1.bf16.msra.mxu0 0
    %4655 = vmatprep.subr.bf16.mxu0 0
    %4656 = vmatpush1.bf16.msra.mxu0 0
    %4657 = vmatprep.subr.bf16.mxu0 0
    %4658 = vmatpush1.bf16.msra.mxu0 0
    %4659 = vmatprep.subr.bf16.mxu0 0
    %4660 = vmatpush1.bf16.msra.mxu0 0
    %4661 = vmatprep.subr.bf16.mxu0 0
    %4662 = vmatpush1.bf16.msra.mxu0 0
    %4663 = vmatprep.subr.bf16.mxu0 0
    %4664 = vmatpush1.bf16.msra.mxu0 0
    %4665 = vmatprep.subr.bf16.mxu0 0
    %4666 = vmatpush1.bf16.msra.mxu0 0
    %4667 = vmatprep.subr.bf16.mxu0 0
    %4668 = vmatpush1.bf16.msra.mxu0 0
    %4669 = vmatprep.subr.bf16.mxu0 0
    %4670 = vmatpush1.bf16.msra.mxu0 0
    %4671 = vmatprep.subr.bf16.mxu0 0
    %4672 = vmatpush1.bf16.msra.mxu0 0
    %4673 = vmatprep.subr.bf16.mxu0 0
    %4674 = vmatpush1.bf16.msra.mxu0 0
    %4675 = vmatprep.mubr.bf16.mxu0 0
    %4676 = vmatmul.mubr.bf16.gmra.mrb[0].mxu0 %v4057
    %v4677 = vpop.f32.mrb[0].mxu0
    %v4678 = vadd.f32 0.0, %v4677
    %v4679 = vpop.f32.mrb[0].mxu0
    %v4680 = vpop.f32.mrb[0].mxu0
    %v4681 = vpop.f32.mrb[0].mxu0
    %4682 = vdwg.mxu0
    %v4691 = vunpack.c.l.b16 %v4635
    %v4692 = vunpack.c.l.b16 %v4636
    %v4693 = vunpack.c.l.b16 %v4637
    %v4694 = vunpack.c.l.b16 %v4638
    %v4695 = vunpack.c.l.b16 %v4639
    %v4696 = vunpack.c.l.b16 %v4640
    %v4697 = vunpack.c.l.b16 %v4641
    %v4698 = vunpack.c.l.b16 %v4642
    %v4699 = vrot.slane %v4691, 5
    %v4700 = vrot.slane %v4692, 4
    %v4701 = vsel %vm756, %v4700, %v4699
    %v4702 = vrot.slane %v4693, 3
    %v4703 = vsel %vm759, %v4702, %v4701
    %v4704 = vrot.slane %v4694, 2
    %v4705 = vsel %vm762, %v4704, %v4703
    %v4706 = vrot.slane %v4695, 1
    %v4707 = vsel %vm765, %v4706, %v4705
    %v4708 = vsel %vm768, %v4696, %v4707
    %v4709 = vrot.slane %v4697, 7
    %v4710 = vsel %vm771, %v4709, %v4708
    %v4711 = vrot.slane %v4698, 6
    %v4712 = vsel %vm774, %v4711, %v4710
    %v4713 = vpack.c.b16 %v4712, %v4712
    %4714 = vrot.lane.b32.xlu0 %v4713, 64
    %v4715 = vpop.permute.xlu0 %4714
    %v4717 = vsel %vm419, %v4715, 0
    %4719 = vmatprep.subr.bf16.mxu0 0
    %4720 = vmatpush1.bf16.msra.mxu0 %v787
    %4721 = vmatprep.subr.bf16.mxu0 0
    %4722 = vmatpush1.bf16.msra.mxu0 %v788
    %4723 = vmatprep.subr.bf16.mxu0 0
    %4724 = vmatpush1.bf16.msra.mxu0 0
    %4725 = vmatprep.subr.bf16.mxu0 0
    %4726 = vmatpush1.bf16.msra.mxu0 0
    %4727 = vmatprep.subr.bf16.mxu0 0
    %4728 = vmatpush1.bf16.msra.mxu0 0
    %4729 = vmatprep.subr.bf16.mxu0 0
    %4730 = vmatpush1.bf16.msra.mxu0 0
    %4731 = vmatprep.subr.bf16.mxu0 0
    %4732 = vmatpush1.bf16.msra.mxu0 0
    %4733 = vmatprep.subr.bf16.mxu0 0
    %4734 = vmatpush1.bf16.msra.mxu0 0
    %4735 = vmatprep.subr.bf16.mxu0 0
    %4736 = vmatpush1.bf16.msra.mxu0 0
    %4737 = vmatprep.subr.bf16.mxu0 0
    %4738 = vmatpush1.bf16.msra.mxu0 0
    %4739 = vmatprep.subr.bf16.mxu0 0
    %4740 = vmatpush1.bf16.msra.mxu0 0
    %4741 = vmatprep.subr.bf16.mxu0 0
    %4742 = vmatpush1.bf16.msra.mxu0 0
    %4743 = vmatprep.subr.bf16.mxu0 0
    %4744 = vmatpush1.bf16.msra.mxu0 0
    %4745 = vmatprep.subr.bf16.mxu0 0
    %4746 = vmatpush1.bf16.msra.mxu0 0
    %4747 = vmatprep.subr.bf16.mxu0 0
    %4748 = vmatpush1.bf16.msra.mxu0 0
    %4749 = vmatprep.subr.bf16.mxu0 0
    %4750 = vmatpush1.bf16.msra.mxu0 0
    %4751 = vmatprep.mubr.bf16.mxu0 0
    %4752 = vmatmul.mubr.bf16.gmra.mrb[0].mxu0 %v4717
    %v4753 = vpop.f32.mrb[0].mxu0
    %v4754 = vadd.f32 %v4678, %v4753
    %v4755 = vpop.f32.mrb[0].mxu0
    %v4756 = vpop.f32.mrb[0].mxu0
    %v4757 = vpop.f32.mrb[0].mxu0
    %4758 = vdwg.mxu0
    %v4759 = vadd.f32 %v4754, %v283
    %v4760 = vxor.u32 %v4759, 2147483648
    %v4761 = vmul.f32 %v4760, 1.442695
    %v4762 = vpow.pop %v4761
    %v4763 = vadd.f32 %v4762, 1.0
    %v4764 = vrcp.pop %v4763
    %v4765 = vmul.f32 1.0, %v4764
    %v4766 = vtanh.pop %v4759
    %v4767 = vmul.f32 %v4765, %v4005
    %4769 = vrot.lane.b32.xlu0 %v4766, 32
    %v4770 = vpop.permute.xlu0 %4769
    %v4772 = vmul.f32 %v4765, %v4770
    %4774 = vrot.lane.b32.xlu0 %v4772, 32
    %v4775 = vpop.permute.xlu0 %4774
    %v4777 = vadd.f32 %v4767, %v4775
    %v4778 = vtanh.pop %v4777
    %4780 = vrot.lane.b32.xlu0 %v4778, 32
    %v4781 = vpop.permute.xlu0 %4780
    %v4783 = vmul.f32 %v4765, %v4781
    %v4784 = vpack.c.bf16 %v4783, %v4783
    %4785 = vmatprep.subr.bf16.mxu0 0
    %4786 = vmatpush1.bf16.msra.mxu0 %v868
    %4787 = vmatprep.subr.bf16.mxu0 0
    %4788 = vmatpush1.bf16.msra.mxu0 %v869
    %4789 = vmatprep.subr.bf16.mxu0 0
    %4790 = vmatpush1.bf16.msra.mxu0 0
    %4791 = vmatprep.subr.bf16.mxu0 0
    %4792 = vmatpush1.bf16.msra.mxu0 0
    %4793 = vmatprep.subr.bf16.mxu0 0
    %4794 = vmatpush1.bf16.msra.mxu0 0
    %4795 = vmatprep.subr.bf16.mxu0 0
    %4796 = vmatpush1.bf16.msra.mxu0 0
    %4797 = vmatprep.subr.bf16.mxu0 0
    %4798 = vmatpush1.bf16.msra.mxu0 0
    %4799 = vmatprep.subr.bf16.mxu0 0
    %4800 = vmatpush1.bf16.msra.mxu0 0
    %4801 = vmatprep.subr.bf16.mxu0 0
    %4802 = vmatpush1.bf16.msra.mxu0 0
    %4803 = vmatprep.subr.bf16.mxu0 0
    %4804 = vmatpush1.bf16.msra.mxu0 0
    %4805 = vmatprep.subr.bf16.mxu0 0
    %4806 = vmatpush1.bf16.msra.mxu0 0
    %4807 = vmatprep.subr.bf16.mxu0 0
    %4808 = vmatpush1.bf16.msra.mxu0 0
    %4809 = vmatprep.subr.bf16.mxu0 0
    %4810 = vmatpush1.bf16.msra.mxu0 0
    %4811 = vmatprep.subr.bf16.mxu0 0
    %4812 = vmatpush1.bf16.msra.mxu0 0
    %4813 = vmatprep.subr.bf16.mxu0 0
    %4814 = vmatpush1.bf16.msra.mxu0 0
    %4815 = vmatprep.subr.bf16.mxu0 0
    %4816 = vmatpush1.bf16.msra.mxu0 0
    %4817 = vmatprep.mubr.bf16.mxu0 0
    %4818 = vmatmul.mubr.bf16.gmra.mrb[0].mxu0 %v4169
    %v4819 = vpop.f32.mrb[0].mxu0
    %v4820 = vadd.f32 0.0, %v4819
    %v4821 = vpop.f32.mrb[0].mxu0
    %v4822 = vpop.f32.mrb[0].mxu0
    %v4823 = vpop.f32.mrb[0].mxu0
    %4824 = vdwg.mxu0
    %4826 = vrot.lane.b32.xlu0 %v4784, 64
    %v4827 = vpop.permute.xlu0 %4826
    %v4829 = vsel %vm419, %v4827, 0
    %4831 = vmatprep.subr.bf16.mxu0 0
    %4832 = vmatpush1.bf16.msra.mxu0 %v923
    %4833 = vmatprep.subr.bf16.mxu0 0
    %4834 = vmatpush1.bf16.msra.mxu0 %v924
    %4835 = vmatprep.subr.bf16.mxu0 0
    %4836 = vmatpush1.bf16.msra.mxu0 0
    %4837 = vmatprep.subr.bf16.mxu0 0
    %4838 = vmatpush1.bf16.msra.mxu0 0
    %4839 = vmatprep.subr.bf16.mxu0 0
    %4840 = vmatpush1.bf16.msra.mxu0 0
    %4841 = vmatprep.subr.bf16.mxu0 0
    %4842 = vmatpush1.bf16.msra.mxu0 0
    %4843 = vmatprep.subr.bf16.mxu0 0
    %4844 = vmatpush1.bf16.msra.mxu0 0
    %4845 = vmatprep.subr.bf16.mxu0 0
    %4846 = vmatpush1.bf16.msra.mxu0 0
    %4847 = vmatprep.subr.bf16.mxu0 0
    %4848 = vmatpush1.bf16.msra.mxu0 0
    %4849 = vmatprep.subr.bf16.mxu0 0
    %4850 = vmatpush1.bf16.msra.mxu0 0
    %4851 = vmatprep.subr.bf16.mxu0 0
    %4852 = vmatpush1.bf16.msra.mxu0 0
    %4853 = vmatprep.subr.bf16.mxu0 0
    %4854 = vmatpush1.bf16.msra.mxu0 0
    %4855 = vmatprep.subr.bf16.mxu0 0
    %4856 = vmatpush1.bf16.msra.mxu0 0
    %4857 = vmatprep.subr.bf16.mxu0 0
    %4858 = vmatpush1.bf16.msra.mxu0 0
    %4859 = vmatprep.subr.bf16.mxu0 0
    %4860 = vmatpush1.bf16.msra.mxu0 0
    %4861 = vmatprep.subr.bf16.mxu0 0
    %4862 = vmatpush1.bf16.msra.mxu0 0
    %4863 = vmatprep.mubr.bf16.mxu0 0
    %4864 = vmatmul.mubr.bf16.gmra.mrb[0].mxu0 %v4829
    %v4865 = vpop.f32.mrb[0].mxu0
    %v4866 = vadd.f32 %v4820, %v4865
    %v4867 = vpop.f32.mrb[0].mxu0
    %v4868 = vpop.f32.mrb[0].mxu0
    %v4869 = vpop.f32.mrb[0].mxu0
    %4870 = vdwg.mxu0
    %v4871 = vadd.f32 %v4866, %v290
    %v4872 = vxor.u32 %v4871, 2147483648
    %v4873 = vmul.f32 %v4872, 1.442695
    %v4874 = vpow.pop %v4873
    %v4875 = vadd.f32 %v4874, 1.0
    %v4876 = vrcp.pop %v4875
    %v4877 = vmul.f32 1.0, %v4876
    %v4878 = vtanh.pop %v4871
    %v4879 = vmul.f32 %v4877, %v4117
    %4881 = vrot.lane.b32.xlu0 %v4878, 32
    %v4882 = vpop.permute.xlu0 %4881
    %v4884 = vmul.f32 %v4877, %v4882
    %4886 = vrot.lane.b32.xlu0 %v4884, 32
    %v4887 = vpop.permute.xlu0 %4886
    %v4889 = vadd.f32 %v4879, %v4887
    %v4890 = vtanh.pop %v4889
    %4892 = vrot.lane.b32.xlu0 %v4890, 32
    %v4893 = vpop.permute.xlu0 %4892
    %v4895 = vmul.f32 %v4877, %v4893
    %v4896 = vpack.c.bf16 %v4895, %v4895
    %4897 = vmatprep.subr.bf16.mxu0 0
    %4898 = vmatpush1.bf16.msra.mxu0 %v1004
    %4899 = vmatprep.subr.bf16.mxu0 0
    %4900 = vmatpush1.bf16.msra.mxu0 %v1005
    %4901 = vmatprep.subr.bf16.mxu0 0
    %4902 = vmatpush1.bf16.msra.mxu0 0
    %4903 = vmatprep.subr.bf16.mxu0 0
    %4904 = vmatpush1.bf16.msra.mxu0 0
    %4905 = vmatprep.subr.bf16.mxu0 0
    %4906 = vmatpush1.bf16.msra.mxu0 0
    %4907 = vmatprep.subr.bf16.mxu0 0
    %4908 = vmatpush1.bf16.msra.mxu0 0
    %4909 = vmatprep.subr.bf16.mxu0 0
    %4910 = vmatpush1.bf16.msra.mxu0 0
    %4911 = vmatprep.subr.bf16.mxu0 0
    %4912 = vmatpush1.bf16.msra.mxu0 0
    %4913 = vmatprep.subr.bf16.mxu0 0
    %4914 = vmatpush1.bf16.msra.mxu0 0
    %4915 = vmatprep.subr.bf16.mxu0 0
    %4916 = vmatpush1.bf16.msra.mxu0 0
    %4917 = vmatprep.subr.bf16.mxu0 0
    %4918 = vmatpush1.bf16.msra.mxu0 0
    %4919 = vmatprep.subr.bf16.mxu0 0
    %4920 = vmatpush1.bf16.msra.mxu0 0
    %4921 = vmatprep.subr.bf16.mxu0 0
    %4922 = vmatpush1.bf16.msra.mxu0 0
    %4923 = vmatprep.subr.bf16.mxu0 0
    %4924 = vmatpush1.bf16.msra.mxu0 0
    %4925 = vmatprep.subr.bf16.mxu0 0
    %4926 = vmatpush1.bf16.msra.mxu0 0
    %4927 = vmatprep.subr.bf16.mxu0 0
    %4928 = vmatpush1.bf16.msra.mxu0 0
    %4929 = vmatprep.mubr.bf16.mxu0 0
    %4930 = vmatmul.mubr.bf16.gmra.mrb[0].mxu0 %v4288
    %v4931 = vpop.f32.mrb[0].mxu0
    %v4932 = vadd.f32 0.0, %v4931
    %v4933 = vpop.f32.mrb[0].mxu0
    %v4934 = vpop.f32.mrb[0].mxu0
    %v4935 = vpop.f32.mrb[0].mxu0
    %4936 = vdwg.mxu0
    %4938 = vrot.lane.b32.xlu0 %v4896, 64
    %v4939 = vpop.permute.xlu0 %4938
    %v4941 = vsel %vm419, %v4939, 0
    %4943 = vmatprep.subr.bf16.mxu0 0
    %4944 = vmatpush1.bf16.msra.mxu0 %v1059
    %4945 = vmatprep.subr.bf16.mxu0 0
    %4946 = vmatpush1.bf16.msra.mxu0 %v1060
    %4947 = vmatprep.subr.bf16.mxu0 0
    %4948 = vmatpush1.bf16.msra.mxu0 0
    %4949 = vmatprep.subr.bf16.mxu0 0
    %4950 = vmatpush1.bf16.msra.mxu0 0
    %4951 = vmatprep.subr.bf16.mxu0 0
    %4952 = vmatpush1.bf16.msra.mxu0 0
    %4953 = vmatprep.subr.bf16.mxu0 0
    %4954 = vmatpush1.bf16.msra.mxu0 0
    %4955 = vmatprep.subr.bf16.mxu0 0
    %4956 = vmatpush1.bf16.msra.mxu0 0
    %4957 = vmatprep.subr.bf16.mxu0 0
    %4958 = vmatpush1.bf16.msra.mxu0 0
    %4959 = vmatprep.subr.bf16.mxu0 0
    %4960 = vmatpush1.bf16.msra.mxu0 0
    %4961 = vmatprep.subr.bf16.mxu0 0
    %4962 = vmatpush1.bf16.msra.mxu0 0
    %4963 = vmatprep.subr.bf16.mxu0 0
    %4964 = vmatpush1.bf16.msra.mxu0 0
    %4965 = vmatprep.subr.bf16.mxu0 0
    %4966 = vmatpush1.bf16.msra.mxu0 0
    %4967 = vmatprep.subr.bf16.mxu0 0
    %4968 = vmatpush1.bf16.msra.mxu0 0
    %4969 = vmatprep.subr.bf16.mxu0 0
    %4970 = vmatpush1.bf16.msra.mxu0 0
    %4971 = vmatprep.subr.bf16.mxu0 0
    %4972 = vmatpush1.bf16.msra.mxu0 0
    %4973 = vmatprep.subr.bf16.mxu0 0
    %4974 = vmatpush1.bf16.msra.mxu0 0
    %4975 = vmatprep.mubr.bf16.mxu0 0
    %4976 = vmatmul.mubr.bf16.gmra.mrb[0].mxu0 %v4941
    %v4977 = vpop.f32.mrb[0].mxu0
    %v4978 = vadd.f32 %v4932, %v4977
    %v4979 = vpop.f32.mrb[0].mxu0
    %v4980 = vpop.f32.mrb[0].mxu0
    %v4981 = vpop.f32.mrb[0].mxu0
    %4982 = vdwg.mxu0
    %v4983 = vadd.f32 %v4978, %v297
    %v4984 = vxor.u32 %v4983, 2147483648
    %v4985 = vmul.f32 %v4984, 1.442695
    %v4986 = vpow.pop %v4985
    %v4987 = vadd.f32 %v4986, 1.0
    %v4988 = vrcp.pop %v4987
    %v4989 = vmul.f32 1.0, %v4988
    %v4990 = vtanh.pop %v4983
    %v4991 = vmul.f32 %v4989, %v4229
    %4993 = vrot.lane.b32.xlu0 %v4990, 32
    %v4994 = vpop.permute.xlu0 %4993
    %v4996 = vmul.f32 %v4989, %v4994
    %4998 = vrot.lane.b32.xlu0 %v4996, 32
    %v4999 = vpop.permute.xlu0 %4998
    %v5001 = vadd.f32 %v4991, %v4999
    %v5002 = vtanh.pop %v5001
    %5004 = vrot.lane.b32.xlu0 %v5002, 32
    %v5005 = vpop.permute.xlu0 %5004
    %v5007 = vmul.f32 %v4989, %v5005
    %v5008 = vpack.c.bf16 %v5007, %v5007
    %v5009 = vpack.c.bf16 %v4354, %v4354
    %5011 = vrot.lane.b32.xlu0 %v5009, 64
    %v5012 = vpop.permute.xlu0 %5011
    %v5014 = vsel %vm419, %v5012, 0
    %5016 = vmatprep.subr.bf16.mxu0 0
    %5017 = vmatpush1.bf16.msra.mxu0 %v1140
    %5018 = vmatprep.subr.bf16.mxu0 0
    %5019 = vmatpush1.bf16.msra.mxu0 %v1141
    %5020 = vmatprep.subr.bf16.mxu0 0
    %5021 = vmatpush1.bf16.msra.mxu0 0
    %5022 = vmatprep.subr.bf16.mxu0 0
    %5023 = vmatpush1.bf16.msra.mxu0 0
    %5024 = vmatprep.subr.bf16.mxu0 0
    %5025 = vmatpush1.bf16.msra.mxu0 0
    %5026 = vmatprep.subr.bf16.mxu0 0
    %5027 = vmatpush1.bf16.msra.mxu0 0
    %5028 = vmatprep.subr.bf16.mxu0 0
    %5029 = vmatpush1.bf16.msra.mxu0 0
    %5030 = vmatprep.subr.bf16.mxu0 0
    %5031 = vmatpush1.bf16.msra.mxu0 0
    %5032 = vmatprep.subr.bf16.mxu0 0
    %5033 = vmatpush1.bf16.msra.mxu0 0
    %5034 = vmatprep.subr.bf16.mxu0 0
    %5035 = vmatpush1.bf16.msra.mxu0 0
    %5036 = vmatprep.subr.bf16.mxu0 0
    %5037 = vmatpush1.bf16.msra.mxu0 0
    %5038 = vmatprep.subr.bf16.mxu0 0
    %5039 = vmatpush1.bf16.msra.mxu0 0
    %5040 = vmatprep.subr.bf16.mxu0 0
    %5041 = vmatpush1.bf16.msra.mxu0 0
    %5042 = vmatprep.subr.bf16.mxu0 0
    %5043 = vmatpush1.bf16.msra.mxu0 0
    %5044 = vmatprep.subr.bf16.mxu0 0
    %5045 = vmatpush1.bf16.msra.mxu0 0
    %5046 = vmatprep.subr.bf16.mxu0 0
    %5047 = vmatpush1.bf16.msra.mxu0 0
    %5048 = vmatprep.mubr.bf16.mxu0 0
    %5049 = vmatmul.mubr.bf16.gmra.mrb[0].mxu0 %v5014
    %v5050 = vpop.f32.mrb[0].mxu0
    %v5051 = vadd.f32 0.0, %v5050
    %v5052 = vpop.f32.mrb[0].mxu0
    %v5053 = vpop.f32.mrb[0].mxu0
    %v5054 = vpop.f32.mrb[0].mxu0
    %5055 = vdwg.mxu0
    %5057 = vrot.lane.b32.xlu0 %v5008, 64
    %v5058 = vpop.permute.xlu0 %5057
    %v5060 = vsel %vm419, %v5058, 0
    %5062 = vmatprep.subr.bf16.mxu0 0
    %5063 = vmatpush1.bf16.msra.mxu0 %v1195
    %5064 = vmatprep.subr.bf16.mxu0 0
    %5065 = vmatpush1.bf16.msra.mxu0 %v1196
    %5066 = vmatprep.subr.bf16.mxu0 0
    %5067 = vmatpush1.bf16.msra.mxu0 0
    %5068 = vmatprep.subr.bf16.mxu0 0
    %5069 = vmatpush1.bf16.msra.mxu0 0
    %5070 = vmatprep.subr.bf16.mxu0 0
    %5071 = vmatpush1.bf16.msra.mxu0 0
    %5072 = vmatprep.subr.bf16.mxu0 0
    %5073 = vmatpush1.bf16.msra.mxu0 0
    %5074 = vmatprep.subr.bf16.mxu0 0
    %5075 = vmatpush1.bf16.msra.mxu0 0
    %5076 = vmatprep.subr.bf16.mxu0 0
    %5077 = vmatpush1.bf16.msra.mxu0 0
    %5078 = vmatprep.subr.bf16.mxu0 0
    %5079 = vmatpush1.bf16.msra.mxu0 0
    %5080 = vmatprep.subr.bf16.mxu0 0
    %5081 = vmatpush1.bf16.msra.mxu0 0
    %5082 = vmatprep.subr.bf16.mxu0 0
    %5083 = vmatpush1.bf16.msra.mxu0 0
    %5084 = vmatprep.subr.bf16.mxu0 0
    %5085 = vmatpush1.bf16.msra.mxu0 0
    %5086 = vmatprep.subr.bf16.mxu0 0
    %5087 = vmatpush1.bf16.msra.mxu0 0
    %5088 = vmatprep.subr.bf16.mxu0 0
    %5089 = vmatpush1.bf16.msra.mxu0 0
    %5090 = vmatprep.subr.bf16.mxu0 0
    %5091 = vmatpush1.bf16.msra.mxu0 0
    %5092 = vmatprep.subr.bf16.mxu0 0
    %5093 = vmatpush1.bf16.msra.mxu0 0
    %5094 = vmatprep.mubr.bf16.mxu0 0
    %5095 = vmatmul.mubr.bf16.gmra.mrb[0].mxu0 %v5060
    %v5096 = vpop.f32.mrb[0].mxu0
    %v5097 = vadd.f32 %v5051, %v5096
    %v5098 = vpop.f32.mrb[0].mxu0
    %v5099 = vpop.f32.mrb[0].mxu0
    %v5100 = vpop.f32.mrb[0].mxu0
    %5101 = vdwg.mxu0
    %v5102 = vadd.f32 %v5097, %v304
    %v5103 = vxor.u32 %v5102, 2147483648
    %v5104 = vmul.f32 %v5103, 1.442695
    %v5105 = vpow.pop %v5104
    %v5106 = vadd.f32 %v5105, 1.0
    %v5107 = vrcp.pop %v5106
    %v5108 = vmul.f32 1.0, %v5107
    %v5109 = vtanh.pop %v5102
    %v5110 = vmul.f32 %v5108, %v4348
    %5112 = vrot.lane.b32.xlu0 %v5109, 32
    %v5113 = vpop.permute.xlu0 %5112
    %v5115 = vmul.f32 %v5108, %v5113
    %5117 = vrot.lane.b32.xlu0 %v5115, 32
    %v5118 = vpop.permute.xlu0 %5117
    %v5120 = vadd.f32 %v5110, %v5118
    %v5121 = vtanh.pop %v5120
    %5123 = vrot.lane.b32.xlu0 %v5121, 32
    %v5124 = vpop.permute.xlu0 %5123
    %v5126 = vmul.f32 %v5108, %v5124
    %5127 = vmatprep.subr.bf16.mxu0 0
    %5128 = vmatpush1.bf16.msra.mxu0 %v415
    %5129 = vmatprep.subr.bf16.mxu0 0
    %5130 = vmatpush1.bf16.msra.mxu0 %v416
    %5131 = vmatprep.subr.bf16.mxu0 0
    %5132 = vmatpush1.bf16.msra.mxu0 0
    %5133 = vmatprep.subr.bf16.mxu0 0
    %5134 = vmatpush1.bf16.msra.mxu0 0
    %5135 = vmatprep.subr.bf16.mxu0 0
    %5136 = vmatpush1.bf16.msra.mxu0 0
    %5137 = vmatprep.subr.bf16.mxu0 0
    %5138 = vmatpush1.bf16.msra.mxu0 0
    %5139 = vmatprep.subr.bf16.mxu0 0
    %5140 = vmatpush1.bf16.msra.mxu0 0
    %5141 = vmatprep.subr.bf16.mxu0 0
    %5142 = vmatpush1.bf16.msra.mxu0 0
    %5143 = vmatprep.subr.bf16.mxu0 0
    %5144 = vmatpush1.bf16.msra.mxu0 0
    %5145 = vmatprep.subr.bf16.mxu0 0
    %5146 = vmatpush1.bf16.msra.mxu0 0
    %5147 = vmatprep.subr.bf16.mxu0 0
    %5148 = vmatpush1.bf16.msra.mxu0 0
    %5149 = vmatprep.subr.bf16.mxu0 0
    %5150 = vmatpush1.bf16.msra.mxu0 0
    %5151 = vmatprep.subr.bf16.mxu0 0
    %5152 = vmatpush1.bf16.msra.mxu0 0
    %5153 = vmatprep.subr.bf16.mxu0 0
    %5154 = vmatpush1.bf16.msra.mxu0 0
    %5155 = vmatprep.subr.bf16.mxu0 0
    %5156 = vmatpush1.bf16.msra.mxu0 0
    %5157 = vmatprep.subr.bf16.mxu0 0
    %5158 = vmatpush1.bf16.msra.mxu0 0
    %5159 = vmatprep.mubr.bf16.mxu0 0
    %5160 = vmatmul.mubr.bf16.gmra.mrb[0].mxu0 %v4717
    %v5161 = vpop.f32.mrb[0].mxu0
    %v5162 = vadd.f32 0.0, %v5161
    %v5163 = vpop.f32.mrb[0].mxu0
    %v5164 = vpop.f32.mrb[0].mxu0
    %v5165 = vpop.f32.mrb[0].mxu0
    %5166 = vdwg.mxu0
    %v5168 = vrot.slane %v5162, 2
    %v5169 = vrot.slane %v5162, 3
    %v5170 = vrot.slane %v5162, 4
    %v5171 = vrot.slane %v5162, 5
    %v5172 = vrot.slane %v5162, 6
    %v5173 = vrot.slane %v5162, 7
    %v5174 = vrot.slane %v5162, 1
    %v5183 = vadd.f32 %v377, %v5168
    %v5184 = vadd.f32 %v380, %v5169
    %v5185 = vadd.f32 %v385, %v5170
    %v5186 = vadd.f32 %v388, %v5171
    %v5187 = vadd.f32 %v393, %v5172
    %v5188 = vadd.f32 %v396, %v5173
    %v5189 = vadd.f32 %v401, %v5162
    %v5190 = vadd.f32 %v404, %v5174
    %v5191 = vxor.u32 %v5183, 2147483648
    %v5192 = vxor.u32 %v5184, 2147483648
    %v5193 = vxor.u32 %v5185, 2147483648
    %v5194 = vxor.u32 %v5186, 2147483648
    %v5195 = vxor.u32 %v5187, 2147483648
    %v5196 = vxor.u32 %v5188, 2147483648
    %v5197 = vxor.u32 %v5189, 2147483648
    %v5198 = vxor.u32 %v5190, 2147483648
    %v5199 = vmul.f32 %v5191, 1.442695
    %v5200 = vpow.pop %v5199
    %v5201 = vmul.f32 %v5192, 1.442695
    %v5202 = vpow.pop %v5201
    %v5203 = vmul.f32 %v5193, 1.442695
    %v5204 = vpow.pop %v5203
    %v5205 = vmul.f32 %v5194, 1.442695
    %v5206 = vpow.pop %v5205
    %v5207 = vmul.f32 %v5195, 1.442695
    %v5208 = vpow.pop %v5207
    %v5209 = vmul.f32 %v5196, 1.442695
    %v5210 = vpow.pop %v5209
    %v5211 = vmul.f32 %v5197, 1.442695
    %v5212 = vpow.pop %v5211
    %v5213 = vmul.f32 %v5198, 1.442695
    %v5214 = vpow.pop %v5213
    %v5215 = vadd.f32 %v5200, 1.0
    %v5216 = vadd.f32 %v5202, 1.0
    %v5217 = vadd.f32 %v5204, 1.0
    %v5218 = vadd.f32 %v5206, 1.0
    %v5219 = vadd.f32 %v5208, 1.0
    %v5220 = vadd.f32 %v5210, 1.0
    %v5221 = vadd.f32 %v5212, 1.0
    %v5222 = vadd.f32 %v5214, 1.0
    %v5223 = vrcp.pop %v5215
    %v5224 = vmul.f32 1.0, %v5223
    %v5225 = vrcp.pop %v5216
    %v5226 = vmul.f32 1.0, %v5225
    %v5227 = vrcp.pop %v5217
    %v5228 = vmul.f32 1.0, %v5227
    %v5229 = vrcp.pop %v5218
    %v5230 = vmul.f32 1.0, %v5229
    %v5231 = vrcp.pop %v5219
    %v5232 = vmul.f32 1.0, %v5231
    %v5233 = vrcp.pop %v5220
    %v5234 = vmul.f32 1.0, %v5233
    %v5235 = vrcp.pop %v5221
    %v5236 = vmul.f32 1.0, %v5235
    %v5237 = vrcp.pop %v5222
    %v5238 = vmul.f32 1.0, %v5237
    %v5239 = vtanh.pop %v5183
    %v5240 = vtanh.pop %v5184
    %v5241 = vtanh.pop %v5185
    %v5242 = vtanh.pop %v5186
    %v5243 = vtanh.pop %v5187
    %v5244 = vtanh.pop %v5188
    %v5245 = vtanh.pop %v5189
    %v5246 = vtanh.pop %v5190
    %v5255 = vrot.slane %v4579, 7
    %v5256 = vrot.slane %v4580, 7
    %v5257 = vrot.slane %v4581, 7
    %v5258 = vrot.slane %v4582, 7
    %v5259 = vrot.slane %v4583, 7
    %v5260 = vrot.slane %v4584, 7
    %v5261 = vrot.slane %v4585, 7
    %v5262 = vrot.slane %v4586, 7
    %v5271 = vmul.f32 %v5224, %v5255
    %v5272 = vmul.f32 %v5226, %v5256
    %v5273 = vmul.f32 %v5228, %v5257
    %v5274 = vmul.f32 %v5230, %v5258
    %v5275 = vmul.f32 %v5232, %v5259
    %v5276 = vmul.f32 %v5234, %v5260
    %v5277 = vmul.f32 %v5236, %v5261
    %v5278 = vmul.f32 %v5238, %v5262
    %5287 = vrot.lane.b32.xlu0 %v5239, 32
    %v5288 = vpop.permute.xlu0 %5287
    %5289 = vrot.lane.b32.xlu0 %v5240, 32
    %v5290 = vpop.permute.xlu0 %5289
    %5291 = vrot.lane.b32.xlu0 %v5241, 32
    %v5292 = vpop.permute.xlu0 %5291
    %5293 = vrot.lane.b32.xlu0 %v5242, 32
    %v5294 = vpop.permute.xlu0 %5293
    %5295 = vrot.lane.b32.xlu0 %v5243, 32
    %v5296 = vpop.permute.xlu0 %5295
    %5297 = vrot.lane.b32.xlu0 %v5244, 32
    %v5298 = vpop.permute.xlu0 %5297
    %5299 = vrot.lane.b32.xlu0 %v5245, 32
    %v5300 = vpop.permute.xlu0 %5299
    %5301 = vrot.lane.b32.xlu0 %v5246, 32
    %v5302 = vpop.permute.xlu0 %5301
    %v5311 = vmul.f32 %v5224, %v5288
    %v5312 = vmul.f32 %v5226, %v5290
    %v5313 = vmul.f32 %v5228, %v5292
    %v5314 = vmul.f32 %v5230, %v5294
    %v5315 = vmul.f32 %v5232, %v5296
    %v5316 = vmul.f32 %v5234, %v5298
    %v5317 = vmul.f32 %v5236, %v5300
    %v5318 = vmul.f32 %v5238, %v5302
    %5327 = vrot.lane.b32.xlu0 %v5311, 32
    %v5328 = vpop.permute.xlu0 %5327
    %5329 = vrot.lane.b32.xlu0 %v5312, 32
    %v5330 = vpop.permute.xlu0 %5329
    %5331 = vrot.lane.b32.xlu0 %v5313, 32
    %v5332 = vpop.permute.xlu0 %5331
    %5333 = vrot.lane.b32.xlu0 %v5314, 32
    %v5334 = vpop.permute.xlu0 %5333
    %5335 = vrot.lane.b32.xlu0 %v5315, 32
    %v5336 = vpop.permute.xlu0 %5335
    %5337 = vrot.lane.b32.xlu0 %v5316, 32
    %v5338 = vpop.permute.xlu0 %5337
    %5339 = vrot.lane.b32.xlu0 %v5317, 32
    %v5340 = vpop.permute.xlu0 %5339
    %5341 = vrot.lane.b32.xlu0 %v5318, 32
    %v5342 = vpop.permute.xlu0 %5341
    %v5351 = vadd.f32 %v5271, %v5328
    %v5352 = vadd.f32 %v5272, %v5330
    %v5353 = vadd.f32 %v5273, %v5332
    %v5354 = vadd.f32 %v5274, %v5334
    %v5355 = vadd.f32 %v5275, %v5336
    %v5356 = vadd.f32 %v5276, %v5338
    %v5357 = vadd.f32 %v5277, %v5340
    %v5358 = vadd.f32 %v5278, %v5342
    %v5359 = vtanh.pop %v5351
    %v5360 = vtanh.pop %v5352
    %v5361 = vtanh.pop %v5353
    %v5362 = vtanh.pop %v5354
    %v5363 = vtanh.pop %v5355
    %v5364 = vtanh.pop %v5356
    %v5365 = vtanh.pop %v5357
    %v5366 = vtanh.pop %v5358
    %5375 = vrot.lane.b32.xlu0 %v5359, 32
    %v5376 = vpop.permute.xlu0 %5375
    %5377 = vrot.lane.b32.xlu0 %v5360, 32
    %v5378 = vpop.permute.xlu0 %5377
    %5379 = vrot.lane.b32.xlu0 %v5361, 32
    %v5380 = vpop.permute.xlu0 %5379
    %5381 = vrot.lane.b32.xlu0 %v5362, 32
    %v5382 = vpop.permute.xlu0 %5381
    %5383 = vrot.lane.b32.xlu0 %v5363, 32
    %v5384 = vpop.permute.xlu0 %5383
    %5385 = vrot.lane.b32.xlu0 %v5364, 32
    %v5386 = vpop.permute.xlu0 %5385
    %5387 = vrot.lane.b32.xlu0 %v5365, 32
    %v5388 = vpop.permute.xlu0 %5387
    %5389 = vrot.lane.b32.xlu0 %v5366, 32
    %v5390 = vpop.permute.xlu0 %5389
    %v5399 = vmul.f32 %v5224, %v5376
    %v5400 = vmul.f32 %v5226, %v5378
    %v5401 = vmul.f32 %v5228, %v5380
    %v5402 = vmul.f32 %v5230, %v5382
    %v5403 = vmul.f32 %v5232, %v5384
    %v5404 = vmul.f32 %v5234, %v5386
    %v5405 = vmul.f32 %v5236, %v5388
    %v5406 = vmul.f32 %v5238, %v5390
    %v5407 = vpack.c.bf16 %v5399, %v5399
    %v5408 = vpack.c.bf16 %v5400, %v5400
    %v5409 = vpack.c.bf16 %v5401, %v5401
    %v5410 = vpack.c.bf16 %v5402, %v5402
    %v5411 = vpack.c.bf16 %v5403, %v5403
    %v5412 = vpack.c.bf16 %v5404, %v5404
    %v5413 = vpack.c.bf16 %v5405, %v5405
    %v5414 = vpack.c.bf16 %v5406, %v5406
    %5415 = vmatprep.subr.bf16.mxu0 0
    %5416 = vmatpush1.bf16.msra.mxu0 %v695
    %5417 = vmatprep.subr.bf16.mxu0 0
    %5418 = vmatpush1.bf16.msra.mxu0 %v696
    %5419 = vmatprep.subr.bf16.mxu0 0
    %5420 = vmatpush1.bf16.msra.mxu0 0
    %5421 = vmatprep.subr.bf16.mxu0 0
    %5422 = vmatpush1.bf16.msra.mxu0 0
    %5423 = vmatprep.subr.bf16.mxu0 0
    %5424 = vmatpush1.bf16.msra.mxu0 0
    %5425 = vmatprep.subr.bf16.mxu0 0
    %5426 = vmatpush1.bf16.msra.mxu0 0
    %5427 = vmatprep.subr.bf16.mxu0 0
    %5428 = vmatpush1.bf16.msra.mxu0 0
    %5429 = vmatprep.subr.bf16.mxu0 0
    %5430 = vmatpush1.bf16.msra.mxu0 0
    %5431 = vmatprep.subr.bf16.mxu0 0
    %5432 = vmatpush1.bf16.msra.mxu0 0
    %5433 = vmatprep.subr.bf16.mxu0 0
    %5434 = vmatpush1.bf16.msra.mxu0 0
    %5435 = vmatprep.subr.bf16.mxu0 0
    %5436 = vmatpush1.bf16.msra.mxu0 0
    %5437 = vmatprep.subr.bf16.mxu0 0
    %5438 = vmatpush1.bf16.msra.mxu0 0
    %5439 = vmatprep.subr.bf16.mxu0 0
    %5440 = vmatpush1.bf16.msra.mxu0 0
    %5441 = vmatprep.subr.bf16.mxu0 0
    %5442 = vmatpush1.bf16.msra.mxu0 0
    %5443 = vmatprep.subr.bf16.mxu0 0
    %5444 = vmatpush1.bf16.msra.mxu0 0
    %5445 = vmatprep.subr.bf16.mxu0 0
    %5446 = vmatpush1.bf16.msra.mxu0 0
    %5447 = vmatprep.mubr.bf16.mxu0 0
    %5448 = vmatmul.mubr.bf16.gmra.mrb[0].mxu0 %v4829
    %v5449 = vpop.f32.mrb[0].mxu0
    %v5450 = vadd.f32 0.0, %v5449
    %v5451 = vpop.f32.mrb[0].mxu0
    %v5452 = vpop.f32.mrb[0].mxu0
    %v5453 = vpop.f32.mrb[0].mxu0
    %5454 = vdwg.mxu0
    %v5463 = vunpack.c.l.b16 %v5407
    %v5464 = vunpack.c.l.b16 %v5408
    %v5465 = vunpack.c.l.b16 %v5409
    %v5466 = vunpack.c.l.b16 %v5410
    %v5467 = vunpack.c.l.b16 %v5411
    %v5468 = vunpack.c.l.b16 %v5412
    %v5469 = vunpack.c.l.b16 %v5413
    %v5470 = vunpack.c.l.b16 %v5414
    %v5471 = vrot.slane %v5463, 6
    %v5472 = vrot.slane %v5464, 5
    %v5473 = vsel %vm756, %v5472, %v5471
    %v5474 = vrot.slane %v5465, 4
    %v5475 = vsel %vm759, %v5474, %v5473
    %v5476 = vrot.slane %v5466, 3
    %v5477 = vsel %vm762, %v5476, %v5475
    %v5478 = vrot.slane %v5467, 2
    %v5479 = vsel %vm765, %v5478, %v5477
    %v5480 = vrot.slane %v5468, 1
    %v5481 = vsel %vm768, %v5480, %v5479
    %v5482 = vsel %vm771, %v5469, %v5481
    %v5483 = vrot.slane %v5470, 7
    %v5484 = vsel %vm774, %v5483, %v5482
    %v5485 = vpack.c.b16 %v5484, %v5484
    %5486 = vrot.lane.b32.xlu0 %v5485, 64
    %v5487 = vpop.permute.xlu0 %5486
    %v5489 = vsel %vm419, %v5487, 0
    %5491 = vmatprep.subr.bf16.mxu0 0
    %5492 = vmatpush1.bf16.msra.mxu0 %v787
    %5493 = vmatprep.subr.bf16.mxu0 0
    %5494 = vmatpush1.bf16.msra.mxu0 %v788
    %5495 = vmatprep.subr.bf16.mxu0 0
    %5496 = vmatpush1.bf16.msra.mxu0 0
    %5497 = vmatprep.subr.bf16.mxu0 0
    %5498 = vmatpush1.bf16.msra.mxu0 0
    %5499 = vmatprep.subr.bf16.mxu0 0
    %5500 = vmatpush1.bf16.msra.mxu0 0
    %5501 = vmatprep.subr.bf16.mxu0 0
    %5502 = vmatpush1.bf16.msra.mxu0 0
    %5503 = vmatprep.subr.bf16.mxu0 0
    %5504 = vmatpush1.bf16.msra.mxu0 0
    %5505 = vmatprep.subr.bf16.mxu0 0
    %5506 = vmatpush1.bf16.msra.mxu0 0
    %5507 = vmatprep.subr.bf16.mxu0 0
    %5508 = vmatpush1.bf16.msra.mxu0 0
    %5509 = vmatprep.subr.bf16.mxu0 0
    %5510 = vmatpush1.bf16.msra.mxu0 0
    %5511 = vmatprep.subr.bf16.mxu0 0
    %5512 = vmatpush1.bf16.msra.mxu0 0
    %5513 = vmatprep.subr.bf16.mxu0 0
    %5514 = vmatpush1.bf16.msra.mxu0 0
    %5515 = vmatprep.subr.bf16.mxu0 0
    %5516 = vmatpush1.bf16.msra.mxu0 0
    %5517 = vmatprep.subr.bf16.mxu0 0
    %5518 = vmatpush1.bf16.msra.mxu0 0
    %5519 = vmatprep.subr.bf16.mxu0 0
    %5520 = vmatpush1.bf16.msra.mxu0 0
    %5521 = vmatprep.subr.bf16.mxu0 0
    %5522 = vmatpush1.bf16.msra.mxu0 0
    %5523 = vmatprep.mubr.bf16.mxu0 0
    %5524 = vmatmul.mubr.bf16.gmra.mrb[0].mxu0 %v5489
    %v5525 = vpop.f32.mrb[0].mxu0
    %v5526 = vadd.f32 %v5450, %v5525
    %v5527 = vpop.f32.mrb[0].mxu0
    %v5528 = vpop.f32.mrb[0].mxu0
    %v5529 = vpop.f32.mrb[0].mxu0
    %5530 = vdwg.mxu0
    %v5531 = vadd.f32 %v5526, %v283
    %v5532 = vxor.u32 %v5531, 2147483648
    %v5533 = vmul.f32 %v5532, 1.442695
    %v5534 = vpow.pop %v5533
    %v5535 = vadd.f32 %v5534, 1.0
    %v5536 = vrcp.pop %v5535
    %v5537 = vmul.f32 1.0, %v5536
    %v5538 = vtanh.pop %v5531
    %v5539 = vmul.f32 %v5537, %v4777
    %5541 = vrot.lane.b32.xlu0 %v5538, 32
    %v5542 = vpop.permute.xlu0 %5541
    %v5544 = vmul.f32 %v5537, %v5542
    %5546 = vrot.lane.b32.xlu0 %v5544, 32
    %v5547 = vpop.permute.xlu0 %5546
    %v5549 = vadd.f32 %v5539, %v5547
    %v5550 = vtanh.pop %v5549
    %5552 = vrot.lane.b32.xlu0 %v5550, 32
    %v5553 = vpop.permute.xlu0 %5552
    %v5555 = vmul.f32 %v5537, %v5553
    %v5556 = vpack.c.bf16 %v5555, %v5555
    %5557 = vmatprep.subr.bf16.mxu0 0
    %5558 = vmatpush1.bf16.msra.mxu0 %v868
    %5559 = vmatprep.subr.bf16.mxu0 0
    %5560 = vmatpush1.bf16.msra.mxu0 %v869
    %5561 = vmatprep.subr.bf16.mxu0 0
    %5562 = vmatpush1.bf16.msra.mxu0 0
    %5563 = vmatprep.subr.bf16.mxu0 0
    %5564 = vmatpush1.bf16.msra.mxu0 0
    %5565 = vmatprep.subr.bf16.mxu0 0
    %5566 = vmatpush1.bf16.msra.mxu0 0
    %5567 = vmatprep.subr.bf16.mxu0 0
    %5568 = vmatpush1.bf16.msra.mxu0 0
    %5569 = vmatprep.subr.bf16.mxu0 0
    %5570 = vmatpush1.bf16.msra.mxu0 0
    %5571 = vmatprep.subr.bf16.mxu0 0
    %5572 = vmatpush1.bf16.msra.mxu0 0
    %5573 = vmatprep.subr.bf16.mxu0 0
    %5574 = vmatpush1.bf16.msra.mxu0 0
    %5575 = vmatprep.subr.bf16.mxu0 0
    %5576 = vmatpush1.bf16.msra.mxu0 0
    %5577 = vmatprep.subr.bf16.mxu0 0
    %5578 = vmatpush1.bf16.msra.mxu0 0
    %5579 = vmatprep.subr.bf16.mxu0 0
    %5580 = vmatpush1.bf16.msra.mxu0 0
    %5581 = vmatprep.subr.bf16.mxu0 0
    %5582 = vmatpush1.bf16.msra.mxu0 0
    %5583 = vmatprep.subr.bf16.mxu0 0
    %5584 = vmatpush1.bf16.msra.mxu0 0
    %5585 = vmatprep.subr.bf16.mxu0 0
    %5586 = vmatpush1.bf16.msra.mxu0 0
    %5587 = vmatprep.subr.bf16.mxu0 0
    %5588 = vmatpush1.bf16.msra.mxu0 0
    %5589 = vmatprep.mubr.bf16.mxu0 0
    %5590 = vmatmul.mubr.bf16.gmra.mrb[0].mxu0 %v4941
    %v5591 = vpop.f32.mrb[0].mxu0
    %v5592 = vadd.f32 0.0, %v5591
    %v5593 = vpop.f32.mrb[0].mxu0
    %v5594 = vpop.f32.mrb[0].mxu0
    %v5595 = vpop.f32.mrb[0].mxu0
    %5596 = vdwg.mxu0
    %5598 = vrot.lane.b32.xlu0 %v5556, 64
    %v5599 = vpop.permute.xlu0 %5598
    %v5601 = vsel %vm419, %v5599, 0
    %5603 = vmatprep.subr.bf16.mxu0 0
    %5604 = vmatpush1.bf16.msra.mxu0 %v923
    %5605 = vmatprep.subr.bf16.mxu0 0
    %5606 = vmatpush1.bf16.msra.mxu0 %v924
    %5607 = vmatprep.subr.bf16.mxu0 0
    %5608 = vmatpush1.bf16.msra.mxu0 0
    %5609 = vmatprep.subr.bf16.mxu0 0
    %5610 = vmatpush1.bf16.msra.mxu0 0
    %5611 = vmatprep.subr.bf16.mxu0 0
    %5612 = vmatpush1.bf16.msra.mxu0 0
    %5613 = vmatprep.subr.bf16.mxu0 0
    %5614 = vmatpush1.bf16.msra.mxu0 0
    %5615 = vmatprep.subr.bf16.mxu0 0
    %5616 = vmatpush1.bf16.msra.mxu0 0
    %5617 = vmatprep.subr.bf16.mxu0 0
    %5618 = vmatpush1.bf16.msra.mxu0 0
    %5619 = vmatprep.subr.bf16.mxu0 0
    %5620 = vmatpush1.bf16.msra.mxu0 0
    %5621 = vmatprep.subr.bf16.mxu0 0
    %5622 = vmatpush1.bf16.msra.mxu0 0
    %5623 = vmatprep.subr.bf16.mxu0 0
    %5624 = vmatpush1.bf16.msra.mxu0 0
    %5625 = vmatprep.subr.bf16.mxu0 0
    %5626 = vmatpush1.bf16.msra.mxu0 0
    %5627 = vmatprep.subr.bf16.mxu0 0
    %5628 = vmatpush1.bf16.msra.mxu0 0
    %5629 = vmatprep.subr.bf16.mxu0 0
    %5630 = vmatpush1.bf16.msra.mxu0 0
    %5631 = vmatprep.subr.bf16.mxu0 0
    %5632 = vmatpush1.bf16.msra.mxu0 0
    %5633 = vmatprep.subr.bf16.mxu0 0
    %5634 = vmatpush1.bf16.msra.mxu0 0
    %5635 = vmatprep.mubr.bf16.mxu0 0
    %5636 = vmatmul.mubr.bf16.gmra.mrb[0].mxu0 %v5601
    %v5637 = vpop.f32.mrb[0].mxu0
    %v5638 = vadd.f32 %v5592, %v5637
    %v5639 = vpop.f32.mrb[0].mxu0
    %v5640 = vpop.f32.mrb[0].mxu0
    %v5641 = vpop.f32.mrb[0].mxu0
    %5642 = vdwg.mxu0
    %v5643 = vadd.f32 %v5638, %v290
    %v5644 = vxor.u32 %v5643, 2147483648
    %v5645 = vmul.f32 %v5644, 1.442695
    %v5646 = vpow.pop %v5645
    %v5647 = vadd.f32 %v5646, 1.0
    %v5648 = vrcp.pop %v5647
    %v5649 = vmul.f32 1.0, %v5648
    %v5650 = vtanh.pop %v5643
    %v5651 = vmul.f32 %v5649, %v4889
    %5653 = vrot.lane.b32.xlu0 %v5650, 32
    %v5654 = vpop.permute.xlu0 %5653
    %v5656 = vmul.f32 %v5649, %v5654
    %5658 = vrot.lane.b32.xlu0 %v5656, 32
    %v5659 = vpop.permute.xlu0 %5658
    %v5661 = vadd.f32 %v5651, %v5659
    %v5662 = vtanh.pop %v5661
    %5664 = vrot.lane.b32.xlu0 %v5662, 32
    %v5665 = vpop.permute.xlu0 %5664
    %v5667 = vmul.f32 %v5649, %v5665
    %v5668 = vpack.c.bf16 %v5667, %v5667
    %5669 = vmatprep.subr.bf16.mxu0 0
    %5670 = vmatpush1.bf16.msra.mxu0 %v1004
    %5671 = vmatprep.subr.bf16.mxu0 0
    %5672 = vmatpush1.bf16.msra.mxu0 %v1005
    %5673 = vmatprep.subr.bf16.mxu0 0
    %5674 = vmatpush1.bf16.msra.mxu0 0
    %5675 = vmatprep.subr.bf16.mxu0 0
    %5676 = vmatpush1.bf16.msra.mxu0 0
    %5677 = vmatprep.subr.bf16.mxu0 0
    %5678 = vmatpush1.bf16.msra.mxu0 0
    %5679 = vmatprep.subr.bf16.mxu0 0
    %5680 = vmatpush1.bf16.msra.mxu0 0
    %5681 = vmatprep.subr.bf16.mxu0 0
    %5682 = vmatpush1.bf16.msra.mxu0 0
    %5683 = vmatprep.subr.bf16.mxu0 0
    %5684 = vmatpush1.bf16.msra.mxu0 0
    %5685 = vmatprep.subr.bf16.mxu0 0
    %5686 = vmatpush1.bf16.msra.mxu0 0
    %5687 = vmatprep.subr.bf16.mxu0 0
    %5688 = vmatpush1.bf16.msra.mxu0 0
    %5689 = vmatprep.subr.bf16.mxu0 0
    %5690 = vmatpush1.bf16.msra.mxu0 0
    %5691 = vmatprep.subr.bf16.mxu0 0
    %5692 = vmatpush1.bf16.msra.mxu0 0
    %5693 = vmatprep.subr.bf16.mxu0 0
    %5694 = vmatpush1.bf16.msra.mxu0 0
    %5695 = vmatprep.subr.bf16.mxu0 0
    %5696 = vmatpush1.bf16.msra.mxu0 0
    %5697 = vmatprep.subr.bf16.mxu0 0
    %5698 = vmatpush1.bf16.msra.mxu0 0
    %5699 = vmatprep.subr.bf16.mxu0 0
    %5700 = vmatpush1.bf16.msra.mxu0 0
    %5701 = vmatprep.mubr.bf16.mxu0 0
    %5702 = vmatmul.mubr.bf16.gmra.mrb[0].mxu0 %v5060
    %v5703 = vpop.f32.mrb[0].mxu0
    %v5704 = vadd.f32 0.0, %v5703
    %v5705 = vpop.f32.mrb[0].mxu0
    %v5706 = vpop.f32.mrb[0].mxu0
    %v5707 = vpop.f32.mrb[0].mxu0
    %5708 = vdwg.mxu0
    %5710 = vrot.lane.b32.xlu0 %v5668, 64
    %v5711 = vpop.permute.xlu0 %5710
    %v5713 = vsel %vm419, %v5711, 0
    %5715 = vmatprep.subr.bf16.mxu0 0
    %5716 = vmatpush1.bf16.msra.mxu0 %v1059
    %5717 = vmatprep.subr.bf16.mxu0 0
    %5718 = vmatpush1.bf16.msra.mxu0 %v1060
    %5719 = vmatprep.subr.bf16.mxu0 0
    %5720 = vmatpush1.bf16.msra.mxu0 0
    %5721 = vmatprep.subr.bf16.mxu0 0
    %5722 = vmatpush1.bf16.msra.mxu0 0
    %5723 = vmatprep.subr.bf16.mxu0 0
    %5724 = vmatpush1.bf16.msra.mxu0 0
    %5725 = vmatprep.subr.bf16.mxu0 0
    %5726 = vmatpush1.bf16.msra.mxu0 0
    %5727 = vmatprep.subr.bf16.mxu0 0
    %5728 = vmatpush1.bf16.msra.mxu0 0
    %5729 = vmatprep.subr.bf16.mxu0 0
    %5730 = vmatpush1.bf16.msra.mxu0 0
    %5731 = vmatprep.subr.bf16.mxu0 0
    %5732 = vmatpush1.bf16.msra.mxu0 0
    %5733 = vmatprep.subr.bf16.mxu0 0
    %5734 = vmatpush1.bf16.msra.mxu0 0
    %5735 = vmatprep.subr.bf16.mxu0 0
    %5736 = vmatpush1.bf16.msra.mxu0 0
    %5737 = vmatprep.subr.bf16.mxu0 0
    %5738 = vmatpush1.bf16.msra.mxu0 0
    %5739 = vmatprep.subr.bf16.mxu0 0
    %5740 = vmatpush1.bf16.msra.mxu0 0
    %5741 = vmatprep.subr.bf16.mxu0 0
    %5742 = vmatpush1.bf16.msra.mxu0 0
    %5743 = vmatprep.subr.bf16.mxu0 0
    %5744 = vmatpush1.bf16.msra.mxu0 0
    %5745 = vmatprep.subr.bf16.mxu0 0
    %5746 = vmatpush1.bf16.msra.mxu0 0
    %5747 = vmatprep.mubr.bf16.mxu0 0
    %5748 = vmatmul.mubr.bf16.gmra.mrb[0].mxu0 %v5713
    %v5749 = vpop.f32.mrb[0].mxu0
    %v5750 = vadd.f32 %v5704, %v5749
    %v5751 = vpop.f32.mrb[0].mxu0
    %v5752 = vpop.f32.mrb[0].mxu0
    %v5753 = vpop.f32.mrb[0].mxu0
    %5754 = vdwg.mxu0
    %v5755 = vadd.f32 %v5750, %v297
    %v5756 = vxor.u32 %v5755, 2147483648
    %v5757 = vmul.f32 %v5756, 1.442695
    %v5758 = vpow.pop %v5757
    %v5759 = vadd.f32 %v5758, 1.0
    %v5760 = vrcp.pop %v5759
    %v5761 = vmul.f32 1.0, %v5760
    %v5762 = vtanh.pop %v5755
    %v5763 = vmul.f32 %v5761, %v5001
    %5765 = vrot.lane.b32.xlu0 %v5762, 32
    %v5766 = vpop.permute.xlu0 %5765
    %v5768 = vmul.f32 %v5761, %v5766
    %5770 = vrot.lane.b32.xlu0 %v5768, 32
    %v5771 = vpop.permute.xlu0 %5770
    %v5773 = vadd.f32 %v5763, %v5771
    %v5774 = vtanh.pop %v5773
    %5776 = vrot.lane.b32.xlu0 %v5774, 32
    %v5777 = vpop.permute.xlu0 %5776
    %v5779 = vmul.f32 %v5761, %v5777
    %v5780 = vpack.c.bf16 %v5779, %v5779
    %v5781 = vpack.c.bf16 %v5126, %v5126
    %5783 = vrot.lane.b32.xlu0 %v5781, 64
    %v5784 = vpop.permute.xlu0 %5783
    %v5786 = vsel %vm419, %v5784, 0
    %5788 = vmatprep.subr.bf16.mxu0 0
    %5789 = vmatpush1.bf16.msra.mxu0 %v1140
    %5790 = vmatprep.subr.bf16.mxu0 0
    %5791 = vmatpush1.bf16.msra.mxu0 %v1141
    %5792 = vmatprep.subr.bf16.mxu0 0
    %5793 = vmatpush1.bf16.msra.mxu0 0
    %5794 = vmatprep.subr.bf16.mxu0 0
    %5795 = vmatpush1.bf16.msra.mxu0 0
    %5796 = vmatprep.subr.bf16.mxu0 0
    %5797 = vmatpush1.bf16.msra.mxu0 0
    %5798 = vmatprep.subr.bf16.mxu0 0
    %5799 = vmatpush1.bf16.msra.mxu0 0
    %5800 = vmatprep.subr.bf16.mxu0 0
    %5801 = vmatpush1.bf16.msra.mxu0 0
    %5802 = vmatprep.subr.bf16.mxu0 0
    %5803 = vmatpush1.bf16.msra.mxu0 0
    %5804 = vmatprep.subr.bf16.mxu0 0
    %5805 = vmatpush1.bf16.msra.mxu0 0
    %5806 = vmatprep.subr.bf16.mxu0 0
    %5807 = vmatpush1.bf16.msra.mxu0 0
    %5808 = vmatprep.subr.bf16.mxu0 0
    %5809 = vmatpush1.bf16.msra.mxu0 0
    %5810 = vmatprep.subr.bf16.mxu0 0
    %5811 = vmatpush1.bf16.msra.mxu0 0
    %5812 = vmatprep.subr.bf16.mxu0 0
    %5813 = vmatpush1.bf16.msra.mxu0 0
    %5814 = vmatprep.subr.bf16.mxu0 0
    %5815 = vmatpush1.bf16.msra.mxu0 0
    %5816 = vmatprep.subr.bf16.mxu0 0
    %5817 = vmatpush1.bf16.msra.mxu0 0
    %5818 = vmatprep.subr.bf16.mxu0 0
    %5819 = vmatpush1.bf16.msra.mxu0 0
    %5820 = vmatprep.mubr.bf16.mxu0 0
    %5821 = vmatmul.mubr.bf16.gmra.mrb[0].mxu0 %v5786
    %v5822 = vpop.f32.mrb[0].mxu0
    %v5823 = vadd.f32 0.0, %v5822
    %v5824 = vpop.f32.mrb[0].mxu0
    %v5825 = vpop.f32.mrb[0].mxu0
    %v5826 = vpop.f32.mrb[0].mxu0
    %5827 = vdwg.mxu0
    %5829 = vrot.lane.b32.xlu0 %v5780, 64
    %v5830 = vpop.permute.xlu0 %5829
    %v5832 = vsel %vm419, %v5830, 0
    %5834 = vmatprep.subr.bf16.mxu0 0
    %5835 = vmatpush1.bf16.msra.mxu0 %v1195
    %5836 = vmatprep.subr.bf16.mxu0 0
    %5837 = vmatpush1.bf16.msra.mxu0 %v1196
    %5838 = vmatprep.subr.bf16.mxu0 0
    %5839 = vmatpush1.bf16.msra.mxu0 0
    %5840 = vmatprep.subr.bf16.mxu0 0
    %5841 = vmatpush1.bf16.msra.mxu0 0
    %5842 = vmatprep.subr.bf16.mxu0 0
    %5843 = vmatpush1.bf16.msra.mxu0 0
    %5844 = vmatprep.subr.bf16.mxu0 0
    %5845 = vmatpush1.bf16.msra.mxu0 0
    %5846 = vmatprep.subr.bf16.mxu0 0
    %5847 = vmatpush1.bf16.msra.mxu0 0
    %5848 = vmatprep.subr.bf16.mxu0 0
    %5849 = vmatpush1.bf16.msra.mxu0 0
    %5850 = vmatprep.subr.bf16.mxu0 0
    %5851 = vmatpush1.bf16.msra.mxu0 0
    %5852 = vmatprep.subr.bf16.mxu0 0
    %5853 = vmatpush1.bf16.msra.mxu0 0
    %5854 = vmatprep.subr.bf16.mxu0 0
    %5855 = vmatpush1.bf16.msra.mxu0 0
    %5856 = vmatprep.subr.bf16.mxu0 0
    %5857 = vmatpush1.bf16.msra.mxu0 0
    %5858 = vmatprep.subr.bf16.mxu0 0
    %5859 = vmatpush1.bf16.msra.mxu0 0
    %5860 = vmatprep.subr.bf16.mxu0 0
    %5861 = vmatpush1.bf16.msra.mxu0 0
    %5862 = vmatprep.subr.bf16.mxu0 0
    %5863 = vmatpush1.bf16.msra.mxu0 0
    %5864 = vmatprep.subr.bf16.mxu0 0
    %5865 = vmatpush1.bf16.msra.mxu0 0
    %5866 = vmatprep.mubr.bf16.mxu0 0
    %5867 = vmatmul.mubr.bf16.gmra.mrb[0].mxu0 %v5832
    %v5868 = vpop.f32.mrb[0].mxu0
    %v5869 = vadd.f32 %v5823, %v5868
    %v5870 = vpop.f32.mrb[0].mxu0
    %v5871 = vpop.f32.mrb[0].mxu0
    %v5872 = vpop.f32.mrb[0].mxu0
    %5873 = vdwg.mxu0
    %v5874 = vadd.f32 %v5869, %v304
    %v5875 = vxor.u32 %v5874, 2147483648
    %v5876 = vmul.f32 %v5875, 1.442695
    %v5877 = vpow.pop %v5876
    %v5878 = vadd.f32 %v5877, 1.0
    %v5879 = vrcp.pop %v5878
    %v5880 = vmul.f32 1.0, %v5879
    %v5881 = vtanh.pop %v5874
    %v5882 = vmul.f32 %v5880, %v5120
    %5884 = vrot.lane.b32.xlu0 %v5881, 32
    %v5885 = vpop.permute.xlu0 %5884
    %v5887 = vmul.f32 %v5880, %v5885
    %5889 = vrot.lane.b32.xlu0 %v5887, 32
    %v5890 = vpop.permute.xlu0 %5889
    %v5892 = vadd.f32 %v5882, %v5890
    %v5893 = vtanh.pop %v5892
    %5895 = vrot.lane.b32.xlu0 %v5893, 32
    %v5896 = vpop.permute.xlu0 %5895
    %v5898 = vmul.f32 %v5880, %v5896
    %5899 = vmatprep.subr.bf16.mxu0 0
    %5900 = vmatpush1.bf16.msra.mxu0 %v415
    %5901 = vmatprep.subr.bf16.mxu0 0
    %5902 = vmatpush1.bf16.msra.mxu0 %v416
    %5903 = vmatprep.subr.bf16.mxu0 0
    %5904 = vmatpush1.bf16.msra.mxu0 0
    %5905 = vmatprep.subr.bf16.mxu0 0
    %5906 = vmatpush1.bf16.msra.mxu0 0
    %5907 = vmatprep.subr.bf16.mxu0 0
    %5908 = vmatpush1.bf16.msra.mxu0 0
    %5909 = vmatprep.subr.bf16.mxu0 0
    %5910 = vmatpush1.bf16.msra.mxu0 0
    %5911 = vmatprep.subr.bf16.mxu0 0
    %5912 = vmatpush1.bf16.msra.mxu0 0
    %5913 = vmatprep.subr.bf16.mxu0 0
    %5914 = vmatpush1.bf16.msra.mxu0 0
    %5915 = vmatprep.subr.bf16.mxu0 0
    %5916 = vmatpush1.bf16.msra.mxu0 0
    %5917 = vmatprep.subr.bf16.mxu0 0
    %5918 = vmatpush1.bf16.msra.mxu0 0
    %5919 = vmatprep.subr.bf16.mxu0 0
    %5920 = vmatpush1.bf16.msra.mxu0 0
    %5921 = vmatprep.subr.bf16.mxu0 0
    %5922 = vmatpush1.bf16.msra.mxu0 0
    %5923 = vmatprep.subr.bf16.mxu0 0
    %5924 = vmatpush1.bf16.msra.mxu0 0
    %5925 = vmatprep.subr.bf16.mxu0 0
    %5926 = vmatpush1.bf16.msra.mxu0 0
    %5927 = vmatprep.subr.bf16.mxu0 0
    %5928 = vmatpush1.bf16.msra.mxu0 0
    %5929 = vmatprep.subr.bf16.mxu0 0
    %5930 = vmatpush1.bf16.msra.mxu0 0
    %5931 = vmatprep.mubr.bf16.mxu0 0
    %5932 = vmatmul.mubr.bf16.gmra.mrb[0].mxu0 %v5489
    %v5933 = vpop.f32.mrb[0].mxu0
    %v5934 = vadd.f32 0.0, %v5933
    %v5935 = vpop.f32.mrb[0].mxu0
    %v5936 = vpop.f32.mrb[0].mxu0
    %v5937 = vpop.f32.mrb[0].mxu0
    %5938 = vdwg.mxu0
    %v5940 = vrot.slane %v5934, 1
    %v5941 = vrot.slane %v5934, 2
    %v5942 = vrot.slane %v5934, 3
    %v5943 = vrot.slane %v5934, 4
    %v5944 = vrot.slane %v5934, 5
    %v5945 = vrot.slane %v5934, 6
    %v5946 = vrot.slane %v5934, 7
    %v5955 = vadd.f32 %v377, %v5940
    %v5956 = vadd.f32 %v380, %v5941
    %v5957 = vadd.f32 %v385, %v5942
    %v5958 = vadd.f32 %v388, %v5943
    %v5959 = vadd.f32 %v393, %v5944
    %v5960 = vadd.f32 %v396, %v5945
    %v5961 = vadd.f32 %v401, %v5946
    %v5962 = vadd.f32 %v404, %v5934
    %v5963 = vxor.u32 %v5955, 2147483648
    %v5964 = vxor.u32 %v5956, 2147483648
    %v5965 = vxor.u32 %v5957, 2147483648
    %v5966 = vxor.u32 %v5958, 2147483648
    %v5967 = vxor.u32 %v5959, 2147483648
    %v5968 = vxor.u32 %v5960, 2147483648
    %v5969 = vxor.u32 %v5961, 2147483648
    %v5970 = vxor.u32 %v5962, 2147483648
    %v5971 = vmul.f32 %v5963, 1.442695
    %v5972 = vpow.pop %v5971
    %v5973 = vmul.f32 %v5964, 1.442695
    %v5974 = vpow.pop %v5973
    %v5975 = vmul.f32 %v5965, 1.442695
    %v5976 = vpow.pop %v5975
    %v5977 = vmul.f32 %v5966, 1.442695
    %v5978 = vpow.pop %v5977
    %v5979 = vmul.f32 %v5967, 1.442695
    %v5980 = vpow.pop %v5979
    %v5981 = vmul.f32 %v5968, 1.442695
    %v5982 = vpow.pop %v5981
    %v5983 = vmul.f32 %v5969, 1.442695
    %v5984 = vpow.pop %v5983
    %v5985 = vmul.f32 %v5970, 1.442695
    %v5986 = vpow.pop %v5985
    %v5987 = vadd.f32 %v5972, 1.0
    %v5988 = vadd.f32 %v5974, 1.0
    %v5989 = vadd.f32 %v5976, 1.0
    %v5990 = vadd.f32 %v5978, 1.0
    %v5991 = vadd.f32 %v5980, 1.0
    %v5992 = vadd.f32 %v5982, 1.0
    %v5993 = vadd.f32 %v5984, 1.0
    %v5994 = vadd.f32 %v5986, 1.0
    %v5995 = vrcp.pop %v5987
    %v5996 = vmul.f32 1.0, %v5995
    %v5997 = vrcp.pop %v5988
    %v5998 = vmul.f32 1.0, %v5997
    %v5999 = vrcp.pop %v5989
    %v6000 = vmul.f32 1.0, %v5999
    %v6001 = vrcp.pop %v5990
    %v6002 = vmul.f32 1.0, %v6001
    %v6003 = vrcp.pop %v5991
    %v6004 = vmul.f32 1.0, %v6003
    %v6005 = vrcp.pop %v5992
    %v6006 = vmul.f32 1.0, %v6005
    %v6007 = vrcp.pop %v5993
    %v6008 = vmul.f32 1.0, %v6007
    %v6009 = vrcp.pop %v5994
    %v6010 = vmul.f32 1.0, %v6009
    %v6011 = vtanh.pop %v5955
    %v6012 = vtanh.pop %v5956
    %v6013 = vtanh.pop %v5957
    %v6014 = vtanh.pop %v5958
    %v6015 = vtanh.pop %v5959
    %v6016 = vtanh.pop %v5960
    %v6017 = vtanh.pop %v5961
    %v6018 = vtanh.pop %v5962
    %v6027 = vrot.slane %v5351, 7
    %v6028 = vrot.slane %v5352, 7
    %v6029 = vrot.slane %v5353, 7
    %v6030 = vrot.slane %v5354, 7
    %v6031 = vrot.slane %v5355, 7
    %v6032 = vrot.slane %v5356, 7
    %v6033 = vrot.slane %v5357, 7
    %v6034 = vrot.slane %v5358, 7
    %v6043 = vmul.f32 %v5996, %v6027
    %v6044 = vmul.f32 %v5998, %v6028
    %v6045 = vmul.f32 %v6000, %v6029
    %v6046 = vmul.f32 %v6002, %v6030
    %v6047 = vmul.f32 %v6004, %v6031
    %v6048 = vmul.f32 %v6006, %v6032
    %v6049 = vmul.f32 %v6008, %v6033
    %v6050 = vmul.f32 %v6010, %v6034
    %6059 = vrot.lane.b32.xlu0 %v6011, 32
    %v6060 = vpop.permute.xlu0 %6059
    %6061 = vrot.lane.b32.xlu0 %v6012, 32
    %v6062 = vpop.permute.xlu0 %6061
    %6063 = vrot.lane.b32.xlu0 %v6013, 32
    %v6064 = vpop.permute.xlu0 %6063
    %6065 = vrot.lane.b32.xlu0 %v6014, 32
    %v6066 = vpop.permute.xlu0 %6065
    %6067 = vrot.lane.b32.xlu0 %v6015, 32
    %v6068 = vpop.permute.xlu0 %6067
    %6069 = vrot.lane.b32.xlu0 %v6016, 32
    %v6070 = vpop.permute.xlu0 %6069
    %6071 = vrot.lane.b32.xlu0 %v6017, 32
    %v6072 = vpop.permute.xlu0 %6071
    %6073 = vrot.lane.b32.xlu0 %v6018, 32
    %v6074 = vpop.permute.xlu0 %6073
    %v6083 = vmul.f32 %v5996, %v6060
    %v6084 = vmul.f32 %v5998, %v6062
    %v6085 = vmul.f32 %v6000, %v6064
    %v6086 = vmul.f32 %v6002, %v6066
    %v6087 = vmul.f32 %v6004, %v6068
    %v6088 = vmul.f32 %v6006, %v6070
    %v6089 = vmul.f32 %v6008, %v6072
    %v6090 = vmul.f32 %v6010, %v6074
    %6099 = vrot.lane.b32.xlu0 %v6083, 32
    %v6100 = vpop.permute.xlu0 %6099
    %6101 = vrot.lane.b32.xlu0 %v6084, 32
    %v6102 = vpop.permute.xlu0 %6101
    %6103 = vrot.lane.b32.xlu0 %v6085, 32
    %v6104 = vpop.permute.xlu0 %6103
    %6105 = vrot.lane.b32.xlu0 %v6086, 32
    %v6106 = vpop.permute.xlu0 %6105
    %6107 = vrot.lane.b32.xlu0 %v6087, 32
    %v6108 = vpop.permute.xlu0 %6107
    %6109 = vrot.lane.b32.xlu0 %v6088, 32
    %v6110 = vpop.permute.xlu0 %6109
    %6111 = vrot.lane.b32.xlu0 %v6089, 32
    %v6112 = vpop.permute.xlu0 %6111
    %6113 = vrot.lane.b32.xlu0 %v6090, 32
    %v6114 = vpop.permute.xlu0 %6113
    %v6123 = vadd.f32 %v6043, %v6100
    %v6124 = vadd.f32 %v6044, %v6102
    %v6125 = vadd.f32 %v6045, %v6104
    %v6126 = vadd.f32 %v6046, %v6106
    %v6127 = vadd.f32 %v6047, %v6108
    %v6128 = vadd.f32 %v6048, %v6110
    %v6129 = vadd.f32 %v6049, %v6112
    %v6130 = vadd.f32 %v6050, %v6114
    %v6131 = vtanh.pop %v6123
    %v6132 = vtanh.pop %v6124
    %v6133 = vtanh.pop %v6125
    %v6134 = vtanh.pop %v6126
    %v6135 = vtanh.pop %v6127
    %v6136 = vtanh.pop %v6128
    %v6137 = vtanh.pop %v6129
    %v6138 = vtanh.pop %v6130
    %6147 = vrot.lane.b32.xlu0 %v6131, 32
    %v6148 = vpop.permute.xlu0 %6147
    %6149 = vrot.lane.b32.xlu0 %v6132, 32
    %v6150 = vpop.permute.xlu0 %6149
    %6151 = vrot.lane.b32.xlu0 %v6133, 32
    %v6152 = vpop.permute.xlu0 %6151
    %6153 = vrot.lane.b32.xlu0 %v6134, 32
    %v6154 = vpop.permute.xlu0 %6153
    %6155 = vrot.lane.b32.xlu0 %v6135, 32
    %v6156 = vpop.permute.xlu0 %6155
    %6157 = vrot.lane.b32.xlu0 %v6136, 32
    %v6158 = vpop.permute.xlu0 %6157
    %6159 = vrot.lane.b32.xlu0 %v6137, 32
    %v6160 = vpop.permute.xlu0 %6159
    %6161 = vrot.lane.b32.xlu0 %v6138, 32
    %v6162 = vpop.permute.xlu0 %6161
    %v6171 = vmul.f32 %v5996, %v6148
    %v6172 = vmul.f32 %v5998, %v6150
    %v6173 = vmul.f32 %v6000, %v6152
    %v6174 = vmul.f32 %v6002, %v6154
    %v6175 = vmul.f32 %v6004, %v6156
    %v6176 = vmul.f32 %v6006, %v6158
    %v6177 = vmul.f32 %v6008, %v6160
    %v6178 = vmul.f32 %v6010, %v6162
    %v6179 = vpack.c.bf16 %v6171, %v6171
    %v6180 = vpack.c.bf16 %v6172, %v6172
    %v6181 = vpack.c.bf16 %v6173, %v6173
    %v6182 = vpack.c.bf16 %v6174, %v6174
    %v6183 = vpack.c.bf16 %v6175, %v6175
    %v6184 = vpack.c.bf16 %v6176, %v6176
    %v6185 = vpack.c.bf16 %v6177, %v6177
    %v6186 = vpack.c.bf16 %v6178, %v6178
    %6187 = vmatprep.subr.bf16.mxu0 0
    %6188 = vmatpush1.bf16.msra.mxu0 %v695
    %6189 = vmatprep.subr.bf16.mxu0 0
    %6190 = vmatpush1.bf16.msra.mxu0 %v696
    %6191 = vmatprep.subr.bf16.mxu0 0
    %6192 = vmatpush1.bf16.msra.mxu0 0
    %6193 = vmatprep.subr.bf16.mxu0 0
    %6194 = vmatpush1.bf16.msra.mxu0 0
    %6195 = vmatprep.subr.bf16.mxu0 0
    %6196 = vmatpush1.bf16.msra.mxu0 0
    %6197 = vmatprep.subr.bf16.mxu0 0
    %6198 = vmatpush1.bf16.msra.mxu0 0
    %6199 = vmatprep.subr.bf16.mxu0 0
    %6200 = vmatpush1.bf16.msra.mxu0 0
    %6201 = vmatprep.subr.bf16.mxu0 0
    %6202 = vmatpush1.bf16.msra.mxu0 0
    %6203 = vmatprep.subr.bf16.mxu0 0
    %6204 = vmatpush1.bf16.msra.mxu0 0
    %6205 = vmatprep.subr.bf16.mxu0 0
    %6206 = vmatpush1.bf16.msra.mxu0 0
    %6207 = vmatprep.subr.bf16.mxu0 0
    %6208 = vmatpush1.bf16.msra.mxu0 0
    %6209 = vmatprep.subr.bf16.mxu0 0
    %6210 = vmatpush1.bf16.msra.mxu0 0
    %6211 = vmatprep.subr.bf16.mxu0 0
    %6212 = vmatpush1.bf16.msra.mxu0 0
    %6213 = vmatprep.subr.bf16.mxu0 0
    %6214 = vmatpush1.bf16.msra.mxu0 0
    %6215 = vmatprep.subr.bf16.mxu0 0
    %6216 = vmatpush1.bf16.msra.mxu0 0
    %6217 = vmatprep.subr.bf16.mxu0 0
    %6218 = vmatpush1.bf16.msra.mxu0 0
    %6219 = vmatprep.mubr.bf16.mxu0 0
    %6220 = vmatmul.mubr.bf16.gmra.mrb[0].mxu0 %v5601
    %v6221 = vpop.f32.mrb[0].mxu0
    %v6222 = vadd.f32 0.0, %v6221
    %v6223 = vpop.f32.mrb[0].mxu0
    %v6224 = vpop.f32.mrb[0].mxu0
    %v6225 = vpop.f32.mrb[0].mxu0
    %6226 = vdwg.mxu0
    %v6235 = vunpack.c.l.b16 %v6179
    %v6236 = vunpack.c.l.b16 %v6180
    %v6237 = vunpack.c.l.b16 %v6181
    %v6238 = vunpack.c.l.b16 %v6182
    %v6239 = vunpack.c.l.b16 %v6183
    %v6240 = vunpack.c.l.b16 %v6184
    %v6241 = vunpack.c.l.b16 %v6185
    %v6242 = vunpack.c.l.b16 %v6186
    %v6243 = vrot.slane %v6235, 7
    %v6244 = vrot.slane %v6236, 6
    %v6245 = vsel %vm756, %v6244, %v6243
    %v6246 = vrot.slane %v6237, 5
    %v6247 = vsel %vm759, %v6246, %v6245
    %v6248 = vrot.slane %v6238, 4
    %v6249 = vsel %vm762, %v6248, %v6247
    %v6250 = vrot.slane %v6239, 3
    %v6251 = vsel %vm765, %v6250, %v6249
    %v6252 = vrot.slane %v6240, 2
    %v6253 = vsel %vm768, %v6252, %v6251
    %v6254 = vrot.slane %v6241, 1
    %v6255 = vsel %vm771, %v6254, %v6253
    %v6256 = vsel %vm774, %v6242, %v6255
    %v6257 = vpack.c.b16 %v6256, %v6256
    %6258 = vrot.lane.b32.xlu0 %v6257, 64
    %v6259 = vpop.permute.xlu0 %6258
    %v6261 = vsel %vm419, %v6259, 0
    %6263 = vmatprep.subr.bf16.mxu0 0
    %6264 = vmatpush1.bf16.msra.mxu0 %v787
    %6265 = vmatprep.subr.bf16.mxu0 0
    %6266 = vmatpush1.bf16.msra.mxu0 %v788
    %6267 = vmatprep.subr.bf16.mxu0 0
    %6268 = vmatpush1.bf16.msra.mxu0 0
    %6269 = vmatprep.subr.bf16.mxu0 0
    %6270 = vmatpush1.bf16.msra.mxu0 0
    %6271 = vmatprep.subr.bf16.mxu0 0
    %6272 = vmatpush1.bf16.msra.mxu0 0
    %6273 = vmatprep.subr.bf16.mxu0 0
    %6274 = vmatpush1.bf16.msra.mxu0 0
    %6275 = vmatprep.subr.bf16.mxu0 0
    %6276 = vmatpush1.bf16.msra.mxu0 0
    %6277 = vmatprep.subr.bf16.mxu0 0
    %6278 = vmatpush1.bf16.msra.mxu0 0
    %6279 = vmatprep.subr.bf16.mxu0 0
    %6280 = vmatpush1.bf16.msra.mxu0 0
    %6281 = vmatprep.subr.bf16.mxu0 0
    %6282 = vmatpush1.bf16.msra.mxu0 0
    %6283 = vmatprep.subr.bf16.mxu0 0
    %6284 = vmatpush1.bf16.msra.mxu0 0
    %6285 = vmatprep.subr.bf16.mxu0 0
    %6286 = vmatpush1.bf16.msra.mxu0 0
    %6287 = vmatprep.subr.bf16.mxu0 0
    %6288 = vmatpush1.bf16.msra.mxu0 0
    %6289 = vmatprep.subr.bf16.mxu0 0
    %6290 = vmatpush1.bf16.msra.mxu0 0
    %6291 = vmatprep.subr.bf16.mxu0 0
    %6292 = vmatpush1.bf16.msra.mxu0 0
    %6293 = vmatprep.subr.bf16.mxu0 0
    %6294 = vmatpush1.bf16.msra.mxu0 0
    %6295 = vmatprep.mubr.bf16.mxu0 0
    %6296 = vmatmul.mubr.bf16.gmra.mrb[0].mxu0 %v6261
    %v6297 = vpop.f32.mrb[0].mxu0
    %v6298 = vadd.f32 %v6222, %v6297
    %v6299 = vpop.f32.mrb[0].mxu0
    %v6300 = vpop.f32.mrb[0].mxu0
    %v6301 = vpop.f32.mrb[0].mxu0
    %6302 = vdwg.mxu0
    %v6303 = vadd.f32 %v6298, %v283
    %v6304 = vxor.u32 %v6303, 2147483648
    %v6305 = vmul.f32 %v6304, 1.442695
    %v6306 = vpow.pop %v6305
    %v6307 = vadd.f32 %v6306, 1.0
    %v6308 = vrcp.pop %v6307
    %v6309 = vmul.f32 1.0, %v6308
    %v6310 = vtanh.pop %v6303
    %v6311 = vmul.f32 %v6309, %v5549
    %6313 = vrot.lane.b32.xlu0 %v6310, 32
    %v6314 = vpop.permute.xlu0 %6313
    %v6316 = vmul.f32 %v6309, %v6314
    %6318 = vrot.lane.b32.xlu0 %v6316, 32
    %v6319 = vpop.permute.xlu0 %6318
    %v6321 = vadd.f32 %v6311, %v6319
    %v6322 = vtanh.pop %v6321
    %6324 = vrot.lane.b32.xlu0 %v6322, 32
    %v6325 = vpop.permute.xlu0 %6324
    %v6327 = vmul.f32 %v6309, %v6325
    %v6328 = vpack.c.bf16 %v6327, %v6327
    %6329 = vmatprep.subr.bf16.mxu0 0
    %6330 = vmatpush1.bf16.msra.mxu0 %v868
    %6331 = vmatprep.subr.bf16.mxu0 0
    %6332 = vmatpush1.bf16.msra.mxu0 %v869
    %6333 = vmatprep.subr.bf16.mxu0 0
    %6334 = vmatpush1.bf16.msra.mxu0 0
    %6335 = vmatprep.subr.bf16.mxu0 0
    %6336 = vmatpush1.bf16.msra.mxu0 0
    %6337 = vmatprep.subr.bf16.mxu0 0
    %6338 = vmatpush1.bf16.msra.mxu0 0
    %6339 = vmatprep.subr.bf16.mxu0 0
    %6340 = vmatpush1.bf16.msra.mxu0 0
    %6341 = vmatprep.subr.bf16.mxu0 0
    %6342 = vmatpush1.bf16.msra.mxu0 0
    %6343 = vmatprep.subr.bf16.mxu0 0
    %6344 = vmatpush1.bf16.msra.mxu0 0
    %6345 = vmatprep.subr.bf16.mxu0 0
    %6346 = vmatpush1.bf16.msra.mxu0 0
    %6347 = vmatprep.subr.bf16.mxu0 0
    %6348 = vmatpush1.bf16.msra.mxu0 0
    %6349 = vmatprep.subr.bf16.mxu0 0
    %6350 = vmatpush1.bf16.msra.mxu0 0
    %6351 = vmatprep.subr.bf16.mxu0 0
    %6352 = vmatpush1.bf16.msra.mxu0 0
    %6353 = vmatprep.subr.bf16.mxu0 0
    %6354 = vmatpush1.bf16.msra.mxu0 0
    %6355 = vmatprep.subr.bf16.mxu0 0
    %6356 = vmatpush1.bf16.msra.mxu0 0
    %6357 = vmatprep.subr.bf16.mxu0 0
    %6358 = vmatpush1.bf16.msra.mxu0 0
    %6359 = vmatprep.subr.bf16.mxu0 0
    %6360 = vmatpush1.bf16.msra.mxu0 0
    %6361 = vmatprep.mubr.bf16.mxu0 0
    %6362 = vmatmul.mubr.bf16.gmra.mrb[0].mxu0 %v5713
    %v6363 = vpop.f32.mrb[0].mxu0
    %v6364 = vadd.f32 0.0, %v6363
    %v6365 = vpop.f32.mrb[0].mxu0
    %v6366 = vpop.f32.mrb[0].mxu0
    %v6367 = vpop.f32.mrb[0].mxu0
    %6368 = vdwg.mxu0
    %6370 = vrot.lane.b32.xlu0 %v6328, 64
    %v6371 = vpop.permute.xlu0 %6370
    %v6373 = vsel %vm419, %v6371, 0
    %6375 = vmatprep.subr.bf16.mxu0 0
    %6376 = vmatpush1.bf16.msra.mxu0 %v923
    %6377 = vmatprep.subr.bf16.mxu0 0
    %6378 = vmatpush1.bf16.msra.mxu0 %v924
    %6379 = vmatprep.subr.bf16.mxu0 0
    %6380 = vmatpush1.bf16.msra.mxu0 0
    %6381 = vmatprep.subr.bf16.mxu0 0
    %6382 = vmatpush1.bf16.msra.mxu0 0
    %6383 = vmatprep.subr.bf16.mxu0 0
    %6384 = vmatpush1.bf16.msra.mxu0 0
    %6385 = vmatprep.subr.bf16.mxu0 0
    %6386 = vmatpush1.bf16.msra.mxu0 0
    %6387 = vmatprep.subr.bf16.mxu0 0
    %6388 = vmatpush1.bf16.msra.mxu0 0
    %6389 = vmatprep.subr.bf16.mxu0 0
    %6390 = vmatpush1.bf16.msra.mxu0 0
    %6391 = vmatprep.subr.bf16.mxu0 0
    %6392 = vmatpush1.bf16.msra.mxu0 0
    %6393 = vmatprep.subr.bf16.mxu0 0
    %6394 = vmatpush1.bf16.msra.mxu0 0
    %6395 = vmatprep.subr.bf16.mxu0 0
    %6396 = vmatpush1.bf16.msra.mxu0 0
    %6397 = vmatprep.subr.bf16.mxu0 0
    %6398 = vmatpush1.bf16.msra.mxu0 0
    %6399 = vmatprep.subr.bf16.mxu0 0
    %6400 = vmatpush1.bf16.msra.mxu0 0
    %6401 = vmatprep.subr.bf16.mxu0 0
    %6402 = vmatpush1.bf16.msra.mxu0 0
    %6403 = vmatprep.subr.bf16.mxu0 0
    %6404 = vmatpush1.bf16.msra.mxu0 0
    %6405 = vmatprep.subr.bf16.mxu0 0
    %6406 = vmatpush1.bf16.msra.mxu0 0
    %6407 = vmatprep.mubr.bf16.mxu0 0
    %6408 = vmatmul.mubr.bf16.gmra.mrb[0].mxu0 %v6373
    %v6409 = vpop.f32.mrb[0].mxu0
    %v6410 = vadd.f32 %v6364, %v6409
    %v6411 = vpop.f32.mrb[0].mxu0
    %v6412 = vpop.f32.mrb[0].mxu0
    %v6413 = vpop.f32.mrb[0].mxu0
    %6414 = vdwg.mxu0
    %v6415 = vadd.f32 %v6410, %v290
    %v6416 = vxor.u32 %v6415, 2147483648
    %v6417 = vmul.f32 %v6416, 1.442695
    %v6418 = vpow.pop %v6417
    %v6419 = vadd.f32 %v6418, 1.0
    %v6420 = vrcp.pop %v6419
    %v6421 = vmul.f32 1.0, %v6420
    %v6422 = vtanh.pop %v6415
    %v6423 = vmul.f32 %v6421, %v5661
    %6425 = vrot.lane.b32.xlu0 %v6422, 32
    %v6426 = vpop.permute.xlu0 %6425
    %v6428 = vmul.f32 %v6421, %v6426
    %6430 = vrot.lane.b32.xlu0 %v6428, 32
    %v6431 = vpop.permute.xlu0 %6430
    %v6433 = vadd.f32 %v6423, %v6431
    %v6434 = vtanh.pop %v6433
    %6436 = vrot.lane.b32.xlu0 %v6434, 32
    %v6437 = vpop.permute.xlu0 %6436
    %v6439 = vmul.f32 %v6421, %v6437
    %v6440 = vpack.c.bf16 %v6439, %v6439
    %6441 = vmatprep.subr.bf16.mxu0 0
    %6442 = vmatpush1.bf16.msra.mxu0 %v1004
    %6443 = vmatprep.subr.bf16.mxu0 0
    %6444 = vmatpush1.bf16.msra.mxu0 %v1005
    %6445 = vmatprep.subr.bf16.mxu0 0
    %6446 = vmatpush1.bf16.msra.mxu0 0
    %6447 = vmatprep.subr.bf16.mxu0 0
    %6448 = vmatpush1.bf16.msra.mxu0 0
    %6449 = vmatprep.subr.bf16.mxu0 0
    %6450 = vmatpush1.bf16.msra.mxu0 0
    %6451 = vmatprep.subr.bf16.mxu0 0
    %6452 = vmatpush1.bf16.msra.mxu0 0
    %6453 = vmatprep.subr.bf16.mxu0 0
    %6454 = vmatpush1.bf16.msra.mxu0 0
    %6455 = vmatprep.subr.bf16.mxu0 0
    %6456 = vmatpush1.bf16.msra.mxu0 0
    %6457 = vmatprep.subr.bf16.mxu0 0
    %6458 = vmatpush1.bf16.msra.mxu0 0
    %6459 = vmatprep.subr.bf16.mxu0 0
    %6460 = vmatpush1.bf16.msra.mxu0 0
    %6461 = vmatprep.subr.bf16.mxu0 0
    %6462 = vmatpush1.bf16.msra.mxu0 0
    %6463 = vmatprep.subr.bf16.mxu0 0
    %6464 = vmatpush1.bf16.msra.mxu0 0
    %6465 = vmatprep.subr.bf16.mxu0 0
    %6466 = vmatpush1.bf16.msra.mxu0 0
    %6467 = vmatprep.subr.bf16.mxu0 0
    %6468 = vmatpush1.bf16.msra.mxu0 0
    %6469 = vmatprep.subr.bf16.mxu0 0
    %6470 = vmatpush1.bf16.msra.mxu0 0
    %6471 = vmatprep.subr.bf16.mxu0 0
    %6472 = vmatpush1.bf16.msra.mxu0 0
    %6473 = vmatprep.mubr.bf16.mxu0 0
    %6474 = vmatmul.mubr.bf16.gmra.mrb[0].mxu0 %v5832
    %v6475 = vpop.f32.mrb[0].mxu0
    %v6476 = vadd.f32 0.0, %v6475
    %v6477 = vpop.f32.mrb[0].mxu0
    %v6478 = vpop.f32.mrb[0].mxu0
    %v6479 = vpop.f32.mrb[0].mxu0
    %6480 = vdwg.mxu0
    %6482 = vrot.lane.b32.xlu0 %v6440, 64
    %v6483 = vpop.permute.xlu0 %6482
    %v6485 = vsel %vm419, %v6483, 0
    %6487 = vmatprep.subr.bf16.mxu0 0
    %6488 = vmatpush1.bf16.msra.mxu0 %v1059
    %6489 = vmatprep.subr.bf16.mxu0 0
    %6490 = vmatpush1.bf16.msra.mxu0 %v1060
    %6491 = vmatprep.subr.bf16.mxu0 0
    %6492 = vmatpush1.bf16.msra.mxu0 0
    %6493 = vmatprep.subr.bf16.mxu0 0
    %6494 = vmatpush1.bf16.msra.mxu0 0
    %6495 = vmatprep.subr.bf16.mxu0 0
    %6496 = vmatpush1.bf16.msra.mxu0 0
    %6497 = vmatprep.subr.bf16.mxu0 0
    %6498 = vmatpush1.bf16.msra.mxu0 0
    %6499 = vmatprep.subr.bf16.mxu0 0
    %6500 = vmatpush1.bf16.msra.mxu0 0
    %6501 = vmatprep.subr.bf16.mxu0 0
    %6502 = vmatpush1.bf16.msra.mxu0 0
    %6503 = vmatprep.subr.bf16.mxu0 0
    %6504 = vmatpush1.bf16.msra.mxu0 0
    %6505 = vmatprep.subr.bf16.mxu0 0
    %6506 = vmatpush1.bf16.msra.mxu0 0
    %6507 = vmatprep.subr.bf16.mxu0 0
    %6508 = vmatpush1.bf16.msra.mxu0 0
    %6509 = vmatprep.subr.bf16.mxu0 0
    %6510 = vmatpush1.bf16.msra.mxu0 0
    %6511 = vmatprep.subr.bf16.mxu0 0
    %6512 = vmatpush1.bf16.msra.mxu0 0
    %6513 = vmatprep.subr.bf16.mxu0 0
    %6514 = vmatpush1.bf16.msra.mxu0 0
    %6515 = vmatprep.subr.bf16.mxu0 0
    %6516 = vmatpush1.bf16.msra.mxu0 0
    %6517 = vmatprep.subr.bf16.mxu0 0
    %6518 = vmatpush1.bf16.msra.mxu0 0
    %6519 = vmatprep.mubr.bf16.mxu0 0
    %6520 = vmatmul.mubr.bf16.gmra.mrb[0].mxu0 %v6485
    %v6521 = vpop.f32.mrb[0].mxu0
    %v6522 = vadd.f32 %v6476, %v6521
    %v6523 = vpop.f32.mrb[0].mxu0
    %v6524 = vpop.f32.mrb[0].mxu0
    %v6525 = vpop.f32.mrb[0].mxu0
    %6526 = vdwg.mxu0
    %v6527 = vadd.f32 %v6522, %v297
    %v6528 = vxor.u32 %v6527, 2147483648
    %v6529 = vmul.f32 %v6528, 1.442695
    %v6530 = vpow.pop %v6529
    %v6531 = vadd.f32 %v6530, 1.0
    %v6532 = vrcp.pop %v6531
    %v6533 = vmul.f32 1.0, %v6532
    %v6534 = vtanh.pop %v6527
    %v6535 = vmul.f32 %v6533, %v5773
    %6537 = vrot.lane.b32.xlu0 %v6534, 32
    %v6538 = vpop.permute.xlu0 %6537
    %v6540 = vmul.f32 %v6533, %v6538
    %6542 = vrot.lane.b32.xlu0 %v6540, 32
    %v6543 = vpop.permute.xlu0 %6542
    %v6545 = vadd.f32 %v6535, %v6543
    %v6546 = vtanh.pop %v6545
    %6548 = vrot.lane.b32.xlu0 %v6546, 32
    %v6549 = vpop.permute.xlu0 %6548
    %v6551 = vmul.f32 %v6533, %v6549
    %v6552 = vpack.c.bf16 %v6551, %v6551
    %v6553 = vpack.c.bf16 %v5898, %v5898
    %6555 = vrot.lane.b32.xlu0 %v6553, 64
    %v6556 = vpop.permute.xlu0 %6555
    %v6558 = vsel %vm419, %v6556, 0
    %6560 = vmatprep.subr.bf16.mxu0 0
    %6561 = vmatpush1.bf16.msra.mxu0 %v1140
    %6562 = vmatprep.subr.bf16.mxu0 0
    %6563 = vmatpush1.bf16.msra.mxu0 %v1141
    %6564 = vmatprep.subr.bf16.mxu0 0
    %6565 = vmatpush1.bf16.msra.mxu0 0
    %6566 = vmatprep.subr.bf16.mxu0 0
    %6567 = vmatpush1.bf16.msra.mxu0 0
    %6568 = vmatprep.subr.bf16.mxu0 0
    %6569 = vmatpush1.bf16.msra.mxu0 0
    %6570 = vmatprep.subr.bf16.mxu0 0
    %6571 = vmatpush1.bf16.msra.mxu0 0
    %6572 = vmatprep.subr.bf16.mxu0 0
    %6573 = vmatpush1.bf16.msra.mxu0 0
    %6574 = vmatprep.subr.bf16.mxu0 0
    %6575 = vmatpush1.bf16.msra.mxu0 0
    %6576 = vmatprep.subr.bf16.mxu0 0
    %6577 = vmatpush1.bf16.msra.mxu0 0
    %6578 = vmatprep.subr.bf16.mxu0 0
    %6579 = vmatpush1.bf16.msra.mxu0 0
    %6580 = vmatprep.subr.bf16.mxu0 0
    %6581 = vmatpush1.bf16.msra.mxu0 0
    %6582 = vmatprep.subr.bf16.mxu0 0
    %6583 = vmatpush1.bf16.msra.mxu0 0
    %6584 = vmatprep.subr.bf16.mxu0 0
    %6585 = vmatpush1.bf16.msra.mxu0 0
    %6586 = vmatprep.subr.bf16.mxu0 0
    %6587 = vmatpush1.bf16.msra.mxu0 0
    %6588 = vmatprep.subr.bf16.mxu0 0
    %6589 = vmatpush1.bf16.msra.mxu0 0
    %6590 = vmatprep.subr.bf16.mxu0 0
    %6591 = vmatpush1.bf16.msra.mxu0 0
    %6592 = vmatprep.mubr.bf16.mxu0 0
    %6593 = vmatmul.mubr.bf16.gmra.mrb[0].mxu0 %v6558
    %v6594 = vpop.f32.mrb[0].mxu0
    %v6595 = vadd.f32 0.0, %v6594
    %v6596 = vpop.f32.mrb[0].mxu0
    %v6597 = vpop.f32.mrb[0].mxu0
    %v6598 = vpop.f32.mrb[0].mxu0
    %6599 = vdwg.mxu0
    %6601 = vrot.lane.b32.xlu0 %v6552, 64
    %v6602 = vpop.permute.xlu0 %6601
    %v6604 = vsel %vm419, %v6602, 0
    %6606 = vmatprep.subr.bf16.mxu0 0
    %6607 = vmatpush1.bf16.msra.mxu0 %v1195
    %6608 = vmatprep.subr.bf16.mxu0 0
    %6609 = vmatpush1.bf16.msra.mxu0 %v1196
    %6610 = vmatprep.subr.bf16.mxu0 0
    %6611 = vmatpush1.bf16.msra.mxu0 0
    %6612 = vmatprep.subr.bf16.mxu0 0
    %6613 = vmatpush1.bf16.msra.mxu0 0
    %6614 = vmatprep.subr.bf16.mxu0 0
    %6615 = vmatpush1.bf16.msra.mxu0 0
    %6616 = vmatprep.subr.bf16.mxu0 0
    %6617 = vmatpush1.bf16.msra.mxu0 0
    %6618 = vmatprep.subr.bf16.mxu0 0
    %6619 = vmatpush1.bf16.msra.mxu0 0
    %6620 = vmatprep.subr.bf16.mxu0 0
    %6621 = vmatpush1.bf16.msra.mxu0 0
    %6622 = vmatprep.subr.bf16.mxu0 0
    %6623 = vmatpush1.bf16.msra.mxu0 0
    %6624 = vmatprep.subr.bf16.mxu0 0
    %6625 = vmatpush1.bf16.msra.mxu0 0
    %6626 = vmatprep.subr.bf16.mxu0 0
    %6627 = vmatpush1.bf16.msra.mxu0 0
    %6628 = vmatprep.subr.bf16.mxu0 0
    %6629 = vmatpush1.bf16.msra.mxu0 0
    %6630 = vmatprep.subr.bf16.mxu0 0
    %6631 = vmatpush1.bf16.msra.mxu0 0
    %6632 = vmatprep.subr.bf16.mxu0 0
    %6633 = vmatpush1.bf16.msra.mxu0 0
    %6634 = vmatprep.subr.bf16.mxu0 0
    %6635 = vmatpush1.bf16.msra.mxu0 0
    %6636 = vmatprep.subr.bf16.mxu0 0
    %6637 = vmatpush1.bf16.msra.mxu0 0
    %6638 = vmatprep.mubr.bf16.mxu0 0
    %6639 = vmatmul.mubr.bf16.gmra.mrb[0].mxu0 %v6604
    %v6640 = vpop.f32.mrb[0].mxu0
    %v6641 = vadd.f32 %v6595, %v6640
    %v6642 = vpop.f32.mrb[0].mxu0
    %v6643 = vpop.f32.mrb[0].mxu0
    %v6644 = vpop.f32.mrb[0].mxu0
    %6645 = vdwg.mxu0
    %v6646 = vadd.f32 %v6641, %v304
    %v6647 = vxor.u32 %v6646, 2147483648
    %v6648 = vmul.f32 %v6647, 1.442695
    %v6649 = vpow.pop %v6648
    %v6650 = vadd.f32 %v6649, 1.0
    %v6651 = vrcp.pop %v6650
    %v6652 = vmul.f32 1.0, %v6651
    %v6653 = vtanh.pop %v6646
    %v6654 = vmul.f32 %v6652, %v5892
    %6656 = vrot.lane.b32.xlu0 %v6653, 32
    %v6657 = vpop.permute.xlu0 %6656
    %v6659 = vmul.f32 %v6652, %v6657
    %6661 = vrot.lane.b32.xlu0 %v6659, 32
    %v6662 = vpop.permute.xlu0 %6661
    %v6664 = vadd.f32 %v6654, %v6662
    %v6665 = vtanh.pop %v6664
    %6667 = vrot.lane.b32.xlu0 %v6665, 32
    %v6668 = vpop.permute.xlu0 %6667
    %v6670 = vmul.f32 %v6652, %v6668
    %v6671 = vmax.f32 %v6670, 0.0
    %v6672 = vpack.c.bf16 %v6671, %v6671
    %v6673 = vld [vmem:[#allocation20] sm:$0xf]
    %v6674 = vld [vmem:[#allocation20 + $0x4] sm:$0xf]
    %v6675 = vld [vmem:[#allocation20 + $0x8] sm:$0xf]
    %v6676 = vld [vmem:[#allocation20 + $0xc] sm:$0xf]
    %v6677 = vld [vmem:[#allocation22] sm:$0x1]
    %v6679 = vlaneseq
    %v6680 = vshrl.u32 %v6679, 7
    %v6681 = vsub.s32 0, %v6680
    %v6682 = vrot.slane %v6677, %v6681
    %6685 = vrot.lane.b32.xlu0 %v6672, 64
    %v6686 = vpop.permute.xlu0 %6685
    %v6691 = vunpack.c.l.b16 %v6673
    %v6692 = vunpack.c.l.b16 %v6674
    %v6693 = vunpack.c.l.b16 %v6675
    %v6694 = vunpack.c.l.b16 %v6676
    %v6695 = vpack.c.b16 %v6692, %v6691
    %v6696 = vpack.c.b16 %v6694, %v6693
    %v6700 = vsel %vm419, %v6686, 0
    %6702 = vmatprep.subr.bf16.mxu0 0
    %6703 = vmatpush1.bf16.msra.mxu0 %v6695
    %6704 = vmatprep.subr.bf16.mxu0 0
    %6705 = vmatpush1.bf16.msra.mxu0 %v6696
    %6706 = vmatprep.subr.bf16.mxu0 0
    %6707 = vmatpush1.bf16.msra.mxu0 0
    %6708 = vmatprep.subr.bf16.mxu0 0
    %6709 = vmatpush1.bf16.msra.mxu0 0
    %6710 = vmatprep.subr.bf16.mxu0 0
    %6711 = vmatpush1.bf16.msra.mxu0 0
    %6712 = vmatprep.subr.bf16.mxu0 0
    %6713 = vmatpush1.bf16.msra.mxu0 0
    %6714 = vmatprep.subr.bf16.mxu0 0
    %6715 = vmatpush1.bf16.msra.mxu0 0
    %6716 = vmatprep.subr.bf16.mxu0 0
    %6717 = vmatpush1.bf16.msra.mxu0 0
    %6718 = vmatprep.subr.bf16.mxu0 0
    %6719 = vmatpush1.bf16.msra.mxu0 0
    %6720 = vmatprep.subr.bf16.mxu0 0
    %6721 = vmatpush1.bf16.msra.mxu0 0
    %6722 = vmatprep.subr.bf16.mxu0 0
    %6723 = vmatpush1.bf16.msra.mxu0 0
    %6724 = vmatprep.subr.bf16.mxu0 0
    %6725 = vmatpush1.bf16.msra.mxu0 0
    %6726 = vmatprep.subr.bf16.mxu0 0
    %6727 = vmatpush1.bf16.msra.mxu0 0
    %6728 = vmatprep.subr.bf16.mxu0 0
    %6729 = vmatpush1.bf16.msra.mxu0 0
    %6730 = vmatprep.subr.bf16.mxu0 0
    %6731 = vmatpush1.bf16.msra.mxu0 0
    %6732 = vmatprep.subr.bf16.mxu0 0
    %6733 = vmatpush1.bf16.msra.mxu0 0
    %6734 = vmatprep.mubr.bf16.mxu0 0
    %6735 = vmatmul.mubr.bf16.gmra.mrb[0].mxu0 %v6700
    %v6736 = vpop.f32.mrb[0].mxu0
    %v6737 = vadd.f32 %v6682, %v6736
    %v6738 = vpop.f32.mrb[0].mxu0
    %v6739 = vpop.f32.mrb[0].mxu0
    %v6740 = vpop.f32.mrb[0].mxu0
    %6741 = vdwg.mxu0
    %v6742 = vmax.f32 %v6737, 0.0
    %v6743 = vpack.c.bf16 %v6742, %v6742
    %v6744 = vld [vmem:[%s18] sm:$0xf]
    %v6745 = vld [vmem:[%s18 + $0x4] sm:$0xf]
    %v6746 = vld [vmem:[%s18 + $0x8] sm:$0xf]
    %v6747 = vld [vmem:[%s18 + $0xc] sm:$0xf]
    %v6748 = vld [vmem:[%s18 + $0x10] sm:$0xf]
    %v6749 = vld [vmem:[%s18 + $0x14] sm:$0xf]
    %v6750 = vld [vmem:[%s18 + $0x18] sm:$0xf]
    %v6751 = vld [vmem:[%s18 + $0x1c] sm:$0xf]
    %v6752 = vld [vmem:[%s18 + $0x20] sm:$0xf]
    %v6753 = vld [vmem:[%s18 + $0x24] sm:$0xf]
    %v6754 = vld [vmem:[%s18 + $0x28] sm:$0xf]
    %v6755 = vld [vmem:[%s18 + $0x2c] sm:$0xf]
    %v6756 = vld [vmem:[%s18 + $0x30] sm:$0xf]
    %v6757 = vld [vmem:[%s18 + $0x34] sm:$0xf]
    %v6758 = vld [vmem:[%s18 + $0x38] sm:$0xf]
    %v6759 = vld [vmem:[%s18 + $0x3c] sm:$0xf]
    %v6760 = vld [vmem:[#allocation23] sm:$0x1]
    %v6762 = vlaneseq
    %v6763 = vshrl.u32 %v6762, 7
    %v6764 = vsub.s32 0, %v6763
    %v6765 = vrot.slane %v6760, %v6764
    %v6783 = vunpack.c.l.b16 %v6744
    %v6784 = vunpack.c.l.b16 %v6745
    %v6785 = vunpack.c.l.b16 %v6746
    %v6786 = vunpack.c.l.b16 %v6747
    %v6787 = vunpack.c.l.b16 %v6748
    %v6788 = vunpack.c.l.b16 %v6749
    %v6789 = vunpack.c.l.b16 %v6750
    %v6790 = vunpack.c.l.b16 %v6751
    %v6791 = vunpack.c.l.b16 %v6752
    %v6792 = vunpack.c.l.b16 %v6753
    %v6793 = vunpack.c.l.b16 %v6754
    %v6794 = vunpack.c.l.b16 %v6755
    %v6795 = vunpack.c.l.b16 %v6756
    %v6796 = vunpack.c.l.b16 %v6757
    %v6797 = vunpack.c.l.b16 %v6758
    %v6798 = vunpack.c.l.b16 %v6759
    %v6799 = vpack.c.b16 %v6784, %v6783
    %v6800 = vpack.c.b16 %v6786, %v6785
    %v6801 = vpack.c.b16 %v6788, %v6787
    %v6802 = vpack.c.b16 %v6790, %v6789
    %v6803 = vpack.c.b16 %v6792, %v6791
    %v6804 = vpack.c.b16 %v6794, %v6793
    %v6805 = vpack.c.b16 %v6796, %v6795
    %v6806 = vpack.c.b16 %v6798, %v6797
    %6815 = vmatprep.subr.bf16.mxu0 0
    %6816 = vmatpush1.bf16.msra.mxu0 %v6799
    %6817 = vmatprep.subr.bf16.mxu0 0
    %6818 = vmatpush1.bf16.msra.mxu0 %v6800
    %6819 = vmatprep.subr.bf16.mxu0 0
    %6820 = vmatpush1.bf16.msra.mxu0 %v6801
    %6821 = vmatprep.subr.bf16.mxu0 0
    %6822 = vmatpush1.bf16.msra.mxu0 %v6802
    %6823 = vmatprep.subr.bf16.mxu0 0
    %6824 = vmatpush1.bf16.msra.mxu0 %v6803
    %6825 = vmatprep.subr.bf16.mxu0 0
    %6826 = vmatpush1.bf16.msra.mxu0 %v6804
    %6827 = vmatprep.subr.bf16.mxu0 0
    %6828 = vmatpush1.bf16.msra.mxu0 %v6805
    %6829 = vmatprep.subr.bf16.mxu0 0
    %6830 = vmatpush1.bf16.msra.mxu0 %v6806
    %6831 = vmatprep.subr.bf16.mxu0 0
    %6832 = vmatpush1.bf16.msra.mxu0 0
    %6833 = vmatprep.subr.bf16.mxu0 0
    %6834 = vmatpush1.bf16.msra.mxu0 0
    %6835 = vmatprep.subr.bf16.mxu0 0
    %6836 = vmatpush1.bf16.msra.mxu0 0
    %6837 = vmatprep.subr.bf16.mxu0 0
    %6838 = vmatpush1.bf16.msra.mxu0 0
    %6839 = vmatprep.subr.bf16.mxu0 0
    %6840 = vmatpush1.bf16.msra.mxu0 0
    %6841 = vmatprep.subr.bf16.mxu0 0
    %6842 = vmatpush1.bf16.msra.mxu0 0
    %6843 = vmatprep.subr.bf16.mxu0 0
    %6844 = vmatpush1.bf16.msra.mxu0 0
    %6845 = vmatprep.subr.bf16.mxu0 0
    %6846 = vmatpush1.bf16.msra.mxu0 0
    %6847 = vmatprep.mubr.bf16.mxu0 0
    %6848 = vmatmul.mubr.bf16.gmra.mrb[0].mxu0 %v6743
    %v6849 = vpop.f32.mrb[0].mxu0
    %v6850 = vadd.f32 %v6765, %v6849
    %v6851 = vpop.f32.mrb[0].mxu0
    %v6852 = vpop.f32.mrb[0].mxu0
    %v6853 = vpop.f32.mrb[0].mxu0
    %6854 = vdwg.mxu0
    %vm6855 = vcmask 97280
    %6856 = vst.msk [vmem:[#allocation25] sm:$0xff] %vm6855, %v6850
    // Predicated region
    $region138: #{lstm_model_forward.1} parent=1 // pred_check
      _
    $region139: #{lstm_model_forward.1} parent=1 // pred_check_branch
      %6858 = sbr.rel (0) target = $region141
    $region140: #{lstm_model_forward.1} parent=1 // pred_region
      %s6860 = ssub.s32 128, 128
      %6861 = vsyncadd [#allocation4], %s6860
      %s6863 = sshll.u32 [#allocation25], 4
      %s6864 = int_to_ptr.vmem [resolvable:$true] %s6863
      %6866 = dma.vmem_to_hbm [thread:$0]  %s6864, 128, %s20, [#allocation4]
    $region141: #{lstm_model_forward.1} parent=1 // pred_fallthru
      _
    // Predicated region
    $region142: #{lstm_model_forward.1} parent=1 // pred_check
      _
    $region143: #{lstm_model_forward.1} parent=1 // pred_check_branch
      %6868 = sbr.rel (0) target = $region145
    $region144: #{lstm_model_forward.1} parent=1 // pred_region
      %6869 = dma.done [#allocation4], 128
    $region145: #{lstm_model_forward.1} parent=1 // pred_fallthru
      _
    %6870 = vsyncpa [#allocation3], 1
    %6871 = vsyncpa [#allocation6], 1
    %6872 = vsyncpa [#allocation9], 1
    %6873 = vsyncpa [#allocation12], 1
    %6874 = vsyncpa [#allocation15], 1
    %6875 = vsyncpa [#allocation18], 1
    %6876 = vsyncpa [#allocation21], 1
    %6877 = vsyncpa [#allocation24], 1
    %6878 = vsyncpa [#allocation4], 1

</llo_original>
